<compile_context>
chip_gen: v5e
topology: v5e:2x2
jax: 0.10.0
libtpu: 0.0.40
codegen_flags: <defaults>
</compile_context>

<pallas_src>
import functools

import jax
import jax.numpy as jnp
from jax.experimental import pallas as pl
from jax.experimental.pallas import tpu as pltpu

_VMEM_LIMIT = 32 * 1024 * 1024  # leaves headroom on every generation (v7x = 64 MiB)


def _pick_tile(dim, target):
    """Largest candidate tile that divides `dim` (falls back to full dim)."""
    for t in (target, target // 2, target // 4, 128, 64, 32, 16, 8):
        if 0 < t <= dim and dim % t == 0:
            return t
    return dim


def _layernorm(h, gamma, beta, eps=1e-5):
    mu = jnp.mean(h, axis=-1, keepdims=True)
    var = jnp.mean((h - mu) ** 2, axis=-1, keepdims=True)
    return (h - mu) * jax.lax.rsqrt(var + eps) * gamma + beta


# ---------------------------------------------------------------------------
# Kernel 1: fused Q/K/V projection (per sequence tile, lane-dense bf16 output)
# ---------------------------------------------------------------------------
def qkv_kernel(x_ref, wq_ref, bq_ref, wk_ref, bk_ref, wv_ref, bv_ref,
               q_ref, k_ref, v_ref):
    x = x_ref[0].astype(jnp.bfloat16)                     # (TS, D)

    def proj(w_ref, b_ref, o_ref):
        y = jnp.dot(x, w_ref[...], preferred_element_type=jnp.float32) + b_ref[...]
        o_ref[0] = y.astype(o_ref.dtype)

    proj(wq_ref, bq_ref, q_ref)
    proj(wk_ref, bk_ref, k_ref)
    proj(wv_ref, bv_ref, v_ref)


# ---------------------------------------------------------------------------
# Kernel 2: flash-style attention (online softmax) + output proj + AddNorm1
# ---------------------------------------------------------------------------
def attn_addnorm_kernel(x_ref, q_ref, k_ref, v_ref, wo_ref, bo_ref,
                        g1_ref, be1_ref, o_ref, m_sc, l_sc, acc_sc, *, scale):
    ki = pl.program_id(2)

    @pl.when(ki == 0)
    def _():
        m_sc[...] = jnp.full(m_sc.shape, -jnp.inf, dtype=m_sc.dtype)
        l_sc[...] = jnp.zeros(l_sc.shape, dtype=l_sc.dtype)
        acc_sc[...] = jnp.zeros(acc_sc.shape, dtype=acc_sc.dtype)

    q = q_ref[0]                                          # (H, TQ, hd) bf16
    k = k_ref[0]                                          # (H, TK, hd) bf16
    v = v_ref[0]                                          # (H, TK, hd) bf16

    # heads = leading batch axis; one batched contraction per block (MXU).
    s = jnp.einsum("hqd,hkd->hqk", q, k,
                   preferred_element_type=jnp.float32) * scale
    m_new = jnp.maximum(m_sc[...], s.max(axis=-1, keepdims=True))
    alpha = jnp.exp(m_sc[...] - m_new)
    p = jnp.exp(s - m_new)
    l_sc[...] = alpha * l_sc[...] + p.sum(axis=-1, keepdims=True)
    acc_sc[...] = alpha * acc_sc[...] + jnp.einsum(
        "hqk,hkd->hqd", p.astype(v.dtype), v, preferred_element_type=jnp.float32)
    m_sc[...] = m_new

    @pl.when(ki == pl.num_programs(2) - 1)
    def _():
        inv_l = pl.reciprocal(l_sc[...], approx=True)     # (H, TQ, 1), EUP slot
        H, TQ, hd = acc_sc.shape
        D = wo_ref.shape[1]
        # head merge folded into the output projection: per-head sublane slices
        # of Wo, accumulated in f32 (no concat / no in-kernel transposes).
        mha = jnp.zeros((TQ, D), jnp.float32)
        for h in range(H):                                # static unroll, H small
            ctx_h = (acc_sc[h] * inv_l[h]).astype(jnp.bfloat16)        # (TQ, hd)
            mha = mha + jnp.dot(ctx_h, wo_ref[h * hd:(h + 1) * hd, :],
                                preferred_element_type=jnp.float32)
        mha = mha + bo_ref[...]
        h1 = _layernorm(x_ref[0] + mha, g1_ref[...], be1_ref[...])
        o_ref[0] = h1.astype(o_ref.dtype)


# ---------------------------------------------------------------------------
# Kernel 3: position-wise FFN (d_ff streamed as reduction axis) + AddNorm2
# ---------------------------------------------------------------------------
def ffn_addnorm_kernel(h1_ref, w1_ref, b1_ref, w2_ref, b2_ref,
                       g2_ref, be2_ref, o_ref, acc_sc):
    fi = pl.program_id(2)

    @pl.when(fi == 0)
    def _():
        acc_sc[...] = jnp.zeros(acc_sc.shape, dtype=acc_sc.dtype)

    h = h1_ref[0]                                         # (TS, D) bf16
    z = jnp.dot(h, w1_ref[...], preferred_element_type=jnp.float32) + b1_ref[...]
    z = jnp.maximum(z, 0.0)                               # ReLU on the d_ff slab
    acc_sc[...] += jnp.dot(z.astype(jnp.bfloat16), w2_ref[...],
                           preferred_element_type=jnp.float32)

    @pl.when(fi == pl.num_programs(2) - 1)
    def _():
        ff = acc_sc[...] + b2_ref[...]
        # faithful to the reference: addnorm2(x, x) == LayerNorm(ff + ff)
        out = _layernorm(2.0 * ff, g2_ref[...], be2_ref[...])
        o_ref[0] = out.astype(o_ref.dtype)


# ---------------------------------------------------------------------------
# Wrapper
# ---------------------------------------------------------------------------
def encoder_forward(x, p, num_heads):
    B, S, D = x.shape
    d_ff = p["w1"].shape[1]
    assert D % num_heads == 0
    hd = D // num_heads
    f32, bf16 = jnp.float32, jnp.bfloat16

    # bf16 matmul operands (weights cast once on the host), f32 accumulation.
    wq, wk, wv, wo = (p[k].astype(bf16) for k in ("wq", "wk", "wv", "wo"))
    w1, w2 = p["w1"].astype(bf16), p["w2"].astype(bf16)

    TS = _pick_tile(S, 256)       # sequence tile for projections / FFN / LN
    TQ = _pick_tile(S, 256)       # query tile
    TK = _pick_tile(S, 512)       # key/value tile streamed by flash attention
    TF = _pick_tile(d_ff, 512)    # d_ff reduction tile

    # ---- 1) Q/K/V projections ------------------------------------------
    q, k, v = pl.pallas_call(
        qkv_kernel,
        out_shape=tuple(jax.ShapeDtypeStruct((B, S, D), bf16) for _ in range(3)),
        grid=(B, S // TS),
        in_specs=[
            pl.BlockSpec((1, TS, D), lambda b, s: (b, s, 0)),
            pl.BlockSpec((D, D), lambda b, s: (0, 0)),
            pl.BlockSpec((1, D), lambda b, s: (0, 0)),
            pl.BlockSpec((D, D), lambda b, s: (0, 0)),
            pl.BlockSpec((1, D), lambda b, s: (0, 0)),
            pl.BlockSpec((D, D), lambda b, s: (0, 0)),
            pl.BlockSpec((1, D), lambda b, s: (0, 0)),
        ],
        out_specs=tuple(
            pl.BlockSpec((1, TS, D), lambda b, s: (b, s, 0)) for _ in range(3)),
        compiler_params=pltpu.CompilerParams(
            dimension_semantics=("parallel", "parallel"),
            vmem_limit_bytes=_VMEM_LIMIT),
        cost_estimate=pl.CostEstimate(
            flops=int(6 * B * S * D * D),
            transcendentals=0,
            bytes_accessed=int(4 * B * S * D + 6 * D * D + 6 * B * S * D)),
    )(x, wq, p["bq"], wk, p["bk"], wv, p["bv"])

    # head split done with plain XLA (cheap relayout, keeps the kernels free of
    # exotic in-kernel reshapes/transposes).
    def split_heads(t):
        return t.reshape(B, S, num_heads, hd).transpose(0, 2, 1, 3)

    qh, kh, vh = split_heads(q), split_heads(k), split_heads(v)

    # ---- 2) flash attention + output projection + AddNorm1 --------------
    h1 = pl.pallas_call(
        functools.partial(attn_addnorm_kernel, scale=1.0 / (hd ** 0.5)),
        out_shape=jax.ShapeDtypeStruct((B, S, D), bf16),
        grid=(B, S // TQ, S // TK),
        in_specs=[
            pl.BlockSpec((1, TQ, D), lambda b, qi, ki: (b, qi, 0)),           # x (residual)
            pl.BlockSpec((1, num_heads, TQ, hd), lambda b, qi, ki: (b, 0, qi, 0)),
            pl.BlockSpec((1, num_heads, TK, hd), lambda b, qi, ki: (b, 0, ki, 0)),
            pl.BlockSpec((1, num_heads, TK, hd), lambda b, qi, ki: (b, 0, ki, 0)),
            pl.BlockSpec((D, D), lambda b, qi, ki: (0, 0)),                   # Wo
            pl.BlockSpec((1, D), lambda b, qi, ki: (0, 0)),                   # bo
            pl.BlockSpec((1, D), lambda b, qi, ki: (0, 0)),                   # LN1 gamma
            pl.BlockSpec((1, D), lambda b, qi, ki: (0, 0)),                   # LN1 beta
        ],
        out_specs=pl.BlockSpec((1, TQ, D), lambda b, qi, ki: (b, qi, 0)),
        scratch_shapes=[
            pltpu.VMEM((num_heads, TQ, 1), f32),    # running max
            pltpu.VMEM((num_heads, TQ, 1), f32),    # running denom
            pltpu.VMEM((num_heads, TQ, hd), f32),   # context accumulator
        ],
        compiler_params=pltpu.CompilerParams(
            dimension_semantics=("parallel", "parallel", "arbitrary"),
            vmem_limit_bytes=_VMEM_LIMIT),
        cost_estimate=pl.CostEstimate(
            flops=int(4 * B * num_heads * S * S * hd + 2 * B * S * D * D),
            transcendentals=int(B * num_heads * S * S),
            bytes_accessed=int(10 * B * S * D + 2 * D * D + 2 * B * S * D)),
    )(x, qh, kh, vh, wo, p["bo"], p["g1"], p["be1"])

    # ---- 3) FFN + AddNorm2 ----------------------------------------------
    out = pl.pallas_call(
        ffn_addnorm_kernel,
        out_shape=jax.ShapeDtypeStruct((B, S, D), x.dtype),
        grid=(B, S // TS, d_ff // TF),
        in_specs=[
            pl.BlockSpec((1, TS, D), lambda b, si, fi: (b, si, 0)),   # h1
            pl.BlockSpec((D, TF), lambda b, si, fi: (0, fi)),         # W1 slab
            pl.BlockSpec((1, TF), lambda b, si, fi: (0, fi)),         # b1 slab
            pl.BlockSpec((TF, D), lambda b, si, fi: (fi, 0)),         # W2 slab
            pl.BlockSpec((1, D), lambda b, si, fi: (0, 0)),           # b2
            pl.BlockSpec((1, D), lambda b, si, fi: (0, 0)),           # LN2 gamma
            pl.BlockSpec((1, D), lambda b, si, fi: (0, 0)),           # LN2 beta
        ],
        out_specs=pl.BlockSpec((1, TS, D), lambda b, si, fi: (b, si, 0)),
        scratch_shapes=[pltpu.VMEM((TS, D), f32)],
        compiler_params=pltpu.CompilerParams(
            dimension_semantics=("parallel", "parallel", "arbitrary"),
            vmem_limit_bytes=_VMEM_LIMIT),
        cost_estimate=pl.CostEstimate(
            flops=int(4 * B * S * D * d_ff),
            transcendentals=0,
            bytes_accessed=int(6 * B * S * D + 4 * D * d_ff)),
    )(h1, w1, p["b1"], w2, p["b2"], p["g2"], p["be2"])

    return out


# ---------------------------------------------------------------------------
# Parameters + pure-JAX reference
# ---------------------------------------------------------------------------
def make_params(key, d_model, num_heads):
    d_ff = d_model * 6
    ks = jax.random.split(key, 12)

    def w(k, shape):
        return jax.random.normal(k, shape, jnp.float32) * 0.02

    return dict(
        wq=w(ks[0], (d_model, d_model)), bq=w(ks[1], (1, d_model)),
        wk=w(ks[2], (d_model, d_model)), bk=w(ks[3], (1, d_model)),
        wv=w(ks[4], (d_model, d_model)), bv=w(ks[5], (1, d_model)),
        wo=w(ks[6], (d_model, d_model)), bo=w(ks[7], (1, d_model)),
        g1=jnp.ones((1, d_model), jnp.float32), be1=jnp.zeros((1, d_model), jnp.float32),
        w1=w(ks[8], (d_model, d_ff)), b1=w(ks[9], (1, d_ff)),
        w2=w(ks[10], (d_ff, d_model)), b2=w(ks[11], (1, d_model)),
        g2=jnp.ones((1, d_model), jnp.float32), be2=jnp.zeros((1, d_model), jnp.float32),
    )


def encoder_reference(x, p, num_heads):
    """Pure-JAX f32 reference for a sanity check."""
    B, S, D = x.shape
    hd = D // num_heads

    def lin(v, w, b):
        return jnp.dot(v, w, preferred_element_type=jnp.float32) + b

    def ln(v, g, b, eps=1e-5):
        mu = jnp.mean(v, -1, keepdims=True)
        var = jnp.mean((v - mu) ** 2, -1, keepdims=True)
        return (v - mu) * jax.lax.rsqrt(var + eps) * g + b

    q = lin(x, p["wq"], p["bq"]).reshape(B, S, num_heads, hd).transpose(0, 2, 1, 3)
    k = lin(x, p["wk"], p["bk"]).reshape(B, S, num_heads, hd).transpose(0, 2, 1, 3)
    v = lin(x, p["wv"], p["bv"]).reshape(B, S, num_heads, hd).transpose(0, 2, 1, 3)
    s = jnp.einsum("bhqd,bhkd->bhqk", q, k) / (hd ** 0.5)
    a = jax.nn.softmax(s, axis=-1)
    ctx = jnp.einsum("bhqk,bhkd->bhqd", a, v).transpose(0, 2, 1, 3).reshape(B, S, D)
    mha = lin(ctx, p["wo"], p["bo"])
    h1 = ln(x + mha, p["g1"], p["be1"])
    ff = lin(jnp.maximum(lin(h1, p["w1"], p["b1"]), 0.0), p["w2"], p["b2"])
    return ln(ff + ff, p["g2"], p["be2"])


if __name__ == "__main__":
    # small but tile-aligned (multiples of 128 on the lane/sequence dims)
    d_model, num_heads, B, S = 128, 4, 2, 128
    key = jax.random.PRNGKey(0)
    kx, kp = jax.random.split(key)
    x = jax.random.normal(kx, (B, S, d_model), jnp.float32)
    params = make_params(kp, d_model, num_heads)

    fwd = jax.jit(functools.partial(encoder_forward, num_heads=num_heads))
    y = fwd(x, params)
    jax.block_until_ready(y)

    y_ref = encoder_reference(x, params, num_heads)
    assert y.shape == (B, S, d_model)
    max_err = float(jnp.max(jnp.abs(y - y_ref)))
    assert jnp.allclose(y, y_ref, atol=3e-2, rtol=3e-2), \
        f"mismatch vs JAX reference (max abs err {max_err})"

    print("KERNEL_OK")
</pallas_src>

<mosaic_0001>
module attributes {stable_mosaic.version = 11 : i64} {
  func.func @qkv_kernel(%arg0: i32, %arg1: i32, %arg2: memref<1x128x128xf32, #tpu.memory_space<vmem>>, %arg3: memref<128x128xbf16, #tpu.memory_space<vmem>>, %arg4: memref<1x128xf32, #tpu.memory_space<vmem>>, %arg5: memref<128x128xbf16, #tpu.memory_space<vmem>>, %arg6: memref<1x128xf32, #tpu.memory_space<vmem>>, %arg7: memref<128x128xbf16, #tpu.memory_space<vmem>>, %arg8: memref<1x128xf32, #tpu.memory_space<vmem>>, %arg9: memref<1x128x128xbf16, #tpu.memory_space<vmem>>, %arg10: memref<1x128x128xbf16, #tpu.memory_space<vmem>>, %arg11: memref<1x128x128xbf16, #tpu.memory_space<vmem>>) attributes {dimension_semantics = [#tpu.dimension_semantics<parallel>, #tpu.dimension_semantics<parallel>], iteration_bounds = array<i64: 2, 1>, scalar_prefetch = 0 : i64, scratch_operands = 0 : i64, tpu.core_type = #tpu.core_type<tc>, window_params = [{transform_indices = @transform_0, window_bounds = array<i64: 1, 128, 128>}, {pipeline_mode = #tpu.pipeline_mode<synchronous>, transform_indices = @transform_1, window_bounds = array<i64: 128, 128>}, {pipeline_mode = #tpu.pipeline_mode<synchronous>, transform_indices = @transform_2, window_bounds = array<i64: 1, 128>}, {pipeline_mode = #tpu.pipeline_mode<synchronous>, transform_indices = @transform_3, window_bounds = array<i64: 128, 128>}, {pipeline_mode = #tpu.pipeline_mode<synchronous>, transform_indices = @transform_4, window_bounds = array<i64: 1, 128>}, {pipeline_mode = #tpu.pipeline_mode<synchronous>, transform_indices = @transform_5, window_bounds = array<i64: 128, 128>}, {pipeline_mode = #tpu.pipeline_mode<synchronous>, transform_indices = @transform_6, window_bounds = array<i64: 1, 128>}, {transform_indices = @transform_7, window_bounds = array<i64: 1, 128, 128>}, {transform_indices = @transform_8, window_bounds = array<i64: 1, 128, 128>}, {transform_indices = @transform_9, window_bounds = array<i64: 1, 128, 128>}]} {
    %c0 = arith.constant 0 : index
    %c0_0 = arith.constant 0 : index
    %c0_1 = arith.constant 0 : index
    %0 = vector.load %arg2[%c0, %c0_0, %c0_1] : memref<1x128x128xf32, #tpu.memory_space<vmem>>, vector<1x128x128xf32>
    %1 = vector.shape_cast %0 : vector<1x128x128xf32> to vector<128x128xf32>
    %2 = arith.truncf %1 : vector<128x128xf32> to vector<128x128xbf16>
    %c0_2 = arith.constant 0 : index
    %c0_3 = arith.constant 0 : index
    %3 = vector.load %arg3[%c0_2, %c0_3] : memref<128x128xbf16, #tpu.memory_space<vmem>>, vector<128x128xbf16>
    %cst = arith.constant dense<0.000000e+00> : vector<128x128xf32>
    %4 = tpu.matmul %2, %3, %cst {dimension_numbers = #tpu.dot_dimension_numbers<[1], [0], [0], [1], [0, 0, 1, 1], [], []>} : vector<128x128xbf16>, vector<128x128xbf16>, vector<128x128xf32> -> vector<128x128xf32>
    %c0_4 = arith.constant 0 : index
    %c0_5 = arith.constant 0 : index
    %5 = vector.load %arg4[%c0_4, %c0_5] : memref<1x128xf32, #tpu.memory_space<vmem>>, vector<1x128xf32>
    %6 = vector.broadcast %5 : vector<1x128xf32> to vector<128x128xf32>
    %7 = arith.addf %4, %6 : vector<128x128xf32>
    %8 = arith.truncf %7 : vector<128x128xf32> to vector<128x128xbf16>
    %c0_6 = arith.constant 0 : index
    %c0_7 = arith.constant 0 : index
    %c0_8 = arith.constant 0 : index
    %9 = vector.load %arg9[%c0_6, %c0_7, %c0_8] : memref<1x128x128xbf16, #tpu.memory_space<vmem>>, vector<1x128x128xbf16>
    %10 = vector.shape_cast %9 : vector<1x128x128xbf16> to vector<128x128xbf16>
    %11 = vector.shape_cast %8 : vector<128x128xbf16> to vector<1x128x128xbf16>
    tpu.vector_store %arg9[%c0_6, %c0_7, %c0_8], %11 {strides = array<i32>} : memref<1x128x128xbf16, #tpu.memory_space<vmem>>, vector<1x128x128xbf16>,
    %c0_9 = arith.constant 0 : index
    %c0_10 = arith.constant 0 : index
    %12 = vector.load %arg5[%c0_9, %c0_10] : memref<128x128xbf16, #tpu.memory_space<vmem>>, vector<128x128xbf16>
    %cst_11 = arith.constant dense<0.000000e+00> : vector<128x128xf32>
    %13 = tpu.matmul %2, %12, %cst_11 {dimension_numbers = #tpu.dot_dimension_numbers<[1], [0], [0], [1], [0, 0, 1, 1], [], []>} : vector<128x128xbf16>, vector<128x128xbf16>, vector<128x128xf32> -> vector<128x128xf32>
    %c0_12 = arith.constant 0 : index
    %c0_13 = arith.constant 0 : index
    %14 = vector.load %arg6[%c0_12, %c0_13] : memref<1x128xf32, #tpu.memory_space<vmem>>, vector<1x128xf32>
    %15 = vector.broadcast %14 : vector<1x128xf32> to vector<128x128xf32>
    %16 = arith.addf %13, %15 : vector<128x128xf32>
    %17 = arith.truncf %16 : vector<128x128xf32> to vector<128x128xbf16>
    %c0_14 = arith.constant 0 : index
    %c0_15 = arith.constant 0 : index
    %c0_16 = arith.constant 0 : index
    %18 = vector.load %arg10[%c0_14, %c0_15, %c0_16] : memref<1x128x128xbf16, #tpu.memory_space<vmem>>, vector<1x128x128xbf16>
    %19 = vector.shape_cast %18 : vector<1x128x128xbf16> to vector<128x128xbf16>
    %20 = vector.shape_cast %17 : vector<128x128xbf16> to vector<1x128x128xbf16>
    tpu.vector_store %arg10[%c0_14, %c0_15, %c0_16], %20 {strides = array<i32>} : memref<1x128x128xbf16, #tpu.memory_space<vmem>>, vector<1x128x128xbf16>,
    %c0_17 = arith.constant 0 : index
    %c0_18 = arith.constant 0 : index
    %21 = vector.load %arg7[%c0_17, %c0_18] : memref<128x128xbf16, #tpu.memory_space<vmem>>, vector<128x128xbf16>
    %cst_19 = arith.constant dense<0.000000e+00> : vector<128x128xf32>
    %22 = tpu.matmul %2, %21, %cst_19 {dimension_numbers = #tpu.dot_dimension_numbers<[1], [0], [0], [1], [0, 0, 1, 1], [], []>} : vector<128x128xbf16>, vector<128x128xbf16>, vector<128x128xf32> -> vector<128x128xf32>
    %c0_20 = arith.constant 0 : index
    %c0_21 = arith.constant 0 : index
    %23 = vector.load %arg8[%c0_20, %c0_21] : memref<1x128xf32, #tpu.memory_space<vmem>>, vector<1x128xf32>
    %24 = vector.broadcast %23 : vector<1x128xf32> to vector<128x128xf32>
    %25 = arith.addf %22, %24 : vector<128x128xf32>
    %26 = arith.truncf %25 : vector<128x128xf32> to vector<128x128xbf16>
    %c0_22 = arith.constant 0 : index
    %c0_23 = arith.constant 0 : index
    %c0_24 = arith.constant 0 : index
    %27 = vector.load %arg11[%c0_22, %c0_23, %c0_24] : memref<1x128x128xbf16, #tpu.memory_space<vmem>>, vector<1x128x128xbf16>
    %28 = vector.shape_cast %27 : vector<1x128x128xbf16> to vector<128x128xbf16>
    %29 = vector.shape_cast %26 : vector<128x128xbf16> to vector<1x128x128xbf16>
    tpu.vector_store %arg11[%c0_22, %c0_23, %c0_24], %29 {strides = array<i32>} : memref<1x128x128xbf16, #tpu.memory_space<vmem>>, vector<1x128x128xbf16>,
    return
  }
  func.func @transform_0(%arg0: i32, %arg1: i32) -> (i32, i32, i32) {
    %c0_i32 = arith.constant 0 : i32
    %c0_i32_0 = arith.constant 0 : i32
    return %arg0, %arg1, %c0_i32 : i32, i32, i32
  }
  func.func @transform_1(%arg0: i32, %arg1: i32) -> (i32, i32) {
    %c0_i32 = arith.constant 0 : i32
    %c0_i32_0 = arith.constant 0 : i32
    %c0_i32_1 = arith.constant 0 : i32
    return %c0_i32, %c0_i32_0 : i32, i32
  }
  func.func @transform_2(%arg0: i32, %arg1: i32) -> (i32, i32) {
    %c0_i32 = arith.constant 0 : i32
    %c0_i32_0 = arith.constant 0 : i32
    %c0_i32_1 = arith.constant 0 : i32
    return %c0_i32, %c0_i32_0 : i32, i32
  }
  func.func @transform_3(%arg0: i32, %arg1: i32) -> (i32, i32) {
    %c0_i32 = arith.constant 0 : i32
    %c0_i32_0 = arith.constant 0 : i32
    %c0_i32_1 = arith.constant 0 : i32
    return %c0_i32, %c0_i32_0 : i32, i32
  }
  func.func @transform_4(%arg0: i32, %arg1: i32) -> (i32, i32) {
    %c0_i32 = arith.constant 0 : i32
    %c0_i32_0 = arith.constant 0 : i32
    %c0_i32_1 = arith.constant 0 : i32
    return %c0_i32, %c0_i32_0 : i32, i32
  }
  func.func @transform_5(%arg0: i32, %arg1: i32) -> (i32, i32) {
    %c0_i32 = arith.constant 0 : i32
    %c0_i32_0 = arith.constant 0 : i32
    %c0_i32_1 = arith.constant 0 : i32
    return %c0_i32, %c0_i32_0 : i32, i32
  }
  func.func @transform_6(%arg0: i32, %arg1: i32) -> (i32, i32) {
    %c0_i32 = arith.constant 0 : i32
    %c0_i32_0 = arith.constant 0 : i32
    %c0_i32_1 = arith.constant 0 : i32
    return %c0_i32, %c0_i32_0 : i32, i32
  }
  func.func @transform_7(%arg0: i32, %arg1: i32) -> (i32, i32, i32) {
    %c0_i32 = arith.constant 0 : i32
    %c0_i32_0 = arith.constant 0 : i32
    return %arg0, %arg1, %c0_i32 : i32, i32, i32
  }
  func.func @transform_8(%arg0: i32, %arg1: i32) -> (i32, i32, i32) {
    %c0_i32 = arith.constant 0 : i32
    %c0_i32_0 = arith.constant 0 : i32
    return %arg0, %arg1, %c0_i32 : i32, i32, i32
  }
  func.func @transform_9(%arg0: i32, %arg1: i32) -> (i32, i32, i32) {
    %c0_i32 = arith.constant 0 : i32
    %c0_i32_0 = arith.constant 0 : i32
    return %arg0, %arg1, %c0_i32 : i32, i32, i32
  }
}

module attributes {stable_mosaic.version = 11 : i64} {
  func.func @attn_addnorm_kernel(%arg0: i32, %arg1: i32, %arg2: i32, %arg3: memref<1x128x128xf32, #tpu.memory_space<vmem>>, %arg4: memref<1x4x128x32xbf16, #tpu.memory_space<vmem>>, %arg5: memref<1x4x128x32xbf16, #tpu.memory_space<vmem>>, %arg6: memref<1x4x128x32xbf16, #tpu.memory_space<vmem>>, %arg7: memref<128x128xbf16, #tpu.memory_space<vmem>>, %arg8: memref<1x128xf32, #tpu.memory_space<vmem>>, %arg9: memref<1x128xf32, #tpu.memory_space<vmem>>, %arg10: memref<1x128xf32, #tpu.memory_space<vmem>>, %arg11: memref<1x128x128xbf16, #tpu.memory_space<vmem>>, %arg12: memref<4x128x1xf32, #tpu.memory_space<vmem>>, %arg13: memref<4x128x1xf32, #tpu.memory_space<vmem>>, %arg14: memref<4x128x32xf32, #tpu.memory_space<vmem>>) attributes {dimension_semantics = [#tpu.dimension_semantics<parallel>, #tpu.dimension_semantics<parallel>, #tpu.dimension_semantics<arbitrary>], iteration_bounds = array<i64: 2, 1, 1>, scalar_prefetch = 0 : i64, scratch_operands = 3 : i64, tpu.core_type = #tpu.core_type<tc>, window_params = [{transform_indices = @transform_0, window_bounds = array<i64: 1, 128, 128>}, {transform_indices = @transform_1, window_bounds = array<i64: 1, 4, 128, 32>}, {transform_indices = @transform_2, window_bounds = array<i64: 1, 4, 128, 32>}, {transform_indices = @transform_3, window_bounds = array<i64: 1, 4, 128, 32>}, {pipeline_mode = #tpu.pipeline_mode<synchronous>, transform_indices = @transform_4, window_bounds = array<i64: 128, 128>}, {pipeline_mode = #tpu.pipeline_mode<synchronous>, transform_indices = @transform_5, window_bounds = array<i64: 1, 128>}, {pipeline_mode = #tpu.pipeline_mode<synchronous>, transform_indices = @transform_6, window_bounds = array<i64: 1, 128>}, {pipeline_mode = #tpu.pipeline_mode<synchronous>, transform_indices = @transform_7, window_bounds = array<i64: 1, 128>}, {transform_indices = @transform_8, window_bounds = array<i64: 1, 128, 128>}]} {
    %c0_i32 = arith.constant 0 : i32
    %0 = arith.cmpi eq, %arg2, %c0_i32 : i32
    %1 = arith.extui %0 : i1 to i32
    %c0_i32_0 = arith.constant 0 : i32
    %2 = arith.cmpi ne, %1, %c0_i32_0 : i32
    scf.if %2 {
      %cst_39 = arith.constant 0xFF800000 : f32
      %39 = vector.broadcast %cst_39 : f32 to vector<4x128x1xf32>
      %c0_40 = arith.constant 0 : index
      %c0_41 = arith.constant 0 : index
      %c0_42 = arith.constant 0 : index
      %40 = vector.load %arg12[%c0_40, %c0_41, %c0_42] : memref<4x128x1xf32, #tpu.memory_space<vmem>>, vector<4x128x1xf32>
      tpu.vector_store %arg12[%c0_40, %c0_41, %c0_42], %39 {strides = array<i32>} : memref<4x128x1xf32, #tpu.memory_space<vmem>>, vector<4x128x1xf32>,
      %cst_43 = arith.constant 0.000000e+00 : f32
      %41 = vector.broadcast %cst_43 : f32 to vector<4x128x1xf32>
      %c0_44 = arith.constant 0 : index
      %c0_45 = arith.constant 0 : index
      %c0_46 = arith.constant 0 : index
      %42 = vector.load %arg13[%c0_44, %c0_45, %c0_46] : memref<4x128x1xf32, #tpu.memory_space<vmem>>, vector<4x128x1xf32>
      tpu.vector_store %arg13[%c0_44, %c0_45, %c0_46], %41 {strides = array<i32>} : memref<4x128x1xf32, #tpu.memory_space<vmem>>, vector<4x128x1xf32>,
      %cst_47 = arith.constant 0.000000e+00 : f32
      %43 = vector.broadcast %cst_47 : f32 to vector<4x128x32xf32>
      %c0_48 = arith.constant 0 : index
      %c0_49 = arith.constant 0 : index
      %c0_50 = arith.constant 0 : index
      %44 = vector.load %arg14[%c0_48, %c0_49, %c0_50] : memref<4x128x32xf32, #tpu.memory_space<vmem>>, vector<4x128x32xf32>
      tpu.vector_store %arg14[%c0_48, %c0_49, %c0_50], %43 {strides = array<i32>} : memref<4x128x32xf32, #tpu.memory_space<vmem>>, vector<4x128x32xf32>,
    } else {
    }
    %c0 = arith.constant 0 : index
    %c0_1 = arith.constant 0 : index
    %c0_2 = arith.constant 0 : index
    %c0_3 = arith.constant 0 : index
    %3 = vector.load %arg4[%c0, %c0_1, %c0_2, %c0_3] : memref<1x4x128x32xbf16, #tpu.memory_space<vmem>>, vector<1x4x128x32xbf16>
    %4 = vector.shape_cast %3 : vector<1x4x128x32xbf16> to vector<4x128x32xbf16>
    %c0_4 = arith.constant 0 : index
    %c0_5 = arith.constant 0 : index
    %c0_6 = arith.constant 0 : index
    %c0_7 = arith.constant 0 : index
    %5 = vector.load %arg5[%c0_4, %c0_5, %c0_6, %c0_7] : memref<1x4x128x32xbf16, #tpu.memory_space<vmem>>, vector<1x4x128x32xbf16>
    %6 = vector.shape_cast %5 : vector<1x4x128x32xbf16> to vector<4x128x32xbf16>
    %c0_8 = arith.constant 0 : index
    %c0_9 = arith.constant 0 : index
    %c0_10 = arith.constant 0 : index
    %c0_11 = arith.constant 0 : index
    %7 = vector.load %arg6[%c0_8, %c0_9, %c0_10, %c0_11] : memref<1x4x128x32xbf16, #tpu.memory_space<vmem>>, vector<1x4x128x32xbf16>
    %8 = vector.shape_cast %7 : vector<1x4x128x32xbf16> to vector<4x128x32xbf16>
    "tpu.trace_start"() <{level = 10 : i32, message = "hqd,hkd->hqk"}> : () -> ()
    %cst = arith.constant dense<0.000000e+00> : vector<4x128x128xf32>
    %9 = tpu.matmul %4, %6, %cst {dimension_numbers = #tpu.dot_dimension_numbers<[2], [2], [1], [1], [0, 0, 0, 1, 1, 1], [0], [0]>} : vector<4x128x32xbf16>, vector<4x128x32xbf16>, vector<4x128x128xf32> -> vector<4x128x128xf32>
    "tpu.trace_stop"() : () -> ()
    %cst_12 = arith.constant 0.176776692 : f32
    %10 = vector.broadcast %cst_12 : f32 to vector<4x128x128xf32>
    %11 = arith.mulf %9, %10 : vector<4x128x128xf32>
    %c0_13 = arith.constant 0 : index
    %c0_14 = arith.constant 0 : index
    %c0_15 = arith.constant 0 : index
    %12 = vector.load %arg12[%c0_13, %c0_14, %c0_15] : memref<4x128x1xf32, #tpu.memory_space<vmem>>, vector<4x128x1xf32>
    %cst_16 = arith.constant dense<0xFF800000> : vector<4x128xf32>
    %13 = vector.multi_reduction <maximumf>, %11, %cst_16 [2] : vector<4x128x128xf32> to vector<4x128xf32>
    %14 = vector.shape_cast %13 : vector<4x128xf32> to vector<4x128x1xf32>
    %15 = arith.maximumf %12, %14 : vector<4x128x1xf32>
    %c0_17 = arith.constant 0 : index
    %c0_18 = arith.constant 0 : index
    %c0_19 = arith.constant 0 : index
    %16 = vector.load %arg12[%c0_17, %c0_18, %c0_19] : memref<4x128x1xf32, #tpu.memory_space<vmem>>, vector<4x128x1xf32>
    %17 = arith.subf %16, %15 : vector<4x128x1xf32>
    %18 = math.exp %17 : vector<4x128x1xf32>
    %19 = vector.broadcast %15 : vector<4x128x1xf32> to vector<4x128x128xf32>
    %20 = arith.subf %11, %19 : vector<4x128x128xf32>
    %21 = math.exp %20 : vector<4x128x128xf32>
    %c0_20 = arith.constant 0 : index
    %c0_21 = arith.constant 0 : index
    %c0_22 = arith.constant 0 : index
    %22 = vector.load %arg13[%c0_20, %c0_21, %c0_22] : memref<4x128x1xf32, #tpu.memory_space<vmem>>, vector<4x128x1xf32>
    %23 = arith.mulf %18, %22 : vector<4x128x1xf32>
    %cst_23 = arith.constant dense<0.000000e+00> : vector<4x128xf32>
    %24 = vector.multi_reduction <add>, %21, %cst_23 [2] : vector<4x128x128xf32> to vector<4x128xf32>
    %25 = vector.shape_cast %24 : vector<4x128xf32> to vector<4x128x1xf32>
    %26 = arith.addf %23, %25 : vector<4x128x1xf32>
    %c0_24 = arith.constant 0 : index
    %c0_25 = arith.constant 0 : index
    %c0_26 = arith.constant 0 : index
    %27 = vector.load %arg13[%c0_24, %c0_25, %c0_26] : memref<4x128x1xf32, #tpu.memory_space<vmem>>, vector<4x128x1xf32>
    tpu.vector_store %arg13[%c0_24, %c0_25, %c0_26], %26 {strides = array<i32>} : memref<4x128x1xf32, #tpu.memory_space<vmem>>, vector<4x128x1xf32>,
    %c0_27 = arith.constant 0 : index
    %c0_28 = arith.constant 0 : index
    %c0_29 = arith.constant 0 : index
    %28 = vector.load %arg14[%c0_27, %c0_28, %c0_29] : memref<4x128x32xf32, #tpu.memory_space<vmem>>, vector<4x128x32xf32>
    %29 = vector.broadcast %18 : vector<4x128x1xf32> to vector<4x128x32xf32>
    %30 = arith.mulf %29, %28 : vector<4x128x32xf32>
    %31 = arith.truncf %21 : vector<4x128x128xf32> to vector<4x128x128xbf16>
    "tpu.trace_start"() <{level = 10 : i32, message = "hqk,hkd->hqd"}> : () -> ()
    %cst_30 = arith.constant dense<0.000000e+00> : vector<4x128x32xf32>
    %32 = tpu.matmul %31, %8, %cst_30 {dimension_numbers = #tpu.dot_dimension_numbers<[2], [1], [1], [2], [0, 0, 0, 1, 1, 2], [0], [0]>} : vector<4x128x128xbf16>, vector<4x128x32xbf16>, vector<4x128x32xf32> -> vector<4x128x32xf32>
    "tpu.trace_stop"() : () -> ()
    %33 = arith.addf %30, %32 : vector<4x128x32xf32>
    %c0_31 = arith.constant 0 : index
    %c0_32 = arith.constant 0 : index
    %c0_33 = arith.constant 0 : index
    %34 = vector.load %arg14[%c0_31, %c0_32, %c0_33] : memref<4x128x32xf32, #tpu.memory_space<vmem>>, vector<4x128x32xf32>
    tpu.vector_store %arg14[%c0_31, %c0_32, %c0_33], %33 {strides = array<i32>} : memref<4x128x32xf32, #tpu.memory_space<vmem>>, vector<4x128x32xf32>,
    %c0_34 = arith.constant 0 : index
    %c0_35 = arith.constant 0 : index
    %c0_36 = arith.constant 0 : index
    %35 = vector.load %arg12[%c0_34, %c0_35, %c0_36] : memref<4x128x1xf32, #tpu.memory_space<vmem>>, vector<4x128x1xf32>
    tpu.vector_store %arg12[%c0_34, %c0_35, %c0_36], %15 {strides = array<i32>} : memref<4x128x1xf32, #tpu.memory_space<vmem>>, vector<4x128x1xf32>,
    %c0_i32_37 = arith.constant 0 : i32
    %36 = arith.cmpi eq, %arg2, %c0_i32_37 : i32
    %37 = arith.extui %36 : i1 to i32
    %c0_i32_38 = arith.constant 0 : i32
    %38 = arith.cmpi ne, %37, %c0_i32_38 : i32
    scf.if %38 {
      %c0_39 = arith.constant 0 : index
      %c0_40 = arith.constant 0 : index
      %c0_41 = arith.constant 0 : index
      %39 = vector.load %arg13[%c0_39, %c0_40, %c0_41] : memref<4x128x1xf32, #tpu.memory_space<vmem>>, vector<4x128x1xf32>
      %40 = tpu.reciprocal %39 {approx = true} : vector<4x128x1xf32> -> vector<4x128x1xf32>
      %cst_42 = arith.constant 0.000000e+00 : f32
      %41 = vector.broadcast %cst_42 : f32 to vector<128x128xf32>
      %c0_43 = arith.constant 0 : index
      %c0_44 = arith.constant 0 : index
      %c0_45 = arith.constant 0 : index
      %42 = vector.load %arg14[%c0_43, %c0_44, %c0_45] : memref<4x128x32xf32, #tpu.memory_space<vmem>>, vector<1x128x32xf32>
      %43 = vector.shape_cast %42 : vector<1x128x32xf32> to vector<128x32xf32>
      %44 = vector.extract_strided_slice %40 {offsets = [0, 0, 0], sizes = [1, 128, 1], strides = [1, 1, 1]} : vector<4x128x1xf32> to vector<1x128x1xf32>
      %45 = vector.shape_cast %44 : vector<1x128x1xf32> to vector<128x1xf32>
      %46 = vector.broadcast %45 : vector<128x1xf32> to vector<128x32xf32>
      %47 = arith.mulf %43, %46 : vector<128x32xf32>
      %48 = arith.truncf %47 : vector<128x32xf32> to vector<128x32xbf16>
      %c0_46 = arith.constant 0 : index
      %c0_47 = arith.constant 0 : index
      %49 = vector.load %arg7[%c0_46, %c0_47] : memref<128x128xbf16, #tpu.memory_space<vmem>>, vector<32x128xbf16>
      %cst_48 = arith.constant dense<0.000000e+00> : vector<128x128xf32>
      %50 = tpu.matmul %48, %49, %cst_48 {dimension_numbers = #tpu.dot_dimension_numbers<[1], [0], [0], [1], [0, 0, 1, 1], [], []>} : vector<128x32xbf16>, vector<32x128xbf16>, vector<128x128xf32> -> vector<128x128xf32>
      %51 = arith.addf %41, %50 : vector<128x128xf32>
      %c1 = arith.constant 1 : index
      %c0_49 = arith.constant 0 : index
      %c0_50 = arith.constant 0 : index
      %52 = vector.load %arg14[%c1, %c0_49, %c0_50] : memref<4x128x32xf32, #tpu.memory_space<vmem>>, vector<1x128x32xf32>
      %53 = vector.shape_cast %52 : vector<1x128x32xf32> to vector<128x32xf32>
      %54 = vector.extract_strided_slice %40 {offsets = [1, 0, 0], sizes = [1, 128, 1], strides = [1, 1, 1]} : vector<4x128x1xf32> to vector<1x128x1xf32>
      %55 = vector.shape_cast %54 : vector<1x128x1xf32> to vector<128x1xf32>
      %56 = vector.broadcast %55 : vector<128x1xf32> to vector<128x32xf32>
      %57 = arith.mulf %53, %56 : vector<128x32xf32>
      %58 = arith.truncf %57 : vector<128x32xf32> to vector<128x32xbf16>
      %c32 = arith.constant 32 : index
      %c0_51 = arith.constant 0 : index
      %59 = vector.load %arg7[%c32, %c0_51] : memref<128x128xbf16, #tpu.memory_space<vmem>>, vector<32x128xbf16>
      %cst_52 = arith.constant dense<0.000000e+00> : vector<128x128xf32>
      %60 = tpu.matmul %58, %59, %cst_52 {dimension_numbers = #tpu.dot_dimension_numbers<[1], [0], [0], [1], [0, 0, 1, 1], [], []>} : vector<128x32xbf16>, vector<32x128xbf16>, vector<128x128xf32> -> vector<128x128xf32>
      %61 = arith.addf %51, %60 : vector<128x128xf32>
      %c2 = arith.constant 2 : index
      %c0_53 = arith.constant 0 : index
      %c0_54 = arith.constant 0 : index
      %62 = vector.load %arg14[%c2, %c0_53, %c0_54] : memref<4x128x32xf32, #tpu.memory_space<vmem>>, vector<1x128x32xf32>
      %63 = vector.shape_cast %62 : vector<1x128x32xf32> to vector<128x32xf32>
      %64 = vector.extract_strided_slice %40 {offsets = [2, 0, 0], sizes = [1, 128, 1], strides = [1, 1, 1]} : vector<4x128x1xf32> to vector<1x128x1xf32>
      %65 = vector.shape_cast %64 : vector<1x128x1xf32> to vector<128x1xf32>
      %66 = vector.broadcast %65 : vector<128x1xf32> to vector<128x32xf32>
      %67 = arith.mulf %63, %66 : vector<128x32xf32>
      %68 = arith.truncf %67 : vector<128x32xf32> to vector<128x32xbf16>
      %c64 = arith.constant 64 : index
      %c0_55 = arith.constant 0 : index
      %69 = vector.load %arg7[%c64, %c0_55] : memref<128x128xbf16, #tpu.memory_space<vmem>>, vector<32x128xbf16>
      %cst_56 = arith.constant dense<0.000000e+00> : vector<128x128xf32>
      %70 = tpu.matmul %68, %69, %cst_56 {dimension_numbers = #tpu.dot_dimension_numbers<[1], [0], [0], [1], [0, 0, 1, 1], [], []>} : vector<128x32xbf16>, vector<32x128xbf16>, vector<128x128xf32> -> vector<128x128xf32>
      %71 = arith.addf %61, %70 : vector<128x128xf32>
      %c3 = arith.constant 3 : index
      %c0_57 = arith.constant 0 : index
      %c0_58 = arith.constant 0 : index
      %72 = vector.load %arg14[%c3, %c0_57, %c0_58] : memref<4x128x32xf32, #tpu.memory_space<vmem>>, vector<1x128x32xf32>
      %73 = vector.shape_cast %72 : vector<1x128x32xf32> to vector<128x32xf32>
      %74 = vector.extract_strided_slice %40 {offsets = [3, 0, 0], sizes = [1, 128, 1], strides = [1, 1, 1]} : vector<4x128x1xf32> to vector<1x128x1xf32>
      %75 = vector.shape_cast %74 : vector<1x128x1xf32> to vector<128x1xf32>
      %76 = vector.broadcast %75 : vector<128x1xf32> to vector<128x32xf32>
      %77 = arith.mulf %73, %76 : vector<128x32xf32>
      %78 = arith.truncf %77 : vector<128x32xf32> to vector<128x32xbf16>
      %c96 = arith.constant 96 : index
      %c0_59 = arith.constant 0 : index
      %79 = vector.load %arg7[%c96, %c0_59] : memref<128x128xbf16, #tpu.memory_space<vmem>>, vector<32x128xbf16>
      %cst_60 = arith.constant dense<0.000000e+00> : vector<128x128xf32>
      %80 = tpu.matmul %78, %79, %cst_60 {dimension_numbers = #tpu.dot_dimension_numbers<[1], [0], [0], [1], [0, 0, 1, 1], [], []>} : vector<128x32xbf16>, vector<32x128xbf16>, vector<128x128xf32> -> vector<128x128xf32>
      %81 = arith.addf %71, %80 : vector<128x128xf32>
      %c0_61 = arith.constant 0 : index
      %c0_62 = arith.constant 0 : index
      %82 = vector.load %arg8[%c0_61, %c0_62] : memref<1x128xf32, #tpu.memory_space<vmem>>, vector<1x128xf32>
      %83 = vector.broadcast %82 : vector<1x128xf32> to vector<128x128xf32>
      %84 = arith.addf %81, %83 : vector<128x128xf32>
      %c0_63 = arith.constant 0 : index
      %c0_64 = arith.constant 0 : index
      %c0_65 = arith.constant 0 : index
      %85 = vector.load %arg3[%c0_63, %c0_64, %c0_65] : memref<1x128x128xf32, #tpu.memory_space<vmem>>, vector<1x128x128xf32>
      %86 = vector.shape_cast %85 : vector<1x128x128xf32> to vector<128x128xf32>
      %87 = arith.addf %86, %84 : vector<128x128xf32>
      %c0_66 = arith.constant 0 : index
      %c0_67 = arith.constant 0 : index
      %88 = vector.load %arg9[%c0_66, %c0_67] : memref<1x128xf32, #tpu.memory_space<vmem>>, vector<1x128xf32>
      %c0_68 = arith.constant 0 : index
      %c0_69 = arith.constant 0 : index
      %89 = vector.load %arg10[%c0_68, %c0_69] : memref<1x128xf32, #tpu.memory_space<vmem>>, vector<1x128xf32>
      %cst_70 = arith.constant dense<0.000000e+00> : vector<128xf32>
      %90 = vector.multi_reduction <add>, %87, %cst_70 [1] : vector<128x128xf32> to vector<128xf32>
      %91 = vector.shape_cast %90 : vector<128xf32> to vector<128x1xf32>
      %cst_71 = arith.constant 1.280000e+02 : f32
      %92 = vector.broadcast %cst_71 : f32 to vector<128x1xf32>
      %93 = arith.divf %91, %92 : vector<128x1xf32>
      %94 = vector.broadcast %93 : vector<128x1xf32> to vector<128x128xf32>
      %95 = arith.subf %87, %94 : vector<128x128xf32>
      %96 = arith.mulf %95, %95 : vector<128x128xf32>
      %cst_72 = arith.constant dense<0.000000e+00> : vector<128xf32>
      %97 = vector.multi_reduction <add>, %96, %cst_72 [1] : vector<128x128xf32> to vector<128xf32>
      %98 = vector.shape_cast %97 : vector<128xf32> to vector<128x1xf32>
      %cst_73 = arith.constant 1.280000e+02 : f32
      %99 = vector.broadcast %cst_73 : f32 to vector<128x1xf32>
      %100 = arith.divf %98, %99 : vector<128x1xf32>
      %101 = vector.broadcast %93 : vector<128x1xf32> to vector<128x128xf32>
      %102 = arith.subf %87, %101 : vector<128x128xf32>
      %cst_74 = arith.constant 9.99999974E-6 : f32
      %103 = vector.broadcast %cst_74 : f32 to vector<128x1xf32>
      %104 = arith.addf %100, %103 : vector<128x1xf32>
      %105 = math.rsqrt %104 : vector<128x1xf32>
      %106 = vector.broadcast %105 : vector<128x1xf32> to vector<128x128xf32>
      %107 = arith.mulf %102, %106 : vector<128x128xf32>
      %108 = vector.broadcast %88 : vector<1x128xf32> to vector<128x128xf32>
      %109 = arith.mulf %107, %108 : vector<128x128xf32>
      %110 = vector.broadcast %89 : vector<1x128xf32> to vector<128x128xf32>
      %111 = arith.addf %109, %110 : vector<128x128xf32>
      %112 = arith.truncf %111 : vector<128x128xf32> to vector<128x128xbf16>
      %c0_75 = arith.constant 0 : index
      %c0_76 = arith.constant 0 : index
      %c0_77 = arith.constant 0 : index
      %113 = vector.load %arg11[%c0_75, %c0_76, %c0_77] : memref<1x128x128xbf16, #tpu.memory_space<vmem>>, vector<1x128x128xbf16>
      %114 = vector.shape_cast %113 : vector<1x128x128xbf16> to vector<128x128xbf16>
      %115 = vector.shape_cast %112 : vector<128x128xbf16> to vector<1x128x128xbf16>
      tpu.vector_store %arg11[%c0_75, %c0_76, %c0_77], %115 {strides = array<i32>} : memref<1x128x128xbf16, #tpu.memory_space<vmem>>, vector<1x128x128xbf16>,
    } else {
    }
    return
  }
  func.func @transform_0(%arg0: i32, %arg1: i32, %arg2: i32) -> (i32, i32, i32) {
    %c0_i32 = arith.constant 0 : i32
    %c0_i32_0 = arith.constant 0 : i32
    return %arg0, %arg1, %c0_i32 : i32, i32, i32
  }
  func.func @transform_1(%arg0: i32, %arg1: i32, %arg2: i32) -> (i32, i32, i32, i32) {
    %c0_i32 = arith.constant 0 : i32
    %c0_i32_0 = arith.constant 0 : i32
    %c0_i32_1 = arith.constant 0 : i32
    return %arg0, %c0_i32, %arg1, %c0_i32_0 : i32, i32, i32, i32
  }
  func.func @transform_2(%arg0: i32, %arg1: i32, %arg2: i32) -> (i32, i32, i32, i32) {
    %c0_i32 = arith.constant 0 : i32
    %c0_i32_0 = arith.constant 0 : i32
    %c0_i32_1 = arith.constant 0 : i32
    return %arg0, %c0_i32, %arg2, %c0_i32_0 : i32, i32, i32, i32
  }
  func.func @transform_3(%arg0: i32, %arg1: i32, %arg2: i32) -> (i32, i32, i32, i32) {
    %c0_i32 = arith.constant 0 : i32
    %c0_i32_0 = arith.constant 0 : i32
    %c0_i32_1 = arith.constant 0 : i32
    return %arg0, %c0_i32, %arg2, %c0_i32_0 : i32, i32, i32, i32
  }
  func.func @transform_4(%arg0: i32, %arg1: i32, %arg2: i32) -> (i32, i32) {
    %c0_i32 = arith.constant 0 : i32
    %c0_i32_0 = arith.constant 0 : i32
    %c0_i32_1 = arith.constant 0 : i32
    return %c0_i32, %c0_i32_0 : i32, i32
  }
  func.func @transform_5(%arg0: i32, %arg1: i32, %arg2: i32) -> (i32, i32) {
    %c0_i32 = arith.constant 0 : i32
    %c0_i32_0 = arith.constant 0 : i32
    %c0_i32_1 = arith.constant 0 : i32
    return %c0_i32, %c0_i32_0 : i32, i32
  }
  func.func @transform_6(%arg0: i32, %arg1: i32, %arg2: i32) -> (i32, i32) {
    %c0_i32 = arith.constant 0 : i32
    %c0_i32_0 = arith.constant 0 : i32
    %c0_i32_1 = arith.constant 0 : i32
    return %c0_i32, %c0_i32_0 : i32, i32
  }
  func.func @transform_7(%arg0: i32, %arg1: i32, %arg2: i32) -> (i32, i32) {
    %c0_i32 = arith.constant 0 : i32
    %c0_i32_0 = arith.constant 0 : i32
    %c0_i32_1 = arith.constant 0 : i32
    return %c0_i32, %c0_i32_0 : i32, i32
  }
  func.func @transform_8(%arg0: i32, %arg1: i32, %arg2: i32) -> (i32, i32, i32) {
    %c0_i32 = arith.constant 0 : i32
    %c0_i32_0 = arith.constant 0 : i32
    return %arg0, %arg1, %c0_i32 : i32, i32, i32
  }
}

module attributes {stable_mosaic.version = 11 : i64} {
  func.func @ffn_addnorm_kernel(%arg0: i32, %arg1: i32, %arg2: i32, %arg3: memref<1x128x128xbf16, #tpu.memory_space<vmem>>, %arg4: memref<128x256xbf16, #tpu.memory_space<vmem>>, %arg5: memref<1x256xf32, #tpu.memory_space<vmem>>, %arg6: memref<256x128xbf16, #tpu.memory_space<vmem>>, %arg7: memref<1x128xf32, #tpu.memory_space<vmem>>, %arg8: memref<1x128xf32, #tpu.memory_space<vmem>>, %arg9: memref<1x128xf32, #tpu.memory_space<vmem>>, %arg10: memref<1x128x128xf32, #tpu.memory_space<vmem>>, %arg11: memref<128x128xf32, #tpu.memory_space<vmem>>) attributes {dimension_semantics = [#tpu.dimension_semantics<parallel>, #tpu.dimension_semantics<parallel>, #tpu.dimension_semantics<arbitrary>], iteration_bounds = array<i64: 2, 1, 3>, scalar_prefetch = 0 : i64, scratch_operands = 1 : i64, tpu.core_type = #tpu.core_type<tc>, window_params = [{transform_indices = @transform_0, window_bounds = array<i64: 1, 128, 128>}, {transform_indices = @transform_1, window_bounds = array<i64: 128, 256>}, {transform_indices = @transform_2, window_bounds = array<i64: 1, 256>}, {transform_indices = @transform_3, window_bounds = array<i64: 256, 128>}, {pipeline_mode = #tpu.pipeline_mode<synchronous>, transform_indices = @transform_4, window_bounds = array<i64: 1, 128>}, {pipeline_mode = #tpu.pipeline_mode<synchronous>, transform_indices = @transform_5, window_bounds = array<i64: 1, 128>}, {pipeline_mode = #tpu.pipeline_mode<synchronous>, transform_indices = @transform_6, window_bounds = array<i64: 1, 128>}, {transform_indices = @transform_7, window_bounds = array<i64: 1, 128, 128>}]} {
    %c0_i32 = arith.constant 0 : i32
    %0 = arith.cmpi eq, %arg2, %c0_i32 : i32
    %1 = arith.extui %0 : i1 to i32
    %c0_i32_0 = arith.constant 0 : i32
    %2 = arith.cmpi ne, %1, %c0_i32_0 : i32
    scf.if %2 {
      %cst_16 = arith.constant 0.000000e+00 : f32
      %21 = vector.broadcast %cst_16 : f32 to vector<128x128xf32>
      %c0_17 = arith.constant 0 : index
      %c0_18 = arith.constant 0 : index
      %22 = vector.load %arg11[%c0_17, %c0_18] : memref<128x128xf32, #tpu.memory_space<vmem>>, vector<128x128xf32>
      tpu.vector_store %arg11[%c0_17, %c0_18], %21 {strides = array<i32>} : memref<128x128xf32, #tpu.memory_space<vmem>>, vector<128x128xf32>,
    } else {
    }
    %c0 = arith.constant 0 : index
    %c0_1 = arith.constant 0 : index
    %c0_2 = arith.constant 0 : index
    %3 = vector.load %arg3[%c0, %c0_1, %c0_2] : memref<1x128x128xbf16, #tpu.memory_space<vmem>>, vector<1x128x128xbf16>
    %4 = vector.shape_cast %3 : vector<1x128x128xbf16> to vector<128x128xbf16>
    %c0_3 = arith.constant 0 : index
    %c0_4 = arith.constant 0 : index
    %5 = vector.load %arg4[%c0_3, %c0_4] : memref<128x256xbf16, #tpu.memory_space<vmem>>, vector<128x256xbf16>
    %cst = arith.constant dense<0.000000e+00> : vector<128x256xf32>
    %6 = tpu.matmul %4, %5, %cst {dimension_numbers = #tpu.dot_dimension_numbers<[1], [0], [0], [1], [0, 0, 1, 1], [], []>} : vector<128x128xbf16>, vector<128x256xbf16>, vector<128x256xf32> -> vector<128x256xf32>
    %c0_5 = arith.constant 0 : index
    %c0_6 = arith.constant 0 : index
    %7 = vector.load %arg5[%c0_5, %c0_6] : memref<1x256xf32, #tpu.memory_space<vmem>>, vector<1x256xf32>
    %8 = vector.broadcast %7 : vector<1x256xf32> to vector<128x256xf32>
    %9 = arith.addf %6, %8 : vector<128x256xf32>
    %cst_7 = arith.constant 0.000000e+00 : f32
    %10 = vector.broadcast %cst_7 : f32 to vector<128x256xf32>
    %11 = arith.maximumf %9, %10 : vector<128x256xf32>
    %c0_8 = arith.constant 0 : index
    %c0_9 = arith.constant 0 : index
    %12 = vector.load %arg11[%c0_8, %c0_9] : memref<128x128xf32, #tpu.memory_space<vmem>>, vector<128x128xf32>
    %13 = arith.truncf %11 : vector<128x256xf32> to vector<128x256xbf16>
    %c0_10 = arith.constant 0 : index
    %c0_11 = arith.constant 0 : index
    %14 = vector.load %arg6[%c0_10, %c0_11] : memref<256x128xbf16, #tpu.memory_space<vmem>>, vector<256x128xbf16>
    %cst_12 = arith.constant dense<0.000000e+00> : vector<128x128xf32>
    %15 = tpu.matmul %13, %14, %cst_12 {dimension_numbers = #tpu.dot_dimension_numbers<[1], [0], [0], [1], [0, 0, 1, 1], [], []>} : vector<128x256xbf16>, vector<256x128xbf16>, vector<128x128xf32> -> vector<128x128xf32>
    %16 = arith.addf %12, %15 : vector<128x128xf32>
    %c0_13 = arith.constant 0 : index
    %c0_14 = arith.constant 0 : index
    %17 = vector.load %arg11[%c0_13, %c0_14] : memref<128x128xf32, #tpu.memory_space<vmem>>, vector<128x128xf32>
    tpu.vector_store %arg11[%c0_13, %c0_14], %16 {strides = array<i32>} : memref<128x128xf32, #tpu.memory_space<vmem>>, vector<128x128xf32>,
    %c2_i32 = arith.constant 2 : i32
    %18 = arith.cmpi eq, %arg2, %c2_i32 : i32
    %19 = arith.extui %18 : i1 to i32
    %c0_i32_15 = arith.constant 0 : i32
    %20 = arith.cmpi ne, %19, %c0_i32_15 : i32
    scf.if %20 {
      %c0_16 = arith.constant 0 : index
      %c0_17 = arith.constant 0 : index
      %21 = vector.load %arg11[%c0_16, %c0_17] : memref<128x128xf32, #tpu.memory_space<vmem>>, vector<128x128xf32>
      %c0_18 = arith.constant 0 : index
      %c0_19 = arith.constant 0 : index
      %22 = vector.load %arg7[%c0_18, %c0_19] : memref<1x128xf32, #tpu.memory_space<vmem>>, vector<1x128xf32>
      %23 = vector.broadcast %22 : vector<1x128xf32> to vector<128x128xf32>
      %24 = arith.addf %21, %23 : vector<128x128xf32>
      %cst_20 = arith.constant 2.000000e+00 : f32
      %25 = vector.broadcast %cst_20 : f32 to vector<128x128xf32>
      %26 = arith.mulf %25, %24 : vector<128x128xf32>
      %c0_21 = arith.constant 0 : index
      %c0_22 = arith.constant 0 : index
      %27 = vector.load %arg8[%c0_21, %c0_22] : memref<1x128xf32, #tpu.memory_space<vmem>>, vector<1x128xf32>
      %c0_23 = arith.constant 0 : index
      %c0_24 = arith.constant 0 : index
      %28 = vector.load %arg9[%c0_23, %c0_24] : memref<1x128xf32, #tpu.memory_space<vmem>>, vector<1x128xf32>
      %cst_25 = arith.constant dense<0.000000e+00> : vector<128xf32>
      %29 = vector.multi_reduction <add>, %26, %cst_25 [1] : vector<128x128xf32> to vector<128xf32>
      %30 = vector.shape_cast %29 : vector<128xf32> to vector<128x1xf32>
      %cst_26 = arith.constant 1.280000e+02 : f32
      %31 = vector.broadcast %cst_26 : f32 to vector<128x1xf32>
      %32 = arith.divf %30, %31 : vector<128x1xf32>
      %33 = vector.broadcast %32 : vector<128x1xf32> to vector<128x128xf32>
      %34 = arith.subf %26, %33 : vector<128x128xf32>
      %35 = arith.mulf %34, %34 : vector<128x128xf32>
      %cst_27 = arith.constant dense<0.000000e+00> : vector<128xf32>
      %36 = vector.multi_reduction <add>, %35, %cst_27 [1] : vector<128x128xf32> to vector<128xf32>
      %37 = vector.shape_cast %36 : vector<128xf32> to vector<128x1xf32>
      %cst_28 = arith.constant 1.280000e+02 : f32
      %38 = vector.broadcast %cst_28 : f32 to vector<128x1xf32>
      %39 = arith.divf %37, %38 : vector<128x1xf32>
      %40 = vector.broadcast %32 : vector<128x1xf32> to vector<128x128xf32>
      %41 = arith.subf %26, %40 : vector<128x128xf32>
      %cst_29 = arith.constant 9.99999974E-6 : f32
      %42 = vector.broadcast %cst_29 : f32 to vector<128x1xf32>
      %43 = arith.addf %39, %42 : vector<128x1xf32>
      %44 = math.rsqrt %43 : vector<128x1xf32>
      %45 = vector.broadcast %44 : vector<128x1xf32> to vector<128x128xf32>
      %46 = arith.mulf %41, %45 : vector<128x128xf32>
      %47 = vector.broadcast %27 : vector<1x128xf32> to vector<128x128xf32>
      %48 = arith.mulf %46, %47 : vector<128x128xf32>
      %49 = vector.broadcast %28 : vector<1x128xf32> to vector<128x128xf32>
      %50 = arith.addf %48, %49 : vector<128x128xf32>
      %c0_30 = arith.constant 0 : index
      %c0_31 = arith.constant 0 : index
      %c0_32 = arith.constant 0 : index
      %51 = vector.load %arg10[%c0_30, %c0_31, %c0_32] : memref<1x128x128xf32, #tpu.memory_space<vmem>>, vector<1x128x128xf32>
      %52 = vector.shape_cast %51 : vector<1x128x128xf32> to vector<128x128xf32>
      %53 = vector.shape_cast %50 : vector<128x128xf32> to vector<1x128x128xf32>
      tpu.vector_store %arg10[%c0_30, %c0_31, %c0_32], %53 {strides = array<i32>} : memref<1x128x128xf32, #tpu.memory_space<vmem>>, vector<1x128x128xf32>,
    } else {
    }
    return
  }
  func.func @transform_0(%arg0: i32, %arg1: i32, %arg2: i32) -> (i32, i32, i32) {
    %c0_i32 = arith.constant 0 : i32
    %c0_i32_0 = arith.constant 0 : i32
    return %arg0, %arg1, %c0_i32 : i32, i32, i32
  }
  func.func @transform_1(%arg0: i32, %arg1: i32, %arg2: i32) -> (i32, i32) {
    %c0_i32 = arith.constant 0 : i32
    %c0_i32_0 = arith.constant 0 : i32
    return %c0_i32, %arg2 : i32, i32
  }
  func.func @transform_2(%arg0: i32, %arg1: i32, %arg2: i32) -> (i32, i32) {
    %c0_i32 = arith.constant 0 : i32
    %c0_i32_0 = arith.constant 0 : i32
    return %c0_i32, %arg2 : i32, i32
  }
  func.func @transform_3(%arg0: i32, %arg1: i32, %arg2: i32) -> (i32, i32) {
    %c0_i32 = arith.constant 0 : i32
    %c0_i32_0 = arith.constant 0 : i32
    return %arg2, %c0_i32 : i32, i32
  }
  func.func @transform_4(%arg0: i32, %arg1: i32, %arg2: i32) -> (i32, i32) {
    %c0_i32 = arith.constant 0 : i32
    %c0_i32_0 = arith.constant 0 : i32
    %c0_i32_1 = arith.constant 0 : i32
    return %c0_i32, %c0_i32_0 : i32, i32
  }
  func.func @transform_5(%arg0: i32, %arg1: i32, %arg2: i32) -> (i32, i32) {
    %c0_i32 = arith.constant 0 : i32
    %c0_i32_0 = arith.constant 0 : i32
    %c0_i32_1 = arith.constant 0 : i32
    return %c0_i32, %c0_i32_0 : i32, i32
  }
  func.func @transform_6(%arg0: i32, %arg1: i32, %arg2: i32) -> (i32, i32) {
    %c0_i32 = arith.constant 0 : i32
    %c0_i32_0 = arith.constant 0 : i32
    %c0_i32_1 = arith.constant 0 : i32
    return %c0_i32, %c0_i32_0 : i32, i32
  }
  func.func @transform_7(%arg0: i32, %arg1: i32, %arg2: i32) -> (i32, i32, i32) {
    %c0_i32 = arith.constant 0 : i32
    %c0_i32_0 = arith.constant 0 : i32
    return %arg0, %arg1, %c0_i32 : i32, i32, i32
  }
}

</mosaic_0001>

<llo_original>
// kernel: encoder_forward.3
$region0: #{encoder_forward.3}
  #allocation0 [shape = 'u32[]', space=smem, size = 0x4, offset = 0x4, fixed_abs, tag = 'smem constant byte address 0x4 - core index']
  #allocation1 [shape = 'u32[72,128]{1,0:T(1,128)}', space=vmem, size = 0x9000, scoped, tag = 'internal scratch']
  %s0 = inlined_call_operand.vmem [shape: f32[2,128,128], index: 0, kind: input, shape index: {}]
  %s1 = inlined_call_operand.vmem [shape: bf16[128,128], index: 1, kind: input, shape index: {}]
  %s2 = inlined_call_operand.vmem [shape: f32[1,128], index: 2, kind: input, shape index: {}]
  %s3 = inlined_call_operand.vmem [shape: bf16[128,128], index: 3, kind: input, shape index: {}]
  %s4 = inlined_call_operand.vmem [shape: f32[1,128], index: 4, kind: input, shape index: {}]
  %s5 = inlined_call_operand.vmem [shape: bf16[128,128], index: 5, kind: input, shape index: {}]
  %s6 = inlined_call_operand.vmem [shape: f32[1,128], index: 6, kind: input, shape index: {}]
  %s7 = inlined_call_operand.vmem [shape: bf16[2,128,128], index: 7, kind: output, shape index: {0}]
  %s8 = inlined_call_operand.vmem [shape: bf16[2,128,128], index: 8, kind: output, shape index: {1}]
  %s9 = inlined_call_operand.vmem [shape: bf16[2,128,128], index: 9, kind: output, shape index: {2}]
  %10 = xla_tuple %s7, %s8, %s9
  %s11 = sld [smem:[#allocation0]]
  $region77: #{encoder_forward.3} parent=0
    _
  %s13 = ssub.s32 1, %s11
  %s14 = scalar_select 0, %s13, %s11
  loop: start=0, step=1, limit=4
  $region2: #{encoder_forward.3} parent=0 // loop_pre_header
    _
  $region3: #{encoder_forward.3} parent=0 // loop_header
    %s16 = sphi 0, %s20
    %p17 = scmp.ge.s32.totalorder %s16, 4
    %s23 = sphi 0, %s35
    %s24 = sphi 0, %s31
    %s25 = sphi 0, %s23
    %s26 = sphi 0, %s24
    %s27 = sphi 0, %s25
    %s28 = sphi 0, %s26
    %s40 = sphi 0, %s42
    %s43 = sphi 0, %s40
    %s44 = sphi 0, %s43
    %s60 = sphi 0, %s44
    %s64 = sphi 0, %s64
    %s66 = sphi 0, %s64
    %s67 = sphi 0, %s66
    %s81 = sphi 0, %s67
    %s85 = sphi 0, %s85
    %s87 = sphi 0, %s85
    %s88 = sphi 0, %s87
    %s102 = sphi 0, %s88
    %s106 = sphi 0, %s106
    %s108 = sphi 0, %s106
    %s109 = sphi 0, %s108
    %s123 = sphi 0, %s109
    %s127 = sphi 0, %s127
    %s129 = sphi 0, %s127
    %s130 = sphi 0, %s129
    %s144 = sphi 0, %s130
    %s148 = sphi 0, %s148
    %s150 = sphi 0, %s148
    %s151 = sphi 0, %s150
    %s165 = sphi 0, %s151
    %s169 = sphi 0, %s169
    %s171 = sphi 0, %s169
    %s172 = sphi 0, %s171
    %s186 = sphi 0, %s172
    %s194 = sphi 0, %s196
    %s197 = sphi 0, %s194
    %s198 = sphi 0, %s197
    %s214 = sphi 0, %s198
    %s222 = sphi 0, %s224
    %s225 = sphi 0, %s222
    %s226 = sphi 0, %s225
    %s242 = sphi 0, %s226
    %s250 = sphi 0, %s252
    %s253 = sphi 0, %s250
    %s254 = sphi 0, %s253
    %s270 = sphi 0, %s254
  $region4: #{encoder_forward.3} parent=0 // loop_header_branch
    %19 = sbr.rel (%p17) target = $region8
  $region5: #{encoder_forward.3} parent=0 // loop_body
    %s21 = ssub.s32 %s16, 1
    %s22 = ssub.s32 %s16, 2
    %s29 = sadd.s32 1, %s24
    %p30 = scmp.ge.s32.totalorder %s29, 1
    %s31 = scalar_select %p30, 0, %s29
    %s32 = sadd.s32 1, %s23
    %s33 = scalar_select %p30, %s32, %s23
    %p34 = scmp.ge.s32.totalorder %s33, 2
    %s35 = scalar_select %p34, 0, %s33
    %s36 = ssub.s32 %s23, %s35
    %s37 = ssub.s32 %s24, %s31
    %s38 = sor.u32 %s36, %s37
    %p39 = scmp.eq.s32.totalorder %s38, 0
    %s41 = sadd.s32 %s40, 1
    %s42 = scalar_select %p39, %s40, %s41
    %p45 = pneg %p39
    %p46 = scmp.eq.s32.totalorder %s16, 1
    %p47 = por %p45, %p46
    %p48 = scmp.ne.s32.totalorder %s40, %s43
    %p49 = scmp.eq.s32.totalorder %s16, 0
    %p50 = por %p48, %p49
    %p51 = scmp.ne.s32.totalorder %s40, %s43
    %p52 = scmp.eq.s32.totalorder %s21, 1
    %p53 = por %p51, %p52
    %p54 = scmp.ne.s32.totalorder %s43, %s44
    %p55 = scmp.eq.s32.totalorder %s21, 0
    %p56 = por %p54, %p55
    %p57 = scmp.ne.s32.totalorder %s43, %s44
    %p58 = scmp.eq.s32.totalorder %s22, 1
    %p59 = por %p57, %p58
    %p61 = scmp.ne.s32.totalorder %s44, %s60
    %p62 = scmp.eq.s32.totalorder %s22, 0
    %p63 = por %p61, %p62
    %s65 = sadd.s32 %s64, 1
    %p68 = scmp.eq.s32.totalorder %s16, 1
    %p69 = scmp.ne.s32.totalorder %s64, %s66
    %p70 = scmp.eq.s32.totalorder %s16, 0
    %p71 = por %p69, %p70
    %p72 = scmp.ne.s32.totalorder %s64, %s66
    %p73 = scmp.eq.s32.totalorder %s21, 1
    %p74 = por %p72, %p73
    %p75 = scmp.ne.s32.totalorder %s66, %s67
    %p76 = scmp.eq.s32.totalorder %s21, 0
    %p77 = por %p75, %p76
    %p78 = scmp.ne.s32.totalorder %s66, %s67
    %p79 = scmp.eq.s32.totalorder %s22, 1
    %p80 = por %p78, %p79
    %p82 = scmp.ne.s32.totalorder %s67, %s81
    %p83 = scmp.eq.s32.totalorder %s22, 0
    %p84 = por %p82, %p83
    %s86 = sadd.s32 %s85, 1
    %p89 = scmp.eq.s32.totalorder %s16, 1
    %p90 = scmp.ne.s32.totalorder %s85, %s87
    %p91 = scmp.eq.s32.totalorder %s16, 0
    %p92 = por %p90, %p91
    %p93 = scmp.ne.s32.totalorder %s85, %s87
    %p94 = scmp.eq.s32.totalorder %s21, 1
    %p95 = por %p93, %p94
    %p96 = scmp.ne.s32.totalorder %s87, %s88
    %p97 = scmp.eq.s32.totalorder %s21, 0
    %p98 = por %p96, %p97
    %p99 = scmp.ne.s32.totalorder %s87, %s88
    %p100 = scmp.eq.s32.totalorder %s22, 1
    %p101 = por %p99, %p100
    %p103 = scmp.ne.s32.totalorder %s88, %s102
    %p104 = scmp.eq.s32.totalorder %s22, 0
    %p105 = por %p103, %p104
    %s107 = sadd.s32 %s106, 1
    %p110 = scmp.eq.s32.totalorder %s16, 1
    %p111 = scmp.ne.s32.totalorder %s106, %s108
    %p112 = scmp.eq.s32.totalorder %s16, 0
    %p113 = por %p111, %p112
    %p114 = scmp.ne.s32.totalorder %s106, %s108
    %p115 = scmp.eq.s32.totalorder %s21, 1
    %p116 = por %p114, %p115
    %p117 = scmp.ne.s32.totalorder %s108, %s109
    %p118 = scmp.eq.s32.totalorder %s21, 0
    %p119 = por %p117, %p118
    %p120 = scmp.ne.s32.totalorder %s108, %s109
    %p121 = scmp.eq.s32.totalorder %s22, 1
    %p122 = por %p120, %p121
    %p124 = scmp.ne.s32.totalorder %s109, %s123
    %p125 = scmp.eq.s32.totalorder %s22, 0
    %p126 = por %p124, %p125
    %s128 = sadd.s32 %s127, 1
    %p131 = scmp.eq.s32.totalorder %s16, 1
    %p132 = scmp.ne.s32.totalorder %s127, %s129
    %p133 = scmp.eq.s32.totalorder %s16, 0
    %p134 = por %p132, %p133
    %p135 = scmp.ne.s32.totalorder %s127, %s129
    %p136 = scmp.eq.s32.totalorder %s21, 1
    %p137 = por %p135, %p136
    %p138 = scmp.ne.s32.totalorder %s129, %s130
    %p139 = scmp.eq.s32.totalorder %s21, 0
    %p140 = por %p138, %p139
    %p141 = scmp.ne.s32.totalorder %s129, %s130
    %p142 = scmp.eq.s32.totalorder %s22, 1
    %p143 = por %p141, %p142
    %p145 = scmp.ne.s32.totalorder %s130, %s144
    %p146 = scmp.eq.s32.totalorder %s22, 0
    %p147 = por %p145, %p146
    %s149 = sadd.s32 %s148, 1
    %p152 = scmp.eq.s32.totalorder %s16, 1
    %p153 = scmp.ne.s32.totalorder %s148, %s150
    %p154 = scmp.eq.s32.totalorder %s16, 0
    %p155 = por %p153, %p154
    %p156 = scmp.ne.s32.totalorder %s148, %s150
    %p157 = scmp.eq.s32.totalorder %s21, 1
    %p158 = por %p156, %p157
    %p159 = scmp.ne.s32.totalorder %s150, %s151
    %p160 = scmp.eq.s32.totalorder %s21, 0
    %p161 = por %p159, %p160
    %p162 = scmp.ne.s32.totalorder %s150, %s151
    %p163 = scmp.eq.s32.totalorder %s22, 1
    %p164 = por %p162, %p163
    %p166 = scmp.ne.s32.totalorder %s151, %s165
    %p167 = scmp.eq.s32.totalorder %s22, 0
    %p168 = por %p166, %p167
    %s170 = sadd.s32 %s169, 1
    %p173 = scmp.eq.s32.totalorder %s16, 1
    %p174 = scmp.ne.s32.totalorder %s169, %s171
    %p175 = scmp.eq.s32.totalorder %s16, 0
    %p176 = por %p174, %p175
    %p177 = scmp.ne.s32.totalorder %s169, %s171
    %p178 = scmp.eq.s32.totalorder %s21, 1
    %p179 = por %p177, %p178
    %p180 = scmp.ne.s32.totalorder %s171, %s172
    %p181 = scmp.eq.s32.totalorder %s21, 0
    %p182 = por %p180, %p181
    %p183 = scmp.ne.s32.totalorder %s171, %s172
    %p184 = scmp.eq.s32.totalorder %s22, 1
    %p185 = por %p183, %p184
    %p187 = scmp.ne.s32.totalorder %s172, %s186
    %p188 = scmp.eq.s32.totalorder %s22, 0
    %p189 = por %p187, %p188
    %s190 = ssub.s32 %s23, %s35
    %s191 = ssub.s32 %s24, %s31
    %s192 = sor.u32 %s190, %s191
    %p193 = scmp.eq.s32.totalorder %s192, 0
    %s195 = sadd.s32 %s194, 1
    %s196 = scalar_select %p193, %s194, %s195
    %p199 = pneg %p193
    %p200 = scmp.eq.s32.totalorder %s16, 1
    %p201 = por %p199, %p200
    %p202 = scmp.ne.s32.totalorder %s194, %s197
    %p203 = scmp.eq.s32.totalorder %s16, 0
    %p204 = por %p202, %p203
    %p205 = scmp.ne.s32.totalorder %s194, %s197
    %p206 = scmp.eq.s32.totalorder %s21, 1
    %p207 = por %p205, %p206
    %p208 = scmp.ne.s32.totalorder %s197, %s198
    %p209 = scmp.eq.s32.totalorder %s21, 0
    %p210 = por %p208, %p209
    %p211 = scmp.ne.s32.totalorder %s197, %s198
    %p212 = scmp.eq.s32.totalorder %s22, 1
    %p213 = por %p211, %p212
    %p215 = scmp.ne.s32.totalorder %s198, %s214
    %p216 = scmp.eq.s32.totalorder %s22, 0
    %p217 = por %p215, %p216
    %s218 = ssub.s32 %s23, %s35
    %s219 = ssub.s32 %s24, %s31
    %s220 = sor.u32 %s218, %s219
    %p221 = scmp.eq.s32.totalorder %s220, 0
    %s223 = sadd.s32 %s222, 1
    %s224 = scalar_select %p221, %s222, %s223
    %p227 = pneg %p221
    %p228 = scmp.eq.s32.totalorder %s16, 1
    %p229 = por %p227, %p228
    %p230 = scmp.ne.s32.totalorder %s222, %s225
    %p231 = scmp.eq.s32.totalorder %s16, 0
    %p232 = por %p230, %p231
    %p233 = scmp.ne.s32.totalorder %s222, %s225
    %p234 = scmp.eq.s32.totalorder %s21, 1
    %p235 = por %p233, %p234
    %p236 = scmp.ne.s32.totalorder %s225, %s226
    %p237 = scmp.eq.s32.totalorder %s21, 0
    %p238 = por %p236, %p237
    %p239 = scmp.ne.s32.totalorder %s225, %s226
    %p240 = scmp.eq.s32.totalorder %s22, 1
    %p241 = por %p239, %p240
    %p243 = scmp.ne.s32.totalorder %s226, %s242
    %p244 = scmp.eq.s32.totalorder %s22, 0
    %p245 = por %p243, %p244
    %s246 = ssub.s32 %s23, %s35
    %s247 = ssub.s32 %s24, %s31
    %s248 = sor.u32 %s246, %s247
    %p249 = scmp.eq.s32.totalorder %s248, 0
    %s251 = sadd.s32 %s250, 1
    %s252 = scalar_select %p249, %s250, %s251
    %p255 = pneg %p249
    %p256 = scmp.eq.s32.totalorder %s16, 1
    %p257 = por %p255, %p256
    %p258 = scmp.ne.s32.totalorder %s250, %s253
    %p259 = scmp.eq.s32.totalorder %s16, 0
    %p260 = por %p258, %p259
    %p261 = scmp.ne.s32.totalorder %s250, %s253
    %p262 = scmp.eq.s32.totalorder %s21, 1
    %p263 = por %p261, %p262
    %p264 = scmp.ne.s32.totalorder %s253, %s254
    %p265 = scmp.eq.s32.totalorder %s21, 0
    %p266 = por %p264, %p265
    %p267 = scmp.ne.s32.totalorder %s253, %s254
    %p268 = scmp.eq.s32.totalorder %s22, 1
    %p269 = por %p267, %p268
    %p271 = scmp.ne.s32.totalorder %s254, %s270
    %p272 = scmp.eq.s32.totalorder %s22, 0
    %p273 = por %p271, %p272
    %p274 = scmp.le.s32.totalorder 1, %s16
    %p275 = scmp.lt.s32.totalorder %s16, 3
    %p276 = pnand %p274, %p275
    %p277 = pneg %p276
    // Predicated region
    $region9: #{encoder_forward.3} parent=5 // pred_check
      _
    $region10: #{encoder_forward.3} parent=5 // pred_check_branch
      %279 = sbr.rel (%p276) target = $region12
    $region11: #{encoder_forward.3} parent=5 // pred_region
      %s280 = ssub.s32 %s16, 1
      // Predicated region
      $region13: #{encoder_forward.3} parent=11 // pred_check
        %p281 = pneg %p77
      $region14: #{encoder_forward.3} parent=11 // pred_check_branch
        %283 = sbr.rel (%p281) target = $region16
      $region15: #{encoder_forward.3} parent=11 // pred_region
        _
      $region16: #{encoder_forward.3} parent=11 // pred_fallthru
        _
      // Predicated region
      $region17: #{encoder_forward.3} parent=11 // pred_check
        %p284 = pneg %p98
      $region18: #{encoder_forward.3} parent=11 // pred_check_branch
        %286 = sbr.rel (%p284) target = $region20
      $region19: #{encoder_forward.3} parent=11 // pred_region
        _
      $region20: #{encoder_forward.3} parent=11 // pred_fallthru
        _
      // Predicated region
      $region21: #{encoder_forward.3} parent=11 // pred_check
        %p287 = pneg %p119
      $region22: #{encoder_forward.3} parent=11 // pred_check_branch
        %289 = sbr.rel (%p287) target = $region24
      $region23: #{encoder_forward.3} parent=11 // pred_region
        _
      $region24: #{encoder_forward.3} parent=11 // pred_fallthru
        _
      // Predicated region
      $region25: #{encoder_forward.3} parent=11 // pred_check
        %p290 = pneg %p140
      $region26: #{encoder_forward.3} parent=11 // pred_check_branch
        %292 = sbr.rel (%p290) target = $region28
      $region27: #{encoder_forward.3} parent=11 // pred_region
        _
      $region28: #{encoder_forward.3} parent=11 // pred_fallthru
        _
      // Predicated region
      $region29: #{encoder_forward.3} parent=11 // pred_check
        %p293 = pneg %p161
      $region30: #{encoder_forward.3} parent=11 // pred_check_branch
        %295 = sbr.rel (%p293) target = $region32
      $region31: #{encoder_forward.3} parent=11 // pred_region
        _
      $region32: #{encoder_forward.3} parent=11 // pred_fallthru
        _
      // Predicated region
      $region33: #{encoder_forward.3} parent=11 // pred_check
        %p296 = pneg %p182
      $region34: #{encoder_forward.3} parent=11 // pred_check_branch
        %298 = sbr.rel (%p296) target = $region36
      $region35: #{encoder_forward.3} parent=11 // pred_region
        _
      $region36: #{encoder_forward.3} parent=11 // pred_fallthru
        _
    $region12: #{encoder_forward.3} parent=5 // pred_fallthru
      _
    %p299 = scmp.lt.s32.totalorder %s16, 2
    // Predicated region
    $region37: #{encoder_forward.3} parent=5 // pred_check
      %p300 = pneg %p299
    $region38: #{encoder_forward.3} parent=5 // pred_check_branch
      %302 = sbr.rel (%p300) target = $region40
    $region39: #{encoder_forward.3} parent=5 // pred_region
      // Predicated region
      $region41: #{encoder_forward.3} parent=39 // pred_check
        %p303 = pneg %p50
      $region42: #{encoder_forward.3} parent=39 // pred_check_branch
        %305 = sbr.rel (%p303) target = $region44
      $region43: #{encoder_forward.3} parent=39 // pred_region
        %s306 = smul.u32 16, %s24
        %p307 = scmp.lt.s32.totalorder %s23, 1
        %s308 = scalar_select %p307, %s23, 1
        %p309 = scmp.lt.s32.totalorder %s306, 15
        %s310 = scalar_select %p309, %s306, 15
        %s311 = smul.addr %s308, 16
        %s312 = sadd.s32 %s310, %s311
        %s313 = smul.addr %s312, 8
        %s314 = scalar_lea.vmem %s0, %s313
        %s315 = smul.u32 16, %s24
      $region44: #{encoder_forward.3} parent=39 // pred_fallthru
        _
    $region40: #{encoder_forward.3} parent=5 // pred_fallthru
      _
    %p316 = scmp.le.s32.totalorder 1, %s16
    %p317 = scmp.lt.s32.totalorder %s16, 3
    %p318 = pnand %p316, %p317
    %p319 = pneg %p318
    // Predicated region
    $region45: #{encoder_forward.3} parent=5 // pred_check
      _
    $region46: #{encoder_forward.3} parent=5 // pred_check_branch
      %321 = sbr.rel (%p318) target = $region48
    $region47: #{encoder_forward.3} parent=5 // pred_region
      %s322 = ssub.s32 %s16, 1
      %s323 = smul.u32 16, %s26
      %p324 = scmp.lt.s32.totalorder %s25, 1
      %s325 = scalar_select %p324, %s25, 1
      %p326 = scmp.lt.s32.totalorder %s323, 15
      %s327 = scalar_select %p326, %s323, 15
      %s328 = smul.addr %s325, 16
      %s329 = sadd.s32 %s327, %s328
      %s330 = smul.addr %s329, 8
      %s331 = scalar_lea.vmem %s0, %s330
      %p332 = pneg %p56
      %p333 = pneg %p53
      %p334 = pneg %p77
      %p335 = pneg %p74
      %p336 = pneg %p98
      %p337 = pneg %p95
      %p338 = pneg %p119
      %p339 = pneg %p116
      %p340 = pneg %p140
      %p341 = pneg %p137
      %p342 = pneg %p161
      %p343 = pneg %p158
      %p344 = pneg %p182
      %p345 = pneg %p179
      %p346 = pneg %p210
      %p347 = pneg %p207
      %s348 = smul.u32 16, %s26
      %p349 = scmp.lt.s32.totalorder %s25, 1
      %s350 = scalar_select %p349, %s25, 1
      %p351 = scmp.lt.s32.totalorder %s348, 15
      %s352 = scalar_select %p351, %s348, 15
      %s353 = smul.addr %s350, 16
      %s354 = sadd.s32 %s352, %s353
      %s355 = smul.addr %s354, 4
      %s356 = scalar_lea.vmem %s7, %s355
      %p357 = pneg %p238
      %p358 = pneg %p235
      %s359 = smul.u32 16, %s26
      %p360 = scmp.lt.s32.totalorder %s25, 1
      %s361 = scalar_select %p360, %s25, 1
      %p362 = scmp.lt.s32.totalorder %s359, 15
      %s363 = scalar_select %p362, %s359, 15
      %s364 = smul.addr %s361, 16
      %s365 = sadd.s32 %s363, %s364
      %s366 = smul.addr %s365, 4
      %s367 = scalar_lea.vmem %s8, %s366
      %p368 = pneg %p266
      %p369 = pneg %p263
      %s370 = smul.u32 16, %s26
      %p371 = scmp.lt.s32.totalorder %s25, 1
      %s372 = scalar_select %p371, %s25, 1
      %p373 = scmp.lt.s32.totalorder %s370, 15
      %s374 = scalar_select %p373, %s370, 15
      %s375 = smul.addr %s372, 16
      %s376 = sadd.s32 %s374, %s375
      %s377 = smul.addr %s376, 4
      %s378 = scalar_lea.vmem %s9, %s377
      %s379 = smul.u32 16, %s26
      %p380 = scmp.lt.s32.totalorder %s25, 1
      %s381 = scalar_select %p380, %s25, 1
      %p382 = scmp.lt.s32.totalorder %s379, 15
      %s383 = scalar_select %p382, %s379, 15
      %s384 = smul.addr %s381, 16
      %s385 = sadd.s32 %s383, %s384
      %s386 = smul.addr %s385, 8
      %s387 = scalar_lea.vmem %s0, %s386
      %s388 = smul.u32 16, %s26
      %s389 = smul.u32 16, %s26
      %p390 = scmp.lt.s32.totalorder %s25, 1
      %s391 = scalar_select %p390, %s25, 1
      %p392 = scmp.lt.s32.totalorder %s389, 15
      %s393 = scalar_select %p392, %s389, 15
      %s394 = smul.addr %s391, 16
      %s395 = sadd.s32 %s393, %s394
      %s396 = smul.addr %s395, 4
      %s397 = scalar_lea.vmem %s7, %s396
      %s398 = smul.u32 16, %s26
      %s399 = smul.u32 16, %s26
      %p400 = scmp.lt.s32.totalorder %s25, 1
      %s401 = scalar_select %p400, %s25, 1
      %p402 = scmp.lt.s32.totalorder %s399, 15
      %s403 = scalar_select %p402, %s399, 15
      %s404 = smul.addr %s401, 16
      %s405 = sadd.s32 %s403, %s404
      %s406 = smul.addr %s405, 4
      %s407 = scalar_lea.vmem %s8, %s406
      %s408 = smul.u32 16, %s26
      %s409 = smul.u32 16, %s26
      %p410 = scmp.lt.s32.totalorder %s25, 1
      %s411 = scalar_select %p410, %s25, 1
      %p412 = scmp.lt.s32.totalorder %s409, 15
      %s413 = scalar_select %p412, %s409, 15
      %s414 = smul.addr %s411, 16
      %s415 = sadd.s32 %s413, %s414
      %s416 = smul.addr %s415, 4
      %s417 = scalar_lea.vmem %s9, %s416
      %s418 = smul.u32 16, %s26
      %v419 = vld [vmem:[%s387] sm:$0xff]
      %v420 = vld [vmem:[%s387 + $0x8] sm:$0xff]
      %v421 = vld [vmem:[%s387 + $0x10] sm:$0xff]
      %v422 = vld [vmem:[%s387 + $0x18] sm:$0xff]
      %v423 = vld [vmem:[%s387 + $0x20] sm:$0xff]
      %v424 = vld [vmem:[%s387 + $0x28] sm:$0xff]
      %v425 = vld [vmem:[%s387 + $0x30] sm:$0xff]
      %v426 = vld [vmem:[%s387 + $0x38] sm:$0xff]
      %v427 = vld [vmem:[%s387 + $0x40] sm:$0xff]
      %v428 = vld [vmem:[%s387 + $0x48] sm:$0xff]
      %v429 = vld [vmem:[%s387 + $0x50] sm:$0xff]
      %v430 = vld [vmem:[%s387 + $0x58] sm:$0xff]
      %v431 = vld [vmem:[%s387 + $0x60] sm:$0xff]
      %v432 = vld [vmem:[%s387 + $0x68] sm:$0xff]
      %v433 = vld [vmem:[%s387 + $0x70] sm:$0xff]
      %v434 = vld [vmem:[%s387 + $0x78] sm:$0xff]
      %v435 = vpack.c.bf16 %v420, %v419
      %v436 = vpack.c.bf16 %v422, %v421
      %v437 = vpack.c.bf16 %v424, %v423
      %v438 = vpack.c.bf16 %v426, %v425
      %v439 = vpack.c.bf16 %v428, %v427
      %v440 = vpack.c.bf16 %v430, %v429
      %v441 = vpack.c.bf16 %v432, %v431
      %v442 = vpack.c.bf16 %v434, %v433
      %v443 = vld [vmem:[%s1] sm:$0xf]
      %v444 = vld [vmem:[%s1 + $0x4] sm:$0xf]
      %v445 = vld [vmem:[%s1 + $0x8] sm:$0xf]
      %v446 = vld [vmem:[%s1 + $0xc] sm:$0xf]
      %v447 = vld [vmem:[%s1 + $0x10] sm:$0xf]
      %v448 = vld [vmem:[%s1 + $0x14] sm:$0xf]
      %v449 = vld [vmem:[%s1 + $0x18] sm:$0xf]
      %v450 = vld [vmem:[%s1 + $0x1c] sm:$0xf]
      %v451 = vld [vmem:[%s1 + $0x20] sm:$0xf]
      %v452 = vld [vmem:[%s1 + $0x24] sm:$0xf]
      %v453 = vld [vmem:[%s1 + $0x28] sm:$0xf]
      %v454 = vld [vmem:[%s1 + $0x2c] sm:$0xf]
      %v455 = vld [vmem:[%s1 + $0x30] sm:$0xf]
      %v456 = vld [vmem:[%s1 + $0x34] sm:$0xf]
      %v457 = vld [vmem:[%s1 + $0x38] sm:$0xf]
      %v458 = vld [vmem:[%s1 + $0x3c] sm:$0xf]
      %v459 = vld [vmem:[%s2] sm:$0x1]
      %v461 = vperm.slane %v459, 0
      %v479 = vunpack.c.l.b16 %v443
      %v480 = vunpack.c.l.b16 %v444
      %v481 = vunpack.c.l.b16 %v445
      %v482 = vunpack.c.l.b16 %v446
      %v483 = vunpack.c.l.b16 %v447
      %v484 = vunpack.c.l.b16 %v448
      %v485 = vunpack.c.l.b16 %v449
      %v486 = vunpack.c.l.b16 %v450
      %v487 = vunpack.c.l.b16 %v451
      %v488 = vunpack.c.l.b16 %v452
      %v489 = vunpack.c.l.b16 %v453
      %v490 = vunpack.c.l.b16 %v454
      %v491 = vunpack.c.l.b16 %v455
      %v492 = vunpack.c.l.b16 %v456
      %v493 = vunpack.c.l.b16 %v457
      %v494 = vunpack.c.l.b16 %v458
      %v495 = vpack.c.b16 %v480, %v479
      %v496 = vpack.c.b16 %v482, %v481
      %v497 = vpack.c.b16 %v484, %v483
      %v498 = vpack.c.b16 %v486, %v485
      %v499 = vpack.c.b16 %v488, %v487
      %v500 = vpack.c.b16 %v490, %v489
      %v501 = vpack.c.b16 %v492, %v491
      %v502 = vpack.c.b16 %v494, %v493
      %511 = vmatpush.bf16.msra.mxu0 %v502
      %512 = vmatpush.bf16.msra.mxu0 %v501
      %513 = vmatpush.bf16.msra.mxu0 %v500
      %514 = vmatpush.bf16.msra.mxu0 %v499
      %515 = vmatpush.bf16.msra.mxu0 %v498
      %516 = vmatpush.bf16.msra.mxu0 %v497
      %517 = vmatpush.bf16.msra.mxu0 %v496
      %518 = vmatpush.bf16.msra.mxu0 %v495
      %519 = vmatmul.bf16.gmra.mxu0 %v435
      %v520 = vpop.f32.mrf.mxu0
      %v521 = vadd.f32 %v461, %v520
      %v522 = vpop.f32.mrf.mxu0
      %v523 = vadd.f32 %v461, %v522
      %524 = vmatmul.bf16.gmra.mxu0 %v436
      %v525 = vpop.f32.mrf.mxu0
      %v526 = vadd.f32 %v461, %v525
      %v527 = vpop.f32.mrf.mxu0
      %v528 = vadd.f32 %v461, %v527
      %529 = vmatmul.bf16.gmra.mxu0 %v437
      %v530 = vpop.f32.mrf.mxu0
      %v531 = vadd.f32 %v461, %v530
      %v532 = vpop.f32.mrf.mxu0
      %v533 = vadd.f32 %v461, %v532
      %534 = vmatmul.bf16.gmra.mxu0 %v438
      %v535 = vpop.f32.mrf.mxu0
      %v536 = vadd.f32 %v461, %v535
      %v537 = vpop.f32.mrf.mxu0
      %v538 = vadd.f32 %v461, %v537
      %539 = vmatmul.bf16.gmra.mxu0 %v439
      %v540 = vpop.f32.mrf.mxu0
      %v541 = vadd.f32 %v461, %v540
      %v542 = vpop.f32.mrf.mxu0
      %v543 = vadd.f32 %v461, %v542
      %544 = vmatmul.bf16.gmra.mxu0 %v440
      %v545 = vpop.f32.mrf.mxu0
      %v546 = vadd.f32 %v461, %v545
      %v547 = vpop.f32.mrf.mxu0
      %v548 = vadd.f32 %v461, %v547
      %549 = vmatmul.bf16.gmra.mxu0 %v441
      %v550 = vpop.f32.mrf.mxu0
      %v551 = vadd.f32 %v461, %v550
      %v552 = vpop.f32.mrf.mxu0
      %v553 = vadd.f32 %v461, %v552
      %554 = vmatmul.bf16.gmra.mxu0 %v442
      %v555 = vpop.f32.mrf.mxu0
      %v556 = vadd.f32 %v461, %v555
      %v557 = vpop.f32.mrf.mxu0
      %v558 = vadd.f32 %v461, %v557
      %559 = vdwg.mxu0
      %v560 = vpack.c.bf16 %v521, %v521
      %v561 = vpack.c.bf16 %v523, %v523
      %v562 = vpack.c.bf16 %v526, %v526
      %v563 = vpack.c.bf16 %v528, %v528
      %v564 = vpack.c.bf16 %v531, %v531
      %v565 = vpack.c.bf16 %v533, %v533
      %v566 = vpack.c.bf16 %v536, %v536
      %v567 = vpack.c.bf16 %v538, %v538
      %v568 = vpack.c.bf16 %v541, %v541
      %v569 = vpack.c.bf16 %v543, %v543
      %v570 = vpack.c.bf16 %v546, %v546
      %v571 = vpack.c.bf16 %v548, %v548
      %v572 = vpack.c.bf16 %v551, %v551
      %v573 = vpack.c.bf16 %v553, %v553
      %v574 = vpack.c.bf16 %v556, %v556
      %v575 = vpack.c.bf16 %v558, %v558
      %576 = vst [vmem:[%s397] sm:$0xf] %v560
      %577 = vst [vmem:[%s397 + $0x4] sm:$0xf] %v561
      %578 = vst [vmem:[%s397 + $0x8] sm:$0xf] %v562
      %579 = vst [vmem:[%s397 + $0xc] sm:$0xf] %v563
      %580 = vst [vmem:[%s397 + $0x10] sm:$0xf] %v564
      %581 = vst [vmem:[%s397 + $0x14] sm:$0xf] %v565
      %582 = vst [vmem:[%s397 + $0x18] sm:$0xf] %v566
      %583 = vst [vmem:[%s397 + $0x1c] sm:$0xf] %v567
      %584 = vst [vmem:[%s397 + $0x20] sm:$0xf] %v568
      %585 = vst [vmem:[%s397 + $0x24] sm:$0xf] %v569
      %586 = vst [vmem:[%s397 + $0x28] sm:$0xf] %v570
      %587 = vst [vmem:[%s397 + $0x2c] sm:$0xf] %v571
      %588 = vst [vmem:[%s397 + $0x30] sm:$0xf] %v572
      %589 = vst [vmem:[%s397 + $0x34] sm:$0xf] %v573
      %590 = vst [vmem:[%s397 + $0x38] sm:$0xf] %v574
      %591 = vst [vmem:[%s397 + $0x3c] sm:$0xf] %v575
      %v592 = vld [vmem:[%s3] sm:$0xf]
      %v593 = vld [vmem:[%s3 + $0x4] sm:$0xf]
      %v594 = vld [vmem:[%s3 + $0x8] sm:$0xf]
      %v595 = vld [vmem:[%s3 + $0xc] sm:$0xf]
      %v596 = vld [vmem:[%s3 + $0x10] sm:$0xf]
      %v597 = vld [vmem:[%s3 + $0x14] sm:$0xf]
      %v598 = vld [vmem:[%s3 + $0x18] sm:$0xf]
      %v599 = vld [vmem:[%s3 + $0x1c] sm:$0xf]
      %v600 = vld [vmem:[%s3 + $0x20] sm:$0xf]
      %v601 = vld [vmem:[%s3 + $0x24] sm:$0xf]
      %v602 = vld [vmem:[%s3 + $0x28] sm:$0xf]
      %v603 = vld [vmem:[%s3 + $0x2c] sm:$0xf]
      %v604 = vld [vmem:[%s3 + $0x30] sm:$0xf]
      %v605 = vld [vmem:[%s3 + $0x34] sm:$0xf]
      %v606 = vld [vmem:[%s3 + $0x38] sm:$0xf]
      %v607 = vld [vmem:[%s3 + $0x3c] sm:$0xf]
      %v608 = vld [vmem:[%s4] sm:$0x1]
      %v610 = vperm.slane %v608, 0
      %v628 = vunpack.c.l.b16 %v592
      %v629 = vunpack.c.l.b16 %v593
      %v630 = vunpack.c.l.b16 %v594
      %v631 = vunpack.c.l.b16 %v595
      %v632 = vunpack.c.l.b16 %v596
      %v633 = vunpack.c.l.b16 %v597
      %v634 = vunpack.c.l.b16 %v598
      %v635 = vunpack.c.l.b16 %v599
      %v636 = vunpack.c.l.b16 %v600
      %v637 = vunpack.c.l.b16 %v601
      %v638 = vunpack.c.l.b16 %v602
      %v639 = vunpack.c.l.b16 %v603
      %v640 = vunpack.c.l.b16 %v604
      %v641 = vunpack.c.l.b16 %v605
      %v642 = vunpack.c.l.b16 %v606
      %v643 = vunpack.c.l.b16 %v607
      %v644 = vpack.c.b16 %v629, %v628
      %v645 = vpack.c.b16 %v631, %v630
      %v646 = vpack.c.b16 %v633, %v632
      %v647 = vpack.c.b16 %v635, %v634
      %v648 = vpack.c.b16 %v637, %v636
      %v649 = vpack.c.b16 %v639, %v638
      %v650 = vpack.c.b16 %v641, %v640
      %v651 = vpack.c.b16 %v643, %v642
      %660 = vmatpush.bf16.msra.mxu0 %v651
      %661 = vmatpush.bf16.msra.mxu0 %v650
      %662 = vmatpush.bf16.msra.mxu0 %v649
      %663 = vmatpush.bf16.msra.mxu0 %v648
      %664 = vmatpush.bf16.msra.mxu0 %v647
      %665 = vmatpush.bf16.msra.mxu0 %v646
      %666 = vmatpush.bf16.msra.mxu0 %v645
      %667 = vmatpush.bf16.msra.mxu0 %v644
      %668 = vmatmul.bf16.gmra.mxu0 %v435
      %v669 = vpop.f32.mrf.mxu0
      %v670 = vadd.f32 %v610, %v669
      %v671 = vpop.f32.mrf.mxu0
      %v672 = vadd.f32 %v610, %v671
      %673 = vmatmul.bf16.gmra.mxu0 %v436
      %v674 = vpop.f32.mrf.mxu0
      %v675 = vadd.f32 %v610, %v674
      %v676 = vpop.f32.mrf.mxu0
      %v677 = vadd.f32 %v610, %v676
      %678 = vmatmul.bf16.gmra.mxu0 %v437
      %v679 = vpop.f32.mrf.mxu0
      %v680 = vadd.f32 %v610, %v679
      %v681 = vpop.f32.mrf.mxu0
      %v682 = vadd.f32 %v610, %v681
      %683 = vmatmul.bf16.gmra.mxu0 %v438
      %v684 = vpop.f32.mrf.mxu0
      %v685 = vadd.f32 %v610, %v684
      %v686 = vpop.f32.mrf.mxu0
      %v687 = vadd.f32 %v610, %v686
      %688 = vmatmul.bf16.gmra.mxu0 %v439
      %v689 = vpop.f32.mrf.mxu0
      %v690 = vadd.f32 %v610, %v689
      %v691 = vpop.f32.mrf.mxu0
      %v692 = vadd.f32 %v610, %v691
      %693 = vmatmul.bf16.gmra.mxu0 %v440
      %v694 = vpop.f32.mrf.mxu0
      %v695 = vadd.f32 %v610, %v694
      %v696 = vpop.f32.mrf.mxu0
      %v697 = vadd.f32 %v610, %v696
      %698 = vmatmul.bf16.gmra.mxu0 %v441
      %v699 = vpop.f32.mrf.mxu0
      %v700 = vadd.f32 %v610, %v699
      %v701 = vpop.f32.mrf.mxu0
      %v702 = vadd.f32 %v610, %v701
      %703 = vmatmul.bf16.gmra.mxu0 %v442
      %v704 = vpop.f32.mrf.mxu0
      %v705 = vadd.f32 %v610, %v704
      %v706 = vpop.f32.mrf.mxu0
      %v707 = vadd.f32 %v610, %v706
      %708 = vdwg.mxu0
      %v709 = vpack.c.bf16 %v670, %v670
      %v710 = vpack.c.bf16 %v672, %v672
      %v711 = vpack.c.bf16 %v675, %v675
      %v712 = vpack.c.bf16 %v677, %v677
      %v713 = vpack.c.bf16 %v680, %v680
      %v714 = vpack.c.bf16 %v682, %v682
      %v715 = vpack.c.bf16 %v685, %v685
      %v716 = vpack.c.bf16 %v687, %v687
      %v717 = vpack.c.bf16 %v690, %v690
      %v718 = vpack.c.bf16 %v692, %v692
      %v719 = vpack.c.bf16 %v695, %v695
      %v720 = vpack.c.bf16 %v697, %v697
      %v721 = vpack.c.bf16 %v700, %v700
      %v722 = vpack.c.bf16 %v702, %v702
      %v723 = vpack.c.bf16 %v705, %v705
      %v724 = vpack.c.bf16 %v707, %v707
      %725 = vst [vmem:[%s407] sm:$0xf] %v709
      %726 = vst [vmem:[%s407 + $0x4] sm:$0xf] %v710
      %727 = vst [vmem:[%s407 + $0x8] sm:$0xf] %v711
      %728 = vst [vmem:[%s407 + $0xc] sm:$0xf] %v712
      %729 = vst [vmem:[%s407 + $0x10] sm:$0xf] %v713
      %730 = vst [vmem:[%s407 + $0x14] sm:$0xf] %v714
      %731 = vst [vmem:[%s407 + $0x18] sm:$0xf] %v715
      %732 = vst [vmem:[%s407 + $0x1c] sm:$0xf] %v716
      %733 = vst [vmem:[%s407 + $0x20] sm:$0xf] %v717
      %734 = vst [vmem:[%s407 + $0x24] sm:$0xf] %v718
      %735 = vst [vmem:[%s407 + $0x28] sm:$0xf] %v719
      %736 = vst [vmem:[%s407 + $0x2c] sm:$0xf] %v720
      %737 = vst [vmem:[%s407 + $0x30] sm:$0xf] %v721
      %738 = vst [vmem:[%s407 + $0x34] sm:$0xf] %v722
      %739 = vst [vmem:[%s407 + $0x38] sm:$0xf] %v723
      %740 = vst [vmem:[%s407 + $0x3c] sm:$0xf] %v724
      %v741 = vld [vmem:[%s5] sm:$0xf]
      %v742 = vld [vmem:[%s5 + $0x4] sm:$0xf]
      %v743 = vld [vmem:[%s5 + $0x8] sm:$0xf]
      %v744 = vld [vmem:[%s5 + $0xc] sm:$0xf]
      %v745 = vld [vmem:[%s5 + $0x10] sm:$0xf]
      %v746 = vld [vmem:[%s5 + $0x14] sm:$0xf]
      %v747 = vld [vmem:[%s5 + $0x18] sm:$0xf]
      %v748 = vld [vmem:[%s5 + $0x1c] sm:$0xf]
      %v749 = vld [vmem:[%s5 + $0x20] sm:$0xf]
      %v750 = vld [vmem:[%s5 + $0x24] sm:$0xf]
      %v751 = vld [vmem:[%s5 + $0x28] sm:$0xf]
      %v752 = vld [vmem:[%s5 + $0x2c] sm:$0xf]
      %v753 = vld [vmem:[%s5 + $0x30] sm:$0xf]
      %v754 = vld [vmem:[%s5 + $0x34] sm:$0xf]
      %v755 = vld [vmem:[%s5 + $0x38] sm:$0xf]
      %v756 = vld [vmem:[%s5 + $0x3c] sm:$0xf]
      %v757 = vld [vmem:[%s6] sm:$0x1]
      %v759 = vperm.slane %v757, 0
      %v777 = vunpack.c.l.b16 %v741
      %v778 = vunpack.c.l.b16 %v742
      %v779 = vunpack.c.l.b16 %v743
      %v780 = vunpack.c.l.b16 %v744
      %v781 = vunpack.c.l.b16 %v745
      %v782 = vunpack.c.l.b16 %v746
      %v783 = vunpack.c.l.b16 %v747
      %v784 = vunpack.c.l.b16 %v748
      %v785 = vunpack.c.l.b16 %v749
      %v786 = vunpack.c.l.b16 %v750
      %v787 = vunpack.c.l.b16 %v751
      %v788 = vunpack.c.l.b16 %v752
      %v789 = vunpack.c.l.b16 %v753
      %v790 = vunpack.c.l.b16 %v754
      %v791 = vunpack.c.l.b16 %v755
      %v792 = vunpack.c.l.b16 %v756
      %v793 = vpack.c.b16 %v778, %v777
      %v794 = vpack.c.b16 %v780, %v779
      %v795 = vpack.c.b16 %v782, %v781
      %v796 = vpack.c.b16 %v784, %v783
      %v797 = vpack.c.b16 %v786, %v785
      %v798 = vpack.c.b16 %v788, %v787
      %v799 = vpack.c.b16 %v790, %v789
      %v800 = vpack.c.b16 %v792, %v791
      %809 = vmatpush.bf16.msra.mxu0 %v800
      %810 = vmatpush.bf16.msra.mxu0 %v799
      %811 = vmatpush.bf16.msra.mxu0 %v798
      %812 = vmatpush.bf16.msra.mxu0 %v797
      %813 = vmatpush.bf16.msra.mxu0 %v796
      %814 = vmatpush.bf16.msra.mxu0 %v795
      %815 = vmatpush.bf16.msra.mxu0 %v794
      %816 = vmatpush.bf16.msra.mxu0 %v793
      %817 = vmatmul.bf16.gmra.mxu0 %v435
      %v818 = vpop.f32.mrf.mxu0
      %v819 = vadd.f32 %v759, %v818
      %v820 = vpop.f32.mrf.mxu0
      %v821 = vadd.f32 %v759, %v820
      %822 = vmatmul.bf16.gmra.mxu0 %v436
      %v823 = vpop.f32.mrf.mxu0
      %v824 = vadd.f32 %v759, %v823
      %v825 = vpop.f32.mrf.mxu0
      %v826 = vadd.f32 %v759, %v825
      %827 = vmatmul.bf16.gmra.mxu0 %v437
      %v828 = vpop.f32.mrf.mxu0
      %v829 = vadd.f32 %v759, %v828
      %v830 = vpop.f32.mrf.mxu0
      %v831 = vadd.f32 %v759, %v830
      %832 = vmatmul.bf16.gmra.mxu0 %v438
      %v833 = vpop.f32.mrf.mxu0
      %v834 = vadd.f32 %v759, %v833
      %v835 = vpop.f32.mrf.mxu0
      %v836 = vadd.f32 %v759, %v835
      %837 = vmatmul.bf16.gmra.mxu0 %v439
      %v838 = vpop.f32.mrf.mxu0
      %v839 = vadd.f32 %v759, %v838
      %v840 = vpop.f32.mrf.mxu0
      %v841 = vadd.f32 %v759, %v840
      %842 = vmatmul.bf16.gmra.mxu0 %v440
      %v843 = vpop.f32.mrf.mxu0
      %v844 = vadd.f32 %v759, %v843
      %v845 = vpop.f32.mrf.mxu0
      %v846 = vadd.f32 %v759, %v845
      %847 = vmatmul.bf16.gmra.mxu0 %v441
      %v848 = vpop.f32.mrf.mxu0
      %v849 = vadd.f32 %v759, %v848
      %v850 = vpop.f32.mrf.mxu0
      %v851 = vadd.f32 %v759, %v850
      %852 = vmatmul.bf16.gmra.mxu0 %v442
      %v853 = vpop.f32.mrf.mxu0
      %v854 = vadd.f32 %v759, %v853
      %v855 = vpop.f32.mrf.mxu0
      %v856 = vadd.f32 %v759, %v855
      %857 = vdwg.mxu0
      %v858 = vpack.c.bf16 %v819, %v819
      %v859 = vpack.c.bf16 %v821, %v821
      %v860 = vpack.c.bf16 %v824, %v824
      %v861 = vpack.c.bf16 %v826, %v826
      %v862 = vpack.c.bf16 %v829, %v829
      %v863 = vpack.c.bf16 %v831, %v831
      %v864 = vpack.c.bf16 %v834, %v834
      %v865 = vpack.c.bf16 %v836, %v836
      %v866 = vpack.c.bf16 %v839, %v839
      %v867 = vpack.c.bf16 %v841, %v841
      %v868 = vpack.c.bf16 %v844, %v844
      %v869 = vpack.c.bf16 %v846, %v846
      %v870 = vpack.c.bf16 %v849, %v849
      %v871 = vpack.c.bf16 %v851, %v851
      %v872 = vpack.c.bf16 %v854, %v854
      %v873 = vpack.c.bf16 %v856, %v856
      %874 = vst [vmem:[%s417] sm:$0xf] %v858
      %875 = vst [vmem:[%s417 + $0x4] sm:$0xf] %v859
      %876 = vst [vmem:[%s417 + $0x8] sm:$0xf] %v860
      %877 = vst [vmem:[%s417 + $0xc] sm:$0xf] %v861
      %878 = vst [vmem:[%s417 + $0x10] sm:$0xf] %v862
      %879 = vst [vmem:[%s417 + $0x14] sm:$0xf] %v863
      %880 = vst [vmem:[%s417 + $0x18] sm:$0xf] %v864
      %881 = vst [vmem:[%s417 + $0x1c] sm:$0xf] %v865
      %882 = vst [vmem:[%s417 + $0x20] sm:$0xf] %v866
      %883 = vst [vmem:[%s417 + $0x24] sm:$0xf] %v867
      %884 = vst [vmem:[%s417 + $0x28] sm:$0xf] %v868
      %885 = vst [vmem:[%s417 + $0x2c] sm:$0xf] %v869
      %886 = vst [vmem:[%s417 + $0x30] sm:$0xf] %v870
      %887 = vst [vmem:[%s417 + $0x34] sm:$0xf] %v871
      %888 = vst [vmem:[%s417 + $0x38] sm:$0xf] %v872
      %889 = vst [vmem:[%s417 + $0x3c] sm:$0xf] %v873
      %s890 = smul.u32 16, %s26
      %p891 = scmp.lt.s32.totalorder %s25, 1
      %s892 = scalar_select %p891, %s25, 1
      %p893 = scmp.lt.s32.totalorder %s890, 15
      %s894 = scalar_select %p893, %s890, 15
      %s895 = smul.addr %s892, 16
      %s896 = sadd.s32 %s894, %s895
      %s897 = smul.addr %s896, 4
      %s898 = scalar_lea.vmem %s7, %s897
      %s899 = smul.u32 16, %s26
      %p900 = scmp.lt.s32.totalorder %s25, 1
      %s901 = scalar_select %p900, %s25, 1
      %p902 = scmp.lt.s32.totalorder %s899, 15
      %s903 = scalar_select %p902, %s899, 15
      %s904 = smul.addr %s901, 16
      %s905 = sadd.s32 %s903, %s904
      %s906 = smul.addr %s905, 4
      %s907 = scalar_lea.vmem %s8, %s906
      %s908 = smul.u32 16, %s26
      %p909 = scmp.lt.s32.totalorder %s25, 1
      %s910 = scalar_select %p909, %s25, 1
      %p911 = scmp.lt.s32.totalorder %s908, 15
      %s912 = scalar_select %p911, %s908, 15
      %s913 = smul.addr %s910, 16
      %s914 = sadd.s32 %s912, %s913
      %s915 = smul.addr %s914, 4
      %s916 = scalar_lea.vmem %s9, %s915
      // Predicated region
      $region49: #{encoder_forward.3} parent=47 // pred_check
        %p917 = pneg %p207
      $region50: #{encoder_forward.3} parent=47 // pred_check_branch
        %919 = sbr.rel (%p917) target = $region52
      $region51: #{encoder_forward.3} parent=47 // pred_region
        %s920 = smul.u32 16, %s26
      $region52: #{encoder_forward.3} parent=47 // pred_fallthru
        _
      // Predicated region
      $region53: #{encoder_forward.3} parent=47 // pred_check
        %p921 = pneg %p235
      $region54: #{encoder_forward.3} parent=47 // pred_check_branch
        %923 = sbr.rel (%p921) target = $region56
      $region55: #{encoder_forward.3} parent=47 // pred_region
        %s924 = smul.u32 16, %s26
      $region56: #{encoder_forward.3} parent=47 // pred_fallthru
        _
      // Predicated region
      $region57: #{encoder_forward.3} parent=47 // pred_check
        %p925 = pneg %p263
      $region58: #{encoder_forward.3} parent=47 // pred_check_branch
        %927 = sbr.rel (%p925) target = $region60
      $region59: #{encoder_forward.3} parent=47 // pred_region
        %s928 = smul.u32 16, %s26
      $region60: #{encoder_forward.3} parent=47 // pred_fallthru
        _
    $region48: #{encoder_forward.3} parent=5 // pred_fallthru
      _
    %p929 = scmp.le.s32.totalorder 2, %s16
    // Predicated region
    $region61: #{encoder_forward.3} parent=5 // pred_check
      %p930 = pneg %p929
    $region62: #{encoder_forward.3} parent=5 // pred_check_branch
      %932 = sbr.rel (%p930) target = $region64
    $region63: #{encoder_forward.3} parent=5 // pred_region
      %s933 = ssub.s32 %s16, 2
      // Predicated region
      $region65: #{encoder_forward.3} parent=63 // pred_check
        %p934 = pneg %p213
      $region66: #{encoder_forward.3} parent=63 // pred_check_branch
        %936 = sbr.rel (%p934) target = $region68
      $region67: #{encoder_forward.3} parent=63 // pred_region
        %s937 = smul.u32 16, %s28
        %p938 = scmp.lt.s32.totalorder %s27, 1
        %s939 = scalar_select %p938, %s27, 1
        %p940 = scmp.lt.s32.totalorder %s937, 15
        %s941 = scalar_select %p940, %s937, 15
        %s942 = smul.addr %s939, 16
        %s943 = sadd.s32 %s941, %s942
        %s944 = smul.addr %s943, 4
        %s945 = scalar_lea.vmem %s7, %s944
      $region68: #{encoder_forward.3} parent=63 // pred_fallthru
        _
      // Predicated region
      $region69: #{encoder_forward.3} parent=63 // pred_check
        %p946 = pneg %p241
      $region70: #{encoder_forward.3} parent=63 // pred_check_branch
        %948 = sbr.rel (%p946) target = $region72
      $region71: #{encoder_forward.3} parent=63 // pred_region
        %s949 = smul.u32 16, %s28
        %p950 = scmp.lt.s32.totalorder %s27, 1
        %s951 = scalar_select %p950, %s27, 1
        %p952 = scmp.lt.s32.totalorder %s949, 15
        %s953 = scalar_select %p952, %s949, 15
        %s954 = smul.addr %s951, 16
        %s955 = sadd.s32 %s953, %s954
        %s956 = smul.addr %s955, 4
        %s957 = scalar_lea.vmem %s8, %s956
      $region72: #{encoder_forward.3} parent=63 // pred_fallthru
        _
      // Predicated region
      $region73: #{encoder_forward.3} parent=63 // pred_check
        %p958 = pneg %p269
      $region74: #{encoder_forward.3} parent=63 // pred_check_branch
        %960 = sbr.rel (%p958) target = $region76
      $region75: #{encoder_forward.3} parent=63 // pred_region
        %s961 = smul.u32 16, %s28
        %p962 = scmp.lt.s32.totalorder %s27, 1
        %s963 = scalar_select %p962, %s27, 1
        %p964 = scmp.lt.s32.totalorder %s961, 15
        %s965 = scalar_select %p964, %s961, 15
        %s966 = smul.addr %s963, 16
        %s967 = sadd.s32 %s965, %s966
        %s968 = smul.addr %s967, 4
        %s969 = scalar_lea.vmem %s9, %s968
      $region76: #{encoder_forward.3} parent=63 // pred_fallthru
        _
    $region64: #{encoder_forward.3} parent=5 // pred_fallthru
      _
  $region6: #{encoder_forward.3} parent=0 // loop_footer
    %s20 = sadd.s32 1, %s16
  $region7: #{encoder_forward.3} parent=0 // loop_footer_branch
    %15 = sbr.rel target = $region3
  $region8: #{encoder_forward.3} parent=0 // loop_exit
    _

// kernel: encoder_forward.5
$region0: #{encoder_forward.5}
  #allocation0 [shape = 'u32[]', space=smem, size = 0x4, offset = 0x4, fixed_abs, tag = 'smem constant byte address 0x4 - core index']
  #allocation1 [shape = 'u32[72,128]{1,0:T(1,128)}', space=vmem, size = 0x9000, scoped, tag = 'internal scratch']
  #allocation2 [shape = 'f32[128,128]{1,0:T(8,128)}', space=vmem, size = 0x10000, scoped, tag = 'scratch operand']
  %s0 = inlined_call_operand.vmem [shape: bf16[2,128,128], index: 0, kind: input, shape index: {}]
  %s1 = inlined_call_operand.vmem [shape: bf16[128,768], index: 1, kind: input, shape index: {}]
  %s2 = inlined_call_operand.vmem [shape: f32[1,768], index: 2, kind: input, shape index: {}]
  %s3 = inlined_call_operand.vmem [shape: bf16[768,128], index: 3, kind: input, shape index: {}]
  %s4 = inlined_call_operand.vmem [shape: f32[1,128], index: 4, kind: input, shape index: {}]
  %s5 = inlined_call_operand.vmem [shape: f32[1,128], index: 5, kind: input, shape index: {}]
  %s6 = inlined_call_operand.vmem [shape: f32[1,128], index: 6, kind: input, shape index: {}]
  %s7 = inlined_call_operand.hbm [shape: f32[2,128,128], index: 7, kind: output, shape index: {}]
  %s8 = sld [smem:[#allocation0]]
  $region107: #{encoder_forward.5} parent=0
    _
  %s10 = ssub.s32 1, %s8
  %s11 = scalar_select 0, %s10, %s8
  $region1: #{encoder_forward.5} parent=0
    #allocation3 [shape = 'u8[131072]{0}', space=vmem, size = 0x20000, scoped, tag = 'input window, operand 1']
    #allocation4 [shape = 'u8[131072]{0}', space=vmem, size = 0x20000, scoped, tag = 'output window, operand 0']
    #allocation5 [shape = 's32[2]{0}', space=sflag, size = 0x8, scoped, tag = 'scoped memory for encoder_forward.5']
    %12 = vsyncpa [#allocation5], 0
    %s13 = scalar_lea.sflag [#allocation5], 1
    %14 = vsyncpa %s13, 0
    loop: start=0, step=1, limit=8
    $region2: #{encoder_forward.5} parent=1 // loop_pre_header
      _
    $region3: #{encoder_forward.5} parent=1 // loop_header
      %s16 = sphi 0, %s20
      %p17 = scmp.ge.s32.totalorder %s16, 8
      %s23 = sphi 0, %s42
      %s24 = sphi 0, %s38
      %s25 = sphi 0, %s34
      %s26 = sphi 0, %s23
      %s27 = sphi 0, %s24
      %s28 = sphi 0, %s25
      %s29 = sphi 0, %s26
      %s30 = sphi 0, %s27
      %s31 = sphi 0, %s28
      %s47 = sphi 0, %s49
      %s50 = sphi 0, %s47
      %s51 = sphi 0, %s50
      %s67 = sphi 0, %s51
      %s73 = sphi 0, %s75
      %s76 = sphi 0, %s73
      %s77 = sphi 0, %s76
      %s93 = sphi 0, %s77
      %s99 = sphi 0, %s101
      %s102 = sphi 0, %s99
      %s103 = sphi 0, %s102
      %s119 = sphi 0, %s103
      %s125 = sphi 0, %s127
      %s128 = sphi 0, %s125
      %s129 = sphi 0, %s128
      %s145 = sphi 0, %s129
      %s149 = sphi 0, %s149
      %s151 = sphi 0, %s149
      %s152 = sphi 0, %s151
      %s166 = sphi 0, %s152
      %s170 = sphi 0, %s170
      %s172 = sphi 0, %s170
      %s173 = sphi 0, %s172
      %s187 = sphi 0, %s173
      %s191 = sphi 0, %s191
      %s193 = sphi 0, %s191
      %s194 = sphi 0, %s193
      %s208 = sphi 0, %s194
      %s216 = sphi 0, %s218
      %s219 = sphi 0, %s216
      %s220 = sphi 0, %s219
      %s236 = sphi 0, %s220
    $region4: #{encoder_forward.5} parent=1 // loop_header_branch
      %19 = sbr.rel (%p17) target = $region8
    $region5: #{encoder_forward.5} parent=1 // loop_body
      %s21 = ssub.s32 %s16, 1
      %s22 = ssub.s32 %s16, 2
      %s32 = sadd.s32 1, %s25
      %p33 = scmp.ge.s32.totalorder %s32, 3
      %s34 = scalar_select %p33, 0, %s32
      %s35 = sadd.s32 1, %s24
      %s36 = scalar_select %p33, %s35, %s24
      %p37 = scmp.ge.s32.totalorder %s36, 1
      %s38 = scalar_select %p37, 0, %s36
      %s39 = sadd.s32 1, %s23
      %s40 = scalar_select %p37, %s39, %s23
      %p41 = scmp.ge.s32.totalorder %s40, 2
      %s42 = scalar_select %p41, 0, %s40
      %s43 = ssub.s32 %s23, %s42
      %s44 = ssub.s32 %s24, %s38
      %s45 = sor.u32 %s43, %s44
      %p46 = scmp.eq.s32.totalorder %s45, 0
      %s48 = sadd.s32 %s47, 1
      %s49 = scalar_select %p46, %s47, %s48
      %p52 = pneg %p46
      %p53 = scmp.eq.s32.totalorder %s16, 5
      %p54 = por %p52, %p53
      %p55 = scmp.ne.s32.totalorder %s47, %s50
      %p56 = scmp.eq.s32.totalorder %s16, 0
      %p57 = por %p55, %p56
      %p58 = scmp.ne.s32.totalorder %s47, %s50
      %p59 = scmp.eq.s32.totalorder %s21, 5
      %p60 = por %p58, %p59
      %p61 = scmp.ne.s32.totalorder %s50, %s51
      %p62 = scmp.eq.s32.totalorder %s21, 0
      %p63 = por %p61, %p62
      %p64 = scmp.ne.s32.totalorder %s50, %s51
      %p65 = scmp.eq.s32.totalorder %s22, 5
      %p66 = por %p64, %p65
      %p68 = scmp.ne.s32.totalorder %s51, %s67
      %p69 = scmp.eq.s32.totalorder %s22, 0
      %p70 = por %p68, %p69
      %s71 = ssub.s32 %s25, %s34
      %p72 = scmp.eq.s32.totalorder %s71, 0
      %s74 = sadd.s32 %s73, 1
      %s75 = scalar_select %p72, %s73, %s74
      %p78 = pneg %p72
      %p79 = scmp.eq.s32.totalorder %s16, 5
      %p80 = por %p78, %p79
      %p81 = scmp.ne.s32.totalorder %s73, %s76
      %p82 = scmp.eq.s32.totalorder %s16, 0
      %p83 = por %p81, %p82
      %p84 = scmp.ne.s32.totalorder %s73, %s76
      %p85 = scmp.eq.s32.totalorder %s21, 5
      %p86 = por %p84, %p85
      %p87 = scmp.ne.s32.totalorder %s76, %s77
      %p88 = scmp.eq.s32.totalorder %s21, 0
      %p89 = por %p87, %p88
      %p90 = scmp.ne.s32.totalorder %s76, %s77
      %p91 = scmp.eq.s32.totalorder %s22, 5
      %p92 = por %p90, %p91
      %p94 = scmp.ne.s32.totalorder %s77, %s93
      %p95 = scmp.eq.s32.totalorder %s22, 0
      %p96 = por %p94, %p95
      %s97 = ssub.s32 %s25, %s34
      %p98 = scmp.eq.s32.totalorder %s97, 0
      %s100 = sadd.s32 %s99, 1
      %s101 = scalar_select %p98, %s99, %s100
      %p104 = pneg %p98
      %p105 = scmp.eq.s32.totalorder %s16, 5
      %p106 = por %p104, %p105
      %p107 = scmp.ne.s32.totalorder %s99, %s102
      %p108 = scmp.eq.s32.totalorder %s16, 0
      %p109 = por %p107, %p108
      %p110 = scmp.ne.s32.totalorder %s99, %s102
      %p111 = scmp.eq.s32.totalorder %s21, 5
      %p112 = por %p110, %p111
      %p113 = scmp.ne.s32.totalorder %s102, %s103
      %p114 = scmp.eq.s32.totalorder %s21, 0
      %p115 = por %p113, %p114
      %p116 = scmp.ne.s32.totalorder %s102, %s103
      %p117 = scmp.eq.s32.totalorder %s22, 5
      %p118 = por %p116, %p117
      %p120 = scmp.ne.s32.totalorder %s103, %s119
      %p121 = scmp.eq.s32.totalorder %s22, 0
      %p122 = por %p120, %p121
      %s123 = ssub.s32 %s25, %s34
      %p124 = scmp.eq.s32.totalorder %s123, 0
      %s126 = sadd.s32 %s125, 1
      %s127 = scalar_select %p124, %s125, %s126
      %p130 = pneg %p124
      %p131 = scmp.eq.s32.totalorder %s16, 5
      %p132 = por %p130, %p131
      %p133 = scmp.ne.s32.totalorder %s125, %s128
      %p134 = scmp.eq.s32.totalorder %s16, 0
      %p135 = por %p133, %p134
      %p136 = scmp.ne.s32.totalorder %s125, %s128
      %p137 = scmp.eq.s32.totalorder %s21, 5
      %p138 = por %p136, %p137
      %p139 = scmp.ne.s32.totalorder %s128, %s129
      %p140 = scmp.eq.s32.totalorder %s21, 0
      %p141 = por %p139, %p140
      %p142 = scmp.ne.s32.totalorder %s128, %s129
      %p143 = scmp.eq.s32.totalorder %s22, 5
      %p144 = por %p142, %p143
      %p146 = scmp.ne.s32.totalorder %s129, %s145
      %p147 = scmp.eq.s32.totalorder %s22, 0
      %p148 = por %p146, %p147
      %s150 = sadd.s32 %s149, 1
      %p153 = scmp.eq.s32.totalorder %s16, 5
      %p154 = scmp.ne.s32.totalorder %s149, %s151
      %p155 = scmp.eq.s32.totalorder %s16, 0
      %p156 = por %p154, %p155
      %p157 = scmp.ne.s32.totalorder %s149, %s151
      %p158 = scmp.eq.s32.totalorder %s21, 5
      %p159 = por %p157, %p158
      %p160 = scmp.ne.s32.totalorder %s151, %s152
      %p161 = scmp.eq.s32.totalorder %s21, 0
      %p162 = por %p160, %p161
      %p163 = scmp.ne.s32.totalorder %s151, %s152
      %p164 = scmp.eq.s32.totalorder %s22, 5
      %p165 = por %p163, %p164
      %p167 = scmp.ne.s32.totalorder %s152, %s166
      %p168 = scmp.eq.s32.totalorder %s22, 0
      %p169 = por %p167, %p168
      %s171 = sadd.s32 %s170, 1
      %p174 = scmp.eq.s32.totalorder %s16, 5
      %p175 = scmp.ne.s32.totalorder %s170, %s172
      %p176 = scmp.eq.s32.totalorder %s16, 0
      %p177 = por %p175, %p176
      %p178 = scmp.ne.s32.totalorder %s170, %s172
      %p179 = scmp.eq.s32.totalorder %s21, 5
      %p180 = por %p178, %p179
      %p181 = scmp.ne.s32.totalorder %s172, %s173
      %p182 = scmp.eq.s32.totalorder %s21, 0
      %p183 = por %p181, %p182
      %p184 = scmp.ne.s32.totalorder %s172, %s173
      %p185 = scmp.eq.s32.totalorder %s22, 5
      %p186 = por %p184, %p185
      %p188 = scmp.ne.s32.totalorder %s173, %s187
      %p189 = scmp.eq.s32.totalorder %s22, 0
      %p190 = por %p188, %p189
      %s192 = sadd.s32 %s191, 1
      %p195 = scmp.eq.s32.totalorder %s16, 5
      %p196 = scmp.ne.s32.totalorder %s191, %s193
      %p197 = scmp.eq.s32.totalorder %s16, 0
      %p198 = por %p196, %p197
      %p199 = scmp.ne.s32.totalorder %s191, %s193
      %p200 = scmp.eq.s32.totalorder %s21, 5
      %p201 = por %p199, %p200
      %p202 = scmp.ne.s32.totalorder %s193, %s194
      %p203 = scmp.eq.s32.totalorder %s21, 0
      %p204 = por %p202, %p203
      %p205 = scmp.ne.s32.totalorder %s193, %s194
      %p206 = scmp.eq.s32.totalorder %s22, 5
      %p207 = por %p205, %p206
      %p209 = scmp.ne.s32.totalorder %s194, %s208
      %p210 = scmp.eq.s32.totalorder %s22, 0
      %p211 = por %p209, %p210
      %s212 = ssub.s32 %s23, %s42
      %s213 = ssub.s32 %s24, %s38
      %s214 = sor.u32 %s212, %s213
      %p215 = scmp.eq.s32.totalorder %s214, 0
      %s217 = sadd.s32 %s216, 1
      %s218 = scalar_select %p215, %s216, %s217
      %p221 = pneg %p215
      %p222 = scmp.eq.s32.totalorder %s16, 5
      %p223 = por %p221, %p222
      %p224 = scmp.ne.s32.totalorder %s216, %s219
      %p225 = scmp.eq.s32.totalorder %s16, 0
      %p226 = por %p224, %p225
      %p227 = scmp.ne.s32.totalorder %s216, %s219
      %p228 = scmp.eq.s32.totalorder %s21, 5
      %p229 = por %p227, %p228
      %p230 = scmp.ne.s32.totalorder %s219, %s220
      %p231 = scmp.eq.s32.totalorder %s21, 0
      %p232 = por %p230, %p231
      %p233 = scmp.ne.s32.totalorder %s219, %s220
      %p234 = scmp.eq.s32.totalorder %s22, 5
      %p235 = por %p233, %p234
      %p237 = scmp.ne.s32.totalorder %s220, %s236
      %p238 = scmp.eq.s32.totalorder %s22, 0
      %p239 = por %p237, %p238
      %p240 = scmp.le.s32.totalorder 1, %s16
      %p241 = scmp.lt.s32.totalorder %s16, 7
      %p242 = pnand %p240, %p241
      %p243 = pneg %p242
      // Predicated region
      $region9: #{encoder_forward.5} parent=5 // pred_check
        _
      $region10: #{encoder_forward.5} parent=5 // pred_check_branch
        %245 = sbr.rel (%p242) target = $region12
      $region11: #{encoder_forward.5} parent=5 // pred_region
        %s246 = ssub.s32 %s16, 1
        // Predicated region
        $region13: #{encoder_forward.5} parent=11 // pred_check
          %p247 = pneg %p162
        $region14: #{encoder_forward.5} parent=11 // pred_check_branch
          %249 = sbr.rel (%p247) target = $region16
        $region15: #{encoder_forward.5} parent=11 // pred_region
          _
        $region16: #{encoder_forward.5} parent=11 // pred_fallthru
          _
        // Predicated region
        $region17: #{encoder_forward.5} parent=11 // pred_check
          %p250 = pneg %p183
        $region18: #{encoder_forward.5} parent=11 // pred_check_branch
          %252 = sbr.rel (%p250) target = $region20
        $region19: #{encoder_forward.5} parent=11 // pred_region
          _
        $region20: #{encoder_forward.5} parent=11 // pred_fallthru
          _
        // Predicated region
        $region21: #{encoder_forward.5} parent=11 // pred_check
          %p253 = pneg %p204
        $region22: #{encoder_forward.5} parent=11 // pred_check_branch
          %255 = sbr.rel (%p253) target = $region24
        $region23: #{encoder_forward.5} parent=11 // pred_region
          _
        $region24: #{encoder_forward.5} parent=11 // pred_fallthru
          _
      $region12: #{encoder_forward.5} parent=5 // pred_fallthru
        _
      %p256 = scmp.lt.s32.totalorder %s16, 6
      // Predicated region
      $region25: #{encoder_forward.5} parent=5 // pred_check
        %p257 = pneg %p256
      $region26: #{encoder_forward.5} parent=5 // pred_check_branch
        %259 = sbr.rel (%p257) target = $region28
      $region27: #{encoder_forward.5} parent=5 // pred_region
        // Predicated region
        $region29: #{encoder_forward.5} parent=27 // pred_check
          %p260 = pneg %p57
        $region30: #{encoder_forward.5} parent=27 // pred_check_branch
          %262 = sbr.rel (%p260) target = $region32
        $region31: #{encoder_forward.5} parent=27 // pred_region
          %s263 = smul.u32 16, %s24
          %p264 = scmp.lt.s32.totalorder %s23, 1
          %s265 = scalar_select %p264, %s23, 1
          %p266 = scmp.lt.s32.totalorder %s263, 15
          %s267 = scalar_select %p266, %s263, 15
          %s268 = smul.addr %s265, 16
          %s269 = sadd.s32 %s267, %s268
          %s270 = smul.addr %s269, 4
          %s271 = scalar_lea.vmem %s0, %s270
          %s272 = smul.u32 16, %s24
        $region32: #{encoder_forward.5} parent=27 // pred_fallthru
          _
        // Predicated region
        $region33: #{encoder_forward.5} parent=27 // pred_check
          %p273 = pneg %p83
        $region34: #{encoder_forward.5} parent=27 // pred_check_branch
          %275 = sbr.rel (%p273) target = $region36
        $region35: #{encoder_forward.5} parent=27 // pred_region
          %s276 = sand.u32 %s73, 1
          %s277 = sand.u32 %s73, 1
          %s278 = smul.addr %s277, 128
          %s279 = scalar_lea.vmem [#allocation3], %s278
          %s280 = smul.u32 2, %s25
          %s281 = smul.addr %s280, 4
          %s282 = scalar_lea.vmem %s1, %s281
          // Predicated region
          $region37: #{encoder_forward.5} parent=35 // pred_check
            _
          $region38: #{encoder_forward.5} parent=35 // pred_check_branch
            %284 = sbr.rel (0) target = $region40
          $region39: #{encoder_forward.5} parent=35 // pred_region
            // Predicated region
            $region41: #{encoder_forward.5} parent=39 // pred_check
              _
            $region42: #{encoder_forward.5} parent=39 // pred_check_branch
              %286 = sbr.rel (0) target = $region44
            $region43: #{encoder_forward.5} parent=39 // pred_region
              // Predicated region
              $region56: #{encoder_forward.5} parent=43 // pred_check
                _
              $region57: #{encoder_forward.5} parent=43 // pred_check_branch
                %332 = sbr.rel (0) target = $region59
              $region58: #{encoder_forward.5} parent=43 // pred_region
                loop: start=0, step=1, limit=1
                $region60: #{encoder_forward.5} parent=58 // loop_pre_header
                  _
                $region61: #{encoder_forward.5} parent=58 // loop_header
                  %s334 = sphi 0, %s338
                  %p335 = scmp.ge.s32.totalorder %s334, 1
                  %s339 = sphi %s282, %s282
                  %s340 = sphi %s279, %s279
                $region62: #{encoder_forward.5} parent=58 // loop_header_branch
                  %337 = sbr.rel (%p335) target = $region66
                $region63: #{encoder_forward.5} parent=58 // loop_body
                  %v341 = vld [vmem:[%s339] sm:$0xff]
                  %342 = vst [vmem:[%s340] sm:$0xff] %v341
                  %v343 = vld [vmem:[%s339 + $0x18] sm:$0xff]
                  %344 = vst [vmem:[%s340 + $0x8] sm:$0xff] %v343
                  %v345 = vld [vmem:[%s339 + $0x30] sm:$0xff]
                  %346 = vst [vmem:[%s340 + $0x10] sm:$0xff] %v345
                  %v347 = vld [vmem:[%s339 + $0x48] sm:$0xff]
                  %348 = vst [vmem:[%s340 + $0x18] sm:$0xff] %v347
                  %v349 = vld [vmem:[%s339 + $0x60] sm:$0xff]
                  %350 = vst [vmem:[%s340 + $0x20] sm:$0xff] %v349
                  %v351 = vld [vmem:[%s339 + $0x78] sm:$0xff]
                  %352 = vst [vmem:[%s340 + $0x28] sm:$0xff] %v351
                  %v353 = vld [vmem:[%s339 + $0x90] sm:$0xff]
                  %354 = vst [vmem:[%s340 + $0x30] sm:$0xff] %v353
                  %v355 = vld [vmem:[%s339 + $0xa8] sm:$0xff]
                  %356 = vst [vmem:[%s340 + $0x38] sm:$0xff] %v355
                  %v357 = vld [vmem:[%s339 + $0xc0] sm:$0xff]
                  %358 = vst [vmem:[%s340 + $0x40] sm:$0xff] %v357
                  %v359 = vld [vmem:[%s339 + $0xd8] sm:$0xff]
                  %360 = vst [vmem:[%s340 + $0x48] sm:$0xff] %v359
                  %v361 = vld [vmem:[%s339 + $0xf0] sm:$0xff]
                  %362 = vst [vmem:[%s340 + $0x50] sm:$0xff] %v361
                  %v363 = vld [vmem:[%s339 + $0x108] sm:$0xff]
                  %364 = vst [vmem:[%s340 + $0x58] sm:$0xff] %v363
                  %v365 = vld [vmem:[%s339 + $0x120] sm:$0xff]
                  %366 = vst [vmem:[%s340 + $0x60] sm:$0xff] %v365
                  %v367 = vld [vmem:[%s339 + $0x138] sm:$0xff]
                  %368 = vst [vmem:[%s340 + $0x68] sm:$0xff] %v367
                  %v369 = vld [vmem:[%s339 + $0x150] sm:$0xff]
                  %370 = vst [vmem:[%s340 + $0x70] sm:$0xff] %v369
                  %v371 = vld [vmem:[%s339 + $0x168] sm:$0xff]
                  %372 = vst [vmem:[%s340 + $0x78] sm:$0xff] %v371
                $region64: #{encoder_forward.5} parent=58 // loop_footer
                  %s338 = sadd.s32 1, %s334
                $region65: #{encoder_forward.5} parent=58 // loop_footer_branch
                  %333 = sbr.rel target = $region61
                $region66: #{encoder_forward.5} parent=58 // loop_exit
                  _
              $region59: #{encoder_forward.5} parent=43 // pred_fallthru
                _
              // Predicated region
              $region67: #{encoder_forward.5} parent=43 // pred_check
                _
              $region68: #{encoder_forward.5} parent=43 // pred_check_branch
                %374 = sbr.rel target = $region70
              $region69: #{encoder_forward.5} parent=43 // pred_region
                _
              $region70: #{encoder_forward.5} parent=43 // pred_fallthru
                _
            $region44: #{encoder_forward.5} parent=39 // pred_fallthru
              _
            // Predicated region
            $region45: #{encoder_forward.5} parent=39 // pred_check
              _
            $region46: #{encoder_forward.5} parent=39 // pred_check_branch
              %288 = sbr.rel target = $region48
            $region47: #{encoder_forward.5} parent=39 // pred_region
              %s290 = ssub.s32 256, 1
              loop: start=0, step=1, limit=1
              $region49: #{encoder_forward.5} parent=47 // loop_pre_header
                _
              $region50: #{encoder_forward.5} parent=47 // loop_header
                %s292 = sphi 0, %s296
                %p293 = scmp.ge.s32.totalorder %s292, 1
                %s297 = sphi %s282, %s282
                %s298 = sphi %s279, %s279
              $region51: #{encoder_forward.5} parent=47 // loop_header_branch
                %295 = sbr.rel (%p293) target = $region55
              $region52: #{encoder_forward.5} parent=47 // loop_body
                %v299 = vld [vmem:[%s297] sm:%s290]
                %300 = vst [vmem:[%s298] sm:%s290] %v299
                %v301 = vld [vmem:[%s297 + $0x18] sm:%s290]
                %302 = vst [vmem:[%s298 + $0x8] sm:%s290] %v301
                %v303 = vld [vmem:[%s297 + $0x30] sm:%s290]
                %304 = vst [vmem:[%s298 + $0x10] sm:%s290] %v303
                %v305 = vld [vmem:[%s297 + $0x48] sm:%s290]
                %306 = vst [vmem:[%s298 + $0x18] sm:%s290] %v305
                %v307 = vld [vmem:[%s297 + $0x60] sm:%s290]
                %308 = vst [vmem:[%s298 + $0x20] sm:%s290] %v307
                %v309 = vld [vmem:[%s297 + $0x78] sm:%s290]
                %310 = vst [vmem:[%s298 + $0x28] sm:%s290] %v309
                %v311 = vld [vmem:[%s297 + $0x90] sm:%s290]
                %312 = vst [vmem:[%s298 + $0x30] sm:%s290] %v311
                %v313 = vld [vmem:[%s297 + $0xa8] sm:%s290]
                %314 = vst [vmem:[%s298 + $0x38] sm:%s290] %v313
                %v315 = vld [vmem:[%s297 + $0xc0] sm:%s290]
                %316 = vst [vmem:[%s298 + $0x40] sm:%s290] %v315
                %v317 = vld [vmem:[%s297 + $0xd8] sm:%s290]
                %318 = vst [vmem:[%s298 + $0x48] sm:%s290] %v317
                %v319 = vld [vmem:[%s297 + $0xf0] sm:%s290]
                %320 = vst [vmem:[%s298 + $0x50] sm:%s290] %v319
                %v321 = vld [vmem:[%s297 + $0x108] sm:%s290]
                %322 = vst [vmem:[%s298 + $0x58] sm:%s290] %v321
                %v323 = vld [vmem:[%s297 + $0x120] sm:%s290]
                %324 = vst [vmem:[%s298 + $0x60] sm:%s290] %v323
                %v325 = vld [vmem:[%s297 + $0x138] sm:%s290]
                %326 = vst [vmem:[%s298 + $0x68] sm:%s290] %v325
                %v327 = vld [vmem:[%s297 + $0x150] sm:%s290]
                %328 = vst [vmem:[%s298 + $0x70] sm:%s290] %v327
                %v329 = vld [vmem:[%s297 + $0x168] sm:%s290]
                %330 = vst [vmem:[%s298 + $0x78] sm:%s290] %v329
              $region53: #{encoder_forward.5} parent=47 // loop_footer
                %s296 = sadd.s32 1, %s292
              $region54: #{encoder_forward.5} parent=47 // loop_footer_branch
                %291 = sbr.rel target = $region50
              $region55: #{encoder_forward.5} parent=47 // loop_exit
                _
            $region48: #{encoder_forward.5} parent=39 // pred_fallthru
              _
          $region40: #{encoder_forward.5} parent=35 // pred_fallthru
            _
          %375 = vnop
        $region36: #{encoder_forward.5} parent=27 // pred_fallthru
          _
        // Predicated region
        $region71: #{encoder_forward.5} parent=27 // pred_check
          %p376 = pneg %p109
        $region72: #{encoder_forward.5} parent=27 // pred_check_branch
          %378 = sbr.rel (%p376) target = $region74
        $region73: #{encoder_forward.5} parent=27 // pred_region
          %s379 = smul.u32 2, %s25
          %p380 = scmp.lt.s32.totalorder %s379, 5
          %s381 = scalar_select %p380, %s379, 5
          %s382 = scalar_lea.vmem %s2, %s381
          %s383 = smul.u32 2, %s25
        $region74: #{encoder_forward.5} parent=27 // pred_fallthru
          _
        // Predicated region
        $region75: #{encoder_forward.5} parent=27 // pred_check
          %p384 = pneg %p135
        $region76: #{encoder_forward.5} parent=27 // pred_check_branch
          %386 = sbr.rel (%p384) target = $region78
        $region77: #{encoder_forward.5} parent=27 // pred_region
          %s387 = smul.u32 32, %s25
          %p388 = scmp.lt.s32.totalorder %s387, 95
          %s389 = scalar_select %p388, %s387, 95
          %s390 = smul.addr %s389, 4
          %s391 = scalar_lea.vmem %s3, %s390
          %s392 = smul.u32 32, %s25
        $region78: #{encoder_forward.5} parent=27 // pred_fallthru
          _
      $region28: #{encoder_forward.5} parent=5 // pred_fallthru
        _
      %p393 = scmp.le.s32.totalorder 1, %s16
      %p394 = scmp.lt.s32.totalorder %s16, 7
      %p395 = pnand %p393, %p394
      %p396 = pneg %p395
      // Predicated region
      $region79: #{encoder_forward.5} parent=5 // pred_check
        _
      $region80: #{encoder_forward.5} parent=5 // pred_check_branch
        %398 = sbr.rel (%p395) target = $region82
      $region81: #{encoder_forward.5} parent=5 // pred_region
        %s399 = ssub.s32 %s16, 1
        %s400 = sand.u32 %s76, 1
        %s401 = sand.u32 %s76, 1
        %s402 = smul.addr %s401, 128
        %s403 = scalar_lea.vmem [#allocation3], %s402
        // Predicated region
        $region83: #{encoder_forward.5} parent=81 // pred_check
          %p404 = pneg %p89
        $region84: #{encoder_forward.5} parent=81 // pred_check_branch
          %406 = sbr.rel (%p404) target = $region86
        $region85: #{encoder_forward.5} parent=81 // pred_region
          _
        $region86: #{encoder_forward.5} parent=81 // pred_fallthru
          _
        %s407 = smul.u32 16, %s27
        %p408 = scmp.lt.s32.totalorder %s26, 1
        %s409 = scalar_select %p408, %s26, 1
        %p410 = scmp.lt.s32.totalorder %s407, 15
        %s411 = scalar_select %p410, %s407, 15
        %s412 = smul.addr %s409, 16
        %s413 = sadd.s32 %s411, %s412
        %s414 = smul.addr %s413, 4
        %s415 = scalar_lea.vmem %s0, %s414
        %p416 = pneg %p63
        %p417 = pneg %p60
        %s418 = sand.u32 %s76, 1
        %s419 = sand.u32 %s76, 1
        %s420 = smul.addr %s419, 128
        %s421 = scalar_lea.vmem [#allocation3], %s420
        %p422 = pneg %p89
        %p423 = pneg %p86
        %s424 = smul.u32 2, %s28
        %p425 = scmp.lt.s32.totalorder %s424, 5
        %s426 = scalar_select %p425, %s424, 5
        %s427 = scalar_lea.vmem %s2, %s426
        %p428 = pneg %p115
        %p429 = pneg %p112
        %s430 = smul.u32 32, %s28
        %p431 = scmp.lt.s32.totalorder %s430, 95
        %s432 = scalar_select %p431, %s430, 95
        %s433 = smul.addr %s432, 4
        %s434 = scalar_lea.vmem %s3, %s433
        %p435 = pneg %p141
        %p436 = pneg %p138
        %p437 = pneg %p162
        %p438 = pneg %p159
        %p439 = pneg %p183
        %p440 = pneg %p180
        %p441 = pneg %p204
        %p442 = pneg %p201
        %p443 = pneg %p232
        %p444 = pneg %p229
        %s445 = sand.u32 %s219, 1
        %s446 = scalar_lea.sflag [#allocation5], %s445
        %s447 = sand.u32 %s219, 1
        %s448 = smul.addr %s447, 128
        %s449 = scalar_lea.vmem [#allocation4], %s448
        %s450 = smul.u32 16, %s27
        %p451 = scmp.lt.s32.totalorder %s26, 1
        %s452 = scalar_select %p451, %s26, 1
        %p453 = scmp.lt.s32.totalorder %s450, 15
        %s454 = scalar_select %p453, %s450, 15
        %s455 = smul.addr %s452, 16
        %s456 = sadd.s32 %s454, %s455
        %s457 = smul.addr %s456, 4
        %s458 = scalar_lea.vmem %s0, %s457
        %s459 = smul.u32 16, %s27
        %s460 = smul.u32 2, %s28
        %s461 = smul.u32 2, %s28
        %p462 = scmp.lt.s32.totalorder %s461, 5
        %s463 = scalar_select %p462, %s461, 5
        %s464 = scalar_lea.vmem %s2, %s463
        %s465 = smul.u32 2, %s28
        %s466 = smul.u32 32, %s28
        %p467 = scmp.lt.s32.totalorder %s466, 95
        %s468 = scalar_select %p467, %s466, 95
        %s469 = smul.addr %s468, 4
        %s470 = scalar_lea.vmem %s3, %s469
        %s471 = smul.u32 32, %s28
        %s472 = smul.u32 16, %s27
        %p473 = scmp.eq.s32.totalorder %s28, 0
        // Predicated region
        $region87: #{encoder_forward.5} parent=81 // pred_check
          %p474 = pneg %p473
        $region88: #{encoder_forward.5} parent=81 // pred_check_branch
          %476 = sbr.rel (%p474) target = $region90
        $region89: #{encoder_forward.5} parent=81 // pred_region
          %477 = vst [vmem:[#allocation2] sm:$0xff] 0.0
          %478 = vst [vmem:[#allocation2 + $0x8] sm:$0xff] 0.0
          %479 = vst [vmem:[#allocation2 + $0x10] sm:$0xff] 0.0
          %480 = vst [vmem:[#allocation2 + $0x18] sm:$0xff] 0.0
          %481 = vst [vmem:[#allocation2 + $0x20] sm:$0xff] 0.0
          %482 = vst [vmem:[#allocation2 + $0x28] sm:$0xff] 0.0
          %483 = vst [vmem:[#allocation2 + $0x30] sm:$0xff] 0.0
          %484 = vst [vmem:[#allocation2 + $0x38] sm:$0xff] 0.0
          %485 = vst [vmem:[#allocation2 + $0x40] sm:$0xff] 0.0
          %486 = vst [vmem:[#allocation2 + $0x48] sm:$0xff] 0.0
          %487 = vst [vmem:[#allocation2 + $0x50] sm:$0xff] 0.0
          %488 = vst [vmem:[#allocation2 + $0x58] sm:$0xff] 0.0
          %489 = vst [vmem:[#allocation2 + $0x60] sm:$0xff] 0.0
          %490 = vst [vmem:[#allocation2 + $0x68] sm:$0xff] 0.0
          %491 = vst [vmem:[#allocation2 + $0x70] sm:$0xff] 0.0
          %492 = vst [vmem:[#allocation2 + $0x78] sm:$0xff] 0.0
        $region90: #{encoder_forward.5} parent=81 // pred_fallthru
          _
        %v493 = vld [vmem:[%s458] sm:$0xf]
        %v494 = vld [vmem:[%s458 + $0x4] sm:$0xf]
        %v495 = vld [vmem:[%s458 + $0x8] sm:$0xf]
        %v496 = vld [vmem:[%s458 + $0xc] sm:$0xf]
        %v497 = vld [vmem:[%s458 + $0x10] sm:$0xf]
        %v498 = vld [vmem:[%s458 + $0x14] sm:$0xf]
        %v499 = vld [vmem:[%s458 + $0x18] sm:$0xf]
        %v500 = vld [vmem:[%s458 + $0x1c] sm:$0xf]
        %v501 = vld [vmem:[%s458 + $0x20] sm:$0xf]
        %v502 = vld [vmem:[%s458 + $0x24] sm:$0xf]
        %v503 = vld [vmem:[%s458 + $0x28] sm:$0xf]
        %v504 = vld [vmem:[%s458 + $0x2c] sm:$0xf]
        %v505 = vld [vmem:[%s458 + $0x30] sm:$0xf]
        %v506 = vld [vmem:[%s458 + $0x34] sm:$0xf]
        %v507 = vld [vmem:[%s458 + $0x38] sm:$0xf]
        %v508 = vld [vmem:[%s458 + $0x3c] sm:$0xf]
        %v509 = vld [vmem:[%s403] sm:$0xff]
        %v510 = vld [vmem:[%s403 + $0x8] sm:$0xff]
        %v511 = vld [vmem:[%s403 + $0x10] sm:$0xff]
        %v512 = vld [vmem:[%s403 + $0x18] sm:$0xff]
        %v513 = vld [vmem:[%s403 + $0x20] sm:$0xff]
        %v514 = vld [vmem:[%s403 + $0x28] sm:$0xff]
        %v515 = vld [vmem:[%s403 + $0x30] sm:$0xff]
        %v516 = vld [vmem:[%s403 + $0x38] sm:$0xff]
        %v517 = vld [vmem:[%s403 + $0x40] sm:$0xff]
        %v518 = vld [vmem:[%s403 + $0x48] sm:$0xff]
        %v519 = vld [vmem:[%s403 + $0x50] sm:$0xff]
        %v520 = vld [vmem:[%s403 + $0x58] sm:$0xff]
        %v521 = vld [vmem:[%s403 + $0x60] sm:$0xff]
        %v522 = vld [vmem:[%s403 + $0x68] sm:$0xff]
        %v523 = vld [vmem:[%s403 + $0x70] sm:$0xff]
        %v524 = vld [vmem:[%s403 + $0x78] sm:$0xff]
        %v525 = vld [vmem:[%s464] sm:$0x3]
        %v527 = vperm.slane %v525, 0
        %v528 = vperm.slane %v525, 1
        %v547 = vunpack.c.l.b16 %v493
        %v548 = vunpack.c.l.b16 %v494
        %v549 = vunpack.c.l.b16 %v495
        %v550 = vunpack.c.l.b16 %v496
        %v551 = vunpack.c.l.b16 %v497
        %v552 = vunpack.c.l.b16 %v498
        %v553 = vunpack.c.l.b16 %v499
        %v554 = vunpack.c.l.b16 %v500
        %v555 = vunpack.c.l.b16 %v501
        %v556 = vunpack.c.l.b16 %v502
        %v557 = vunpack.c.l.b16 %v503
        %v558 = vunpack.c.l.b16 %v504
        %v559 = vunpack.c.l.b16 %v505
        %v560 = vunpack.c.l.b16 %v506
        %v561 = vunpack.c.l.b16 %v507
        %v562 = vunpack.c.l.b16 %v508
        %v563 = vpack.c.b16 %v548, %v547
        %v564 = vpack.c.b16 %v550, %v549
        %v565 = vpack.c.b16 %v552, %v551
        %v566 = vpack.c.b16 %v554, %v553
        %v567 = vpack.c.b16 %v556, %v555
        %v568 = vpack.c.b16 %v558, %v557
        %v569 = vpack.c.b16 %v560, %v559
        %v570 = vpack.c.b16 %v562, %v561
        %v595 = vunpack.c.l.b16 %v509
        %v596 = vunpack.c.h.b16 %v509
        %v597 = vunpack.c.l.b16 %v510
        %v598 = vunpack.c.h.b16 %v510
        %v599 = vunpack.c.l.b16 %v511
        %v600 = vunpack.c.h.b16 %v511
        %v601 = vunpack.c.l.b16 %v512
        %v602 = vunpack.c.h.b16 %v512
        %v603 = vunpack.c.l.b16 %v513
        %v604 = vunpack.c.h.b16 %v513
        %v605 = vunpack.c.l.b16 %v514
        %v606 = vunpack.c.h.b16 %v514
        %v607 = vunpack.c.l.b16 %v515
        %v608 = vunpack.c.h.b16 %v515
        %v609 = vunpack.c.l.b16 %v516
        %v610 = vunpack.c.h.b16 %v516
        %v611 = vunpack.c.l.b16 %v517
        %v612 = vunpack.c.h.b16 %v517
        %v613 = vunpack.c.l.b16 %v518
        %v614 = vunpack.c.h.b16 %v518
        %v615 = vunpack.c.l.b16 %v519
        %v616 = vunpack.c.h.b16 %v519
        %v617 = vunpack.c.l.b16 %v520
        %v618 = vunpack.c.h.b16 %v520
        %v619 = vunpack.c.l.b16 %v521
        %v620 = vunpack.c.h.b16 %v521
        %v621 = vunpack.c.l.b16 %v522
        %v622 = vunpack.c.h.b16 %v522
        %v623 = vunpack.c.l.b16 %v523
        %v624 = vunpack.c.h.b16 %v523
        %v625 = vunpack.c.l.b16 %v524
        %v626 = vunpack.c.h.b16 %v524
        %v627 = vpack.c.b16 %v597, %v595
        %v628 = vpack.c.b16 %v598, %v596
        %v629 = vpack.c.b16 %v601, %v599
        %v630 = vpack.c.b16 %v602, %v600
        %v631 = vpack.c.b16 %v605, %v603
        %v632 = vpack.c.b16 %v606, %v604
        %v633 = vpack.c.b16 %v609, %v607
        %v634 = vpack.c.b16 %v610, %v608
        %v635 = vpack.c.b16 %v613, %v611
        %v636 = vpack.c.b16 %v614, %v612
        %v637 = vpack.c.b16 %v617, %v615
        %v638 = vpack.c.b16 %v618, %v616
        %v639 = vpack.c.b16 %v621, %v619
        %v640 = vpack.c.b16 %v622, %v620
        %v641 = vpack.c.b16 %v625, %v623
        %v642 = vpack.c.b16 %v626, %v624
        %659 = vmatpush.bf16.msra.mxu0 %v641
        %660 = vmatpush.bf16.msra.mxu0 %v639
        %661 = vmatpush.bf16.msra.mxu0 %v637
        %662 = vmatpush.bf16.msra.mxu0 %v635
        %663 = vmatpush.bf16.msra.mxu0 %v633
        %664 = vmatpush.bf16.msra.mxu0 %v631
        %665 = vmatpush.bf16.msra.mxu0 %v629
        %666 = vmatpush.bf16.msra.mxu0 %v627
        %667 = vmatmul.bf16.gmra.mxu0 %v563
        %v668 = vpop.f32.mrf.mxu0
        %v669 = vadd.f32 %v527, %v668
        %v670 = vpop.f32.mrf.mxu0
        %v671 = vadd.f32 %v527, %v670
        %672 = vmatmul.bf16.gmra.mxu0 %v564
        %v673 = vpop.f32.mrf.mxu0
        %v674 = vadd.f32 %v527, %v673
        %v675 = vpop.f32.mrf.mxu0
        %v676 = vadd.f32 %v527, %v675
        %677 = vmatmul.bf16.gmra.mxu0 %v565
        %v678 = vpop.f32.mrf.mxu0
        %v679 = vadd.f32 %v527, %v678
        %v680 = vpop.f32.mrf.mxu0
        %v681 = vadd.f32 %v527, %v680
        %682 = vmatmul.bf16.gmra.mxu0 %v566
        %v683 = vpop.f32.mrf.mxu0
        %v684 = vadd.f32 %v527, %v683
        %v685 = vpop.f32.mrf.mxu0
        %v686 = vadd.f32 %v527, %v685
        %687 = vmatmul.bf16.gmra.mxu0 %v567
        %v688 = vpop.f32.mrf.mxu0
        %v689 = vadd.f32 %v527, %v688
        %v690 = vpop.f32.mrf.mxu0
        %v691 = vadd.f32 %v527, %v690
        %692 = vmatmul.bf16.gmra.mxu0 %v568
        %v693 = vpop.f32.mrf.mxu0
        %v694 = vadd.f32 %v527, %v693
        %v695 = vpop.f32.mrf.mxu0
        %v696 = vadd.f32 %v527, %v695
        %697 = vmatmul.bf16.gmra.mxu0 %v569
        %v698 = vpop.f32.mrf.mxu0
        %v699 = vadd.f32 %v527, %v698
        %v700 = vpop.f32.mrf.mxu0
        %v701 = vadd.f32 %v527, %v700
        %702 = vmatmul.bf16.gmra.mxu0 %v570
        %v703 = vpop.f32.mrf.mxu0
        %v704 = vadd.f32 %v527, %v703
        %v705 = vpop.f32.mrf.mxu0
        %v706 = vadd.f32 %v527, %v705
        %707 = vdwg.mxu0
        %708 = vmatpush.bf16.msra.mxu0 %v642
        %709 = vmatpush.bf16.msra.mxu0 %v640
        %710 = vmatpush.bf16.msra.mxu0 %v638
        %711 = vmatpush.bf16.msra.mxu0 %v636
        %712 = vmatpush.bf16.msra.mxu0 %v634
        %713 = vmatpush.bf16.msra.mxu0 %v632
        %714 = vmatpush.bf16.msra.mxu0 %v630
        %715 = vmatpush.bf16.msra.mxu0 %v628
        %716 = vmatmul.bf16.gmra.mxu0 %v563
        %v717 = vpop.f32.mrf.mxu0
        %v718 = vadd.f32 %v528, %v717
        %v719 = vpop.f32.mrf.mxu0
        %v720 = vadd.f32 %v528, %v719
        %721 = vmatmul.bf16.gmra.mxu0 %v564
        %v722 = vpop.f32.mrf.mxu0
        %v723 = vadd.f32 %v528, %v722
        %v724 = vpop.f32.mrf.mxu0
        %v725 = vadd.f32 %v528, %v724
        %726 = vmatmul.bf16.gmra.mxu0 %v565
        %v727 = vpop.f32.mrf.mxu0
        %v728 = vadd.f32 %v528, %v727
        %v729 = vpop.f32.mrf.mxu0
        %v730 = vadd.f32 %v528, %v729
        %731 = vmatmul.bf16.gmra.mxu0 %v566
        %v732 = vpop.f32.mrf.mxu0
        %v733 = vadd.f32 %v528, %v732
        %v734 = vpop.f32.mrf.mxu0
        %v735 = vadd.f32 %v528, %v734
        %736 = vmatmul.bf16.gmra.mxu0 %v567
        %v737 = vpop.f32.mrf.mxu0
        %v738 = vadd.f32 %v528, %v737
        %v739 = vpop.f32.mrf.mxu0
        %v740 = vadd.f32 %v528, %v739
        %741 = vmatmul.bf16.gmra.mxu0 %v568
        %v742 = vpop.f32.mrf.mxu0
        %v743 = vadd.f32 %v528, %v742
        %v744 = vpop.f32.mrf.mxu0
        %v745 = vadd.f32 %v528, %v744
        %746 = vmatmul.bf16.gmra.mxu0 %v569
        %v747 = vpop.f32.mrf.mxu0
        %v748 = vadd.f32 %v528, %v747
        %v749 = vpop.f32.mrf.mxu0
        %v750 = vadd.f32 %v528, %v749
        %751 = vmatmul.bf16.gmra.mxu0 %v570
        %v752 = vpop.f32.mrf.mxu0
        %v753 = vadd.f32 %v528, %v752
        %v754 = vpop.f32.mrf.mxu0
        %v755 = vadd.f32 %v528, %v754
        %756 = vdwg.mxu0
        %v757 = vmax.f32 %v669, 0.0
        %v758 = vmax.f32 %v718, 0.0
        %v759 = vmax.f32 %v671, 0.0
        %v760 = vmax.f32 %v720, 0.0
        %v761 = vmax.f32 %v674, 0.0
        %v762 = vmax.f32 %v723, 0.0
        %v763 = vmax.f32 %v676, 0.0
        %v764 = vmax.f32 %v725, 0.0
        %v765 = vmax.f32 %v679, 0.0
        %v766 = vmax.f32 %v728, 0.0
        %v767 = vmax.f32 %v681, 0.0
        %v768 = vmax.f32 %v730, 0.0
        %v769 = vmax.f32 %v684, 0.0
        %v770 = vmax.f32 %v733, 0.0
        %v771 = vmax.f32 %v686, 0.0
        %v772 = vmax.f32 %v735, 0.0
        %v773 = vmax.f32 %v689, 0.0
        %v774 = vmax.f32 %v738, 0.0
        %v775 = vmax.f32 %v691, 0.0
        %v776 = vmax.f32 %v740, 0.0
        %v777 = vmax.f32 %v694, 0.0
        %v778 = vmax.f32 %v743, 0.0
        %v779 = vmax.f32 %v696, 0.0
        %v780 = vmax.f32 %v745, 0.0
        %v781 = vmax.f32 %v699, 0.0
        %v782 = vmax.f32 %v748, 0.0
        %v783 = vmax.f32 %v701, 0.0
        %v784 = vmax.f32 %v750, 0.0
        %v785 = vmax.f32 %v704, 0.0
        %v786 = vmax.f32 %v753, 0.0
        %v787 = vmax.f32 %v706, 0.0
        %v788 = vmax.f32 %v755, 0.0
        %v789 = vld [vmem:[#allocation2] sm:$0xff]
        %v790 = vld [vmem:[#allocation2 + $0x8] sm:$0xff]
        %v791 = vld [vmem:[#allocation2 + $0x10] sm:$0xff]
        %v792 = vld [vmem:[#allocation2 + $0x18] sm:$0xff]
        %v793 = vld [vmem:[#allocation2 + $0x20] sm:$0xff]
        %v794 = vld [vmem:[#allocation2 + $0x28] sm:$0xff]
        %v795 = vld [vmem:[#allocation2 + $0x30] sm:$0xff]
        %v796 = vld [vmem:[#allocation2 + $0x38] sm:$0xff]
        %v797 = vld [vmem:[#allocation2 + $0x40] sm:$0xff]
        %v798 = vld [vmem:[#allocation2 + $0x48] sm:$0xff]
        %v799 = vld [vmem:[#allocation2 + $0x50] sm:$0xff]
        %v800 = vld [vmem:[#allocation2 + $0x58] sm:$0xff]
        %v801 = vld [vmem:[#allocation2 + $0x60] sm:$0xff]
        %v802 = vld [vmem:[#allocation2 + $0x68] sm:$0xff]
        %v803 = vld [vmem:[#allocation2 + $0x70] sm:$0xff]
        %v804 = vld [vmem:[#allocation2 + $0x78] sm:$0xff]
        %v805 = vpack.c.bf16 %v759, %v757
        %v806 = vpack.c.bf16 %v760, %v758
        %v807 = vpack.c.bf16 %v763, %v761
        %v808 = vpack.c.bf16 %v764, %v762
        %v809 = vpack.c.bf16 %v767, %v765
        %v810 = vpack.c.bf16 %v768, %v766
        %v811 = vpack.c.bf16 %v771, %v769
        %v812 = vpack.c.bf16 %v772, %v770
        %v813 = vpack.c.bf16 %v775, %v773
        %v814 = vpack.c.bf16 %v776, %v774
        %v815 = vpack.c.bf16 %v779, %v777
        %v816 = vpack.c.bf16 %v780, %v778
        %v817 = vpack.c.bf16 %v783, %v781
        %v818 = vpack.c.bf16 %v784, %v782
        %v819 = vpack.c.bf16 %v787, %v785
        %v820 = vpack.c.bf16 %v788, %v786
        %v821 = vld [vmem:[%s470] sm:$0xf]
        %v822 = vld [vmem:[%s470 + $0x4] sm:$0xf]
        %v823 = vld [vmem:[%s470 + $0x8] sm:$0xf]
        %v824 = vld [vmem:[%s470 + $0xc] sm:$0xf]
        %v825 = vld [vmem:[%s470 + $0x10] sm:$0xf]
        %v826 = vld [vmem:[%s470 + $0x14] sm:$0xf]
        %v827 = vld [vmem:[%s470 + $0x18] sm:$0xf]
        %v828 = vld [vmem:[%s470 + $0x1c] sm:$0xf]
        %v829 = vld [vmem:[%s470 + $0x20] sm:$0xf]
        %v830 = vld [vmem:[%s470 + $0x24] sm:$0xf]
        %v831 = vld [vmem:[%s470 + $0x28] sm:$0xf]
        %v832 = vld [vmem:[%s470 + $0x2c] sm:$0xf]
        %v833 = vld [vmem:[%s470 + $0x30] sm:$0xf]
        %v834 = vld [vmem:[%s470 + $0x34] sm:$0xf]
        %v835 = vld [vmem:[%s470 + $0x38] sm:$0xf]
        %v836 = vld [vmem:[%s470 + $0x3c] sm:$0xf]
        %v837 = vld [vmem:[%s470 + $0x40] sm:$0xf]
        %v838 = vld [vmem:[%s470 + $0x44] sm:$0xf]
        %v839 = vld [vmem:[%s470 + $0x48] sm:$0xf]
        %v840 = vld [vmem:[%s470 + $0x4c] sm:$0xf]
        %v841 = vld [vmem:[%s470 + $0x50] sm:$0xf]
        %v842 = vld [vmem:[%s470 + $0x54] sm:$0xf]
        %v843 = vld [vmem:[%s470 + $0x58] sm:$0xf]
        %v844 = vld [vmem:[%s470 + $0x5c] sm:$0xf]
        %v845 = vld [vmem:[%s470 + $0x60] sm:$0xf]
        %v846 = vld [vmem:[%s470 + $0x64] sm:$0xf]
        %v847 = vld [vmem:[%s470 + $0x68] sm:$0xf]
        %v848 = vld [vmem:[%s470 + $0x6c] sm:$0xf]
        %v849 = vld [vmem:[%s470 + $0x70] sm:$0xf]
        %v850 = vld [vmem:[%s470 + $0x74] sm:$0xf]
        %v851 = vld [vmem:[%s470 + $0x78] sm:$0xf]
        %v852 = vld [vmem:[%s470 + $0x7c] sm:$0xf]
        %v885 = vunpack.c.l.b16 %v821
        %v886 = vunpack.c.l.b16 %v822
        %v887 = vunpack.c.l.b16 %v823
        %v888 = vunpack.c.l.b16 %v824
        %v889 = vunpack.c.l.b16 %v825
        %v890 = vunpack.c.l.b16 %v826
        %v891 = vunpack.c.l.b16 %v827
        %v892 = vunpack.c.l.b16 %v828
        %v893 = vunpack.c.l.b16 %v829
        %v894 = vunpack.c.l.b16 %v830
        %v895 = vunpack.c.l.b16 %v831
        %v896 = vunpack.c.l.b16 %v832
        %v897 = vunpack.c.l.b16 %v833
        %v898 = vunpack.c.l.b16 %v834
        %v899 = vunpack.c.l.b16 %v835
        %v900 = vunpack.c.l.b16 %v836
        %v901 = vunpack.c.l.b16 %v837
        %v902 = vunpack.c.l.b16 %v838
        %v903 = vunpack.c.l.b16 %v839
        %v904 = vunpack.c.l.b16 %v840
        %v905 = vunpack.c.l.b16 %v841
        %v906 = vunpack.c.l.b16 %v842
        %v907 = vunpack.c.l.b16 %v843
        %v908 = vunpack.c.l.b16 %v844
        %v909 = vunpack.c.l.b16 %v845
        %v910 = vunpack.c.l.b16 %v846
        %v911 = vunpack.c.l.b16 %v847
        %v912 = vunpack.c.l.b16 %v848
        %v913 = vunpack.c.l.b16 %v849
        %v914 = vunpack.c.l.b16 %v850
        %v915 = vunpack.c.l.b16 %v851
        %v916 = vunpack.c.l.b16 %v852
        %v917 = vpack.c.b16 %v886, %v885
        %v918 = vpack.c.b16 %v888, %v887
        %v919 = vpack.c.b16 %v890, %v889
        %v920 = vpack.c.b16 %v892, %v891
        %v921 = vpack.c.b16 %v894, %v893
        %v922 = vpack.c.b16 %v896, %v895
        %v923 = vpack.c.b16 %v898, %v897
        %v924 = vpack.c.b16 %v900, %v899
        %v925 = vpack.c.b16 %v902, %v901
        %v926 = vpack.c.b16 %v904, %v903
        %v927 = vpack.c.b16 %v906, %v905
        %v928 = vpack.c.b16 %v908, %v907
        %v929 = vpack.c.b16 %v910, %v909
        %v930 = vpack.c.b16 %v912, %v911
        %v931 = vpack.c.b16 %v914, %v913
        %v932 = vpack.c.b16 %v916, %v915
        %949 = vmatpush.bf16.msra.mxu0 %v924
        %950 = vmatpush.bf16.msra.mxu0 %v923
        %951 = vmatpush.bf16.msra.mxu0 %v922
        %952 = vmatpush.bf16.msra.mxu0 %v921
        %953 = vmatpush.bf16.msra.mxu0 %v920
        %954 = vmatpush.bf16.msra.mxu0 %v919
        %955 = vmatpush.bf16.msra.mxu0 %v918
        %956 = vmatpush.bf16.msra.mxu0 %v917
        %957 = vmatmul.bf16.gmra.mxu0 %v805
        %v958 = vpop.f32.mrf.mxu0
        %v959 = vadd.f32 0.0, %v958
        %v960 = vpop.f32.mrf.mxu0
        %v961 = vadd.f32 0.0, %v960
        %962 = vmatmul.bf16.gmra.mxu0 %v807
        %v963 = vpop.f32.mrf.mxu0
        %v964 = vadd.f32 0.0, %v963
        %v965 = vpop.f32.mrf.mxu0
        %v966 = vadd.f32 0.0, %v965
        %967 = vmatmul.bf16.gmra.mxu0 %v809
        %v968 = vpop.f32.mrf.mxu0
        %v969 = vadd.f32 0.0, %v968
        %v970 = vpop.f32.mrf.mxu0
        %v971 = vadd.f32 0.0, %v970
        %972 = vmatmul.bf16.gmra.mxu0 %v811
        %v973 = vpop.f32.mrf.mxu0
        %v974 = vadd.f32 0.0, %v973
        %v975 = vpop.f32.mrf.mxu0
        %v976 = vadd.f32 0.0, %v975
        %977 = vmatmul.bf16.gmra.mxu0 %v813
        %v978 = vpop.f32.mrf.mxu0
        %v979 = vadd.f32 0.0, %v978
        %v980 = vpop.f32.mrf.mxu0
        %v981 = vadd.f32 0.0, %v980
        %982 = vmatmul.bf16.gmra.mxu0 %v815
        %v983 = vpop.f32.mrf.mxu0
        %v984 = vadd.f32 0.0, %v983
        %v985 = vpop.f32.mrf.mxu0
        %v986 = vadd.f32 0.0, %v985
        %987 = vmatmul.bf16.gmra.mxu0 %v817
        %v988 = vpop.f32.mrf.mxu0
        %v989 = vadd.f32 0.0, %v988
        %v990 = vpop.f32.mrf.mxu0
        %v991 = vadd.f32 0.0, %v990
        %992 = vmatmul.bf16.gmra.mxu0 %v819
        %v993 = vpop.f32.mrf.mxu0
        %v994 = vadd.f32 0.0, %v993
        %v995 = vpop.f32.mrf.mxu0
        %v996 = vadd.f32 0.0, %v995
        %997 = vdwg.mxu0
        %998 = vmatpush.bf16.msra.mxu0 %v932
        %999 = vmatpush.bf16.msra.mxu0 %v931
        %1000 = vmatpush.bf16.msra.mxu0 %v930
        %1001 = vmatpush.bf16.msra.mxu0 %v929
        %1002 = vmatpush.bf16.msra.mxu0 %v928
        %1003 = vmatpush.bf16.msra.mxu0 %v927
        %1004 = vmatpush.bf16.msra.mxu0 %v926
        %1005 = vmatpush.bf16.msra.mxu0 %v925
        %1006 = vmatmul.bf16.gmra.mxu0 %v806
        %v1007 = vpop.f32.mrf.mxu0
        %v1008 = vadd.f32 %v959, %v1007
        %v1009 = vpop.f32.mrf.mxu0
        %v1010 = vadd.f32 %v961, %v1009
        %1011 = vmatmul.bf16.gmra.mxu0 %v808
        %v1012 = vpop.f32.mrf.mxu0
        %v1013 = vadd.f32 %v964, %v1012
        %v1014 = vpop.f32.mrf.mxu0
        %v1015 = vadd.f32 %v966, %v1014
        %1016 = vmatmul.bf16.gmra.mxu0 %v810
        %v1017 = vpop.f32.mrf.mxu0
        %v1018 = vadd.f32 %v969, %v1017
        %v1019 = vpop.f32.mrf.mxu0
        %v1020 = vadd.f32 %v971, %v1019
        %1021 = vmatmul.bf16.gmra.mxu0 %v812
        %v1022 = vpop.f32.mrf.mxu0
        %v1023 = vadd.f32 %v974, %v1022
        %v1024 = vpop.f32.mrf.mxu0
        %v1025 = vadd.f32 %v976, %v1024
        %1026 = vmatmul.bf16.gmra.mxu0 %v814
        %v1027 = vpop.f32.mrf.mxu0
        %v1028 = vadd.f32 %v979, %v1027
        %v1029 = vpop.f32.mrf.mxu0
        %v1030 = vadd.f32 %v981, %v1029
        %1031 = vmatmul.bf16.gmra.mxu0 %v816
        %v1032 = vpop.f32.mrf.mxu0
        %v1033 = vadd.f32 %v984, %v1032
        %v1034 = vpop.f32.mrf.mxu0
        %v1035 = vadd.f32 %v986, %v1034
        %1036 = vmatmul.bf16.gmra.mxu0 %v818
        %v1037 = vpop.f32.mrf.mxu0
        %v1038 = vadd.f32 %v989, %v1037
        %v1039 = vpop.f32.mrf.mxu0
        %v1040 = vadd.f32 %v991, %v1039
        %1041 = vmatmul.bf16.gmra.mxu0 %v820
        %v1042 = vpop.f32.mrf.mxu0
        %v1043 = vadd.f32 %v994, %v1042
        %v1044 = vpop.f32.mrf.mxu0
        %v1045 = vadd.f32 %v996, %v1044
        %1046 = vdwg.mxu0
        %v1047 = vadd.f32 %v789, %v1008
        %v1048 = vadd.f32 %v790, %v1010
        %v1049 = vadd.f32 %v791, %v1013
        %v1050 = vadd.f32 %v792, %v1015
        %v1051 = vadd.f32 %v793, %v1018
        %v1052 = vadd.f32 %v794, %v1020
        %v1053 = vadd.f32 %v795, %v1023
        %v1054 = vadd.f32 %v796, %v1025
        %v1055 = vadd.f32 %v797, %v1028
        %v1056 = vadd.f32 %v798, %v1030
        %v1057 = vadd.f32 %v799, %v1033
        %v1058 = vadd.f32 %v800, %v1035
        %v1059 = vadd.f32 %v801, %v1038
        %v1060 = vadd.f32 %v802, %v1040
        %v1061 = vadd.f32 %v803, %v1043
        %v1062 = vadd.f32 %v804, %v1045
        %1063 = vst [vmem:[#allocation2] sm:$0xff] %v1047
        %1064 = vst [vmem:[#allocation2 + $0x8] sm:$0xff] %v1048
        %1065 = vst [vmem:[#allocation2 + $0x10] sm:$0xff] %v1049
        %1066 = vst [vmem:[#allocation2 + $0x18] sm:$0xff] %v1050
        %1067 = vst [vmem:[#allocation2 + $0x20] sm:$0xff] %v1051
        %1068 = vst [vmem:[#allocation2 + $0x28] sm:$0xff] %v1052
        %1069 = vst [vmem:[#allocation2 + $0x30] sm:$0xff] %v1053
        %1070 = vst [vmem:[#allocation2 + $0x38] sm:$0xff] %v1054
        %1071 = vst [vmem:[#allocation2 + $0x40] sm:$0xff] %v1055
        %1072 = vst [vmem:[#allocation2 + $0x48] sm:$0xff] %v1056
        %1073 = vst [vmem:[#allocation2 + $0x50] sm:$0xff] %v1057
        %1074 = vst [vmem:[#allocation2 + $0x58] sm:$0xff] %v1058
        %1075 = vst [vmem:[#allocation2 + $0x60] sm:$0xff] %v1059
        %1076 = vst [vmem:[#allocation2 + $0x68] sm:$0xff] %v1060
        %1077 = vst [vmem:[#allocation2 + $0x70] sm:$0xff] %v1061
        %1078 = vst [vmem:[#allocation2 + $0x78] sm:$0xff] %v1062
        %p1079 = scmp.eq.s32.totalorder %s28, 2
        // Predicated region
        $region91: #{encoder_forward.5} parent=81 // pred_check
          %p1080 = pneg %p1079
        $region92: #{encoder_forward.5} parent=81 // pred_check_branch
          %1082 = sbr.rel (%p1080) target = $region94
        $region93: #{encoder_forward.5} parent=81 // pred_region
          %v1083 = vld [vmem:[#allocation2] sm:$0xff]
          %v1084 = vld [vmem:[#allocation2 + $0x8] sm:$0xff]
          %v1085 = vld [vmem:[#allocation2 + $0x10] sm:$0xff]
          %v1086 = vld [vmem:[#allocation2 + $0x18] sm:$0xff]
          %v1087 = vld [vmem:[#allocation2 + $0x20] sm:$0xff]
          %v1088 = vld [vmem:[#allocation2 + $0x28] sm:$0xff]
          %v1089 = vld [vmem:[#allocation2 + $0x30] sm:$0xff]
          %v1090 = vld [vmem:[#allocation2 + $0x38] sm:$0xff]
          %v1091 = vld [vmem:[#allocation2 + $0x40] sm:$0xff]
          %v1092 = vld [vmem:[#allocation2 + $0x48] sm:$0xff]
          %v1093 = vld [vmem:[#allocation2 + $0x50] sm:$0xff]
          %v1094 = vld [vmem:[#allocation2 + $0x58] sm:$0xff]
          %v1095 = vld [vmem:[#allocation2 + $0x60] sm:$0xff]
          %v1096 = vld [vmem:[#allocation2 + $0x68] sm:$0xff]
          %v1097 = vld [vmem:[#allocation2 + $0x70] sm:$0xff]
          %v1098 = vld [vmem:[#allocation2 + $0x78] sm:$0xff]
          %v1099 = vld [vmem:[%s4] sm:$0x1]
          %v1101 = vperm.slane %v1099, 0
          %v1103 = vadd.f32 %v1083, %v1101
          %v1104 = vadd.f32 %v1084, %v1101
          %v1105 = vadd.f32 %v1085, %v1101
          %v1106 = vadd.f32 %v1086, %v1101
          %v1107 = vadd.f32 %v1087, %v1101
          %v1108 = vadd.f32 %v1088, %v1101
          %v1109 = vadd.f32 %v1089, %v1101
          %v1110 = vadd.f32 %v1090, %v1101
          %v1111 = vadd.f32 %v1091, %v1101
          %v1112 = vadd.f32 %v1092, %v1101
          %v1113 = vadd.f32 %v1093, %v1101
          %v1114 = vadd.f32 %v1094, %v1101
          %v1115 = vadd.f32 %v1095, %v1101
          %v1116 = vadd.f32 %v1096, %v1101
          %v1117 = vadd.f32 %v1097, %v1101
          %v1118 = vadd.f32 %v1098, %v1101
          %v1119 = vmul.f32 %v1103, 2.0
          %v1120 = vmul.f32 %v1104, 2.0
          %v1121 = vmul.f32 %v1105, 2.0
          %v1122 = vmul.f32 %v1106, 2.0
          %v1123 = vmul.f32 %v1107, 2.0
          %v1124 = vmul.f32 %v1108, 2.0
          %v1125 = vmul.f32 %v1109, 2.0
          %v1126 = vmul.f32 %v1110, 2.0
          %v1127 = vmul.f32 %v1111, 2.0
          %v1128 = vmul.f32 %v1112, 2.0
          %v1129 = vmul.f32 %v1113, 2.0
          %v1130 = vmul.f32 %v1114, 2.0
          %v1131 = vmul.f32 %v1115, 2.0
          %v1132 = vmul.f32 %v1116, 2.0
          %v1133 = vmul.f32 %v1117, 2.0
          %v1134 = vmul.f32 %v1118, 2.0
          %v1135 = vld [vmem:[%s5] sm:$0x1]
          %v1136 = vld [vmem:[%s6] sm:$0x1]
          %1137 = vadd.xlane.f32.xlu0 %v1119
          %v1138 = vpop.xlane.xlu0 %1137
          %1139 = vadd.xlane.f32.xlu0 %v1120
          %v1140 = vpop.xlane.xlu0 %1139
          %1141 = vadd.xlane.f32.xlu0 %v1121
          %v1142 = vpop.xlane.xlu0 %1141
          %1143 = vadd.xlane.f32.xlu0 %v1122
          %v1144 = vpop.xlane.xlu0 %1143
          %1145 = vadd.xlane.f32.xlu0 %v1123
          %v1146 = vpop.xlane.xlu0 %1145
          %1147 = vadd.xlane.f32.xlu0 %v1124
          %v1148 = vpop.xlane.xlu0 %1147
          %1149 = vadd.xlane.f32.xlu0 %v1125
          %v1150 = vpop.xlane.xlu0 %1149
          %1151 = vadd.xlane.f32.xlu0 %v1126
          %v1152 = vpop.xlane.xlu0 %1151
          %1153 = vadd.xlane.f32.xlu0 %v1127
          %v1154 = vpop.xlane.xlu0 %1153
          %1155 = vadd.xlane.f32.xlu0 %v1128
          %v1156 = vpop.xlane.xlu0 %1155
          %1157 = vadd.xlane.f32.xlu0 %v1129
          %v1158 = vpop.xlane.xlu0 %1157
          %1159 = vadd.xlane.f32.xlu0 %v1130
          %v1160 = vpop.xlane.xlu0 %1159
          %1161 = vadd.xlane.f32.xlu0 %v1131
          %v1162 = vpop.xlane.xlu0 %1161
          %1163 = vadd.xlane.f32.xlu0 %v1132
          %v1164 = vpop.xlane.xlu0 %1163
          %1165 = vadd.xlane.f32.xlu0 %v1133
          %v1166 = vpop.xlane.xlu0 %1165
          %1167 = vadd.xlane.f32.xlu0 %v1134
          %v1168 = vpop.xlane.xlu0 %1167
          %v1169 = vrcp.pop 128.0
          %v1170 = vmul.f32 128.0, %v1169
          %v1171 = vsub.f32 1.0, %v1170
          %v1172 = vmul.f32 %v1169, %v1171
          %v1173 = vadd.f32 %v1169, %v1172
          %vm1174 = vweird.f32 %v1169
          %v1175 = vsel %vm1174, %v1169, %v1173
          %v1176 = vmul.f32 %v1138, %v1175
          %v1177 = vmul.f32 %v1140, %v1175
          %v1178 = vmul.f32 %v1142, %v1175
          %v1179 = vmul.f32 %v1144, %v1175
          %v1180 = vmul.f32 %v1146, %v1175
          %v1181 = vmul.f32 %v1148, %v1175
          %v1182 = vmul.f32 %v1150, %v1175
          %v1183 = vmul.f32 %v1152, %v1175
          %v1184 = vmul.f32 %v1154, %v1175
          %v1185 = vmul.f32 %v1156, %v1175
          %v1186 = vmul.f32 %v1158, %v1175
          %v1187 = vmul.f32 %v1160, %v1175
          %v1188 = vmul.f32 %v1162, %v1175
          %v1189 = vmul.f32 %v1164, %v1175
          %v1190 = vmul.f32 %v1166, %v1175
          %v1191 = vmul.f32 %v1168, %v1175
          %v1192 = vsub.f32 %v1119, %v1176
          %v1193 = vsub.f32 %v1120, %v1177
          %v1194 = vsub.f32 %v1121, %v1178
          %v1195 = vsub.f32 %v1122, %v1179
          %v1196 = vsub.f32 %v1123, %v1180
          %v1197 = vsub.f32 %v1124, %v1181
          %v1198 = vsub.f32 %v1125, %v1182
          %v1199 = vsub.f32 %v1126, %v1183
          %v1200 = vsub.f32 %v1127, %v1184
          %v1201 = vsub.f32 %v1128, %v1185
          %v1202 = vsub.f32 %v1129, %v1186
          %v1203 = vsub.f32 %v1130, %v1187
          %v1204 = vsub.f32 %v1131, %v1188
          %v1205 = vsub.f32 %v1132, %v1189
          %v1206 = vsub.f32 %v1133, %v1190
          %v1207 = vsub.f32 %v1134, %v1191
          %v1208 = vmul.f32 %v1192, %v1192
          %v1209 = vmul.f32 %v1193, %v1193
          %v1210 = vmul.f32 %v1194, %v1194
          %v1211 = vmul.f32 %v1195, %v1195
          %v1212 = vmul.f32 %v1196, %v1196
          %v1213 = vmul.f32 %v1197, %v1197
          %v1214 = vmul.f32 %v1198, %v1198
          %v1215 = vmul.f32 %v1199, %v1199
          %v1216 = vmul.f32 %v1200, %v1200
          %v1217 = vmul.f32 %v1201, %v1201
          %v1218 = vmul.f32 %v1202, %v1202
          %v1219 = vmul.f32 %v1203, %v1203
          %v1220 = vmul.f32 %v1204, %v1204
          %v1221 = vmul.f32 %v1205, %v1205
          %v1222 = vmul.f32 %v1206, %v1206
          %v1223 = vmul.f32 %v1207, %v1207
          %1224 = vadd.xlane.f32.xlu0 %v1208
          %v1225 = vpop.xlane.xlu0 %1224
          %1226 = vadd.xlane.f32.xlu0 %v1209
          %v1227 = vpop.xlane.xlu0 %1226
          %1228 = vadd.xlane.f32.xlu0 %v1210
          %v1229 = vpop.xlane.xlu0 %1228
          %1230 = vadd.xlane.f32.xlu0 %v1211
          %v1231 = vpop.xlane.xlu0 %1230
          %1232 = vadd.xlane.f32.xlu0 %v1212
          %v1233 = vpop.xlane.xlu0 %1232
          %1234 = vadd.xlane.f32.xlu0 %v1213
          %v1235 = vpop.xlane.xlu0 %1234
          %1236 = vadd.xlane.f32.xlu0 %v1214
          %v1237 = vpop.xlane.xlu0 %1236
          %1238 = vadd.xlane.f32.xlu0 %v1215
          %v1239 = vpop.xlane.xlu0 %1238
          %1240 = vadd.xlane.f32.xlu0 %v1216
          %v1241 = vpop.xlane.xlu0 %1240
          %1242 = vadd.xlane.f32.xlu0 %v1217
          %v1243 = vpop.xlane.xlu0 %1242
          %1244 = vadd.xlane.f32.xlu0 %v1218
          %v1245 = vpop.xlane.xlu0 %1244
          %1246 = vadd.xlane.f32.xlu0 %v1219
          %v1247 = vpop.xlane.xlu0 %1246
          %1248 = vadd.xlane.f32.xlu0 %v1220
          %v1249 = vpop.xlane.xlu0 %1248
          %1250 = vadd.xlane.f32.xlu0 %v1221
          %v1251 = vpop.xlane.xlu0 %1250
          %1252 = vadd.xlane.f32.xlu0 %v1222
          %v1253 = vpop.xlane.xlu0 %1252
          %1254 = vadd.xlane.f32.xlu0 %v1223
          %v1255 = vpop.xlane.xlu0 %1254
          %v1256 = vmul.f32 %v1225, %v1175
          %v1257 = vmul.f32 %v1227, %v1175
          %v1258 = vmul.f32 %v1229, %v1175
          %v1259 = vmul.f32 %v1231, %v1175
          %v1260 = vmul.f32 %v1233, %v1175
          %v1261 = vmul.f32 %v1235, %v1175
          %v1262 = vmul.f32 %v1237, %v1175
          %v1263 = vmul.f32 %v1239, %v1175
          %v1264 = vmul.f32 %v1241, %v1175
          %v1265 = vmul.f32 %v1243, %v1175
          %v1266 = vmul.f32 %v1245, %v1175
          %v1267 = vmul.f32 %v1247, %v1175
          %v1268 = vmul.f32 %v1249, %v1175
          %v1269 = vmul.f32 %v1251, %v1175
          %v1270 = vmul.f32 %v1253, %v1175
          %v1271 = vmul.f32 %v1255, %v1175
          %v1272 = vadd.f32 %v1256, 1e-05
          %v1273 = vadd.f32 %v1257, 1e-05
          %v1274 = vadd.f32 %v1258, 1e-05
          %v1275 = vadd.f32 %v1259, 1e-05
          %v1276 = vadd.f32 %v1260, 1e-05
          %v1277 = vadd.f32 %v1261, 1e-05
          %v1278 = vadd.f32 %v1262, 1e-05
          %v1279 = vadd.f32 %v1263, 1e-05
          %v1280 = vadd.f32 %v1264, 1e-05
          %v1281 = vadd.f32 %v1265, 1e-05
          %v1282 = vadd.f32 %v1266, 1e-05
          %v1283 = vadd.f32 %v1267, 1e-05
          %v1284 = vadd.f32 %v1268, 1e-05
          %v1285 = vadd.f32 %v1269, 1e-05
          %v1286 = vadd.f32 %v1270, 1e-05
          %v1287 = vadd.f32 %v1271, 1e-05
          %v1288 = vrsqrt.pop %v1272
          %v1289 = vmul.f32 %v1288, %v1272
          %v1290 = vmul.f32 %v1289, %v1288
          %v1291 = vmul.f32 0.5, %v1290
          %v1292 = vsub.f32 1.5, %v1291
          %v1293 = vmul.f32 %v1288, %v1292
          %vm1294 = vweird.f32 %v1272
          %vm1295 = vweird.f32 %v1288
          %vm1296 = vmor %vm1294, %vm1295
          %v1297 = vsel %vm1296, %v1288, %v1293
          %v1298 = vrsqrt.pop %v1273
          %v1299 = vmul.f32 %v1298, %v1273
          %v1300 = vmul.f32 %v1299, %v1298
          %v1301 = vmul.f32 0.5, %v1300
          %v1302 = vsub.f32 1.5, %v1301
          %v1303 = vmul.f32 %v1298, %v1302
          %vm1304 = vweird.f32 %v1273
          %vm1305 = vweird.f32 %v1298
          %vm1306 = vmor %vm1304, %vm1305
          %v1307 = vsel %vm1306, %v1298, %v1303
          %v1308 = vrsqrt.pop %v1274
          %v1309 = vmul.f32 %v1308, %v1274
          %v1310 = vmul.f32 %v1309, %v1308
          %v1311 = vmul.f32 0.5, %v1310
          %v1312 = vsub.f32 1.5, %v1311
          %v1313 = vmul.f32 %v1308, %v1312
          %vm1314 = vweird.f32 %v1274
          %vm1315 = vweird.f32 %v1308
          %vm1316 = vmor %vm1314, %vm1315
          %v1317 = vsel %vm1316, %v1308, %v1313
          %v1318 = vrsqrt.pop %v1275
          %v1319 = vmul.f32 %v1318, %v1275
          %v1320 = vmul.f32 %v1319, %v1318
          %v1321 = vmul.f32 0.5, %v1320
          %v1322 = vsub.f32 1.5, %v1321
          %v1323 = vmul.f32 %v1318, %v1322
          %vm1324 = vweird.f32 %v1275
          %vm1325 = vweird.f32 %v1318
          %vm1326 = vmor %vm1324, %vm1325
          %v1327 = vsel %vm1326, %v1318, %v1323
          %v1328 = vrsqrt.pop %v1276
          %v1329 = vmul.f32 %v1328, %v1276
          %v1330 = vmul.f32 %v1329, %v1328
          %v1331 = vmul.f32 0.5, %v1330
          %v1332 = vsub.f32 1.5, %v1331
          %v1333 = vmul.f32 %v1328, %v1332
          %vm1334 = vweird.f32 %v1276
          %vm1335 = vweird.f32 %v1328
          %vm1336 = vmor %vm1334, %vm1335
          %v1337 = vsel %vm1336, %v1328, %v1333
          %v1338 = vrsqrt.pop %v1277
          %v1339 = vmul.f32 %v1338, %v1277
          %v1340 = vmul.f32 %v1339, %v1338
          %v1341 = vmul.f32 0.5, %v1340
          %v1342 = vsub.f32 1.5, %v1341
          %v1343 = vmul.f32 %v1338, %v1342
          %vm1344 = vweird.f32 %v1277
          %vm1345 = vweird.f32 %v1338
          %vm1346 = vmor %vm1344, %vm1345
          %v1347 = vsel %vm1346, %v1338, %v1343
          %v1348 = vrsqrt.pop %v1278
          %v1349 = vmul.f32 %v1348, %v1278
          %v1350 = vmul.f32 %v1349, %v1348
          %v1351 = vmul.f32 0.5, %v1350
          %v1352 = vsub.f32 1.5, %v1351
          %v1353 = vmul.f32 %v1348, %v1352
          %vm1354 = vweird.f32 %v1278
          %vm1355 = vweird.f32 %v1348
          %vm1356 = vmor %vm1354, %vm1355
          %v1357 = vsel %vm1356, %v1348, %v1353
          %v1358 = vrsqrt.pop %v1279
          %v1359 = vmul.f32 %v1358, %v1279
          %v1360 = vmul.f32 %v1359, %v1358
          %v1361 = vmul.f32 0.5, %v1360
          %v1362 = vsub.f32 1.5, %v1361
          %v1363 = vmul.f32 %v1358, %v1362
          %vm1364 = vweird.f32 %v1279
          %vm1365 = vweird.f32 %v1358
          %vm1366 = vmor %vm1364, %vm1365
          %v1367 = vsel %vm1366, %v1358, %v1363
          %v1368 = vrsqrt.pop %v1280
          %v1369 = vmul.f32 %v1368, %v1280
          %v1370 = vmul.f32 %v1369, %v1368
          %v1371 = vmul.f32 0.5, %v1370
          %v1372 = vsub.f32 1.5, %v1371
          %v1373 = vmul.f32 %v1368, %v1372
          %vm1374 = vweird.f32 %v1280
          %vm1375 = vweird.f32 %v1368
          %vm1376 = vmor %vm1374, %vm1375
          %v1377 = vsel %vm1376, %v1368, %v1373
          %v1378 = vrsqrt.pop %v1281
          %v1379 = vmul.f32 %v1378, %v1281
          %v1380 = vmul.f32 %v1379, %v1378
          %v1381 = vmul.f32 0.5, %v1380
          %v1382 = vsub.f32 1.5, %v1381
          %v1383 = vmul.f32 %v1378, %v1382
          %vm1384 = vweird.f32 %v1281
          %vm1385 = vweird.f32 %v1378
          %vm1386 = vmor %vm1384, %vm1385
          %v1387 = vsel %vm1386, %v1378, %v1383
          %v1388 = vrsqrt.pop %v1282
          %v1389 = vmul.f32 %v1388, %v1282
          %v1390 = vmul.f32 %v1389, %v1388
          %v1391 = vmul.f32 0.5, %v1390
          %v1392 = vsub.f32 1.5, %v1391
          %v1393 = vmul.f32 %v1388, %v1392
          %vm1394 = vweird.f32 %v1282
          %vm1395 = vweird.f32 %v1388
          %vm1396 = vmor %vm1394, %vm1395
          %v1397 = vsel %vm1396, %v1388, %v1393
          %v1398 = vrsqrt.pop %v1283
          %v1399 = vmul.f32 %v1398, %v1283
          %v1400 = vmul.f32 %v1399, %v1398
          %v1401 = vmul.f32 0.5, %v1400
          %v1402 = vsub.f32 1.5, %v1401
          %v1403 = vmul.f32 %v1398, %v1402
          %vm1404 = vweird.f32 %v1283
          %vm1405 = vweird.f32 %v1398
          %vm1406 = vmor %vm1404, %vm1405
          %v1407 = vsel %vm1406, %v1398, %v1403
          %v1408 = vrsqrt.pop %v1284
          %v1409 = vmul.f32 %v1408, %v1284
          %v1410 = vmul.f32 %v1409, %v1408
          %v1411 = vmul.f32 0.5, %v1410
          %v1412 = vsub.f32 1.5, %v1411
          %v1413 = vmul.f32 %v1408, %v1412
          %vm1414 = vweird.f32 %v1284
          %vm1415 = vweird.f32 %v1408
          %vm1416 = vmor %vm1414, %vm1415
          %v1417 = vsel %vm1416, %v1408, %v1413
          %v1418 = vrsqrt.pop %v1285
          %v1419 = vmul.f32 %v1418, %v1285
          %v1420 = vmul.f32 %v1419, %v1418
          %v1421 = vmul.f32 0.5, %v1420
          %v1422 = vsub.f32 1.5, %v1421
          %v1423 = vmul.f32 %v1418, %v1422
          %vm1424 = vweird.f32 %v1285
          %vm1425 = vweird.f32 %v1418
          %vm1426 = vmor %vm1424, %vm1425
          %v1427 = vsel %vm1426, %v1418, %v1423
          %v1428 = vrsqrt.pop %v1286
          %v1429 = vmul.f32 %v1428, %v1286
          %v1430 = vmul.f32 %v1429, %v1428
          %v1431 = vmul.f32 0.5, %v1430
          %v1432 = vsub.f32 1.5, %v1431
          %v1433 = vmul.f32 %v1428, %v1432
          %vm1434 = vweird.f32 %v1286
          %vm1435 = vweird.f32 %v1428
          %vm1436 = vmor %vm1434, %vm1435
          %v1437 = vsel %vm1436, %v1428, %v1433
          %v1438 = vrsqrt.pop %v1287
          %v1439 = vmul.f32 %v1438, %v1287
          %v1440 = vmul.f32 %v1439, %v1438
          %v1441 = vmul.f32 0.5, %v1440
          %v1442 = vsub.f32 1.5, %v1441
          %v1443 = vmul.f32 %v1438, %v1442
          %vm1444 = vweird.f32 %v1287
          %vm1445 = vweird.f32 %v1438
          %vm1446 = vmor %vm1444, %vm1445
          %v1447 = vsel %vm1446, %v1438, %v1443
          %v1448 = vmul.f32 %v1192, %v1297
          %v1449 = vmul.f32 %v1193, %v1307
          %v1450 = vmul.f32 %v1194, %v1317
          %v1451 = vmul.f32 %v1195, %v1327
          %v1452 = vmul.f32 %v1196, %v1337
          %v1453 = vmul.f32 %v1197, %v1347
          %v1454 = vmul.f32 %v1198, %v1357
          %v1455 = vmul.f32 %v1199, %v1367
          %v1456 = vmul.f32 %v1200, %v1377
          %v1457 = vmul.f32 %v1201, %v1387
          %v1458 = vmul.f32 %v1202, %v1397
          %v1459 = vmul.f32 %v1203, %v1407
          %v1460 = vmul.f32 %v1204, %v1417
          %v1461 = vmul.f32 %v1205, %v1427
          %v1462 = vmul.f32 %v1206, %v1437
          %v1463 = vmul.f32 %v1207, %v1447
          %v1465 = vperm.slane %v1135, 0
          %v1467 = vmul.f32 %v1448, %v1465
          %v1468 = vmul.f32 %v1449, %v1465
          %v1469 = vmul.f32 %v1450, %v1465
          %v1470 = vmul.f32 %v1451, %v1465
          %v1471 = vmul.f32 %v1452, %v1465
          %v1472 = vmul.f32 %v1453, %v1465
          %v1473 = vmul.f32 %v1454, %v1465
          %v1474 = vmul.f32 %v1455, %v1465
          %v1475 = vmul.f32 %v1456, %v1465
          %v1476 = vmul.f32 %v1457, %v1465
          %v1477 = vmul.f32 %v1458, %v1465
          %v1478 = vmul.f32 %v1459, %v1465
          %v1479 = vmul.f32 %v1460, %v1465
          %v1480 = vmul.f32 %v1461, %v1465
          %v1481 = vmul.f32 %v1462, %v1465
          %v1482 = vmul.f32 %v1463, %v1465
          %v1484 = vperm.slane %v1136, 0
          %v1486 = vadd.f32 %v1467, %v1484
          %v1487 = vadd.f32 %v1468, %v1484
          %v1488 = vadd.f32 %v1469, %v1484
          %v1489 = vadd.f32 %v1470, %v1484
          %v1490 = vadd.f32 %v1471, %v1484
          %v1491 = vadd.f32 %v1472, %v1484
          %v1492 = vadd.f32 %v1473, %v1484
          %v1493 = vadd.f32 %v1474, %v1484
          %v1494 = vadd.f32 %v1475, %v1484
          %v1495 = vadd.f32 %v1476, %v1484
          %v1496 = vadd.f32 %v1477, %v1484
          %v1497 = vadd.f32 %v1478, %v1484
          %v1498 = vadd.f32 %v1479, %v1484
          %v1499 = vadd.f32 %v1480, %v1484
          %v1500 = vadd.f32 %v1481, %v1484
          %v1501 = vadd.f32 %v1482, %v1484
          %1502 = vst [vmem:[%s449] sm:$0xff] %v1486
          %1503 = vst [vmem:[%s449 + $0x8] sm:$0xff] %v1487
          %1504 = vst [vmem:[%s449 + $0x10] sm:$0xff] %v1488
          %1505 = vst [vmem:[%s449 + $0x18] sm:$0xff] %v1489
          %1506 = vst [vmem:[%s449 + $0x20] sm:$0xff] %v1490
          %1507 = vst [vmem:[%s449 + $0x28] sm:$0xff] %v1491
          %1508 = vst [vmem:[%s449 + $0x30] sm:$0xff] %v1492
          %1509 = vst [vmem:[%s449 + $0x38] sm:$0xff] %v1493
          %1510 = vst [vmem:[%s449 + $0x40] sm:$0xff] %v1494
          %1511 = vst [vmem:[%s449 + $0x48] sm:$0xff] %v1495
          %1512 = vst [vmem:[%s449 + $0x50] sm:$0xff] %v1496
          %1513 = vst [vmem:[%s449 + $0x58] sm:$0xff] %v1497
          %1514 = vst [vmem:[%s449 + $0x60] sm:$0xff] %v1498
          %1515 = vst [vmem:[%s449 + $0x68] sm:$0xff] %v1499
          %1516 = vst [vmem:[%s449 + $0x70] sm:$0xff] %v1500
          %1517 = vst [vmem:[%s449 + $0x78] sm:$0xff] %v1501
        $region94: #{encoder_forward.5} parent=81 // pred_fallthru
          _
        %s1518 = sand.u32 %s219, 1
        %s1519 = scalar_lea.sflag [#allocation5], %s1518
        %s1520 = sand.u32 %s219, 1
        %s1521 = smul.addr %s1520, 128
        %s1522 = scalar_lea.vmem [#allocation4], %s1521
        // Predicated region
        $region95: #{encoder_forward.5} parent=81 // pred_check
          %p1523 = pneg %p229
        $region96: #{encoder_forward.5} parent=81 // pred_check_branch
          %1525 = sbr.rel (%p1523) target = $region98
        $region97: #{encoder_forward.5} parent=81 // pred_region
          %s1526 = smul.u32 16, %s27
          %1528 = vsyncadd %s1519, 0
          %s1529 = smul.addr %s26, 16
          %s1530 = sadd.s32 %s1526, %s1529
          %s1531 = smul.addr %s1530, 8
          %s1532 = scalar_lea.hbm %s7, %s1531
          %s1533 = sshll.u32 %s1522, 4
          %s1534 = int_to_ptr.vmem [resolvable:$true] %s1533
          %s1535 = sshll.u32 %s1532, 4
          %s1536 = int_to_ptr.hbm [resolvable:$true] %s1535
          %1541 = dma.vmem_to_hbm [thread:$0]  %s1534, 2048, %s1536, %s1519, 128, 128, 8
        $region98: #{encoder_forward.5} parent=81 // pred_fallthru
          _
      $region82: #{encoder_forward.5} parent=5 // pred_fallthru
        _
      %p1542 = scmp.le.s32.totalorder 2, %s16
      // Predicated region
      $region99: #{encoder_forward.5} parent=5 // pred_check
        %p1543 = pneg %p1542
      $region100: #{encoder_forward.5} parent=5 // pred_check_branch
        %1545 = sbr.rel (%p1543) target = $region102
      $region101: #{encoder_forward.5} parent=5 // pred_region
        %s1546 = ssub.s32 %s16, 2
        // Predicated region
        $region103: #{encoder_forward.5} parent=101 // pred_check
          %p1547 = pneg %p235
        $region104: #{encoder_forward.5} parent=101 // pred_check_branch
          %1549 = sbr.rel (%p1547) target = $region106
        $region105: #{encoder_forward.5} parent=101 // pred_region
          %s1550 = sand.u32 %s220, 1
          %s1551 = scalar_lea.sflag [#allocation5], %s1550
          %s1552 = sand.u32 %s220, 1
          %s1553 = smul.addr %s1552, 128
          %s1554 = scalar_lea.vmem [#allocation4], %s1553
          %1556 = dma.done %s1551, 2048
        $region106: #{encoder_forward.5} parent=101 // pred_fallthru
          _
      $region102: #{encoder_forward.5} parent=5 // pred_fallthru
        _
    $region6: #{encoder_forward.5} parent=1 // loop_footer
      %s20 = sadd.s32 1, %s16
    $region7: #{encoder_forward.5} parent=1 // loop_footer_branch
      %15 = sbr.rel target = $region3
    $region8: #{encoder_forward.5} parent=1 // loop_exit
      _
    %1557 = vsyncpa [#allocation5], 1
    %s1558 = scalar_lea.sflag [#allocation5], 1
    %1559 = vsyncpa %s1558, 1

// kernel: encoder_forward.4
$region0: #{encoder_forward.4}
  #allocation0 [shape = 'u32[]', space=smem, size = 0x4, offset = 0x4, fixed_abs, tag = 'smem constant byte address 0x4 - core index']
  #allocation1 [shape = 'u32[72,128]{1,0:T(1,128)}', space=vmem, size = 0x9000, scoped, tag = 'internal scratch']
  #allocation2 [shape = 'f32[4,128,1]{2,1,0:T(8,128)}', space=vmem, size = 0x40000, scoped, tag = 'scratch operand']
  #allocation3 [shape = 'f32[4,128,1]{2,1,0:T(8,128)}', space=vmem, size = 0x40000, scoped, tag = 'scratch operand']
  #allocation4 [shape = 'f32[4,128,32]{2,1,0:T(8,128)}', space=vmem, size = 0x40000, scoped, tag = 'scratch operand']
  %s0 = inlined_call_operand.vmem [shape: f32[2,128,128], index: 0, kind: input, shape index: {}]
  %s1 = inlined_call_operand.vmem [shape: bf16[2,4,128,32], index: 1, kind: input, shape index: {}]
  %s2 = inlined_call_operand.vmem [shape: bf16[2,4,128,32], index: 2, kind: input, shape index: {}]
  %s3 = inlined_call_operand.vmem [shape: bf16[2,4,128,32], index: 3, kind: input, shape index: {}]
  %s4 = inlined_call_operand.vmem [shape: bf16[128,128], index: 4, kind: input, shape index: {}]
  %s5 = inlined_call_operand.vmem [shape: f32[1,128], index: 5, kind: input, shape index: {}]
  %s6 = inlined_call_operand.vmem [shape: f32[1,128], index: 6, kind: input, shape index: {}]
  %s7 = inlined_call_operand.vmem [shape: f32[1,128], index: 7, kind: input, shape index: {}]
  %s8 = inlined_call_operand.vmem [shape: bf16[2,128,128], index: 8, kind: output, shape index: {}]
  %s9 = sld [smem:[#allocation0]]
  $region73: #{encoder_forward.4} parent=0
    _
  %s11 = ssub.s32 1, %s9
  %s12 = scalar_select 0, %s11, %s9
  loop: start=0, step=1, limit=4
  $region2: #{encoder_forward.4} parent=0 // loop_pre_header
    _
  $region3: #{encoder_forward.4} parent=0 // loop_header
    %s14 = sphi 0, %s18
    %p15 = scmp.ge.s32.totalorder %s14, 4
    %s21 = sphi 0, %s40
    %s22 = sphi 0, %s36
    %s23 = sphi 0, %s32
    %s24 = sphi 0, %s21
    %s25 = sphi 0, %s22
    %s26 = sphi 0, %s23
    %s27 = sphi 0, %s24
    %s28 = sphi 0, %s25
    %s29 = sphi 0, %s26
    %s45 = sphi 0, %s47
    %s48 = sphi 0, %s45
    %s49 = sphi 0, %s48
    %s65 = sphi 0, %s49
    %s73 = sphi 0, %s75
    %s76 = sphi 0, %s73
    %s77 = sphi 0, %s76
    %s93 = sphi 0, %s77
    %s101 = sphi 0, %s103
    %s104 = sphi 0, %s101
    %s105 = sphi 0, %s104
    %s121 = sphi 0, %s105
    %s129 = sphi 0, %s131
    %s132 = sphi 0, %s129
    %s133 = sphi 0, %s132
    %s149 = sphi 0, %s133
    %s153 = sphi 0, %s153
    %s155 = sphi 0, %s153
    %s156 = sphi 0, %s155
    %s170 = sphi 0, %s156
    %s174 = sphi 0, %s174
    %s176 = sphi 0, %s174
    %s177 = sphi 0, %s176
    %s191 = sphi 0, %s177
    %s195 = sphi 0, %s195
    %s197 = sphi 0, %s195
    %s198 = sphi 0, %s197
    %s212 = sphi 0, %s198
    %s216 = sphi 0, %s216
    %s218 = sphi 0, %s216
    %s219 = sphi 0, %s218
    %s233 = sphi 0, %s219
    %s241 = sphi 0, %s243
    %s244 = sphi 0, %s241
    %s245 = sphi 0, %s244
    %s261 = sphi 0, %s245
  $region4: #{encoder_forward.4} parent=0 // loop_header_branch
    %17 = sbr.rel (%p15) target = $region8
  $region5: #{encoder_forward.4} parent=0 // loop_body
    %s19 = ssub.s32 %s14, 1
    %s20 = ssub.s32 %s14, 2
    %s30 = sadd.s32 1, %s23
    %p31 = scmp.ge.s32.totalorder %s30, 1
    %s32 = scalar_select %p31, 0, %s30
    %s33 = sadd.s32 1, %s22
    %s34 = scalar_select %p31, %s33, %s22
    %p35 = scmp.ge.s32.totalorder %s34, 1
    %s36 = scalar_select %p35, 0, %s34
    %s37 = sadd.s32 1, %s21
    %s38 = scalar_select %p35, %s37, %s21
    %p39 = scmp.ge.s32.totalorder %s38, 2
    %s40 = scalar_select %p39, 0, %s38
    %s41 = ssub.s32 %s21, %s40
    %s42 = ssub.s32 %s22, %s36
    %s43 = sor.u32 %s41, %s42
    %p44 = scmp.eq.s32.totalorder %s43, 0
    %s46 = sadd.s32 %s45, 1
    %s47 = scalar_select %p44, %s45, %s46
    %p50 = pneg %p44
    %p51 = scmp.eq.s32.totalorder %s14, 1
    %p52 = por %p50, %p51
    %p53 = scmp.ne.s32.totalorder %s45, %s48
    %p54 = scmp.eq.s32.totalorder %s14, 0
    %p55 = por %p53, %p54
    %p56 = scmp.ne.s32.totalorder %s45, %s48
    %p57 = scmp.eq.s32.totalorder %s19, 1
    %p58 = por %p56, %p57
    %p59 = scmp.ne.s32.totalorder %s48, %s49
    %p60 = scmp.eq.s32.totalorder %s19, 0
    %p61 = por %p59, %p60
    %p62 = scmp.ne.s32.totalorder %s48, %s49
    %p63 = scmp.eq.s32.totalorder %s20, 1
    %p64 = por %p62, %p63
    %p66 = scmp.ne.s32.totalorder %s49, %s65
    %p67 = scmp.eq.s32.totalorder %s20, 0
    %p68 = por %p66, %p67
    %s69 = ssub.s32 %s21, %s40
    %s70 = ssub.s32 %s22, %s36
    %s71 = sor.u32 %s69, %s70
    %p72 = scmp.eq.s32.totalorder %s71, 0
    %s74 = sadd.s32 %s73, 1
    %s75 = scalar_select %p72, %s73, %s74
    %p78 = pneg %p72
    %p79 = scmp.eq.s32.totalorder %s14, 1
    %p80 = por %p78, %p79
    %p81 = scmp.ne.s32.totalorder %s73, %s76
    %p82 = scmp.eq.s32.totalorder %s14, 0
    %p83 = por %p81, %p82
    %p84 = scmp.ne.s32.totalorder %s73, %s76
    %p85 = scmp.eq.s32.totalorder %s19, 1
    %p86 = por %p84, %p85
    %p87 = scmp.ne.s32.totalorder %s76, %s77
    %p88 = scmp.eq.s32.totalorder %s19, 0
    %p89 = por %p87, %p88
    %p90 = scmp.ne.s32.totalorder %s76, %s77
    %p91 = scmp.eq.s32.totalorder %s20, 1
    %p92 = por %p90, %p91
    %p94 = scmp.ne.s32.totalorder %s77, %s93
    %p95 = scmp.eq.s32.totalorder %s20, 0
    %p96 = por %p94, %p95
    %s97 = ssub.s32 %s21, %s40
    %s98 = ssub.s32 %s23, %s32
    %s99 = sor.u32 %s97, %s98
    %p100 = scmp.eq.s32.totalorder %s99, 0
    %s102 = sadd.s32 %s101, 1
    %s103 = scalar_select %p100, %s101, %s102
    %p106 = pneg %p100
    %p107 = scmp.eq.s32.totalorder %s14, 1
    %p108 = por %p106, %p107
    %p109 = scmp.ne.s32.totalorder %s101, %s104
    %p110 = scmp.eq.s32.totalorder %s14, 0
    %p111 = por %p109, %p110
    %p112 = scmp.ne.s32.totalorder %s101, %s104
    %p113 = scmp.eq.s32.totalorder %s19, 1
    %p114 = por %p112, %p113
    %p115 = scmp.ne.s32.totalorder %s104, %s105
    %p116 = scmp.eq.s32.totalorder %s19, 0
    %p117 = por %p115, %p116
    %p118 = scmp.ne.s32.totalorder %s104, %s105
    %p119 = scmp.eq.s32.totalorder %s20, 1
    %p120 = por %p118, %p119
    %p122 = scmp.ne.s32.totalorder %s105, %s121
    %p123 = scmp.eq.s32.totalorder %s20, 0
    %p124 = por %p122, %p123
    %s125 = ssub.s32 %s21, %s40
    %s126 = ssub.s32 %s23, %s32
    %s127 = sor.u32 %s125, %s126
    %p128 = scmp.eq.s32.totalorder %s127, 0
    %s130 = sadd.s32 %s129, 1
    %s131 = scalar_select %p128, %s129, %s130
    %p134 = pneg %p128
    %p135 = scmp.eq.s32.totalorder %s14, 1
    %p136 = por %p134, %p135
    %p137 = scmp.ne.s32.totalorder %s129, %s132
    %p138 = scmp.eq.s32.totalorder %s14, 0
    %p139 = por %p137, %p138
    %p140 = scmp.ne.s32.totalorder %s129, %s132
    %p141 = scmp.eq.s32.totalorder %s19, 1
    %p142 = por %p140, %p141
    %p143 = scmp.ne.s32.totalorder %s132, %s133
    %p144 = scmp.eq.s32.totalorder %s19, 0
    %p145 = por %p143, %p144
    %p146 = scmp.ne.s32.totalorder %s132, %s133
    %p147 = scmp.eq.s32.totalorder %s20, 1
    %p148 = por %p146, %p147
    %p150 = scmp.ne.s32.totalorder %s133, %s149
    %p151 = scmp.eq.s32.totalorder %s20, 0
    %p152 = por %p150, %p151
    %s154 = sadd.s32 %s153, 1
    %p157 = scmp.eq.s32.totalorder %s14, 1
    %p158 = scmp.ne.s32.totalorder %s153, %s155
    %p159 = scmp.eq.s32.totalorder %s14, 0
    %p160 = por %p158, %p159
    %p161 = scmp.ne.s32.totalorder %s153, %s155
    %p162 = scmp.eq.s32.totalorder %s19, 1
    %p163 = por %p161, %p162
    %p164 = scmp.ne.s32.totalorder %s155, %s156
    %p165 = scmp.eq.s32.totalorder %s19, 0
    %p166 = por %p164, %p165
    %p167 = scmp.ne.s32.totalorder %s155, %s156
    %p168 = scmp.eq.s32.totalorder %s20, 1
    %p169 = por %p167, %p168
    %p171 = scmp.ne.s32.totalorder %s156, %s170
    %p172 = scmp.eq.s32.totalorder %s20, 0
    %p173 = por %p171, %p172
    %s175 = sadd.s32 %s174, 1
    %p178 = scmp.eq.s32.totalorder %s14, 1
    %p179 = scmp.ne.s32.totalorder %s174, %s176
    %p180 = scmp.eq.s32.totalorder %s14, 0
    %p181 = por %p179, %p180
    %p182 = scmp.ne.s32.totalorder %s174, %s176
    %p183 = scmp.eq.s32.totalorder %s19, 1
    %p184 = por %p182, %p183
    %p185 = scmp.ne.s32.totalorder %s176, %s177
    %p186 = scmp.eq.s32.totalorder %s19, 0
    %p187 = por %p185, %p186
    %p188 = scmp.ne.s32.totalorder %s176, %s177
    %p189 = scmp.eq.s32.totalorder %s20, 1
    %p190 = por %p188, %p189
    %p192 = scmp.ne.s32.totalorder %s177, %s191
    %p193 = scmp.eq.s32.totalorder %s20, 0
    %p194 = por %p192, %p193
    %s196 = sadd.s32 %s195, 1
    %p199 = scmp.eq.s32.totalorder %s14, 1
    %p200 = scmp.ne.s32.totalorder %s195, %s197
    %p201 = scmp.eq.s32.totalorder %s14, 0
    %p202 = por %p200, %p201
    %p203 = scmp.ne.s32.totalorder %s195, %s197
    %p204 = scmp.eq.s32.totalorder %s19, 1
    %p205 = por %p203, %p204
    %p206 = scmp.ne.s32.totalorder %s197, %s198
    %p207 = scmp.eq.s32.totalorder %s19, 0
    %p208 = por %p206, %p207
    %p209 = scmp.ne.s32.totalorder %s197, %s198
    %p210 = scmp.eq.s32.totalorder %s20, 1
    %p211 = por %p209, %p210
    %p213 = scmp.ne.s32.totalorder %s198, %s212
    %p214 = scmp.eq.s32.totalorder %s20, 0
    %p215 = por %p213, %p214
    %s217 = sadd.s32 %s216, 1
    %p220 = scmp.eq.s32.totalorder %s14, 1
    %p221 = scmp.ne.s32.totalorder %s216, %s218
    %p222 = scmp.eq.s32.totalorder %s14, 0
    %p223 = por %p221, %p222
    %p224 = scmp.ne.s32.totalorder %s216, %s218
    %p225 = scmp.eq.s32.totalorder %s19, 1
    %p226 = por %p224, %p225
    %p227 = scmp.ne.s32.totalorder %s218, %s219
    %p228 = scmp.eq.s32.totalorder %s19, 0
    %p229 = por %p227, %p228
    %p230 = scmp.ne.s32.totalorder %s218, %s219
    %p231 = scmp.eq.s32.totalorder %s20, 1
    %p232 = por %p230, %p231
    %p234 = scmp.ne.s32.totalorder %s219, %s233
    %p235 = scmp.eq.s32.totalorder %s20, 0
    %p236 = por %p234, %p235
    %s237 = ssub.s32 %s21, %s40
    %s238 = ssub.s32 %s22, %s36
    %s239 = sor.u32 %s237, %s238
    %p240 = scmp.eq.s32.totalorder %s239, 0
    %s242 = sadd.s32 %s241, 1
    %s243 = scalar_select %p240, %s241, %s242
    %p246 = pneg %p240
    %p247 = scmp.eq.s32.totalorder %s14, 1
    %p248 = por %p246, %p247
    %p249 = scmp.ne.s32.totalorder %s241, %s244
    %p250 = scmp.eq.s32.totalorder %s14, 0
    %p251 = por %p249, %p250
    %p252 = scmp.ne.s32.totalorder %s241, %s244
    %p253 = scmp.eq.s32.totalorder %s19, 1
    %p254 = por %p252, %p253
    %p255 = scmp.ne.s32.totalorder %s244, %s245
    %p256 = scmp.eq.s32.totalorder %s19, 0
    %p257 = por %p255, %p256
    %p258 = scmp.ne.s32.totalorder %s244, %s245
    %p259 = scmp.eq.s32.totalorder %s20, 1
    %p260 = por %p258, %p259
    %p262 = scmp.ne.s32.totalorder %s245, %s261
    %p263 = scmp.eq.s32.totalorder %s20, 0
    %p264 = por %p262, %p263
    %p265 = scmp.le.s32.totalorder 1, %s14
    %p266 = scmp.lt.s32.totalorder %s14, 3
    %p267 = pnand %p265, %p266
    %p268 = pneg %p267
    // Predicated region
    $region9: #{encoder_forward.4} parent=5 // pred_check
      _
    $region10: #{encoder_forward.4} parent=5 // pred_check_branch
      %270 = sbr.rel (%p267) target = $region12
    $region11: #{encoder_forward.4} parent=5 // pred_region
      %s271 = ssub.s32 %s14, 1
      // Predicated region
      $region13: #{encoder_forward.4} parent=11 // pred_check
        %p272 = pneg %p166
      $region14: #{encoder_forward.4} parent=11 // pred_check_branch
        %274 = sbr.rel (%p272) target = $region16
      $region15: #{encoder_forward.4} parent=11 // pred_region
        _
      $region16: #{encoder_forward.4} parent=11 // pred_fallthru
        _
      // Predicated region
      $region17: #{encoder_forward.4} parent=11 // pred_check
        %p275 = pneg %p187
      $region18: #{encoder_forward.4} parent=11 // pred_check_branch
        %277 = sbr.rel (%p275) target = $region20
      $region19: #{encoder_forward.4} parent=11 // pred_region
        _
      $region20: #{encoder_forward.4} parent=11 // pred_fallthru
        _
      // Predicated region
      $region21: #{encoder_forward.4} parent=11 // pred_check
        %p278 = pneg %p208
      $region22: #{encoder_forward.4} parent=11 // pred_check_branch
        %280 = sbr.rel (%p278) target = $region24
      $region23: #{encoder_forward.4} parent=11 // pred_region
        _
      $region24: #{encoder_forward.4} parent=11 // pred_fallthru
        _
      // Predicated region
      $region25: #{encoder_forward.4} parent=11 // pred_check
        %p281 = pneg %p229
      $region26: #{encoder_forward.4} parent=11 // pred_check_branch
        %283 = sbr.rel (%p281) target = $region28
      $region27: #{encoder_forward.4} parent=11 // pred_region
        _
      $region28: #{encoder_forward.4} parent=11 // pred_fallthru
        _
    $region12: #{encoder_forward.4} parent=5 // pred_fallthru
      _
    %p284 = scmp.lt.s32.totalorder %s14, 2
    // Predicated region
    $region29: #{encoder_forward.4} parent=5 // pred_check
      %p285 = pneg %p284
    $region30: #{encoder_forward.4} parent=5 // pred_check_branch
      %287 = sbr.rel (%p285) target = $region32
    $region31: #{encoder_forward.4} parent=5 // pred_region
      // Predicated region
      $region33: #{encoder_forward.4} parent=31 // pred_check
        %p288 = pneg %p55
      $region34: #{encoder_forward.4} parent=31 // pred_check_branch
        %290 = sbr.rel (%p288) target = $region36
      $region35: #{encoder_forward.4} parent=31 // pred_region
        %s291 = smul.u32 16, %s22
        %p292 = scmp.lt.s32.totalorder %s21, 1
        %s293 = scalar_select %p292, %s21, 1
        %p294 = scmp.lt.s32.totalorder %s291, 15
        %s295 = scalar_select %p294, %s291, 15
        %s296 = smul.addr %s293, 16
        %s297 = sadd.s32 %s295, %s296
        %s298 = smul.addr %s297, 8
        %s299 = scalar_lea.vmem %s0, %s298
        %s300 = smul.u32 16, %s22
      $region36: #{encoder_forward.4} parent=31 // pred_fallthru
        _
      // Predicated region
      $region37: #{encoder_forward.4} parent=31 // pred_check
        %p301 = pneg %p83
      $region38: #{encoder_forward.4} parent=31 // pred_check_branch
        %303 = sbr.rel (%p301) target = $region40
      $region39: #{encoder_forward.4} parent=31 // pred_region
        %s304 = smul.u32 16, %s22
        %p305 = scmp.lt.s32.totalorder %s21, 1
        %s306 = scalar_select %p305, %s21, 1
        %p307 = scmp.lt.s32.totalorder %s304, 15
        %s308 = scalar_select %p307, %s304, 15
        %s309 = smul.addr %s306, 64
        %s310 = sadd.s32 %s308, %s309
        %s311 = smul.addr %s310, 4
        %s312 = scalar_lea.vmem %s1, %s311
        %s313 = smul.u32 16, %s22
      $region40: #{encoder_forward.4} parent=31 // pred_fallthru
        _
      // Predicated region
      $region41: #{encoder_forward.4} parent=31 // pred_check
        %p314 = pneg %p111
      $region42: #{encoder_forward.4} parent=31 // pred_check_branch
        %316 = sbr.rel (%p314) target = $region44
      $region43: #{encoder_forward.4} parent=31 // pred_region
        %s317 = smul.u32 16, %s23
        %p318 = scmp.lt.s32.totalorder %s21, 1
        %s319 = scalar_select %p318, %s21, 1
        %p320 = scmp.lt.s32.totalorder %s317, 15
        %s321 = scalar_select %p320, %s317, 15
        %s322 = smul.addr %s319, 64
        %s323 = sadd.s32 %s321, %s322
        %s324 = smul.addr %s323, 4
        %s325 = scalar_lea.vmem %s2, %s324
        %s326 = smul.u32 16, %s23
      $region44: #{encoder_forward.4} parent=31 // pred_fallthru
        _
      // Predicated region
      $region45: #{encoder_forward.4} parent=31 // pred_check
        %p327 = pneg %p139
      $region46: #{encoder_forward.4} parent=31 // pred_check_branch
        %329 = sbr.rel (%p327) target = $region48
      $region47: #{encoder_forward.4} parent=31 // pred_region
        %s330 = smul.u32 16, %s23
        %p331 = scmp.lt.s32.totalorder %s21, 1
        %s332 = scalar_select %p331, %s21, 1
        %p333 = scmp.lt.s32.totalorder %s330, 15
        %s334 = scalar_select %p333, %s330, 15
        %s335 = smul.addr %s332, 64
        %s336 = sadd.s32 %s334, %s335
        %s337 = smul.addr %s336, 4
        %s338 = scalar_lea.vmem %s3, %s337
        %s339 = smul.u32 16, %s23
      $region48: #{encoder_forward.4} parent=31 // pred_fallthru
        _
    $region32: #{encoder_forward.4} parent=5 // pred_fallthru
      _
    %p340 = scmp.le.s32.totalorder 1, %s14
    %p341 = scmp.lt.s32.totalorder %s14, 3
    %p342 = pnand %p340, %p341
    %p343 = pneg %p342
    // Predicated region
    $region49: #{encoder_forward.4} parent=5 // pred_check
      _
    $region50: #{encoder_forward.4} parent=5 // pred_check_branch
      %345 = sbr.rel (%p342) target = $region52
    $region51: #{encoder_forward.4} parent=5 // pred_region
      %s346 = ssub.s32 %s14, 1
      %s347 = smul.u32 16, %s25
      %p348 = scmp.lt.s32.totalorder %s24, 1
      %s349 = scalar_select %p348, %s24, 1
      %p350 = scmp.lt.s32.totalorder %s347, 15
      %s351 = scalar_select %p350, %s347, 15
      %s352 = smul.addr %s349, 16
      %s353 = sadd.s32 %s351, %s352
      %s354 = smul.addr %s353, 8
      %s355 = scalar_lea.vmem %s0, %s354
      %p356 = pneg %p61
      %p357 = pneg %p58
      %s358 = smul.u32 16, %s25
      %p359 = scmp.lt.s32.totalorder %s24, 1
      %s360 = scalar_select %p359, %s24, 1
      %p361 = scmp.lt.s32.totalorder %s358, 15
      %s362 = scalar_select %p361, %s358, 15
      %s363 = smul.addr %s360, 64
      %s364 = sadd.s32 %s362, %s363
      %s365 = smul.addr %s364, 4
      %s366 = scalar_lea.vmem %s1, %s365
      %p367 = pneg %p89
      %p368 = pneg %p86
      %s369 = smul.u32 16, %s26
      %p370 = scmp.lt.s32.totalorder %s24, 1
      %s371 = scalar_select %p370, %s24, 1
      %p372 = scmp.lt.s32.totalorder %s369, 15
      %s373 = scalar_select %p372, %s369, 15
      %s374 = smul.addr %s371, 64
      %s375 = sadd.s32 %s373, %s374
      %s376 = smul.addr %s375, 4
      %s377 = scalar_lea.vmem %s2, %s376
      %p378 = pneg %p117
      %p379 = pneg %p114
      %s380 = smul.u32 16, %s26
      %p381 = scmp.lt.s32.totalorder %s24, 1
      %s382 = scalar_select %p381, %s24, 1
      %p383 = scmp.lt.s32.totalorder %s380, 15
      %s384 = scalar_select %p383, %s380, 15
      %s385 = smul.addr %s382, 64
      %s386 = sadd.s32 %s384, %s385
      %s387 = smul.addr %s386, 4
      %s388 = scalar_lea.vmem %s3, %s387
      %p389 = pneg %p145
      %p390 = pneg %p142
      %p391 = pneg %p166
      %p392 = pneg %p163
      %p393 = pneg %p187
      %p394 = pneg %p184
      %p395 = pneg %p208
      %p396 = pneg %p205
      %p397 = pneg %p229
      %p398 = pneg %p226
      %p399 = pneg %p257
      %p400 = pneg %p254
      %s401 = smul.u32 16, %s25
      %p402 = scmp.lt.s32.totalorder %s24, 1
      %s403 = scalar_select %p402, %s24, 1
      %p404 = scmp.lt.s32.totalorder %s401, 15
      %s405 = scalar_select %p404, %s401, 15
      %s406 = smul.addr %s403, 16
      %s407 = sadd.s32 %s405, %s406
      %s408 = smul.addr %s407, 4
      %s409 = scalar_lea.vmem %s8, %s408
      %s410 = smul.u32 16, %s25
      %p411 = scmp.lt.s32.totalorder %s24, 1
      %s412 = scalar_select %p411, %s24, 1
      %p413 = scmp.lt.s32.totalorder %s410, 15
      %s414 = scalar_select %p413, %s410, 15
      %s415 = smul.addr %s412, 16
      %s416 = sadd.s32 %s414, %s415
      %s417 = smul.addr %s416, 8
      %s418 = scalar_lea.vmem %s0, %s417
      %s419 = smul.u32 16, %s25
      %s420 = smul.u32 16, %s25
      %p421 = scmp.lt.s32.totalorder %s24, 1
      %s422 = scalar_select %p421, %s24, 1
      %p423 = scmp.lt.s32.totalorder %s420, 15
      %s424 = scalar_select %p423, %s420, 15
      %s425 = smul.addr %s422, 64
      %s426 = sadd.s32 %s424, %s425
      %s427 = smul.addr %s426, 4
      %s428 = scalar_lea.vmem %s1, %s427
      %s429 = smul.u32 16, %s25
      %s430 = smul.u32 16, %s26
      %p431 = scmp.lt.s32.totalorder %s24, 1
      %s432 = scalar_select %p431, %s24, 1
      %p433 = scmp.lt.s32.totalorder %s430, 15
      %s434 = scalar_select %p433, %s430, 15
      %s435 = smul.addr %s432, 64
      %s436 = sadd.s32 %s434, %s435
      %s437 = smul.addr %s436, 4
      %s438 = scalar_lea.vmem %s2, %s437
      %s439 = smul.u32 16, %s26
      %s440 = smul.u32 16, %s26
      %p441 = scmp.lt.s32.totalorder %s24, 1
      %s442 = scalar_select %p441, %s24, 1
      %p443 = scmp.lt.s32.totalorder %s440, 15
      %s444 = scalar_select %p443, %s440, 15
      %s445 = smul.addr %s442, 64
      %s446 = sadd.s32 %s444, %s445
      %s447 = smul.addr %s446, 4
      %s448 = scalar_lea.vmem %s3, %s447
      %s449 = smul.u32 16, %s26
      %s450 = smul.u32 16, %s25
      %p451 = scmp.lt.s32.totalorder %s24, 1
      %s452 = scalar_select %p451, %s24, 1
      %p453 = scmp.lt.s32.totalorder %s450, 15
      %s454 = scalar_select %p453, %s450, 15
      %s455 = smul.addr %s452, 16
      %s456 = sadd.s32 %s454, %s455
      %s457 = smul.addr %s456, 4
      %s458 = scalar_lea.vmem %s8, %s457
      %s459 = smul.u32 16, %s25
      %p461 = scmp.eq.s32.totalorder %s26, 0
      // Predicated region
      $region53: #{encoder_forward.4} parent=51 // pred_check
        %p462 = pneg %p461
      $region54: #{encoder_forward.4} parent=51 // pred_check_branch
        %464 = sbr.rel (%p462) target = $region56
      $region55: #{encoder_forward.4} parent=51 // pred_region
        %vm465 = vcmask 7168
        %466 = vst.msk [vmem:[#allocation2] sm:$0xff] %vm465, -inf
        %467 = vst.msk [vmem:[#allocation2 + $0x8] sm:$0xff] %vm465, -inf
        %468 = vst.msk [vmem:[#allocation2 + $0x10] sm:$0xff] %vm465, -inf
        %469 = vst.msk [vmem:[#allocation2 + $0x18] sm:$0xff] %vm465, -inf
        %470 = vst.msk [vmem:[#allocation2 + $0x20] sm:$0xff] %vm465, -inf
        %471 = vst.msk [vmem:[#allocation2 + $0x28] sm:$0xff] %vm465, -inf
        %472 = vst.msk [vmem:[#allocation2 + $0x30] sm:$0xff] %vm465, -inf
        %473 = vst.msk [vmem:[#allocation2 + $0x38] sm:$0xff] %vm465, -inf
        %474 = vst.msk [vmem:[#allocation2 + $0x40] sm:$0xff] %vm465, -inf
        %475 = vst.msk [vmem:[#allocation2 + $0x48] sm:$0xff] %vm465, -inf
        %476 = vst.msk [vmem:[#allocation2 + $0x50] sm:$0xff] %vm465, -inf
        %477 = vst.msk [vmem:[#allocation2 + $0x58] sm:$0xff] %vm465, -inf
        %478 = vst.msk [vmem:[#allocation2 + $0x60] sm:$0xff] %vm465, -inf
        %479 = vst.msk [vmem:[#allocation2 + $0x68] sm:$0xff] %vm465, -inf
        %480 = vst.msk [vmem:[#allocation2 + $0x70] sm:$0xff] %vm465, -inf
        %481 = vst.msk [vmem:[#allocation2 + $0x78] sm:$0xff] %vm465, -inf
        %482 = vst.msk [vmem:[#allocation2 + $0x80] sm:$0xff] %vm465, -inf
        %483 = vst.msk [vmem:[#allocation2 + $0x88] sm:$0xff] %vm465, -inf
        %484 = vst.msk [vmem:[#allocation2 + $0x90] sm:$0xff] %vm465, -inf
        %485 = vst.msk [vmem:[#allocation2 + $0x98] sm:$0xff] %vm465, -inf
        %486 = vst.msk [vmem:[#allocation2 + $0xa0] sm:$0xff] %vm465, -inf
        %487 = vst.msk [vmem:[#allocation2 + $0xa8] sm:$0xff] %vm465, -inf
        %488 = vst.msk [vmem:[#allocation2 + $0xb0] sm:$0xff] %vm465, -inf
        %489 = vst.msk [vmem:[#allocation2 + $0xb8] sm:$0xff] %vm465, -inf
        %490 = vst.msk [vmem:[#allocation2 + $0xc0] sm:$0xff] %vm465, -inf
        %491 = vst.msk [vmem:[#allocation2 + $0xc8] sm:$0xff] %vm465, -inf
        %492 = vst.msk [vmem:[#allocation2 + $0xd0] sm:$0xff] %vm465, -inf
        %493 = vst.msk [vmem:[#allocation2 + $0xd8] sm:$0xff] %vm465, -inf
        %494 = vst.msk [vmem:[#allocation2 + $0xe0] sm:$0xff] %vm465, -inf
        %495 = vst.msk [vmem:[#allocation2 + $0xe8] sm:$0xff] %vm465, -inf
        %496 = vst.msk [vmem:[#allocation2 + $0xf0] sm:$0xff] %vm465, -inf
        %497 = vst.msk [vmem:[#allocation2 + $0xf8] sm:$0xff] %vm465, -inf
        %498 = vst.msk [vmem:[#allocation2 + $0x100] sm:$0xff] %vm465, -inf
        %499 = vst.msk [vmem:[#allocation2 + $0x108] sm:$0xff] %vm465, -inf
        %500 = vst.msk [vmem:[#allocation2 + $0x110] sm:$0xff] %vm465, -inf
        %501 = vst.msk [vmem:[#allocation2 + $0x118] sm:$0xff] %vm465, -inf
        %502 = vst.msk [vmem:[#allocation2 + $0x120] sm:$0xff] %vm465, -inf
        %503 = vst.msk [vmem:[#allocation2 + $0x128] sm:$0xff] %vm465, -inf
        %504 = vst.msk [vmem:[#allocation2 + $0x130] sm:$0xff] %vm465, -inf
        %505 = vst.msk [vmem:[#allocation2 + $0x138] sm:$0xff] %vm465, -inf
        %506 = vst.msk [vmem:[#allocation2 + $0x140] sm:$0xff] %vm465, -inf
        %507 = vst.msk [vmem:[#allocation2 + $0x148] sm:$0xff] %vm465, -inf
        %508 = vst.msk [vmem:[#allocation2 + $0x150] sm:$0xff] %vm465, -inf
        %509 = vst.msk [vmem:[#allocation2 + $0x158] sm:$0xff] %vm465, -inf
        %510 = vst.msk [vmem:[#allocation2 + $0x160] sm:$0xff] %vm465, -inf
        %511 = vst.msk [vmem:[#allocation2 + $0x168] sm:$0xff] %vm465, -inf
        %512 = vst.msk [vmem:[#allocation2 + $0x170] sm:$0xff] %vm465, -inf
        %513 = vst.msk [vmem:[#allocation2 + $0x178] sm:$0xff] %vm465, -inf
        %514 = vst.msk [vmem:[#allocation2 + $0x180] sm:$0xff] %vm465, -inf
        %515 = vst.msk [vmem:[#allocation2 + $0x188] sm:$0xff] %vm465, -inf
        %516 = vst.msk [vmem:[#allocation2 + $0x190] sm:$0xff] %vm465, -inf
        %517 = vst.msk [vmem:[#allocation2 + $0x198] sm:$0xff] %vm465, -inf
        %518 = vst.msk [vmem:[#allocation2 + $0x1a0] sm:$0xff] %vm465, -inf
        %519 = vst.msk [vmem:[#allocation2 + $0x1a8] sm:$0xff] %vm465, -inf
        %520 = vst.msk [vmem:[#allocation2 + $0x1b0] sm:$0xff] %vm465, -inf
        %521 = vst.msk [vmem:[#allocation2 + $0x1b8] sm:$0xff] %vm465, -inf
        %522 = vst.msk [vmem:[#allocation2 + $0x1c0] sm:$0xff] %vm465, -inf
        %523 = vst.msk [vmem:[#allocation2 + $0x1c8] sm:$0xff] %vm465, -inf
        %524 = vst.msk [vmem:[#allocation2 + $0x1d0] sm:$0xff] %vm465, -inf
        %525 = vst.msk [vmem:[#allocation2 + $0x1d8] sm:$0xff] %vm465, -inf
        %526 = vst.msk [vmem:[#allocation2 + $0x1e0] sm:$0xff] %vm465, -inf
        %527 = vst.msk [vmem:[#allocation2 + $0x1e8] sm:$0xff] %vm465, -inf
        %528 = vst.msk [vmem:[#allocation2 + $0x1f0] sm:$0xff] %vm465, -inf
        %529 = vst.msk [vmem:[#allocation2 + $0x1f8] sm:$0xff] %vm465, -inf
        %530 = vst.msk [vmem:[#allocation3] sm:$0xff] %vm465, 0.0
        %531 = vst.msk [vmem:[#allocation3 + $0x8] sm:$0xff] %vm465, 0.0
        %532 = vst.msk [vmem:[#allocation3 + $0x10] sm:$0xff] %vm465, 0.0
        %533 = vst.msk [vmem:[#allocation3 + $0x18] sm:$0xff] %vm465, 0.0
        %534 = vst.msk [vmem:[#allocation3 + $0x20] sm:$0xff] %vm465, 0.0
        %535 = vst.msk [vmem:[#allocation3 + $0x28] sm:$0xff] %vm465, 0.0
        %536 = vst.msk [vmem:[#allocation3 + $0x30] sm:$0xff] %vm465, 0.0
        %537 = vst.msk [vmem:[#allocation3 + $0x38] sm:$0xff] %vm465, 0.0
        %538 = vst.msk [vmem:[#allocation3 + $0x40] sm:$0xff] %vm465, 0.0
        %539 = vst.msk [vmem:[#allocation3 + $0x48] sm:$0xff] %vm465, 0.0
        %540 = vst.msk [vmem:[#allocation3 + $0x50] sm:$0xff] %vm465, 0.0
        %541 = vst.msk [vmem:[#allocation3 + $0x58] sm:$0xff] %vm465, 0.0
        %542 = vst.msk [vmem:[#allocation3 + $0x60] sm:$0xff] %vm465, 0.0
        %543 = vst.msk [vmem:[#allocation3 + $0x68] sm:$0xff] %vm465, 0.0
        %544 = vst.msk [vmem:[#allocation3 + $0x70] sm:$0xff] %vm465, 0.0
        %545 = vst.msk [vmem:[#allocation3 + $0x78] sm:$0xff] %vm465, 0.0
        %546 = vst.msk [vmem:[#allocation3 + $0x80] sm:$0xff] %vm465, 0.0
        %547 = vst.msk [vmem:[#allocation3 + $0x88] sm:$0xff] %vm465, 0.0
        %548 = vst.msk [vmem:[#allocation3 + $0x90] sm:$0xff] %vm465, 0.0
        %549 = vst.msk [vmem:[#allocation3 + $0x98] sm:$0xff] %vm465, 0.0
        %550 = vst.msk [vmem:[#allocation3 + $0xa0] sm:$0xff] %vm465, 0.0
        %551 = vst.msk [vmem:[#allocation3 + $0xa8] sm:$0xff] %vm465, 0.0
        %552 = vst.msk [vmem:[#allocation3 + $0xb0] sm:$0xff] %vm465, 0.0
        %553 = vst.msk [vmem:[#allocation3 + $0xb8] sm:$0xff] %vm465, 0.0
        %554 = vst.msk [vmem:[#allocation3 + $0xc0] sm:$0xff] %vm465, 0.0
        %555 = vst.msk [vmem:[#allocation3 + $0xc8] sm:$0xff] %vm465, 0.0
        %556 = vst.msk [vmem:[#allocation3 + $0xd0] sm:$0xff] %vm465, 0.0
        %557 = vst.msk [vmem:[#allocation3 + $0xd8] sm:$0xff] %vm465, 0.0
        %558 = vst.msk [vmem:[#allocation3 + $0xe0] sm:$0xff] %vm465, 0.0
        %559 = vst.msk [vmem:[#allocation3 + $0xe8] sm:$0xff] %vm465, 0.0
        %560 = vst.msk [vmem:[#allocation3 + $0xf0] sm:$0xff] %vm465, 0.0
        %561 = vst.msk [vmem:[#allocation3 + $0xf8] sm:$0xff] %vm465, 0.0
        %562 = vst.msk [vmem:[#allocation3 + $0x100] sm:$0xff] %vm465, 0.0
        %563 = vst.msk [vmem:[#allocation3 + $0x108] sm:$0xff] %vm465, 0.0
        %564 = vst.msk [vmem:[#allocation3 + $0x110] sm:$0xff] %vm465, 0.0
        %565 = vst.msk [vmem:[#allocation3 + $0x118] sm:$0xff] %vm465, 0.0
        %566 = vst.msk [vmem:[#allocation3 + $0x120] sm:$0xff] %vm465, 0.0
        %567 = vst.msk [vmem:[#allocation3 + $0x128] sm:$0xff] %vm465, 0.0
        %568 = vst.msk [vmem:[#allocation3 + $0x130] sm:$0xff] %vm465, 0.0
        %569 = vst.msk [vmem:[#allocation3 + $0x138] sm:$0xff] %vm465, 0.0
        %570 = vst.msk [vmem:[#allocation3 + $0x140] sm:$0xff] %vm465, 0.0
        %571 = vst.msk [vmem:[#allocation3 + $0x148] sm:$0xff] %vm465, 0.0
        %572 = vst.msk [vmem:[#allocation3 + $0x150] sm:$0xff] %vm465, 0.0
        %573 = vst.msk [vmem:[#allocation3 + $0x158] sm:$0xff] %vm465, 0.0
        %574 = vst.msk [vmem:[#allocation3 + $0x160] sm:$0xff] %vm465, 0.0
        %575 = vst.msk [vmem:[#allocation3 + $0x168] sm:$0xff] %vm465, 0.0
        %576 = vst.msk [vmem:[#allocation3 + $0x170] sm:$0xff] %vm465, 0.0
        %577 = vst.msk [vmem:[#allocation3 + $0x178] sm:$0xff] %vm465, 0.0
        %578 = vst.msk [vmem:[#allocation3 + $0x180] sm:$0xff] %vm465, 0.0
        %579 = vst.msk [vmem:[#allocation3 + $0x188] sm:$0xff] %vm465, 0.0
        %580 = vst.msk [vmem:[#allocation3 + $0x190] sm:$0xff] %vm465, 0.0
        %581 = vst.msk [vmem:[#allocation3 + $0x198] sm:$0xff] %vm465, 0.0
        %582 = vst.msk [vmem:[#allocation3 + $0x1a0] sm:$0xff] %vm465, 0.0
        %583 = vst.msk [vmem:[#allocation3 + $0x1a8] sm:$0xff] %vm465, 0.0
        %584 = vst.msk [vmem:[#allocation3 + $0x1b0] sm:$0xff] %vm465, 0.0
        %585 = vst.msk [vmem:[#allocation3 + $0x1b8] sm:$0xff] %vm465, 0.0
        %586 = vst.msk [vmem:[#allocation3 + $0x1c0] sm:$0xff] %vm465, 0.0
        %587 = vst.msk [vmem:[#allocation3 + $0x1c8] sm:$0xff] %vm465, 0.0
        %588 = vst.msk [vmem:[#allocation3 + $0x1d0] sm:$0xff] %vm465, 0.0
        %589 = vst.msk [vmem:[#allocation3 + $0x1d8] sm:$0xff] %vm465, 0.0
        %590 = vst.msk [vmem:[#allocation3 + $0x1e0] sm:$0xff] %vm465, 0.0
        %591 = vst.msk [vmem:[#allocation3 + $0x1e8] sm:$0xff] %vm465, 0.0
        %592 = vst.msk [vmem:[#allocation3 + $0x1f0] sm:$0xff] %vm465, 0.0
        %593 = vst.msk [vmem:[#allocation3 + $0x1f8] sm:$0xff] %vm465, 0.0
        %vm594 = vcmask 261120
        %595 = vst.msk [vmem:[#allocation4] sm:$0xff] %vm594, 0.0
        %596 = vst.msk [vmem:[#allocation4 + $0x8] sm:$0xff] %vm594, 0.0
        %597 = vst.msk [vmem:[#allocation4 + $0x10] sm:$0xff] %vm594, 0.0
        %598 = vst.msk [vmem:[#allocation4 + $0x18] sm:$0xff] %vm594, 0.0
        %599 = vst.msk [vmem:[#allocation4 + $0x20] sm:$0xff] %vm594, 0.0
        %600 = vst.msk [vmem:[#allocation4 + $0x28] sm:$0xff] %vm594, 0.0
        %601 = vst.msk [vmem:[#allocation4 + $0x30] sm:$0xff] %vm594, 0.0
        %602 = vst.msk [vmem:[#allocation4 + $0x38] sm:$0xff] %vm594, 0.0
        %603 = vst.msk [vmem:[#allocation4 + $0x40] sm:$0xff] %vm594, 0.0
        %604 = vst.msk [vmem:[#allocation4 + $0x48] sm:$0xff] %vm594, 0.0
        %605 = vst.msk [vmem:[#allocation4 + $0x50] sm:$0xff] %vm594, 0.0
        %606 = vst.msk [vmem:[#allocation4 + $0x58] sm:$0xff] %vm594, 0.0
        %607 = vst.msk [vmem:[#allocation4 + $0x60] sm:$0xff] %vm594, 0.0
        %608 = vst.msk [vmem:[#allocation4 + $0x68] sm:$0xff] %vm594, 0.0
        %609 = vst.msk [vmem:[#allocation4 + $0x70] sm:$0xff] %vm594, 0.0
        %610 = vst.msk [vmem:[#allocation4 + $0x78] sm:$0xff] %vm594, 0.0
        %611 = vst.msk [vmem:[#allocation4 + $0x80] sm:$0xff] %vm594, 0.0
        %612 = vst.msk [vmem:[#allocation4 + $0x88] sm:$0xff] %vm594, 0.0
        %613 = vst.msk [vmem:[#allocation4 + $0x90] sm:$0xff] %vm594, 0.0
        %614 = vst.msk [vmem:[#allocation4 + $0x98] sm:$0xff] %vm594, 0.0
        %615 = vst.msk [vmem:[#allocation4 + $0xa0] sm:$0xff] %vm594, 0.0
        %616 = vst.msk [vmem:[#allocation4 + $0xa8] sm:$0xff] %vm594, 0.0
        %617 = vst.msk [vmem:[#allocation4 + $0xb0] sm:$0xff] %vm594, 0.0
        %618 = vst.msk [vmem:[#allocation4 + $0xb8] sm:$0xff] %vm594, 0.0
        %619 = vst.msk [vmem:[#allocation4 + $0xc0] sm:$0xff] %vm594, 0.0
        %620 = vst.msk [vmem:[#allocation4 + $0xc8] sm:$0xff] %vm594, 0.0
        %621 = vst.msk [vmem:[#allocation4 + $0xd0] sm:$0xff] %vm594, 0.0
        %622 = vst.msk [vmem:[#allocation4 + $0xd8] sm:$0xff] %vm594, 0.0
        %623 = vst.msk [vmem:[#allocation4 + $0xe0] sm:$0xff] %vm594, 0.0
        %624 = vst.msk [vmem:[#allocation4 + $0xe8] sm:$0xff] %vm594, 0.0
        %625 = vst.msk [vmem:[#allocation4 + $0xf0] sm:$0xff] %vm594, 0.0
        %626 = vst.msk [vmem:[#allocation4 + $0xf8] sm:$0xff] %vm594, 0.0
        %627 = vst.msk [vmem:[#allocation4 + $0x100] sm:$0xff] %vm594, 0.0
        %628 = vst.msk [vmem:[#allocation4 + $0x108] sm:$0xff] %vm594, 0.0
        %629 = vst.msk [vmem:[#allocation4 + $0x110] sm:$0xff] %vm594, 0.0
        %630 = vst.msk [vmem:[#allocation4 + $0x118] sm:$0xff] %vm594, 0.0
        %631 = vst.msk [vmem:[#allocation4 + $0x120] sm:$0xff] %vm594, 0.0
        %632 = vst.msk [vmem:[#allocation4 + $0x128] sm:$0xff] %vm594, 0.0
        %633 = vst.msk [vmem:[#allocation4 + $0x130] sm:$0xff] %vm594, 0.0
        %634 = vst.msk [vmem:[#allocation4 + $0x138] sm:$0xff] %vm594, 0.0
        %635 = vst.msk [vmem:[#allocation4 + $0x140] sm:$0xff] %vm594, 0.0
        %636 = vst.msk [vmem:[#allocation4 + $0x148] sm:$0xff] %vm594, 0.0
        %637 = vst.msk [vmem:[#allocation4 + $0x150] sm:$0xff] %vm594, 0.0
        %638 = vst.msk [vmem:[#allocation4 + $0x158] sm:$0xff] %vm594, 0.0
        %639 = vst.msk [vmem:[#allocation4 + $0x160] sm:$0xff] %vm594, 0.0
        %640 = vst.msk [vmem:[#allocation4 + $0x168] sm:$0xff] %vm594, 0.0
        %641 = vst.msk [vmem:[#allocation4 + $0x170] sm:$0xff] %vm594, 0.0
        %642 = vst.msk [vmem:[#allocation4 + $0x178] sm:$0xff] %vm594, 0.0
        %643 = vst.msk [vmem:[#allocation4 + $0x180] sm:$0xff] %vm594, 0.0
        %644 = vst.msk [vmem:[#allocation4 + $0x188] sm:$0xff] %vm594, 0.0
        %645 = vst.msk [vmem:[#allocation4 + $0x190] sm:$0xff] %vm594, 0.0
        %646 = vst.msk [vmem:[#allocation4 + $0x198] sm:$0xff] %vm594, 0.0
        %647 = vst.msk [vmem:[#allocation4 + $0x1a0] sm:$0xff] %vm594, 0.0
        %648 = vst.msk [vmem:[#allocation4 + $0x1a8] sm:$0xff] %vm594, 0.0
        %649 = vst.msk [vmem:[#allocation4 + $0x1b0] sm:$0xff] %vm594, 0.0
        %650 = vst.msk [vmem:[#allocation4 + $0x1b8] sm:$0xff] %vm594, 0.0
        %651 = vst.msk [vmem:[#allocation4 + $0x1c0] sm:$0xff] %vm594, 0.0
        %652 = vst.msk [vmem:[#allocation4 + $0x1c8] sm:$0xff] %vm594, 0.0
        %653 = vst.msk [vmem:[#allocation4 + $0x1d0] sm:$0xff] %vm594, 0.0
        %654 = vst.msk [vmem:[#allocation4 + $0x1d8] sm:$0xff] %vm594, 0.0
        %655 = vst.msk [vmem:[#allocation4 + $0x1e0] sm:$0xff] %vm594, 0.0
        %656 = vst.msk [vmem:[#allocation4 + $0x1e8] sm:$0xff] %vm594, 0.0
        %657 = vst.msk [vmem:[#allocation4 + $0x1f0] sm:$0xff] %vm594, 0.0
        %658 = vst.msk [vmem:[#allocation4 + $0x1f8] sm:$0xff] %vm594, 0.0
      $region56: #{encoder_forward.4} parent=51 // pred_fallthru
        _
      %v659 = vld [vmem:[%s428] sm:$0xf]
      %v660 = vld [vmem:[%s428 + $0x4] sm:$0xf]
      %v661 = vld [vmem:[%s428 + $0x8] sm:$0xf]
      %v662 = vld [vmem:[%s428 + $0xc] sm:$0xf]
      %v663 = vld [vmem:[%s428 + $0x10] sm:$0xf]
      %v664 = vld [vmem:[%s428 + $0x14] sm:$0xf]
      %v665 = vld [vmem:[%s428 + $0x18] sm:$0xf]
      %v666 = vld [vmem:[%s428 + $0x1c] sm:$0xf]
      %v667 = vld [vmem:[%s428 + $0x20] sm:$0xf]
      %v668 = vld [vmem:[%s428 + $0x24] sm:$0xf]
      %v669 = vld [vmem:[%s428 + $0x28] sm:$0xf]
      %v670 = vld [vmem:[%s428 + $0x2c] sm:$0xf]
      %v671 = vld [vmem:[%s428 + $0x30] sm:$0xf]
      %v672 = vld [vmem:[%s428 + $0x34] sm:$0xf]
      %v673 = vld [vmem:[%s428 + $0x38] sm:$0xf]
      %v674 = vld [vmem:[%s428 + $0x3c] sm:$0xf]
      %v675 = vld [vmem:[%s428 + $0x40] sm:$0xf]
      %v676 = vld [vmem:[%s428 + $0x44] sm:$0xf]
      %v677 = vld [vmem:[%s428 + $0x48] sm:$0xf]
      %v678 = vld [vmem:[%s428 + $0x4c] sm:$0xf]
      %v679 = vld [vmem:[%s428 + $0x50] sm:$0xf]
      %v680 = vld [vmem:[%s428 + $0x54] sm:$0xf]
      %v681 = vld [vmem:[%s428 + $0x58] sm:$0xf]
      %v682 = vld [vmem:[%s428 + $0x5c] sm:$0xf]
      %v683 = vld [vmem:[%s428 + $0x60] sm:$0xf]
      %v684 = vld [vmem:[%s428 + $0x64] sm:$0xf]
      %v685 = vld [vmem:[%s428 + $0x68] sm:$0xf]
      %v686 = vld [vmem:[%s428 + $0x6c] sm:$0xf]
      %v687 = vld [vmem:[%s428 + $0x70] sm:$0xf]
      %v688 = vld [vmem:[%s428 + $0x74] sm:$0xf]
      %v689 = vld [vmem:[%s428 + $0x78] sm:$0xf]
      %v690 = vld [vmem:[%s428 + $0x7c] sm:$0xf]
      %v691 = vld [vmem:[%s428 + $0x80] sm:$0xf]
      %v692 = vld [vmem:[%s428 + $0x84] sm:$0xf]
      %v693 = vld [vmem:[%s428 + $0x88] sm:$0xf]
      %v694 = vld [vmem:[%s428 + $0x8c] sm:$0xf]
      %v695 = vld [vmem:[%s428 + $0x90] sm:$0xf]
      %v696 = vld [vmem:[%s428 + $0x94] sm:$0xf]
      %v697 = vld [vmem:[%s428 + $0x98] sm:$0xf]
      %v698 = vld [vmem:[%s428 + $0x9c] sm:$0xf]
      %v699 = vld [vmem:[%s428 + $0xa0] sm:$0xf]
      %v700 = vld [vmem:[%s428 + $0xa4] sm:$0xf]
      %v701 = vld [vmem:[%s428 + $0xa8] sm:$0xf]
      %v702 = vld [vmem:[%s428 + $0xac] sm:$0xf]
      %v703 = vld [vmem:[%s428 + $0xb0] sm:$0xf]
      %v704 = vld [vmem:[%s428 + $0xb4] sm:$0xf]
      %v705 = vld [vmem:[%s428 + $0xb8] sm:$0xf]
      %v706 = vld [vmem:[%s428 + $0xbc] sm:$0xf]
      %v707 = vld [vmem:[%s428 + $0xc0] sm:$0xf]
      %v708 = vld [vmem:[%s428 + $0xc4] sm:$0xf]
      %v709 = vld [vmem:[%s428 + $0xc8] sm:$0xf]
      %v710 = vld [vmem:[%s428 + $0xcc] sm:$0xf]
      %v711 = vld [vmem:[%s428 + $0xd0] sm:$0xf]
      %v712 = vld [vmem:[%s428 + $0xd4] sm:$0xf]
      %v713 = vld [vmem:[%s428 + $0xd8] sm:$0xf]
      %v714 = vld [vmem:[%s428 + $0xdc] sm:$0xf]
      %v715 = vld [vmem:[%s428 + $0xe0] sm:$0xf]
      %v716 = vld [vmem:[%s428 + $0xe4] sm:$0xf]
      %v717 = vld [vmem:[%s428 + $0xe8] sm:$0xf]
      %v718 = vld [vmem:[%s428 + $0xec] sm:$0xf]
      %v719 = vld [vmem:[%s428 + $0xf0] sm:$0xf]
      %v720 = vld [vmem:[%s428 + $0xf4] sm:$0xf]
      %v721 = vld [vmem:[%s428 + $0xf8] sm:$0xf]
      %v722 = vld [vmem:[%s428 + $0xfc] sm:$0xf]
      %v723 = vld [vmem:[%s438] sm:$0xf]
      %v724 = vld [vmem:[%s438 + $0x4] sm:$0xf]
      %v725 = vld [vmem:[%s438 + $0x8] sm:$0xf]
      %v726 = vld [vmem:[%s438 + $0xc] sm:$0xf]
      %v727 = vld [vmem:[%s438 + $0x10] sm:$0xf]
      %v728 = vld [vmem:[%s438 + $0x14] sm:$0xf]
      %v729 = vld [vmem:[%s438 + $0x18] sm:$0xf]
      %v730 = vld [vmem:[%s438 + $0x1c] sm:$0xf]
      %v731 = vld [vmem:[%s438 + $0x20] sm:$0xf]
      %v732 = vld [vmem:[%s438 + $0x24] sm:$0xf]
      %v733 = vld [vmem:[%s438 + $0x28] sm:$0xf]
      %v734 = vld [vmem:[%s438 + $0x2c] sm:$0xf]
      %v735 = vld [vmem:[%s438 + $0x30] sm:$0xf]
      %v736 = vld [vmem:[%s438 + $0x34] sm:$0xf]
      %v737 = vld [vmem:[%s438 + $0x38] sm:$0xf]
      %v738 = vld [vmem:[%s438 + $0x3c] sm:$0xf]
      %v739 = vld [vmem:[%s438 + $0x40] sm:$0xf]
      %v740 = vld [vmem:[%s438 + $0x44] sm:$0xf]
      %v741 = vld [vmem:[%s438 + $0x48] sm:$0xf]
      %v742 = vld [vmem:[%s438 + $0x4c] sm:$0xf]
      %v743 = vld [vmem:[%s438 + $0x50] sm:$0xf]
      %v744 = vld [vmem:[%s438 + $0x54] sm:$0xf]
      %v745 = vld [vmem:[%s438 + $0x58] sm:$0xf]
      %v746 = vld [vmem:[%s438 + $0x5c] sm:$0xf]
      %v747 = vld [vmem:[%s438 + $0x60] sm:$0xf]
      %v748 = vld [vmem:[%s438 + $0x64] sm:$0xf]
      %v749 = vld [vmem:[%s438 + $0x68] sm:$0xf]
      %v750 = vld [vmem:[%s438 + $0x6c] sm:$0xf]
      %v751 = vld [vmem:[%s438 + $0x70] sm:$0xf]
      %v752 = vld [vmem:[%s438 + $0x74] sm:$0xf]
      %v753 = vld [vmem:[%s438 + $0x78] sm:$0xf]
      %v754 = vld [vmem:[%s438 + $0x7c] sm:$0xf]
      %v755 = vld [vmem:[%s438 + $0x80] sm:$0xf]
      %v756 = vld [vmem:[%s438 + $0x84] sm:$0xf]
      %v757 = vld [vmem:[%s438 + $0x88] sm:$0xf]
      %v758 = vld [vmem:[%s438 + $0x8c] sm:$0xf]
      %v759 = vld [vmem:[%s438 + $0x90] sm:$0xf]
      %v760 = vld [vmem:[%s438 + $0x94] sm:$0xf]
      %v761 = vld [vmem:[%s438 + $0x98] sm:$0xf]
      %v762 = vld [vmem:[%s438 + $0x9c] sm:$0xf]
      %v763 = vld [vmem:[%s438 + $0xa0] sm:$0xf]
      %v764 = vld [vmem:[%s438 + $0xa4] sm:$0xf]
      %v765 = vld [vmem:[%s438 + $0xa8] sm:$0xf]
      %v766 = vld [vmem:[%s438 + $0xac] sm:$0xf]
      %v767 = vld [vmem:[%s438 + $0xb0] sm:$0xf]
      %v768 = vld [vmem:[%s438 + $0xb4] sm:$0xf]
      %v769 = vld [vmem:[%s438 + $0xb8] sm:$0xf]
      %v770 = vld [vmem:[%s438 + $0xbc] sm:$0xf]
      %v771 = vld [vmem:[%s438 + $0xc0] sm:$0xf]
      %v772 = vld [vmem:[%s438 + $0xc4] sm:$0xf]
      %v773 = vld [vmem:[%s438 + $0xc8] sm:$0xf]
      %v774 = vld [vmem:[%s438 + $0xcc] sm:$0xf]
      %v775 = vld [vmem:[%s438 + $0xd0] sm:$0xf]
      %v776 = vld [vmem:[%s438 + $0xd4] sm:$0xf]
      %v777 = vld [vmem:[%s438 + $0xd8] sm:$0xf]
      %v778 = vld [vmem:[%s438 + $0xdc] sm:$0xf]
      %v779 = vld [vmem:[%s438 + $0xe0] sm:$0xf]
      %v780 = vld [vmem:[%s438 + $0xe4] sm:$0xf]
      %v781 = vld [vmem:[%s438 + $0xe8] sm:$0xf]
      %v782 = vld [vmem:[%s438 + $0xec] sm:$0xf]
      %v783 = vld [vmem:[%s438 + $0xf0] sm:$0xf]
      %v784 = vld [vmem:[%s438 + $0xf4] sm:$0xf]
      %v785 = vld [vmem:[%s438 + $0xf8] sm:$0xf]
      %v786 = vld [vmem:[%s438 + $0xfc] sm:$0xf]
      %v787 = vld [vmem:[%s448] sm:$0xf]
      %v788 = vld [vmem:[%s448 + $0x4] sm:$0xf]
      %v789 = vld [vmem:[%s448 + $0x8] sm:$0xf]
      %v790 = vld [vmem:[%s448 + $0xc] sm:$0xf]
      %v791 = vld [vmem:[%s448 + $0x10] sm:$0xf]
      %v792 = vld [vmem:[%s448 + $0x14] sm:$0xf]
      %v793 = vld [vmem:[%s448 + $0x18] sm:$0xf]
      %v794 = vld [vmem:[%s448 + $0x1c] sm:$0xf]
      %v795 = vld [vmem:[%s448 + $0x20] sm:$0xf]
      %v796 = vld [vmem:[%s448 + $0x24] sm:$0xf]
      %v797 = vld [vmem:[%s448 + $0x28] sm:$0xf]
      %v798 = vld [vmem:[%s448 + $0x2c] sm:$0xf]
      %v799 = vld [vmem:[%s448 + $0x30] sm:$0xf]
      %v800 = vld [vmem:[%s448 + $0x34] sm:$0xf]
      %v801 = vld [vmem:[%s448 + $0x38] sm:$0xf]
      %v802 = vld [vmem:[%s448 + $0x3c] sm:$0xf]
      %v803 = vld [vmem:[%s448 + $0x40] sm:$0xf]
      %v804 = vld [vmem:[%s448 + $0x44] sm:$0xf]
      %v805 = vld [vmem:[%s448 + $0x48] sm:$0xf]
      %v806 = vld [vmem:[%s448 + $0x4c] sm:$0xf]
      %v807 = vld [vmem:[%s448 + $0x50] sm:$0xf]
      %v808 = vld [vmem:[%s448 + $0x54] sm:$0xf]
      %v809 = vld [vmem:[%s448 + $0x58] sm:$0xf]
      %v810 = vld [vmem:[%s448 + $0x5c] sm:$0xf]
      %v811 = vld [vmem:[%s448 + $0x60] sm:$0xf]
      %v812 = vld [vmem:[%s448 + $0x64] sm:$0xf]
      %v813 = vld [vmem:[%s448 + $0x68] sm:$0xf]
      %v814 = vld [vmem:[%s448 + $0x6c] sm:$0xf]
      %v815 = vld [vmem:[%s448 + $0x70] sm:$0xf]
      %v816 = vld [vmem:[%s448 + $0x74] sm:$0xf]
      %v817 = vld [vmem:[%s448 + $0x78] sm:$0xf]
      %v818 = vld [vmem:[%s448 + $0x7c] sm:$0xf]
      %v819 = vld [vmem:[%s448 + $0x80] sm:$0xf]
      %v820 = vld [vmem:[%s448 + $0x84] sm:$0xf]
      %v821 = vld [vmem:[%s448 + $0x88] sm:$0xf]
      %v822 = vld [vmem:[%s448 + $0x8c] sm:$0xf]
      %v823 = vld [vmem:[%s448 + $0x90] sm:$0xf]
      %v824 = vld [vmem:[%s448 + $0x94] sm:$0xf]
      %v825 = vld [vmem:[%s448 + $0x98] sm:$0xf]
      %v826 = vld [vmem:[%s448 + $0x9c] sm:$0xf]
      %v827 = vld [vmem:[%s448 + $0xa0] sm:$0xf]
      %v828 = vld [vmem:[%s448 + $0xa4] sm:$0xf]
      %v829 = vld [vmem:[%s448 + $0xa8] sm:$0xf]
      %v830 = vld [vmem:[%s448 + $0xac] sm:$0xf]
      %v831 = vld [vmem:[%s448 + $0xb0] sm:$0xf]
      %v832 = vld [vmem:[%s448 + $0xb4] sm:$0xf]
      %v833 = vld [vmem:[%s448 + $0xb8] sm:$0xf]
      %v834 = vld [vmem:[%s448 + $0xbc] sm:$0xf]
      %v835 = vld [vmem:[%s448 + $0xc0] sm:$0xf]
      %v836 = vld [vmem:[%s448 + $0xc4] sm:$0xf]
      %v837 = vld [vmem:[%s448 + $0xc8] sm:$0xf]
      %v838 = vld [vmem:[%s448 + $0xcc] sm:$0xf]
      %v839 = vld [vmem:[%s448 + $0xd0] sm:$0xf]
      %v840 = vld [vmem:[%s448 + $0xd4] sm:$0xf]
      %v841 = vld [vmem:[%s448 + $0xd8] sm:$0xf]
      %v842 = vld [vmem:[%s448 + $0xdc] sm:$0xf]
      %v843 = vld [vmem:[%s448 + $0xe0] sm:$0xf]
      %v844 = vld [vmem:[%s448 + $0xe4] sm:$0xf]
      %v845 = vld [vmem:[%s448 + $0xe8] sm:$0xf]
      %v846 = vld [vmem:[%s448 + $0xec] sm:$0xf]
      %v847 = vld [vmem:[%s448 + $0xf0] sm:$0xf]
      %v848 = vld [vmem:[%s448 + $0xf4] sm:$0xf]
      %v849 = vld [vmem:[%s448 + $0xf8] sm:$0xf]
      %v850 = vld [vmem:[%s448 + $0xfc] sm:$0xf]
      %v867 = vunpack.c.l.b16 %v659
      %v868 = vunpack.c.l.b16 %v660
      %v869 = vunpack.c.l.b16 %v661
      %v870 = vunpack.c.l.b16 %v662
      %v871 = vunpack.c.l.b16 %v663
      %v872 = vunpack.c.l.b16 %v664
      %v873 = vunpack.c.l.b16 %v665
      %v874 = vunpack.c.l.b16 %v666
      %v875 = vunpack.c.l.b16 %v667
      %v876 = vunpack.c.l.b16 %v668
      %v877 = vunpack.c.l.b16 %v669
      %v878 = vunpack.c.l.b16 %v670
      %v879 = vunpack.c.l.b16 %v671
      %v880 = vunpack.c.l.b16 %v672
      %v881 = vunpack.c.l.b16 %v673
      %v882 = vunpack.c.l.b16 %v674
      %v883 = vpack.c.b16 %v868, %v867
      %v884 = vpack.c.b16 %v870, %v869
      %v885 = vpack.c.b16 %v872, %v871
      %v886 = vpack.c.b16 %v874, %v873
      %v887 = vpack.c.b16 %v876, %v875
      %v888 = vpack.c.b16 %v878, %v877
      %v889 = vpack.c.b16 %v880, %v879
      %v890 = vpack.c.b16 %v882, %v881
      %v907 = vunpack.c.l.b16 %v723
      %v908 = vunpack.c.l.b16 %v724
      %v909 = vunpack.c.l.b16 %v725
      %v910 = vunpack.c.l.b16 %v726
      %v911 = vunpack.c.l.b16 %v727
      %v912 = vunpack.c.l.b16 %v728
      %v913 = vunpack.c.l.b16 %v729
      %v914 = vunpack.c.l.b16 %v730
      %v915 = vunpack.c.l.b16 %v731
      %v916 = vunpack.c.l.b16 %v732
      %v917 = vunpack.c.l.b16 %v733
      %v918 = vunpack.c.l.b16 %v734
      %v919 = vunpack.c.l.b16 %v735
      %v920 = vunpack.c.l.b16 %v736
      %v921 = vunpack.c.l.b16 %v737
      %v922 = vunpack.c.l.b16 %v738
      %v923 = vpack.c.b16 %v908, %v907
      %v924 = vpack.c.b16 %v910, %v909
      %v925 = vpack.c.b16 %v912, %v911
      %v926 = vpack.c.b16 %v914, %v913
      %v927 = vpack.c.b16 %v916, %v915
      %v928 = vpack.c.b16 %v918, %v917
      %v929 = vpack.c.b16 %v920, %v919
      %v930 = vpack.c.b16 %v922, %v921
      %vm931 = vcmask 261120
      %v933 = vsel %vm931, %v883, 0
      %v936 = vsel %vm931, %v884, 0
      %v939 = vsel %vm931, %v885, 0
      %v942 = vsel %vm931, %v886, 0
      %v945 = vsel %vm931, %v887, 0
      %v948 = vsel %vm931, %v888, 0
      %v951 = vsel %vm931, %v889, 0
      %v954 = vsel %vm931, %v890, 0
      %v957 = vsel %vm931, %v923, 0
      %v960 = vsel %vm931, %v924, 0
      %v963 = vsel %vm931, %v925, 0
      %v966 = vsel %vm931, %v926, 0
      %v969 = vsel %vm931, %v927, 0
      %v972 = vsel %vm931, %v928, 0
      %v975 = vsel %vm931, %v929, 0
      %v978 = vsel %vm931, %v930, 0
      %980 = vmatpush.bf16.xpose.msra.mxu0 %v978
      %981 = vmatpush.bf16.xpose.msra.mxu0 %v975
      %982 = vmatpush.bf16.xpose.msra.mxu0 %v972
      %983 = vmatpush.bf16.xpose.msra.mxu0 %v969
      %984 = vmatpush.bf16.xpose.msra.mxu0 %v966
      %985 = vmatpush.bf16.xpose.msra.mxu0 %v963
      %986 = vmatpush.bf16.xpose.msra.mxu0 %v960
      %987 = vmatpush.bf16.xpose.msra.mxu0 %v957
      %988 = vmatmul.bf16.gmra.mxu0 %v933
      %v989 = vpop.f32.mrf.mxu0
      %v990 = vadd.f32 0.0, %v989
      %v991 = vpop.f32.mrf.mxu0
      %v992 = vadd.f32 0.0, %v991
      %993 = vmatmul.bf16.gmra.mxu0 %v936
      %v994 = vpop.f32.mrf.mxu0
      %v995 = vadd.f32 0.0, %v994
      %v996 = vpop.f32.mrf.mxu0
      %v997 = vadd.f32 0.0, %v996
      %998 = vmatmul.bf16.gmra.mxu0 %v939
      %v999 = vpop.f32.mrf.mxu0
      %v1000 = vadd.f32 0.0, %v999
      %v1001 = vpop.f32.mrf.mxu0
      %v1002 = vadd.f32 0.0, %v1001
      %1003 = vmatmul.bf16.gmra.mxu0 %v942
      %v1004 = vpop.f32.mrf.mxu0
      %v1005 = vadd.f32 0.0, %v1004
      %v1006 = vpop.f32.mrf.mxu0
      %v1007 = vadd.f32 0.0, %v1006
      %1008 = vmatmul.bf16.gmra.mxu0 %v945
      %v1009 = vpop.f32.mrf.mxu0
      %v1010 = vadd.f32 0.0, %v1009
      %v1011 = vpop.f32.mrf.mxu0
      %v1012 = vadd.f32 0.0, %v1011
      %1013 = vmatmul.bf16.gmra.mxu0 %v948
      %v1014 = vpop.f32.mrf.mxu0
      %v1015 = vadd.f32 0.0, %v1014
      %v1016 = vpop.f32.mrf.mxu0
      %v1017 = vadd.f32 0.0, %v1016
      %1018 = vmatmul.bf16.gmra.mxu0 %v951
      %v1019 = vpop.f32.mrf.mxu0
      %v1020 = vadd.f32 0.0, %v1019
      %v1021 = vpop.f32.mrf.mxu0
      %v1022 = vadd.f32 0.0, %v1021
      %1023 = vmatmul.bf16.gmra.mxu0 %v954
      %v1024 = vpop.f32.mrf.mxu0
      %v1025 = vadd.f32 0.0, %v1024
      %v1026 = vpop.f32.mrf.mxu0
      %v1027 = vadd.f32 0.0, %v1026
      %1028 = vdwg.mxu0
      %v1045 = vunpack.c.l.b16 %v675
      %v1046 = vunpack.c.l.b16 %v676
      %v1047 = vunpack.c.l.b16 %v677
      %v1048 = vunpack.c.l.b16 %v678
      %v1049 = vunpack.c.l.b16 %v679
      %v1050 = vunpack.c.l.b16 %v680
      %v1051 = vunpack.c.l.b16 %v681
      %v1052 = vunpack.c.l.b16 %v682
      %v1053 = vunpack.c.l.b16 %v683
      %v1054 = vunpack.c.l.b16 %v684
      %v1055 = vunpack.c.l.b16 %v685
      %v1056 = vunpack.c.l.b16 %v686
      %v1057 = vunpack.c.l.b16 %v687
      %v1058 = vunpack.c.l.b16 %v688
      %v1059 = vunpack.c.l.b16 %v689
      %v1060 = vunpack.c.l.b16 %v690
      %v1061 = vpack.c.b16 %v1046, %v1045
      %v1062 = vpack.c.b16 %v1048, %v1047
      %v1063 = vpack.c.b16 %v1050, %v1049
      %v1064 = vpack.c.b16 %v1052, %v1051
      %v1065 = vpack.c.b16 %v1054, %v1053
      %v1066 = vpack.c.b16 %v1056, %v1055
      %v1067 = vpack.c.b16 %v1058, %v1057
      %v1068 = vpack.c.b16 %v1060, %v1059
      %v1085 = vunpack.c.l.b16 %v739
      %v1086 = vunpack.c.l.b16 %v740
      %v1087 = vunpack.c.l.b16 %v741
      %v1088 = vunpack.c.l.b16 %v742
      %v1089 = vunpack.c.l.b16 %v743
      %v1090 = vunpack.c.l.b16 %v744
      %v1091 = vunpack.c.l.b16 %v745
      %v1092 = vunpack.c.l.b16 %v746
      %v1093 = vunpack.c.l.b16 %v747
      %v1094 = vunpack.c.l.b16 %v748
      %v1095 = vunpack.c.l.b16 %v749
      %v1096 = vunpack.c.l.b16 %v750
      %v1097 = vunpack.c.l.b16 %v751
      %v1098 = vunpack.c.l.b16 %v752
      %v1099 = vunpack.c.l.b16 %v753
      %v1100 = vunpack.c.l.b16 %v754
      %v1101 = vpack.c.b16 %v1086, %v1085
      %v1102 = vpack.c.b16 %v1088, %v1087
      %v1103 = vpack.c.b16 %v1090, %v1089
      %v1104 = vpack.c.b16 %v1092, %v1091
      %v1105 = vpack.c.b16 %v1094, %v1093
      %v1106 = vpack.c.b16 %v1096, %v1095
      %v1107 = vpack.c.b16 %v1098, %v1097
      %v1108 = vpack.c.b16 %v1100, %v1099
      %v1110 = vsel %vm931, %v1061, 0
      %v1113 = vsel %vm931, %v1062, 0
      %v1116 = vsel %vm931, %v1063, 0
      %v1119 = vsel %vm931, %v1064, 0
      %v1122 = vsel %vm931, %v1065, 0
      %v1125 = vsel %vm931, %v1066, 0
      %v1128 = vsel %vm931, %v1067, 0
      %v1131 = vsel %vm931, %v1068, 0
      %v1134 = vsel %vm931, %v1101, 0
      %v1137 = vsel %vm931, %v1102, 0
      %v1140 = vsel %vm931, %v1103, 0
      %v1143 = vsel %vm931, %v1104, 0
      %v1146 = vsel %vm931, %v1105, 0
      %v1149 = vsel %vm931, %v1106, 0
      %v1152 = vsel %vm931, %v1107, 0
      %v1155 = vsel %vm931, %v1108, 0
      %1157 = vmatpush.bf16.xpose.msra.mxu0 %v1155
      %1158 = vmatpush.bf16.xpose.msra.mxu0 %v1152
      %1159 = vmatpush.bf16.xpose.msra.mxu0 %v1149
      %1160 = vmatpush.bf16.xpose.msra.mxu0 %v1146
      %1161 = vmatpush.bf16.xpose.msra.mxu0 %v1143
      %1162 = vmatpush.bf16.xpose.msra.mxu0 %v1140
      %1163 = vmatpush.bf16.xpose.msra.mxu0 %v1137
      %1164 = vmatpush.bf16.xpose.msra.mxu0 %v1134
      %1165 = vmatmul.bf16.gmra.mxu0 %v1110
      %v1166 = vpop.f32.mrf.mxu0
      %v1167 = vadd.f32 0.0, %v1166
      %v1168 = vpop.f32.mrf.mxu0
      %v1169 = vadd.f32 0.0, %v1168
      %1170 = vmatmul.bf16.gmra.mxu0 %v1113
      %v1171 = vpop.f32.mrf.mxu0
      %v1172 = vadd.f32 0.0, %v1171
      %v1173 = vpop.f32.mrf.mxu0
      %v1174 = vadd.f32 0.0, %v1173
      %1175 = vmatmul.bf16.gmra.mxu0 %v1116
      %v1176 = vpop.f32.mrf.mxu0
      %v1177 = vadd.f32 0.0, %v1176
      %v1178 = vpop.f32.mrf.mxu0
      %v1179 = vadd.f32 0.0, %v1178
      %1180 = vmatmul.bf16.gmra.mxu0 %v1119
      %v1181 = vpop.f32.mrf.mxu0
      %v1182 = vadd.f32 0.0, %v1181
      %v1183 = vpop.f32.mrf.mxu0
      %v1184 = vadd.f32 0.0, %v1183
      %1185 = vmatmul.bf16.gmra.mxu0 %v1122
      %v1186 = vpop.f32.mrf.mxu0
      %v1187 = vadd.f32 0.0, %v1186
      %v1188 = vpop.f32.mrf.mxu0
      %v1189 = vadd.f32 0.0, %v1188
      %1190 = vmatmul.bf16.gmra.mxu0 %v1125
      %v1191 = vpop.f32.mrf.mxu0
      %v1192 = vadd.f32 0.0, %v1191
      %v1193 = vpop.f32.mrf.mxu0
      %v1194 = vadd.f32 0.0, %v1193
      %1195 = vmatmul.bf16.gmra.mxu0 %v1128
      %v1196 = vpop.f32.mrf.mxu0
      %v1197 = vadd.f32 0.0, %v1196
      %v1198 = vpop.f32.mrf.mxu0
      %v1199 = vadd.f32 0.0, %v1198
      %1200 = vmatmul.bf16.gmra.mxu0 %v1131
      %v1201 = vpop.f32.mrf.mxu0
      %v1202 = vadd.f32 0.0, %v1201
      %v1203 = vpop.f32.mrf.mxu0
      %v1204 = vadd.f32 0.0, %v1203
      %1205 = vdwg.mxu0
      %v1222 = vunpack.c.l.b16 %v691
      %v1223 = vunpack.c.l.b16 %v692
      %v1224 = vunpack.c.l.b16 %v693
      %v1225 = vunpack.c.l.b16 %v694
      %v1226 = vunpack.c.l.b16 %v695
      %v1227 = vunpack.c.l.b16 %v696
      %v1228 = vunpack.c.l.b16 %v697
      %v1229 = vunpack.c.l.b16 %v698
      %v1230 = vunpack.c.l.b16 %v699
      %v1231 = vunpack.c.l.b16 %v700
      %v1232 = vunpack.c.l.b16 %v701
      %v1233 = vunpack.c.l.b16 %v702
      %v1234 = vunpack.c.l.b16 %v703
      %v1235 = vunpack.c.l.b16 %v704
      %v1236 = vunpack.c.l.b16 %v705
      %v1237 = vunpack.c.l.b16 %v706
      %v1238 = vpack.c.b16 %v1223, %v1222
      %v1239 = vpack.c.b16 %v1225, %v1224
      %v1240 = vpack.c.b16 %v1227, %v1226
      %v1241 = vpack.c.b16 %v1229, %v1228
      %v1242 = vpack.c.b16 %v1231, %v1230
      %v1243 = vpack.c.b16 %v1233, %v1232
      %v1244 = vpack.c.b16 %v1235, %v1234
      %v1245 = vpack.c.b16 %v1237, %v1236
      %v1262 = vunpack.c.l.b16 %v755
      %v1263 = vunpack.c.l.b16 %v756
      %v1264 = vunpack.c.l.b16 %v757
      %v1265 = vunpack.c.l.b16 %v758
      %v1266 = vunpack.c.l.b16 %v759
      %v1267 = vunpack.c.l.b16 %v760
      %v1268 = vunpack.c.l.b16 %v761
      %v1269 = vunpack.c.l.b16 %v762
      %v1270 = vunpack.c.l.b16 %v763
      %v1271 = vunpack.c.l.b16 %v764
      %v1272 = vunpack.c.l.b16 %v765
      %v1273 = vunpack.c.l.b16 %v766
      %v1274 = vunpack.c.l.b16 %v767
      %v1275 = vunpack.c.l.b16 %v768
      %v1276 = vunpack.c.l.b16 %v769
      %v1277 = vunpack.c.l.b16 %v770
      %v1278 = vpack.c.b16 %v1263, %v1262
      %v1279 = vpack.c.b16 %v1265, %v1264
      %v1280 = vpack.c.b16 %v1267, %v1266
      %v1281 = vpack.c.b16 %v1269, %v1268
      %v1282 = vpack.c.b16 %v1271, %v1270
      %v1283 = vpack.c.b16 %v1273, %v1272
      %v1284 = vpack.c.b16 %v1275, %v1274
      %v1285 = vpack.c.b16 %v1277, %v1276
      %v1287 = vsel %vm931, %v1238, 0
      %v1290 = vsel %vm931, %v1239, 0
      %v1293 = vsel %vm931, %v1240, 0
      %v1296 = vsel %vm931, %v1241, 0
      %v1299 = vsel %vm931, %v1242, 0
      %v1302 = vsel %vm931, %v1243, 0
      %v1305 = vsel %vm931, %v1244, 0
      %v1308 = vsel %vm931, %v1245, 0
      %v1311 = vsel %vm931, %v1278, 0
      %v1314 = vsel %vm931, %v1279, 0
      %v1317 = vsel %vm931, %v1280, 0
      %v1320 = vsel %vm931, %v1281, 0
      %v1323 = vsel %vm931, %v1282, 0
      %v1326 = vsel %vm931, %v1283, 0
      %v1329 = vsel %vm931, %v1284, 0
      %v1332 = vsel %vm931, %v1285, 0
      %1334 = vmatpush.bf16.xpose.msra.mxu0 %v1332
      %1335 = vmatpush.bf16.xpose.msra.mxu0 %v1329
      %1336 = vmatpush.bf16.xpose.msra.mxu0 %v1326
      %1337 = vmatpush.bf16.xpose.msra.mxu0 %v1323
      %1338 = vmatpush.bf16.xpose.msra.mxu0 %v1320
      %1339 = vmatpush.bf16.xpose.msra.mxu0 %v1317
      %1340 = vmatpush.bf16.xpose.msra.mxu0 %v1314
      %1341 = vmatpush.bf16.xpose.msra.mxu0 %v1311
      %1342 = vmatmul.bf16.gmra.mxu0 %v1287
      %v1343 = vpop.f32.mrf.mxu0
      %v1344 = vadd.f32 0.0, %v1343
      %v1345 = vpop.f32.mrf.mxu0
      %v1346 = vadd.f32 0.0, %v1345
      %1347 = vmatmul.bf16.gmra.mxu0 %v1290
      %v1348 = vpop.f32.mrf.mxu0
      %v1349 = vadd.f32 0.0, %v1348
      %v1350 = vpop.f32.mrf.mxu0
      %v1351 = vadd.f32 0.0, %v1350
      %1352 = vmatmul.bf16.gmra.mxu0 %v1293
      %v1353 = vpop.f32.mrf.mxu0
      %v1354 = vadd.f32 0.0, %v1353
      %v1355 = vpop.f32.mrf.mxu0
      %v1356 = vadd.f32 0.0, %v1355
      %1357 = vmatmul.bf16.gmra.mxu0 %v1296
      %v1358 = vpop.f32.mrf.mxu0
      %v1359 = vadd.f32 0.0, %v1358
      %v1360 = vpop.f32.mrf.mxu0
      %v1361 = vadd.f32 0.0, %v1360
      %1362 = vmatmul.bf16.gmra.mxu0 %v1299
      %v1363 = vpop.f32.mrf.mxu0
      %v1364 = vadd.f32 0.0, %v1363
      %v1365 = vpop.f32.mrf.mxu0
      %v1366 = vadd.f32 0.0, %v1365
      %1367 = vmatmul.bf16.gmra.mxu0 %v1302
      %v1368 = vpop.f32.mrf.mxu0
      %v1369 = vadd.f32 0.0, %v1368
      %v1370 = vpop.f32.mrf.mxu0
      %v1371 = vadd.f32 0.0, %v1370
      %1372 = vmatmul.bf16.gmra.mxu0 %v1305
      %v1373 = vpop.f32.mrf.mxu0
      %v1374 = vadd.f32 0.0, %v1373
      %v1375 = vpop.f32.mrf.mxu0
      %v1376 = vadd.f32 0.0, %v1375
      %1377 = vmatmul.bf16.gmra.mxu0 %v1308
      %v1378 = vpop.f32.mrf.mxu0
      %v1379 = vadd.f32 0.0, %v1378
      %v1380 = vpop.f32.mrf.mxu0
      %v1381 = vadd.f32 0.0, %v1380
      %1382 = vdwg.mxu0
      %v1399 = vunpack.c.l.b16 %v707
      %v1400 = vunpack.c.l.b16 %v708
      %v1401 = vunpack.c.l.b16 %v709
      %v1402 = vunpack.c.l.b16 %v710
      %v1403 = vunpack.c.l.b16 %v711
      %v1404 = vunpack.c.l.b16 %v712
      %v1405 = vunpack.c.l.b16 %v713
      %v1406 = vunpack.c.l.b16 %v714
      %v1407 = vunpack.c.l.b16 %v715
      %v1408 = vunpack.c.l.b16 %v716
      %v1409 = vunpack.c.l.b16 %v717
      %v1410 = vunpack.c.l.b16 %v718
      %v1411 = vunpack.c.l.b16 %v719
      %v1412 = vunpack.c.l.b16 %v720
      %v1413 = vunpack.c.l.b16 %v721
      %v1414 = vunpack.c.l.b16 %v722
      %v1415 = vpack.c.b16 %v1400, %v1399
      %v1416 = vpack.c.b16 %v1402, %v1401
      %v1417 = vpack.c.b16 %v1404, %v1403
      %v1418 = vpack.c.b16 %v1406, %v1405
      %v1419 = vpack.c.b16 %v1408, %v1407
      %v1420 = vpack.c.b16 %v1410, %v1409
      %v1421 = vpack.c.b16 %v1412, %v1411
      %v1422 = vpack.c.b16 %v1414, %v1413
      %v1439 = vunpack.c.l.b16 %v771
      %v1440 = vunpack.c.l.b16 %v772
      %v1441 = vunpack.c.l.b16 %v773
      %v1442 = vunpack.c.l.b16 %v774
      %v1443 = vunpack.c.l.b16 %v775
      %v1444 = vunpack.c.l.b16 %v776
      %v1445 = vunpack.c.l.b16 %v777
      %v1446 = vunpack.c.l.b16 %v778
      %v1447 = vunpack.c.l.b16 %v779
      %v1448 = vunpack.c.l.b16 %v780
      %v1449 = vunpack.c.l.b16 %v781
      %v1450 = vunpack.c.l.b16 %v782
      %v1451 = vunpack.c.l.b16 %v783
      %v1452 = vunpack.c.l.b16 %v784
      %v1453 = vunpack.c.l.b16 %v785
      %v1454 = vunpack.c.l.b16 %v786
      %v1455 = vpack.c.b16 %v1440, %v1439
      %v1456 = vpack.c.b16 %v1442, %v1441
      %v1457 = vpack.c.b16 %v1444, %v1443
      %v1458 = vpack.c.b16 %v1446, %v1445
      %v1459 = vpack.c.b16 %v1448, %v1447
      %v1460 = vpack.c.b16 %v1450, %v1449
      %v1461 = vpack.c.b16 %v1452, %v1451
      %v1462 = vpack.c.b16 %v1454, %v1453
      %v1464 = vsel %vm931, %v1415, 0
      %v1467 = vsel %vm931, %v1416, 0
      %v1470 = vsel %vm931, %v1417, 0
      %v1473 = vsel %vm931, %v1418, 0
      %v1476 = vsel %vm931, %v1419, 0
      %v1479 = vsel %vm931, %v1420, 0
      %v1482 = vsel %vm931, %v1421, 0
      %v1485 = vsel %vm931, %v1422, 0
      %v1488 = vsel %vm931, %v1455, 0
      %v1491 = vsel %vm931, %v1456, 0
      %v1494 = vsel %vm931, %v1457, 0
      %v1497 = vsel %vm931, %v1458, 0
      %v1500 = vsel %vm931, %v1459, 0
      %v1503 = vsel %vm931, %v1460, 0
      %v1506 = vsel %vm931, %v1461, 0
      %v1509 = vsel %vm931, %v1462, 0
      %1511 = vmatpush.bf16.xpose.msra.mxu0 %v1509
      %1512 = vmatpush.bf16.xpose.msra.mxu0 %v1506
      %1513 = vmatpush.bf16.xpose.msra.mxu0 %v1503
      %1514 = vmatpush.bf16.xpose.msra.mxu0 %v1500
      %1515 = vmatpush.bf16.xpose.msra.mxu0 %v1497
      %1516 = vmatpush.bf16.xpose.msra.mxu0 %v1494
      %1517 = vmatpush.bf16.xpose.msra.mxu0 %v1491
      %1518 = vmatpush.bf16.xpose.msra.mxu0 %v1488
      %1519 = vmatmul.bf16.gmra.mxu0 %v1464
      %v1520 = vpop.f32.mrf.mxu0
      %v1521 = vadd.f32 0.0, %v1520
      %v1522 = vpop.f32.mrf.mxu0
      %v1523 = vadd.f32 0.0, %v1522
      %1524 = vmatmul.bf16.gmra.mxu0 %v1467
      %v1525 = vpop.f32.mrf.mxu0
      %v1526 = vadd.f32 0.0, %v1525
      %v1527 = vpop.f32.mrf.mxu0
      %v1528 = vadd.f32 0.0, %v1527
      %1529 = vmatmul.bf16.gmra.mxu0 %v1470
      %v1530 = vpop.f32.mrf.mxu0
      %v1531 = vadd.f32 0.0, %v1530
      %v1532 = vpop.f32.mrf.mxu0
      %v1533 = vadd.f32 0.0, %v1532
      %1534 = vmatmul.bf16.gmra.mxu0 %v1473
      %v1535 = vpop.f32.mrf.mxu0
      %v1536 = vadd.f32 0.0, %v1535
      %v1537 = vpop.f32.mrf.mxu0
      %v1538 = vadd.f32 0.0, %v1537
      %1539 = vmatmul.bf16.gmra.mxu0 %v1476
      %v1540 = vpop.f32.mrf.mxu0
      %v1541 = vadd.f32 0.0, %v1540
      %v1542 = vpop.f32.mrf.mxu0
      %v1543 = vadd.f32 0.0, %v1542
      %1544 = vmatmul.bf16.gmra.mxu0 %v1479
      %v1545 = vpop.f32.mrf.mxu0
      %v1546 = vadd.f32 0.0, %v1545
      %v1547 = vpop.f32.mrf.mxu0
      %v1548 = vadd.f32 0.0, %v1547
      %1549 = vmatmul.bf16.gmra.mxu0 %v1482
      %v1550 = vpop.f32.mrf.mxu0
      %v1551 = vadd.f32 0.0, %v1550
      %v1552 = vpop.f32.mrf.mxu0
      %v1553 = vadd.f32 0.0, %v1552
      %1554 = vmatmul.bf16.gmra.mxu0 %v1485
      %v1555 = vpop.f32.mrf.mxu0
      %v1556 = vadd.f32 0.0, %v1555
      %v1557 = vpop.f32.mrf.mxu0
      %v1558 = vadd.f32 0.0, %v1557
      %1559 = vdwg.mxu0
      %v1560 = vmul.f32 %v990, 0.17677669
      %v1561 = vmul.f32 %v992, 0.17677669
      %v1562 = vmul.f32 %v995, 0.17677669
      %v1563 = vmul.f32 %v997, 0.17677669
      %v1564 = vmul.f32 %v1000, 0.17677669
      %v1565 = vmul.f32 %v1002, 0.17677669
      %v1566 = vmul.f32 %v1005, 0.17677669
      %v1567 = vmul.f32 %v1007, 0.17677669
      %v1568 = vmul.f32 %v1010, 0.17677669
      %v1569 = vmul.f32 %v1012, 0.17677669
      %v1570 = vmul.f32 %v1015, 0.17677669
      %v1571 = vmul.f32 %v1017, 0.17677669
      %v1572 = vmul.f32 %v1020, 0.17677669
      %v1573 = vmul.f32 %v1022, 0.17677669
      %v1574 = vmul.f32 %v1025, 0.17677669
      %v1575 = vmul.f32 %v1027, 0.17677669
      %v1576 = vmul.f32 %v1167, 0.17677669
      %v1577 = vmul.f32 %v1169, 0.17677669
      %v1578 = vmul.f32 %v1172, 0.17677669
      %v1579 = vmul.f32 %v1174, 0.17677669
      %v1580 = vmul.f32 %v1177, 0.17677669
      %v1581 = vmul.f32 %v1179, 0.17677669
      %v1582 = vmul.f32 %v1182, 0.17677669
      %v1583 = vmul.f32 %v1184, 0.17677669
      %v1584 = vmul.f32 %v1187, 0.17677669
      %v1585 = vmul.f32 %v1189, 0.17677669
      %v1586 = vmul.f32 %v1192, 0.17677669
      %v1587 = vmul.f32 %v1194, 0.17677669
      %v1588 = vmul.f32 %v1197, 0.17677669
      %v1589 = vmul.f32 %v1199, 0.17677669
      %v1590 = vmul.f32 %v1202, 0.17677669
      %v1591 = vmul.f32 %v1204, 0.17677669
      %v1592 = vmul.f32 %v1344, 0.17677669
      %v1593 = vmul.f32 %v1346, 0.17677669
      %v1594 = vmul.f32 %v1349, 0.17677669
      %v1595 = vmul.f32 %v1351, 0.17677669
      %v1596 = vmul.f32 %v1354, 0.17677669
      %v1597 = vmul.f32 %v1356, 0.17677669
      %v1598 = vmul.f32 %v1359, 0.17677669
      %v1599 = vmul.f32 %v1361, 0.17677669
      %v1600 = vmul.f32 %v1364, 0.17677669
      %v1601 = vmul.f32 %v1366, 0.17677669
      %v1602 = vmul.f32 %v1369, 0.17677669
      %v1603 = vmul.f32 %v1371, 0.17677669
      %v1604 = vmul.f32 %v1374, 0.17677669
      %v1605 = vmul.f32 %v1376, 0.17677669
      %v1606 = vmul.f32 %v1379, 0.17677669
      %v1607 = vmul.f32 %v1381, 0.17677669
      %v1608 = vmul.f32 %v1521, 0.17677669
      %v1609 = vmul.f32 %v1523, 0.17677669
      %v1610 = vmul.f32 %v1526, 0.17677669
      %v1611 = vmul.f32 %v1528, 0.17677669
      %v1612 = vmul.f32 %v1531, 0.17677669
      %v1613 = vmul.f32 %v1533, 0.17677669
      %v1614 = vmul.f32 %v1536, 0.17677669
      %v1615 = vmul.f32 %v1538, 0.17677669
      %v1616 = vmul.f32 %v1541, 0.17677669
      %v1617 = vmul.f32 %v1543, 0.17677669
      %v1618 = vmul.f32 %v1546, 0.17677669
      %v1619 = vmul.f32 %v1548, 0.17677669
      %v1620 = vmul.f32 %v1551, 0.17677669
      %v1621 = vmul.f32 %v1553, 0.17677669
      %v1622 = vmul.f32 %v1556, 0.17677669
      %v1623 = vmul.f32 %v1558, 0.17677669
      %v1624 = vld [vmem:[#allocation2] sm:$0xff]
      %v1625 = vld [vmem:[#allocation2 + $0x8] sm:$0xff]
      %v1626 = vld [vmem:[#allocation2 + $0x10] sm:$0xff]
      %v1627 = vld [vmem:[#allocation2 + $0x18] sm:$0xff]
      %v1628 = vld [vmem:[#allocation2 + $0x20] sm:$0xff]
      %v1629 = vld [vmem:[#allocation2 + $0x28] sm:$0xff]
      %v1630 = vld [vmem:[#allocation2 + $0x30] sm:$0xff]
      %v1631 = vld [vmem:[#allocation2 + $0x38] sm:$0xff]
      %v1632 = vld [vmem:[#allocation2 + $0x40] sm:$0xff]
      %v1633 = vld [vmem:[#allocation2 + $0x48] sm:$0xff]
      %v1634 = vld [vmem:[#allocation2 + $0x50] sm:$0xff]
      %v1635 = vld [vmem:[#allocation2 + $0x58] sm:$0xff]
      %v1636 = vld [vmem:[#allocation2 + $0x60] sm:$0xff]
      %v1637 = vld [vmem:[#allocation2 + $0x68] sm:$0xff]
      %v1638 = vld [vmem:[#allocation2 + $0x70] sm:$0xff]
      %v1639 = vld [vmem:[#allocation2 + $0x78] sm:$0xff]
      %v1640 = vld [vmem:[#allocation2 + $0x80] sm:$0xff]
      %v1641 = vld [vmem:[#allocation2 + $0x88] sm:$0xff]
      %v1642 = vld [vmem:[#allocation2 + $0x90] sm:$0xff]
      %v1643 = vld [vmem:[#allocation2 + $0x98] sm:$0xff]
      %v1644 = vld [vmem:[#allocation2 + $0xa0] sm:$0xff]
      %v1645 = vld [vmem:[#allocation2 + $0xa8] sm:$0xff]
      %v1646 = vld [vmem:[#allocation2 + $0xb0] sm:$0xff]
      %v1647 = vld [vmem:[#allocation2 + $0xb8] sm:$0xff]
      %v1648 = vld [vmem:[#allocation2 + $0xc0] sm:$0xff]
      %v1649 = vld [vmem:[#allocation2 + $0xc8] sm:$0xff]
      %v1650 = vld [vmem:[#allocation2 + $0xd0] sm:$0xff]
      %v1651 = vld [vmem:[#allocation2 + $0xd8] sm:$0xff]
      %v1652 = vld [vmem:[#allocation2 + $0xe0] sm:$0xff]
      %v1653 = vld [vmem:[#allocation2 + $0xe8] sm:$0xff]
      %v1654 = vld [vmem:[#allocation2 + $0xf0] sm:$0xff]
      %v1655 = vld [vmem:[#allocation2 + $0xf8] sm:$0xff]
      %v1656 = vld [vmem:[#allocation2 + $0x100] sm:$0xff]
      %v1657 = vld [vmem:[#allocation2 + $0x108] sm:$0xff]
      %v1658 = vld [vmem:[#allocation2 + $0x110] sm:$0xff]
      %v1659 = vld [vmem:[#allocation2 + $0x118] sm:$0xff]
      %v1660 = vld [vmem:[#allocation2 + $0x120] sm:$0xff]
      %v1661 = vld [vmem:[#allocation2 + $0x128] sm:$0xff]
      %v1662 = vld [vmem:[#allocation2 + $0x130] sm:$0xff]
      %v1663 = vld [vmem:[#allocation2 + $0x138] sm:$0xff]
      %v1664 = vld [vmem:[#allocation2 + $0x140] sm:$0xff]
      %v1665 = vld [vmem:[#allocation2 + $0x148] sm:$0xff]
      %v1666 = vld [vmem:[#allocation2 + $0x150] sm:$0xff]
      %v1667 = vld [vmem:[#allocation2 + $0x158] sm:$0xff]
      %v1668 = vld [vmem:[#allocation2 + $0x160] sm:$0xff]
      %v1669 = vld [vmem:[#allocation2 + $0x168] sm:$0xff]
      %v1670 = vld [vmem:[#allocation2 + $0x170] sm:$0xff]
      %v1671 = vld [vmem:[#allocation2 + $0x178] sm:$0xff]
      %v1672 = vld [vmem:[#allocation2 + $0x180] sm:$0xff]
      %v1673 = vld [vmem:[#allocation2 + $0x188] sm:$0xff]
      %v1674 = vld [vmem:[#allocation2 + $0x190] sm:$0xff]
      %v1675 = vld [vmem:[#allocation2 + $0x198] sm:$0xff]
      %v1676 = vld [vmem:[#allocation2 + $0x1a0] sm:$0xff]
      %v1677 = vld [vmem:[#allocation2 + $0x1a8] sm:$0xff]
      %v1678 = vld [vmem:[#allocation2 + $0x1b0] sm:$0xff]
      %v1679 = vld [vmem:[#allocation2 + $0x1b8] sm:$0xff]
      %v1680 = vld [vmem:[#allocation2 + $0x1c0] sm:$0xff]
      %v1681 = vld [vmem:[#allocation2 + $0x1c8] sm:$0xff]
      %v1682 = vld [vmem:[#allocation2 + $0x1d0] sm:$0xff]
      %v1683 = vld [vmem:[#allocation2 + $0x1d8] sm:$0xff]
      %v1684 = vld [vmem:[#allocation2 + $0x1e0] sm:$0xff]
      %v1685 = vld [vmem:[#allocation2 + $0x1e8] sm:$0xff]
      %v1686 = vld [vmem:[#allocation2 + $0x1f0] sm:$0xff]
      %v1687 = vld [vmem:[#allocation2 + $0x1f8] sm:$0xff]
      %1688 = vmax.xlane.f32.xlu0 %v1560
      %v1689 = vpop.xlane.xlu0 %1688
      %1690 = vmax.xlane.f32.xlu0 %v1561
      %v1691 = vpop.xlane.xlu0 %1690
      %1692 = vmax.xlane.f32.xlu0 %v1562
      %v1693 = vpop.xlane.xlu0 %1692
      %1694 = vmax.xlane.f32.xlu0 %v1563
      %v1695 = vpop.xlane.xlu0 %1694
      %1696 = vmax.xlane.f32.xlu0 %v1564
      %v1697 = vpop.xlane.xlu0 %1696
      %1698 = vmax.xlane.f32.xlu0 %v1565
      %v1699 = vpop.xlane.xlu0 %1698
      %1700 = vmax.xlane.f32.xlu0 %v1566
      %v1701 = vpop.xlane.xlu0 %1700
      %1702 = vmax.xlane.f32.xlu0 %v1567
      %v1703 = vpop.xlane.xlu0 %1702
      %1704 = vmax.xlane.f32.xlu0 %v1568
      %v1705 = vpop.xlane.xlu0 %1704
      %1706 = vmax.xlane.f32.xlu0 %v1569
      %v1707 = vpop.xlane.xlu0 %1706
      %1708 = vmax.xlane.f32.xlu0 %v1570
      %v1709 = vpop.xlane.xlu0 %1708
      %1710 = vmax.xlane.f32.xlu0 %v1571
      %v1711 = vpop.xlane.xlu0 %1710
      %1712 = vmax.xlane.f32.xlu0 %v1572
      %v1713 = vpop.xlane.xlu0 %1712
      %1714 = vmax.xlane.f32.xlu0 %v1573
      %v1715 = vpop.xlane.xlu0 %1714
      %1716 = vmax.xlane.f32.xlu0 %v1574
      %v1717 = vpop.xlane.xlu0 %1716
      %1718 = vmax.xlane.f32.xlu0 %v1575
      %v1719 = vpop.xlane.xlu0 %1718
      %1720 = vmax.xlane.f32.xlu0 %v1576
      %v1721 = vpop.xlane.xlu0 %1720
      %1722 = vmax.xlane.f32.xlu0 %v1577
      %v1723 = vpop.xlane.xlu0 %1722
      %1724 = vmax.xlane.f32.xlu0 %v1578
      %v1725 = vpop.xlane.xlu0 %1724
      %1726 = vmax.xlane.f32.xlu0 %v1579
      %v1727 = vpop.xlane.xlu0 %1726
      %1728 = vmax.xlane.f32.xlu0 %v1580
      %v1729 = vpop.xlane.xlu0 %1728
      %1730 = vmax.xlane.f32.xlu0 %v1581
      %v1731 = vpop.xlane.xlu0 %1730
      %1732 = vmax.xlane.f32.xlu0 %v1582
      %v1733 = vpop.xlane.xlu0 %1732
      %1734 = vmax.xlane.f32.xlu0 %v1583
      %v1735 = vpop.xlane.xlu0 %1734
      %1736 = vmax.xlane.f32.xlu0 %v1584
      %v1737 = vpop.xlane.xlu0 %1736
      %1738 = vmax.xlane.f32.xlu0 %v1585
      %v1739 = vpop.xlane.xlu0 %1738
      %1740 = vmax.xlane.f32.xlu0 %v1586
      %v1741 = vpop.xlane.xlu0 %1740
      %1742 = vmax.xlane.f32.xlu0 %v1587
      %v1743 = vpop.xlane.xlu0 %1742
      %1744 = vmax.xlane.f32.xlu0 %v1588
      %v1745 = vpop.xlane.xlu0 %1744
      %1746 = vmax.xlane.f32.xlu0 %v1589
      %v1747 = vpop.xlane.xlu0 %1746
      %1748 = vmax.xlane.f32.xlu0 %v1590
      %v1749 = vpop.xlane.xlu0 %1748
      %1750 = vmax.xlane.f32.xlu0 %v1591
      %v1751 = vpop.xlane.xlu0 %1750
      %1752 = vmax.xlane.f32.xlu0 %v1592
      %v1753 = vpop.xlane.xlu0 %1752
      %1754 = vmax.xlane.f32.xlu0 %v1593
      %v1755 = vpop.xlane.xlu0 %1754
      %1756 = vmax.xlane.f32.xlu0 %v1594
      %v1757 = vpop.xlane.xlu0 %1756
      %1758 = vmax.xlane.f32.xlu0 %v1595
      %v1759 = vpop.xlane.xlu0 %1758
      %1760 = vmax.xlane.f32.xlu0 %v1596
      %v1761 = vpop.xlane.xlu0 %1760
      %1762 = vmax.xlane.f32.xlu0 %v1597
      %v1763 = vpop.xlane.xlu0 %1762
      %1764 = vmax.xlane.f32.xlu0 %v1598
      %v1765 = vpop.xlane.xlu0 %1764
      %1766 = vmax.xlane.f32.xlu0 %v1599
      %v1767 = vpop.xlane.xlu0 %1766
      %1768 = vmax.xlane.f32.xlu0 %v1600
      %v1769 = vpop.xlane.xlu0 %1768
      %1770 = vmax.xlane.f32.xlu0 %v1601
      %v1771 = vpop.xlane.xlu0 %1770
      %1772 = vmax.xlane.f32.xlu0 %v1602
      %v1773 = vpop.xlane.xlu0 %1772
      %1774 = vmax.xlane.f32.xlu0 %v1603
      %v1775 = vpop.xlane.xlu0 %1774
      %1776 = vmax.xlane.f32.xlu0 %v1604
      %v1777 = vpop.xlane.xlu0 %1776
      %1778 = vmax.xlane.f32.xlu0 %v1605
      %v1779 = vpop.xlane.xlu0 %1778
      %1780 = vmax.xlane.f32.xlu0 %v1606
      %v1781 = vpop.xlane.xlu0 %1780
      %1782 = vmax.xlane.f32.xlu0 %v1607
      %v1783 = vpop.xlane.xlu0 %1782
      %1784 = vmax.xlane.f32.xlu0 %v1608
      %v1785 = vpop.xlane.xlu0 %1784
      %1786 = vmax.xlane.f32.xlu0 %v1609
      %v1787 = vpop.xlane.xlu0 %1786
      %1788 = vmax.xlane.f32.xlu0 %v1610
      %v1789 = vpop.xlane.xlu0 %1788
      %1790 = vmax.xlane.f32.xlu0 %v1611
      %v1791 = vpop.xlane.xlu0 %1790
      %1792 = vmax.xlane.f32.xlu0 %v1612
      %v1793 = vpop.xlane.xlu0 %1792
      %1794 = vmax.xlane.f32.xlu0 %v1613
      %v1795 = vpop.xlane.xlu0 %1794
      %1796 = vmax.xlane.f32.xlu0 %v1614
      %v1797 = vpop.xlane.xlu0 %1796
      %1798 = vmax.xlane.f32.xlu0 %v1615
      %v1799 = vpop.xlane.xlu0 %1798
      %1800 = vmax.xlane.f32.xlu0 %v1616
      %v1801 = vpop.xlane.xlu0 %1800
      %1802 = vmax.xlane.f32.xlu0 %v1617
      %v1803 = vpop.xlane.xlu0 %1802
      %1804 = vmax.xlane.f32.xlu0 %v1618
      %v1805 = vpop.xlane.xlu0 %1804
      %1806 = vmax.xlane.f32.xlu0 %v1619
      %v1807 = vpop.xlane.xlu0 %1806
      %1808 = vmax.xlane.f32.xlu0 %v1620
      %v1809 = vpop.xlane.xlu0 %1808
      %1810 = vmax.xlane.f32.xlu0 %v1621
      %v1811 = vpop.xlane.xlu0 %1810
      %1812 = vmax.xlane.f32.xlu0 %v1622
      %v1813 = vpop.xlane.xlu0 %1812
      %1814 = vmax.xlane.f32.xlu0 %v1623
      %v1815 = vpop.xlane.xlu0 %1814
      %v1816 = vmax.f32 %v1624, %v1689
      %v1817 = vmax.f32 %v1625, %v1691
      %v1818 = vmax.f32 %v1626, %v1693
      %v1819 = vmax.f32 %v1627, %v1695
      %v1820 = vmax.f32 %v1628, %v1697
      %v1821 = vmax.f32 %v1629, %v1699
      %v1822 = vmax.f32 %v1630, %v1701
      %v1823 = vmax.f32 %v1631, %v1703
      %v1824 = vmax.f32 %v1632, %v1705
      %v1825 = vmax.f32 %v1633, %v1707
      %v1826 = vmax.f32 %v1634, %v1709
      %v1827 = vmax.f32 %v1635, %v1711
      %v1828 = vmax.f32 %v1636, %v1713
      %v1829 = vmax.f32 %v1637, %v1715
      %v1830 = vmax.f32 %v1638, %v1717
      %v1831 = vmax.f32 %v1639, %v1719
      %v1832 = vmax.f32 %v1640, %v1721
      %v1833 = vmax.f32 %v1641, %v1723
      %v1834 = vmax.f32 %v1642, %v1725
      %v1835 = vmax.f32 %v1643, %v1727
      %v1836 = vmax.f32 %v1644, %v1729
      %v1837 = vmax.f32 %v1645, %v1731
      %v1838 = vmax.f32 %v1646, %v1733
      %v1839 = vmax.f32 %v1647, %v1735
      %v1840 = vmax.f32 %v1648, %v1737
      %v1841 = vmax.f32 %v1649, %v1739
      %v1842 = vmax.f32 %v1650, %v1741
      %v1843 = vmax.f32 %v1651, %v1743
      %v1844 = vmax.f32 %v1652, %v1745
      %v1845 = vmax.f32 %v1653, %v1747
      %v1846 = vmax.f32 %v1654, %v1749
      %v1847 = vmax.f32 %v1655, %v1751
      %v1848 = vmax.f32 %v1656, %v1753
      %v1849 = vmax.f32 %v1657, %v1755
      %v1850 = vmax.f32 %v1658, %v1757
      %v1851 = vmax.f32 %v1659, %v1759
      %v1852 = vmax.f32 %v1660, %v1761
      %v1853 = vmax.f32 %v1661, %v1763
      %v1854 = vmax.f32 %v1662, %v1765
      %v1855 = vmax.f32 %v1663, %v1767
      %v1856 = vmax.f32 %v1664, %v1769
      %v1857 = vmax.f32 %v1665, %v1771
      %v1858 = vmax.f32 %v1666, %v1773
      %v1859 = vmax.f32 %v1667, %v1775
      %v1860 = vmax.f32 %v1668, %v1777
      %v1861 = vmax.f32 %v1669, %v1779
      %v1862 = vmax.f32 %v1670, %v1781
      %v1863 = vmax.f32 %v1671, %v1783
      %v1864 = vmax.f32 %v1672, %v1785
      %v1865 = vmax.f32 %v1673, %v1787
      %v1866 = vmax.f32 %v1674, %v1789
      %v1867 = vmax.f32 %v1675, %v1791
      %v1868 = vmax.f32 %v1676, %v1793
      %v1869 = vmax.f32 %v1677, %v1795
      %v1870 = vmax.f32 %v1678, %v1797
      %v1871 = vmax.f32 %v1679, %v1799
      %v1872 = vmax.f32 %v1680, %v1801
      %v1873 = vmax.f32 %v1681, %v1803
      %v1874 = vmax.f32 %v1682, %v1805
      %v1875 = vmax.f32 %v1683, %v1807
      %v1876 = vmax.f32 %v1684, %v1809
      %v1877 = vmax.f32 %v1685, %v1811
      %v1878 = vmax.f32 %v1686, %v1813
      %v1879 = vmax.f32 %v1687, %v1815
      %v1880 = vsub.f32 %v1624, %v1816
      %v1881 = vsub.f32 %v1625, %v1817
      %v1882 = vsub.f32 %v1626, %v1818
      %v1883 = vsub.f32 %v1627, %v1819
      %v1884 = vsub.f32 %v1628, %v1820
      %v1885 = vsub.f32 %v1629, %v1821
      %v1886 = vsub.f32 %v1630, %v1822
      %v1887 = vsub.f32 %v1631, %v1823
      %v1888 = vsub.f32 %v1632, %v1824
      %v1889 = vsub.f32 %v1633, %v1825
      %v1890 = vsub.f32 %v1634, %v1826
      %v1891 = vsub.f32 %v1635, %v1827
      %v1892 = vsub.f32 %v1636, %v1828
      %v1893 = vsub.f32 %v1637, %v1829
      %v1894 = vsub.f32 %v1638, %v1830
      %v1895 = vsub.f32 %v1639, %v1831
      %v1896 = vsub.f32 %v1640, %v1832
      %v1897 = vsub.f32 %v1641, %v1833
      %v1898 = vsub.f32 %v1642, %v1834
      %v1899 = vsub.f32 %v1643, %v1835
      %v1900 = vsub.f32 %v1644, %v1836
      %v1901 = vsub.f32 %v1645, %v1837
      %v1902 = vsub.f32 %v1646, %v1838
      %v1903 = vsub.f32 %v1647, %v1839
      %v1904 = vsub.f32 %v1648, %v1840
      %v1905 = vsub.f32 %v1649, %v1841
      %v1906 = vsub.f32 %v1650, %v1842
      %v1907 = vsub.f32 %v1651, %v1843
      %v1908 = vsub.f32 %v1652, %v1844
      %v1909 = vsub.f32 %v1653, %v1845
      %v1910 = vsub.f32 %v1654, %v1846
      %v1911 = vsub.f32 %v1655, %v1847
      %v1912 = vsub.f32 %v1656, %v1848
      %v1913 = vsub.f32 %v1657, %v1849
      %v1914 = vsub.f32 %v1658, %v1850
      %v1915 = vsub.f32 %v1659, %v1851
      %v1916 = vsub.f32 %v1660, %v1852
      %v1917 = vsub.f32 %v1661, %v1853
      %v1918 = vsub.f32 %v1662, %v1854
      %v1919 = vsub.f32 %v1663, %v1855
      %v1920 = vsub.f32 %v1664, %v1856
      %v1921 = vsub.f32 %v1665, %v1857
      %v1922 = vsub.f32 %v1666, %v1858
      %v1923 = vsub.f32 %v1667, %v1859
      %v1924 = vsub.f32 %v1668, %v1860
      %v1925 = vsub.f32 %v1669, %v1861
      %v1926 = vsub.f32 %v1670, %v1862
      %v1927 = vsub.f32 %v1671, %v1863
      %v1928 = vsub.f32 %v1672, %v1864
      %v1929 = vsub.f32 %v1673, %v1865
      %v1930 = vsub.f32 %v1674, %v1866
      %v1931 = vsub.f32 %v1675, %v1867
      %v1932 = vsub.f32 %v1676, %v1868
      %v1933 = vsub.f32 %v1677, %v1869
      %v1934 = vsub.f32 %v1678, %v1870
      %v1935 = vsub.f32 %v1679, %v1871
      %v1936 = vsub.f32 %v1680, %v1872
      %v1937 = vsub.f32 %v1681, %v1873
      %v1938 = vsub.f32 %v1682, %v1874
      %v1939 = vsub.f32 %v1683, %v1875
      %v1940 = vsub.f32 %v1684, %v1876
      %v1941 = vsub.f32 %v1685, %v1877
      %v1942 = vsub.f32 %v1686, %v1878
      %v1943 = vsub.f32 %v1687, %v1879
      %v1944 = vmul.f32 %v1880, 1.442695
      %v1945 = vpow.pop %v1944
      %v1946 = vmul.f32 %v1881, 1.442695
      %v1947 = vpow.pop %v1946
      %v1948 = vmul.f32 %v1882, 1.442695
      %v1949 = vpow.pop %v1948
      %v1950 = vmul.f32 %v1883, 1.442695
      %v1951 = vpow.pop %v1950
      %v1952 = vmul.f32 %v1884, 1.442695
      %v1953 = vpow.pop %v1952
      %v1954 = vmul.f32 %v1885, 1.442695
      %v1955 = vpow.pop %v1954
      %v1956 = vmul.f32 %v1886, 1.442695
      %v1957 = vpow.pop %v1956
      %v1958 = vmul.f32 %v1887, 1.442695
      %v1959 = vpow.pop %v1958
      %v1960 = vmul.f32 %v1888, 1.442695
      %v1961 = vpow.pop %v1960
      %v1962 = vmul.f32 %v1889, 1.442695
      %v1963 = vpow.pop %v1962
      %v1964 = vmul.f32 %v1890, 1.442695
      %v1965 = vpow.pop %v1964
      %v1966 = vmul.f32 %v1891, 1.442695
      %v1967 = vpow.pop %v1966
      %v1968 = vmul.f32 %v1892, 1.442695
      %v1969 = vpow.pop %v1968
      %v1970 = vmul.f32 %v1893, 1.442695
      %v1971 = vpow.pop %v1970
      %v1972 = vmul.f32 %v1894, 1.442695
      %v1973 = vpow.pop %v1972
      %v1974 = vmul.f32 %v1895, 1.442695
      %v1975 = vpow.pop %v1974
      %v1976 = vmul.f32 %v1896, 1.442695
      %v1977 = vpow.pop %v1976
      %v1978 = vmul.f32 %v1897, 1.442695
      %v1979 = vpow.pop %v1978
      %v1980 = vmul.f32 %v1898, 1.442695
      %v1981 = vpow.pop %v1980
      %v1982 = vmul.f32 %v1899, 1.442695
      %v1983 = vpow.pop %v1982
      %v1984 = vmul.f32 %v1900, 1.442695
      %v1985 = vpow.pop %v1984
      %v1986 = vmul.f32 %v1901, 1.442695
      %v1987 = vpow.pop %v1986
      %v1988 = vmul.f32 %v1902, 1.442695
      %v1989 = vpow.pop %v1988
      %v1990 = vmul.f32 %v1903, 1.442695
      %v1991 = vpow.pop %v1990
      %v1992 = vmul.f32 %v1904, 1.442695
      %v1993 = vpow.pop %v1992
      %v1994 = vmul.f32 %v1905, 1.442695
      %v1995 = vpow.pop %v1994
      %v1996 = vmul.f32 %v1906, 1.442695
      %v1997 = vpow.pop %v1996
      %v1998 = vmul.f32 %v1907, 1.442695
      %v1999 = vpow.pop %v1998
      %v2000 = vmul.f32 %v1908, 1.442695
      %v2001 = vpow.pop %v2000
      %v2002 = vmul.f32 %v1909, 1.442695
      %v2003 = vpow.pop %v2002
      %v2004 = vmul.f32 %v1910, 1.442695
      %v2005 = vpow.pop %v2004
      %v2006 = vmul.f32 %v1911, 1.442695
      %v2007 = vpow.pop %v2006
      %v2008 = vmul.f32 %v1912, 1.442695
      %v2009 = vpow.pop %v2008
      %v2010 = vmul.f32 %v1913, 1.442695
      %v2011 = vpow.pop %v2010
      %v2012 = vmul.f32 %v1914, 1.442695
      %v2013 = vpow.pop %v2012
      %v2014 = vmul.f32 %v1915, 1.442695
      %v2015 = vpow.pop %v2014
      %v2016 = vmul.f32 %v1916, 1.442695
      %v2017 = vpow.pop %v2016
      %v2018 = vmul.f32 %v1917, 1.442695
      %v2019 = vpow.pop %v2018
      %v2020 = vmul.f32 %v1918, 1.442695
      %v2021 = vpow.pop %v2020
      %v2022 = vmul.f32 %v1919, 1.442695
      %v2023 = vpow.pop %v2022
      %v2024 = vmul.f32 %v1920, 1.442695
      %v2025 = vpow.pop %v2024
      %v2026 = vmul.f32 %v1921, 1.442695
      %v2027 = vpow.pop %v2026
      %v2028 = vmul.f32 %v1922, 1.442695
      %v2029 = vpow.pop %v2028
      %v2030 = vmul.f32 %v1923, 1.442695
      %v2031 = vpow.pop %v2030
      %v2032 = vmul.f32 %v1924, 1.442695
      %v2033 = vpow.pop %v2032
      %v2034 = vmul.f32 %v1925, 1.442695
      %v2035 = vpow.pop %v2034
      %v2036 = vmul.f32 %v1926, 1.442695
      %v2037 = vpow.pop %v2036
      %v2038 = vmul.f32 %v1927, 1.442695
      %v2039 = vpow.pop %v2038
      %v2040 = vmul.f32 %v1928, 1.442695
      %v2041 = vpow.pop %v2040
      %v2042 = vmul.f32 %v1929, 1.442695
      %v2043 = vpow.pop %v2042
      %v2044 = vmul.f32 %v1930, 1.442695
      %v2045 = vpow.pop %v2044
      %v2046 = vmul.f32 %v1931, 1.442695
      %v2047 = vpow.pop %v2046
      %v2048 = vmul.f32 %v1932, 1.442695
      %v2049 = vpow.pop %v2048
      %v2050 = vmul.f32 %v1933, 1.442695
      %v2051 = vpow.pop %v2050
      %v2052 = vmul.f32 %v1934, 1.442695
      %v2053 = vpow.pop %v2052
      %v2054 = vmul.f32 %v1935, 1.442695
      %v2055 = vpow.pop %v2054
      %v2056 = vmul.f32 %v1936, 1.442695
      %v2057 = vpow.pop %v2056
      %v2058 = vmul.f32 %v1937, 1.442695
      %v2059 = vpow.pop %v2058
      %v2060 = vmul.f32 %v1938, 1.442695
      %v2061 = vpow.pop %v2060
      %v2062 = vmul.f32 %v1939, 1.442695
      %v2063 = vpow.pop %v2062
      %v2064 = vmul.f32 %v1940, 1.442695
      %v2065 = vpow.pop %v2064
      %v2066 = vmul.f32 %v1941, 1.442695
      %v2067 = vpow.pop %v2066
      %v2068 = vmul.f32 %v1942, 1.442695
      %v2069 = vpow.pop %v2068
      %v2070 = vmul.f32 %v1943, 1.442695
      %v2071 = vpow.pop %v2070
      %2073 = vset.pattern.permute.xlu0 0
      %2074 = vperm.xlu0 %2073, %v1816
      %v2075 = vpop.permute.xlu0 %2074
      %2078 = vset.pattern.permute.xlu0 0
      %2079 = vperm.xlu0 %2078, %v1817
      %v2080 = vpop.permute.xlu0 %2079
      %2083 = vset.pattern.permute.xlu0 0
      %2084 = vperm.xlu0 %2083, %v1818
      %v2085 = vpop.permute.xlu0 %2084
      %2088 = vset.pattern.permute.xlu0 0
      %2089 = vperm.xlu0 %2088, %v1819
      %v2090 = vpop.permute.xlu0 %2089
      %2093 = vset.pattern.permute.xlu0 0
      %2094 = vperm.xlu0 %2093, %v1820
      %v2095 = vpop.permute.xlu0 %2094
      %2098 = vset.pattern.permute.xlu0 0
      %2099 = vperm.xlu0 %2098, %v1821
      %v2100 = vpop.permute.xlu0 %2099
      %2103 = vset.pattern.permute.xlu0 0
      %2104 = vperm.xlu0 %2103, %v1822
      %v2105 = vpop.permute.xlu0 %2104
      %2108 = vset.pattern.permute.xlu0 0
      %2109 = vperm.xlu0 %2108, %v1823
      %v2110 = vpop.permute.xlu0 %2109
      %2113 = vset.pattern.permute.xlu0 0
      %2114 = vperm.xlu0 %2113, %v1824
      %v2115 = vpop.permute.xlu0 %2114
      %2118 = vset.pattern.permute.xlu0 0
      %2119 = vperm.xlu0 %2118, %v1825
      %v2120 = vpop.permute.xlu0 %2119
      %2123 = vset.pattern.permute.xlu0 0
      %2124 = vperm.xlu0 %2123, %v1826
      %v2125 = vpop.permute.xlu0 %2124
      %2128 = vset.pattern.permute.xlu0 0
      %2129 = vperm.xlu0 %2128, %v1827
      %v2130 = vpop.permute.xlu0 %2129
      %2133 = vset.pattern.permute.xlu0 0
      %2134 = vperm.xlu0 %2133, %v1828
      %v2135 = vpop.permute.xlu0 %2134
      %2138 = vset.pattern.permute.xlu0 0
      %2139 = vperm.xlu0 %2138, %v1829
      %v2140 = vpop.permute.xlu0 %2139
      %2143 = vset.pattern.permute.xlu0 0
      %2144 = vperm.xlu0 %2143, %v1830
      %v2145 = vpop.permute.xlu0 %2144
      %2148 = vset.pattern.permute.xlu0 0
      %2149 = vperm.xlu0 %2148, %v1831
      %v2150 = vpop.permute.xlu0 %2149
      %2153 = vset.pattern.permute.xlu0 0
      %2154 = vperm.xlu0 %2153, %v1832
      %v2155 = vpop.permute.xlu0 %2154
      %2158 = vset.pattern.permute.xlu0 0
      %2159 = vperm.xlu0 %2158, %v1833
      %v2160 = vpop.permute.xlu0 %2159
      %2163 = vset.pattern.permute.xlu0 0
      %2164 = vperm.xlu0 %2163, %v1834
      %v2165 = vpop.permute.xlu0 %2164
      %2168 = vset.pattern.permute.xlu0 0
      %2169 = vperm.xlu0 %2168, %v1835
      %v2170 = vpop.permute.xlu0 %2169
      %2173 = vset.pattern.permute.xlu0 0
      %2174 = vperm.xlu0 %2173, %v1836
      %v2175 = vpop.permute.xlu0 %2174
      %2178 = vset.pattern.permute.xlu0 0
      %2179 = vperm.xlu0 %2178, %v1837
      %v2180 = vpop.permute.xlu0 %2179
      %2183 = vset.pattern.permute.xlu0 0
      %2184 = vperm.xlu0 %2183, %v1838
      %v2185 = vpop.permute.xlu0 %2184
      %2188 = vset.pattern.permute.xlu0 0
      %2189 = vperm.xlu0 %2188, %v1839
      %v2190 = vpop.permute.xlu0 %2189
      %2193 = vset.pattern.permute.xlu0 0
      %2194 = vperm.xlu0 %2193, %v1840
      %v2195 = vpop.permute.xlu0 %2194
      %2198 = vset.pattern.permute.xlu0 0
      %2199 = vperm.xlu0 %2198, %v1841
      %v2200 = vpop.permute.xlu0 %2199
      %2203 = vset.pattern.permute.xlu0 0
      %2204 = vperm.xlu0 %2203, %v1842
      %v2205 = vpop.permute.xlu0 %2204
      %2208 = vset.pattern.permute.xlu0 0
      %2209 = vperm.xlu0 %2208, %v1843
      %v2210 = vpop.permute.xlu0 %2209
      %2213 = vset.pattern.permute.xlu0 0
      %2214 = vperm.xlu0 %2213, %v1844
      %v2215 = vpop.permute.xlu0 %2214
      %2218 = vset.pattern.permute.xlu0 0
      %2219 = vperm.xlu0 %2218, %v1845
      %v2220 = vpop.permute.xlu0 %2219
      %2223 = vset.pattern.permute.xlu0 0
      %2224 = vperm.xlu0 %2223, %v1846
      %v2225 = vpop.permute.xlu0 %2224
      %2228 = vset.pattern.permute.xlu0 0
      %2229 = vperm.xlu0 %2228, %v1847
      %v2230 = vpop.permute.xlu0 %2229
      %2233 = vset.pattern.permute.xlu0 0
      %2234 = vperm.xlu0 %2233, %v1848
      %v2235 = vpop.permute.xlu0 %2234
      %2238 = vset.pattern.permute.xlu0 0
      %2239 = vperm.xlu0 %2238, %v1849
      %v2240 = vpop.permute.xlu0 %2239
      %2243 = vset.pattern.permute.xlu0 0
      %2244 = vperm.xlu0 %2243, %v1850
      %v2245 = vpop.permute.xlu0 %2244
      %2248 = vset.pattern.permute.xlu0 0
      %2249 = vperm.xlu0 %2248, %v1851
      %v2250 = vpop.permute.xlu0 %2249
      %2253 = vset.pattern.permute.xlu0 0
      %2254 = vperm.xlu0 %2253, %v1852
      %v2255 = vpop.permute.xlu0 %2254
      %2258 = vset.pattern.permute.xlu0 0
      %2259 = vperm.xlu0 %2258, %v1853
      %v2260 = vpop.permute.xlu0 %2259
      %2263 = vset.pattern.permute.xlu0 0
      %2264 = vperm.xlu0 %2263, %v1854
      %v2265 = vpop.permute.xlu0 %2264
      %2268 = vset.pattern.permute.xlu0 0
      %2269 = vperm.xlu0 %2268, %v1855
      %v2270 = vpop.permute.xlu0 %2269
      %2273 = vset.pattern.permute.xlu0 0
      %2274 = vperm.xlu0 %2273, %v1856
      %v2275 = vpop.permute.xlu0 %2274
      %2278 = vset.pattern.permute.xlu0 0
      %2279 = vperm.xlu0 %2278, %v1857
      %v2280 = vpop.permute.xlu0 %2279
      %2283 = vset.pattern.permute.xlu0 0
      %2284 = vperm.xlu0 %2283, %v1858
      %v2285 = vpop.permute.xlu0 %2284
      %2288 = vset.pattern.permute.xlu0 0
      %2289 = vperm.xlu0 %2288, %v1859
      %v2290 = vpop.permute.xlu0 %2289
      %2293 = vset.pattern.permute.xlu0 0
      %2294 = vperm.xlu0 %2293, %v1860
      %v2295 = vpop.permute.xlu0 %2294
      %2298 = vset.pattern.permute.xlu0 0
      %2299 = vperm.xlu0 %2298, %v1861
      %v2300 = vpop.permute.xlu0 %2299
      %2303 = vset.pattern.permute.xlu0 0
      %2304 = vperm.xlu0 %2303, %v1862
      %v2305 = vpop.permute.xlu0 %2304
      %2308 = vset.pattern.permute.xlu0 0
      %2309 = vperm.xlu0 %2308, %v1863
      %v2310 = vpop.permute.xlu0 %2309
      %2313 = vset.pattern.permute.xlu0 0
      %2314 = vperm.xlu0 %2313, %v1864
      %v2315 = vpop.permute.xlu0 %2314
      %2318 = vset.pattern.permute.xlu0 0
      %2319 = vperm.xlu0 %2318, %v1865
      %v2320 = vpop.permute.xlu0 %2319
      %2323 = vset.pattern.permute.xlu0 0
      %2324 = vperm.xlu0 %2323, %v1866
      %v2325 = vpop.permute.xlu0 %2324
      %2328 = vset.pattern.permute.xlu0 0
      %2329 = vperm.xlu0 %2328, %v1867
      %v2330 = vpop.permute.xlu0 %2329
      %2333 = vset.pattern.permute.xlu0 0
      %2334 = vperm.xlu0 %2333, %v1868
      %v2335 = vpop.permute.xlu0 %2334
      %2338 = vset.pattern.permute.xlu0 0
      %2339 = vperm.xlu0 %2338, %v1869
      %v2340 = vpop.permute.xlu0 %2339
      %2343 = vset.pattern.permute.xlu0 0
      %2344 = vperm.xlu0 %2343, %v1870
      %v2345 = vpop.permute.xlu0 %2344
      %2348 = vset.pattern.permute.xlu0 0
      %2349 = vperm.xlu0 %2348, %v1871
      %v2350 = vpop.permute.xlu0 %2349
      %2353 = vset.pattern.permute.xlu0 0
      %2354 = vperm.xlu0 %2353, %v1872
      %v2355 = vpop.permute.xlu0 %2354
      %2358 = vset.pattern.permute.xlu0 0
      %2359 = vperm.xlu0 %2358, %v1873
      %v2360 = vpop.permute.xlu0 %2359
      %2363 = vset.pattern.permute.xlu0 0
      %2364 = vperm.xlu0 %2363, %v1874
      %v2365 = vpop.permute.xlu0 %2364
      %2368 = vset.pattern.permute.xlu0 0
      %2369 = vperm.xlu0 %2368, %v1875
      %v2370 = vpop.permute.xlu0 %2369
      %2373 = vset.pattern.permute.xlu0 0
      %2374 = vperm.xlu0 %2373, %v1876
      %v2375 = vpop.permute.xlu0 %2374
      %2378 = vset.pattern.permute.xlu0 0
      %2379 = vperm.xlu0 %2378, %v1877
      %v2380 = vpop.permute.xlu0 %2379
      %2383 = vset.pattern.permute.xlu0 0
      %2384 = vperm.xlu0 %2383, %v1878
      %v2385 = vpop.permute.xlu0 %2384
      %2388 = vset.pattern.permute.xlu0 0
      %2389 = vperm.xlu0 %2388, %v1879
      %v2390 = vpop.permute.xlu0 %2389
      %v2392 = vsub.f32 %v1560, %v2075
      %v2393 = vsub.f32 %v1561, %v2080
      %v2394 = vsub.f32 %v1562, %v2085
      %v2395 = vsub.f32 %v1563, %v2090
      %v2396 = vsub.f32 %v1564, %v2095
      %v2397 = vsub.f32 %v1565, %v2100
      %v2398 = vsub.f32 %v1566, %v2105
      %v2399 = vsub.f32 %v1567, %v2110
      %v2400 = vsub.f32 %v1568, %v2115
      %v2401 = vsub.f32 %v1569, %v2120
      %v2402 = vsub.f32 %v1570, %v2125
      %v2403 = vsub.f32 %v1571, %v2130
      %v2404 = vsub.f32 %v1572, %v2135
      %v2405 = vsub.f32 %v1573, %v2140
      %v2406 = vsub.f32 %v1574, %v2145
      %v2407 = vsub.f32 %v1575, %v2150
      %v2408 = vsub.f32 %v1576, %v2155
      %v2409 = vsub.f32 %v1577, %v2160
      %v2410 = vsub.f32 %v1578, %v2165
      %v2411 = vsub.f32 %v1579, %v2170
      %v2412 = vsub.f32 %v1580, %v2175
      %v2413 = vsub.f32 %v1581, %v2180
      %v2414 = vsub.f32 %v1582, %v2185
      %v2415 = vsub.f32 %v1583, %v2190
      %v2416 = vsub.f32 %v1584, %v2195
      %v2417 = vsub.f32 %v1585, %v2200
      %v2418 = vsub.f32 %v1586, %v2205
      %v2419 = vsub.f32 %v1587, %v2210
      %v2420 = vsub.f32 %v1588, %v2215
      %v2421 = vsub.f32 %v1589, %v2220
      %v2422 = vsub.f32 %v1590, %v2225
      %v2423 = vsub.f32 %v1591, %v2230
      %v2424 = vsub.f32 %v1592, %v2235
      %v2425 = vsub.f32 %v1593, %v2240
      %v2426 = vsub.f32 %v1594, %v2245
      %v2427 = vsub.f32 %v1595, %v2250
      %v2428 = vsub.f32 %v1596, %v2255
      %v2429 = vsub.f32 %v1597, %v2260
      %v2430 = vsub.f32 %v1598, %v2265
      %v2431 = vsub.f32 %v1599, %v2270
      %v2432 = vsub.f32 %v1600, %v2275
      %v2433 = vsub.f32 %v1601, %v2280
      %v2434 = vsub.f32 %v1602, %v2285
      %v2435 = vsub.f32 %v1603, %v2290
      %v2436 = vsub.f32 %v1604, %v2295
      %v2437 = vsub.f32 %v1605, %v2300
      %v2438 = vsub.f32 %v1606, %v2305
      %v2439 = vsub.f32 %v1607, %v2310
      %v2440 = vsub.f32 %v1608, %v2315
      %v2441 = vsub.f32 %v1609, %v2320
      %v2442 = vsub.f32 %v1610, %v2325
      %v2443 = vsub.f32 %v1611, %v2330
      %v2444 = vsub.f32 %v1612, %v2335
      %v2445 = vsub.f32 %v1613, %v2340
      %v2446 = vsub.f32 %v1614, %v2345
      %v2447 = vsub.f32 %v1615, %v2350
      %v2448 = vsub.f32 %v1616, %v2355
      %v2449 = vsub.f32 %v1617, %v2360
      %v2450 = vsub.f32 %v1618, %v2365
      %v2451 = vsub.f32 %v1619, %v2370
      %v2452 = vsub.f32 %v1620, %v2375
      %v2453 = vsub.f32 %v1621, %v2380
      %v2454 = vsub.f32 %v1622, %v2385
      %v2455 = vsub.f32 %v1623, %v2390
      %v2456 = vmul.f32 %v2392, 1.442695
      %v2457 = vpow.pop %v2456
      %v2458 = vmul.f32 %v2393, 1.442695
      %v2459 = vpow.pop %v2458
      %v2460 = vmul.f32 %v2394, 1.442695
      %v2461 = vpow.pop %v2460
      %v2462 = vmul.f32 %v2395, 1.442695
      %v2463 = vpow.pop %v2462
      %v2464 = vmul.f32 %v2396, 1.442695
      %v2465 = vpow.pop %v2464
      %v2466 = vmul.f32 %v2397, 1.442695
      %v2467 = vpow.pop %v2466
      %v2468 = vmul.f32 %v2398, 1.442695
      %v2469 = vpow.pop %v2468
      %v2470 = vmul.f32 %v2399, 1.442695
      %v2471 = vpow.pop %v2470
      %v2472 = vmul.f32 %v2400, 1.442695
      %v2473 = vpow.pop %v2472
      %v2474 = vmul.f32 %v2401, 1.442695
      %v2475 = vpow.pop %v2474
      %v2476 = vmul.f32 %v2402, 1.442695
      %v2477 = vpow.pop %v2476
      %v2478 = vmul.f32 %v2403, 1.442695
      %v2479 = vpow.pop %v2478
      %v2480 = vmul.f32 %v2404, 1.442695
      %v2481 = vpow.pop %v2480
      %v2482 = vmul.f32 %v2405, 1.442695
      %v2483 = vpow.pop %v2482
      %v2484 = vmul.f32 %v2406, 1.442695
      %v2485 = vpow.pop %v2484
      %v2486 = vmul.f32 %v2407, 1.442695
      %v2487 = vpow.pop %v2486
      %v2488 = vmul.f32 %v2408, 1.442695
      %v2489 = vpow.pop %v2488
      %v2490 = vmul.f32 %v2409, 1.442695
      %v2491 = vpow.pop %v2490
      %v2492 = vmul.f32 %v2410, 1.442695
      %v2493 = vpow.pop %v2492
      %v2494 = vmul.f32 %v2411, 1.442695
      %v2495 = vpow.pop %v2494
      %v2496 = vmul.f32 %v2412, 1.442695
      %v2497 = vpow.pop %v2496
      %v2498 = vmul.f32 %v2413, 1.442695
      %v2499 = vpow.pop %v2498
      %v2500 = vmul.f32 %v2414, 1.442695
      %v2501 = vpow.pop %v2500
      %v2502 = vmul.f32 %v2415, 1.442695
      %v2503 = vpow.pop %v2502
      %v2504 = vmul.f32 %v2416, 1.442695
      %v2505 = vpow.pop %v2504
      %v2506 = vmul.f32 %v2417, 1.442695
      %v2507 = vpow.pop %v2506
      %v2508 = vmul.f32 %v2418, 1.442695
      %v2509 = vpow.pop %v2508
      %v2510 = vmul.f32 %v2419, 1.442695
      %v2511 = vpow.pop %v2510
      %v2512 = vmul.f32 %v2420, 1.442695
      %v2513 = vpow.pop %v2512
      %v2514 = vmul.f32 %v2421, 1.442695
      %v2515 = vpow.pop %v2514
      %v2516 = vmul.f32 %v2422, 1.442695
      %v2517 = vpow.pop %v2516
      %v2518 = vmul.f32 %v2423, 1.442695
      %v2519 = vpow.pop %v2518
      %v2520 = vmul.f32 %v2424, 1.442695
      %v2521 = vpow.pop %v2520
      %v2522 = vmul.f32 %v2425, 1.442695
      %v2523 = vpow.pop %v2522
      %v2524 = vmul.f32 %v2426, 1.442695
      %v2525 = vpow.pop %v2524
      %v2526 = vmul.f32 %v2427, 1.442695
      %v2527 = vpow.pop %v2526
      %v2528 = vmul.f32 %v2428, 1.442695
      %v2529 = vpow.pop %v2528
      %v2530 = vmul.f32 %v2429, 1.442695
      %v2531 = vpow.pop %v2530
      %v2532 = vmul.f32 %v2430, 1.442695
      %v2533 = vpow.pop %v2532
      %v2534 = vmul.f32 %v2431, 1.442695
      %v2535 = vpow.pop %v2534
      %v2536 = vmul.f32 %v2432, 1.442695
      %v2537 = vpow.pop %v2536
      %v2538 = vmul.f32 %v2433, 1.442695
      %v2539 = vpow.pop %v2538
      %v2540 = vmul.f32 %v2434, 1.442695
      %v2541 = vpow.pop %v2540
      %v2542 = vmul.f32 %v2435, 1.442695
      %v2543 = vpow.pop %v2542
      %v2544 = vmul.f32 %v2436, 1.442695
      %v2545 = vpow.pop %v2544
      %v2546 = vmul.f32 %v2437, 1.442695
      %v2547 = vpow.pop %v2546
      %v2548 = vmul.f32 %v2438, 1.442695
      %v2549 = vpow.pop %v2548
      %v2550 = vmul.f32 %v2439, 1.442695
      %v2551 = vpow.pop %v2550
      %v2552 = vmul.f32 %v2440, 1.442695
      %v2553 = vpow.pop %v2552
      %v2554 = vmul.f32 %v2441, 1.442695
      %v2555 = vpow.pop %v2554
      %v2556 = vmul.f32 %v2442, 1.442695
      %v2557 = vpow.pop %v2556
      %v2558 = vmul.f32 %v2443, 1.442695
      %v2559 = vpow.pop %v2558
      %v2560 = vmul.f32 %v2444, 1.442695
      %v2561 = vpow.pop %v2560
      %v2562 = vmul.f32 %v2445, 1.442695
      %v2563 = vpow.pop %v2562
      %v2564 = vmul.f32 %v2446, 1.442695
      %v2565 = vpow.pop %v2564
      %v2566 = vmul.f32 %v2447, 1.442695
      %v2567 = vpow.pop %v2566
      %v2568 = vmul.f32 %v2448, 1.442695
      %v2569 = vpow.pop %v2568
      %v2570 = vmul.f32 %v2449, 1.442695
      %v2571 = vpow.pop %v2570
      %v2572 = vmul.f32 %v2450, 1.442695
      %v2573 = vpow.pop %v2572
      %v2574 = vmul.f32 %v2451, 1.442695
      %v2575 = vpow.pop %v2574
      %v2576 = vmul.f32 %v2452, 1.442695
      %v2577 = vpow.pop %v2576
      %v2578 = vmul.f32 %v2453, 1.442695
      %v2579 = vpow.pop %v2578
      %v2580 = vmul.f32 %v2454, 1.442695
      %v2581 = vpow.pop %v2580
      %v2582 = vmul.f32 %v2455, 1.442695
      %v2583 = vpow.pop %v2582
      %v2584 = vld [vmem:[#allocation3] sm:$0xff]
      %v2585 = vld [vmem:[#allocation3 + $0x8] sm:$0xff]
      %v2586 = vld [vmem:[#allocation3 + $0x10] sm:$0xff]
      %v2587 = vld [vmem:[#allocation3 + $0x18] sm:$0xff]
      %v2588 = vld [vmem:[#allocation3 + $0x20] sm:$0xff]
      %v2589 = vld [vmem:[#allocation3 + $0x28] sm:$0xff]
      %v2590 = vld [vmem:[#allocation3 + $0x30] sm:$0xff]
      %v2591 = vld [vmem:[#allocation3 + $0x38] sm:$0xff]
      %v2592 = vld [vmem:[#allocation3 + $0x40] sm:$0xff]
      %v2593 = vld [vmem:[#allocation3 + $0x48] sm:$0xff]
      %v2594 = vld [vmem:[#allocation3 + $0x50] sm:$0xff]
      %v2595 = vld [vmem:[#allocation3 + $0x58] sm:$0xff]
      %v2596 = vld [vmem:[#allocation3 + $0x60] sm:$0xff]
      %v2597 = vld [vmem:[#allocation3 + $0x68] sm:$0xff]
      %v2598 = vld [vmem:[#allocation3 + $0x70] sm:$0xff]
      %v2599 = vld [vmem:[#allocation3 + $0x78] sm:$0xff]
      %v2600 = vld [vmem:[#allocation3 + $0x80] sm:$0xff]
      %v2601 = vld [vmem:[#allocation3 + $0x88] sm:$0xff]
      %v2602 = vld [vmem:[#allocation3 + $0x90] sm:$0xff]
      %v2603 = vld [vmem:[#allocation3 + $0x98] sm:$0xff]
      %v2604 = vld [vmem:[#allocation3 + $0xa0] sm:$0xff]
      %v2605 = vld [vmem:[#allocation3 + $0xa8] sm:$0xff]
      %v2606 = vld [vmem:[#allocation3 + $0xb0] sm:$0xff]
      %v2607 = vld [vmem:[#allocation3 + $0xb8] sm:$0xff]
      %v2608 = vld [vmem:[#allocation3 + $0xc0] sm:$0xff]
      %v2609 = vld [vmem:[#allocation3 + $0xc8] sm:$0xff]
      %v2610 = vld [vmem:[#allocation3 + $0xd0] sm:$0xff]
      %v2611 = vld [vmem:[#allocation3 + $0xd8] sm:$0xff]
      %v2612 = vld [vmem:[#allocation3 + $0xe0] sm:$0xff]
      %v2613 = vld [vmem:[#allocation3 + $0xe8] sm:$0xff]
      %v2614 = vld [vmem:[#allocation3 + $0xf0] sm:$0xff]
      %v2615 = vld [vmem:[#allocation3 + $0xf8] sm:$0xff]
      %v2616 = vld [vmem:[#allocation3 + $0x100] sm:$0xff]
      %v2617 = vld [vmem:[#allocation3 + $0x108] sm:$0xff]
      %v2618 = vld [vmem:[#allocation3 + $0x110] sm:$0xff]
      %v2619 = vld [vmem:[#allocation3 + $0x118] sm:$0xff]
      %v2620 = vld [vmem:[#allocation3 + $0x120] sm:$0xff]
      %v2621 = vld [vmem:[#allocation3 + $0x128] sm:$0xff]
      %v2622 = vld [vmem:[#allocation3 + $0x130] sm:$0xff]
      %v2623 = vld [vmem:[#allocation3 + $0x138] sm:$0xff]
      %v2624 = vld [vmem:[#allocation3 + $0x140] sm:$0xff]
      %v2625 = vld [vmem:[#allocation3 + $0x148] sm:$0xff]
      %v2626 = vld [vmem:[#allocation3 + $0x150] sm:$0xff]
      %v2627 = vld [vmem:[#allocation3 + $0x158] sm:$0xff]
      %v2628 = vld [vmem:[#allocation3 + $0x160] sm:$0xff]
      %v2629 = vld [vmem:[#allocation3 + $0x168] sm:$0xff]
      %v2630 = vld [vmem:[#allocation3 + $0x170] sm:$0xff]
      %v2631 = vld [vmem:[#allocation3 + $0x178] sm:$0xff]
      %v2632 = vld [vmem:[#allocation3 + $0x180] sm:$0xff]
      %v2633 = vld [vmem:[#allocation3 + $0x188] sm:$0xff]
      %v2634 = vld [vmem:[#allocation3 + $0x190] sm:$0xff]
      %v2635 = vld [vmem:[#allocation3 + $0x198] sm:$0xff]
      %v2636 = vld [vmem:[#allocation3 + $0x1a0] sm:$0xff]
      %v2637 = vld [vmem:[#allocation3 + $0x1a8] sm:$0xff]
      %v2638 = vld [vmem:[#allocation3 + $0x1b0] sm:$0xff]
      %v2639 = vld [vmem:[#allocation3 + $0x1b8] sm:$0xff]
      %v2640 = vld [vmem:[#allocation3 + $0x1c0] sm:$0xff]
      %v2641 = vld [vmem:[#allocation3 + $0x1c8] sm:$0xff]
      %v2642 = vld [vmem:[#allocation3 + $0x1d0] sm:$0xff]
      %v2643 = vld [vmem:[#allocation3 + $0x1d8] sm:$0xff]
      %v2644 = vld [vmem:[#allocation3 + $0x1e0] sm:$0xff]
      %v2645 = vld [vmem:[#allocation3 + $0x1e8] sm:$0xff]
      %v2646 = vld [vmem:[#allocation3 + $0x1f0] sm:$0xff]
      %v2647 = vld [vmem:[#allocation3 + $0x1f8] sm:$0xff]
      %v2648 = vmul.f32 %v1945, %v2584
      %v2649 = vmul.f32 %v1947, %v2585
      %v2650 = vmul.f32 %v1949, %v2586
      %v2651 = vmul.f32 %v1951, %v2587
      %v2652 = vmul.f32 %v1953, %v2588
      %v2653 = vmul.f32 %v1955, %v2589
      %v2654 = vmul.f32 %v1957, %v2590
      %v2655 = vmul.f32 %v1959, %v2591
      %v2656 = vmul.f32 %v1961, %v2592
      %v2657 = vmul.f32 %v1963, %v2593
      %v2658 = vmul.f32 %v1965, %v2594
      %v2659 = vmul.f32 %v1967, %v2595
      %v2660 = vmul.f32 %v1969, %v2596
      %v2661 = vmul.f32 %v1971, %v2597
      %v2662 = vmul.f32 %v1973, %v2598
      %v2663 = vmul.f32 %v1975, %v2599
      %v2664 = vmul.f32 %v1977, %v2600
      %v2665 = vmul.f32 %v1979, %v2601
      %v2666 = vmul.f32 %v1981, %v2602
      %v2667 = vmul.f32 %v1983, %v2603
      %v2668 = vmul.f32 %v1985, %v2604
      %v2669 = vmul.f32 %v1987, %v2605
      %v2670 = vmul.f32 %v1989, %v2606
      %v2671 = vmul.f32 %v1991, %v2607
      %v2672 = vmul.f32 %v1993, %v2608
      %v2673 = vmul.f32 %v1995, %v2609
      %v2674 = vmul.f32 %v1997, %v2610
      %v2675 = vmul.f32 %v1999, %v2611
      %v2676 = vmul.f32 %v2001, %v2612
      %v2677 = vmul.f32 %v2003, %v2613
      %v2678 = vmul.f32 %v2005, %v2614
      %v2679 = vmul.f32 %v2007, %v2615
      %v2680 = vmul.f32 %v2009, %v2616
      %v2681 = vmul.f32 %v2011, %v2617
      %v2682 = vmul.f32 %v2013, %v2618
      %v2683 = vmul.f32 %v2015, %v2619
      %v2684 = vmul.f32 %v2017, %v2620
      %v2685 = vmul.f32 %v2019, %v2621
      %v2686 = vmul.f32 %v2021, %v2622
      %v2687 = vmul.f32 %v2023, %v2623
      %v2688 = vmul.f32 %v2025, %v2624
      %v2689 = vmul.f32 %v2027, %v2625
      %v2690 = vmul.f32 %v2029, %v2626
      %v2691 = vmul.f32 %v2031, %v2627
      %v2692 = vmul.f32 %v2033, %v2628
      %v2693 = vmul.f32 %v2035, %v2629
      %v2694 = vmul.f32 %v2037, %v2630
      %v2695 = vmul.f32 %v2039, %v2631
      %v2696 = vmul.f32 %v2041, %v2632
      %v2697 = vmul.f32 %v2043, %v2633
      %v2698 = vmul.f32 %v2045, %v2634
      %v2699 = vmul.f32 %v2047, %v2635
      %v2700 = vmul.f32 %v2049, %v2636
      %v2701 = vmul.f32 %v2051, %v2637
      %v2702 = vmul.f32 %v2053, %v2638
      %v2703 = vmul.f32 %v2055, %v2639
      %v2704 = vmul.f32 %v2057, %v2640
      %v2705 = vmul.f32 %v2059, %v2641
      %v2706 = vmul.f32 %v2061, %v2642
      %v2707 = vmul.f32 %v2063, %v2643
      %v2708 = vmul.f32 %v2065, %v2644
      %v2709 = vmul.f32 %v2067, %v2645
      %v2710 = vmul.f32 %v2069, %v2646
      %v2711 = vmul.f32 %v2071, %v2647
      %2712 = vadd.xlane.f32.xlu0 %v2457
      %v2713 = vpop.xlane.xlu0 %2712
      %2714 = vadd.xlane.f32.xlu0 %v2459
      %v2715 = vpop.xlane.xlu0 %2714
      %2716 = vadd.xlane.f32.xlu0 %v2461
      %v2717 = vpop.xlane.xlu0 %2716
      %2718 = vadd.xlane.f32.xlu0 %v2463
      %v2719 = vpop.xlane.xlu0 %2718
      %2720 = vadd.xlane.f32.xlu0 %v2465
      %v2721 = vpop.xlane.xlu0 %2720
      %2722 = vadd.xlane.f32.xlu0 %v2467
      %v2723 = vpop.xlane.xlu0 %2722
      %2724 = vadd.xlane.f32.xlu0 %v2469
      %v2725 = vpop.xlane.xlu0 %2724
      %2726 = vadd.xlane.f32.xlu0 %v2471
      %v2727 = vpop.xlane.xlu0 %2726
      %2728 = vadd.xlane.f32.xlu0 %v2473
      %v2729 = vpop.xlane.xlu0 %2728
      %2730 = vadd.xlane.f32.xlu0 %v2475
      %v2731 = vpop.xlane.xlu0 %2730
      %2732 = vadd.xlane.f32.xlu0 %v2477
      %v2733 = vpop.xlane.xlu0 %2732
      %2734 = vadd.xlane.f32.xlu0 %v2479
      %v2735 = vpop.xlane.xlu0 %2734
      %2736 = vadd.xlane.f32.xlu0 %v2481
      %v2737 = vpop.xlane.xlu0 %2736
      %2738 = vadd.xlane.f32.xlu0 %v2483
      %v2739 = vpop.xlane.xlu0 %2738
      %2740 = vadd.xlane.f32.xlu0 %v2485
      %v2741 = vpop.xlane.xlu0 %2740
      %2742 = vadd.xlane.f32.xlu0 %v2487
      %v2743 = vpop.xlane.xlu0 %2742
      %2744 = vadd.xlane.f32.xlu0 %v2489
      %v2745 = vpop.xlane.xlu0 %2744
      %2746 = vadd.xlane.f32.xlu0 %v2491
      %v2747 = vpop.xlane.xlu0 %2746
      %2748 = vadd.xlane.f32.xlu0 %v2493
      %v2749 = vpop.xlane.xlu0 %2748
      %2750 = vadd.xlane.f32.xlu0 %v2495
      %v2751 = vpop.xlane.xlu0 %2750
      %2752 = vadd.xlane.f32.xlu0 %v2497
      %v2753 = vpop.xlane.xlu0 %2752
      %2754 = vadd.xlane.f32.xlu0 %v2499
      %v2755 = vpop.xlane.xlu0 %2754
      %2756 = vadd.xlane.f32.xlu0 %v2501
      %v2757 = vpop.xlane.xlu0 %2756
      %2758 = vadd.xlane.f32.xlu0 %v2503
      %v2759 = vpop.xlane.xlu0 %2758
      %2760 = vadd.xlane.f32.xlu0 %v2505
      %v2761 = vpop.xlane.xlu0 %2760
      %2762 = vadd.xlane.f32.xlu0 %v2507
      %v2763 = vpop.xlane.xlu0 %2762
      %2764 = vadd.xlane.f32.xlu0 %v2509
      %v2765 = vpop.xlane.xlu0 %2764
      %2766 = vadd.xlane.f32.xlu0 %v2511
      %v2767 = vpop.xlane.xlu0 %2766
      %2768 = vadd.xlane.f32.xlu0 %v2513
      %v2769 = vpop.xlane.xlu0 %2768
      %2770 = vadd.xlane.f32.xlu0 %v2515
      %v2771 = vpop.xlane.xlu0 %2770
      %2772 = vadd.xlane.f32.xlu0 %v2517
      %v2773 = vpop.xlane.xlu0 %2772
      %2774 = vadd.xlane.f32.xlu0 %v2519
      %v2775 = vpop.xlane.xlu0 %2774
      %2776 = vadd.xlane.f32.xlu0 %v2521
      %v2777 = vpop.xlane.xlu0 %2776
      %2778 = vadd.xlane.f32.xlu0 %v2523
      %v2779 = vpop.xlane.xlu0 %2778
      %2780 = vadd.xlane.f32.xlu0 %v2525
      %v2781 = vpop.xlane.xlu0 %2780
      %2782 = vadd.xlane.f32.xlu0 %v2527
      %v2783 = vpop.xlane.xlu0 %2782
      %2784 = vadd.xlane.f32.xlu0 %v2529
      %v2785 = vpop.xlane.xlu0 %2784
      %2786 = vadd.xlane.f32.xlu0 %v2531
      %v2787 = vpop.xlane.xlu0 %2786
      %2788 = vadd.xlane.f32.xlu0 %v2533
      %v2789 = vpop.xlane.xlu0 %2788
      %2790 = vadd.xlane.f32.xlu0 %v2535
      %v2791 = vpop.xlane.xlu0 %2790
      %2792 = vadd.xlane.f32.xlu0 %v2537
      %v2793 = vpop.xlane.xlu0 %2792
      %2794 = vadd.xlane.f32.xlu0 %v2539
      %v2795 = vpop.xlane.xlu0 %2794
      %2796 = vadd.xlane.f32.xlu0 %v2541
      %v2797 = vpop.xlane.xlu0 %2796
      %2798 = vadd.xlane.f32.xlu0 %v2543
      %v2799 = vpop.xlane.xlu0 %2798
      %2800 = vadd.xlane.f32.xlu0 %v2545
      %v2801 = vpop.xlane.xlu0 %2800
      %2802 = vadd.xlane.f32.xlu0 %v2547
      %v2803 = vpop.xlane.xlu0 %2802
      %2804 = vadd.xlane.f32.xlu0 %v2549
      %v2805 = vpop.xlane.xlu0 %2804
      %2806 = vadd.xlane.f32.xlu0 %v2551
      %v2807 = vpop.xlane.xlu0 %2806
      %2808 = vadd.xlane.f32.xlu0 %v2553
      %v2809 = vpop.xlane.xlu0 %2808
      %2810 = vadd.xlane.f32.xlu0 %v2555
      %v2811 = vpop.xlane.xlu0 %2810
      %2812 = vadd.xlane.f32.xlu0 %v2557
      %v2813 = vpop.xlane.xlu0 %2812
      %2814 = vadd.xlane.f32.xlu0 %v2559
      %v2815 = vpop.xlane.xlu0 %2814
      %2816 = vadd.xlane.f32.xlu0 %v2561
      %v2817 = vpop.xlane.xlu0 %2816
      %2818 = vadd.xlane.f32.xlu0 %v2563
      %v2819 = vpop.xlane.xlu0 %2818
      %2820 = vadd.xlane.f32.xlu0 %v2565
      %v2821 = vpop.xlane.xlu0 %2820
      %2822 = vadd.xlane.f32.xlu0 %v2567
      %v2823 = vpop.xlane.xlu0 %2822
      %2824 = vadd.xlane.f32.xlu0 %v2569
      %v2825 = vpop.xlane.xlu0 %2824
      %2826 = vadd.xlane.f32.xlu0 %v2571
      %v2827 = vpop.xlane.xlu0 %2826
      %2828 = vadd.xlane.f32.xlu0 %v2573
      %v2829 = vpop.xlane.xlu0 %2828
      %2830 = vadd.xlane.f32.xlu0 %v2575
      %v2831 = vpop.xlane.xlu0 %2830
      %2832 = vadd.xlane.f32.xlu0 %v2577
      %v2833 = vpop.xlane.xlu0 %2832
      %2834 = vadd.xlane.f32.xlu0 %v2579
      %v2835 = vpop.xlane.xlu0 %2834
      %2836 = vadd.xlane.f32.xlu0 %v2581
      %v2837 = vpop.xlane.xlu0 %2836
      %2838 = vadd.xlane.f32.xlu0 %v2583
      %v2839 = vpop.xlane.xlu0 %2838
      %v2840 = vadd.f32 %v2648, %v2713
      %v2841 = vadd.f32 %v2649, %v2715
      %v2842 = vadd.f32 %v2650, %v2717
      %v2843 = vadd.f32 %v2651, %v2719
      %v2844 = vadd.f32 %v2652, %v2721
      %v2845 = vadd.f32 %v2653, %v2723
      %v2846 = vadd.f32 %v2654, %v2725
      %v2847 = vadd.f32 %v2655, %v2727
      %v2848 = vadd.f32 %v2656, %v2729
      %v2849 = vadd.f32 %v2657, %v2731
      %v2850 = vadd.f32 %v2658, %v2733
      %v2851 = vadd.f32 %v2659, %v2735
      %v2852 = vadd.f32 %v2660, %v2737
      %v2853 = vadd.f32 %v2661, %v2739
      %v2854 = vadd.f32 %v2662, %v2741
      %v2855 = vadd.f32 %v2663, %v2743
      %v2856 = vadd.f32 %v2664, %v2745
      %v2857 = vadd.f32 %v2665, %v2747
      %v2858 = vadd.f32 %v2666, %v2749
      %v2859 = vadd.f32 %v2667, %v2751
      %v2860 = vadd.f32 %v2668, %v2753
      %v2861 = vadd.f32 %v2669, %v2755
      %v2862 = vadd.f32 %v2670, %v2757
      %v2863 = vadd.f32 %v2671, %v2759
      %v2864 = vadd.f32 %v2672, %v2761
      %v2865 = vadd.f32 %v2673, %v2763
      %v2866 = vadd.f32 %v2674, %v2765
      %v2867 = vadd.f32 %v2675, %v2767
      %v2868 = vadd.f32 %v2676, %v2769
      %v2869 = vadd.f32 %v2677, %v2771
      %v2870 = vadd.f32 %v2678, %v2773
      %v2871 = vadd.f32 %v2679, %v2775
      %v2872 = vadd.f32 %v2680, %v2777
      %v2873 = vadd.f32 %v2681, %v2779
      %v2874 = vadd.f32 %v2682, %v2781
      %v2875 = vadd.f32 %v2683, %v2783
      %v2876 = vadd.f32 %v2684, %v2785
      %v2877 = vadd.f32 %v2685, %v2787
      %v2878 = vadd.f32 %v2686, %v2789
      %v2879 = vadd.f32 %v2687, %v2791
      %v2880 = vadd.f32 %v2688, %v2793
      %v2881 = vadd.f32 %v2689, %v2795
      %v2882 = vadd.f32 %v2690, %v2797
      %v2883 = vadd.f32 %v2691, %v2799
      %v2884 = vadd.f32 %v2692, %v2801
      %v2885 = vadd.f32 %v2693, %v2803
      %v2886 = vadd.f32 %v2694, %v2805
      %v2887 = vadd.f32 %v2695, %v2807
      %v2888 = vadd.f32 %v2696, %v2809
      %v2889 = vadd.f32 %v2697, %v2811
      %v2890 = vadd.f32 %v2698, %v2813
      %v2891 = vadd.f32 %v2699, %v2815
      %v2892 = vadd.f32 %v2700, %v2817
      %v2893 = vadd.f32 %v2701, %v2819
      %v2894 = vadd.f32 %v2702, %v2821
      %v2895 = vadd.f32 %v2703, %v2823
      %v2896 = vadd.f32 %v2704, %v2825
      %v2897 = vadd.f32 %v2705, %v2827
      %v2898 = vadd.f32 %v2706, %v2829
      %v2899 = vadd.f32 %v2707, %v2831
      %v2900 = vadd.f32 %v2708, %v2833
      %v2901 = vadd.f32 %v2709, %v2835
      %v2902 = vadd.f32 %v2710, %v2837
      %v2903 = vadd.f32 %v2711, %v2839
      %vm2904 = vcmask 7168
      %2905 = vst.msk [vmem:[#allocation3] sm:$0xff] %vm2904, %v2840
      %2906 = vst.msk [vmem:[#allocation3 + $0x8] sm:$0xff] %vm2904, %v2841
      %2907 = vst.msk [vmem:[#allocation3 + $0x10] sm:$0xff] %vm2904, %v2842
      %2908 = vst.msk [vmem:[#allocation3 + $0x18] sm:$0xff] %vm2904, %v2843
      %2909 = vst.msk [vmem:[#allocation3 + $0x20] sm:$0xff] %vm2904, %v2844
      %2910 = vst.msk [vmem:[#allocation3 + $0x28] sm:$0xff] %vm2904, %v2845
      %2911 = vst.msk [vmem:[#allocation3 + $0x30] sm:$0xff] %vm2904, %v2846
      %2912 = vst.msk [vmem:[#allocation3 + $0x38] sm:$0xff] %vm2904, %v2847
      %2913 = vst.msk [vmem:[#allocation3 + $0x40] sm:$0xff] %vm2904, %v2848
      %2914 = vst.msk [vmem:[#allocation3 + $0x48] sm:$0xff] %vm2904, %v2849
      %2915 = vst.msk [vmem:[#allocation3 + $0x50] sm:$0xff] %vm2904, %v2850
      %2916 = vst.msk [vmem:[#allocation3 + $0x58] sm:$0xff] %vm2904, %v2851
      %2917 = vst.msk [vmem:[#allocation3 + $0x60] sm:$0xff] %vm2904, %v2852
      %2918 = vst.msk [vmem:[#allocation3 + $0x68] sm:$0xff] %vm2904, %v2853
      %2919 = vst.msk [vmem:[#allocation3 + $0x70] sm:$0xff] %vm2904, %v2854
      %2920 = vst.msk [vmem:[#allocation3 + $0x78] sm:$0xff] %vm2904, %v2855
      %2921 = vst.msk [vmem:[#allocation3 + $0x80] sm:$0xff] %vm2904, %v2856
      %2922 = vst.msk [vmem:[#allocation3 + $0x88] sm:$0xff] %vm2904, %v2857
      %2923 = vst.msk [vmem:[#allocation3 + $0x90] sm:$0xff] %vm2904, %v2858
      %2924 = vst.msk [vmem:[#allocation3 + $0x98] sm:$0xff] %vm2904, %v2859
      %2925 = vst.msk [vmem:[#allocation3 + $0xa0] sm:$0xff] %vm2904, %v2860
      %2926 = vst.msk [vmem:[#allocation3 + $0xa8] sm:$0xff] %vm2904, %v2861
      %2927 = vst.msk [vmem:[#allocation3 + $0xb0] sm:$0xff] %vm2904, %v2862
      %2928 = vst.msk [vmem:[#allocation3 + $0xb8] sm:$0xff] %vm2904, %v2863
      %2929 = vst.msk [vmem:[#allocation3 + $0xc0] sm:$0xff] %vm2904, %v2864
      %2930 = vst.msk [vmem:[#allocation3 + $0xc8] sm:$0xff] %vm2904, %v2865
      %2931 = vst.msk [vmem:[#allocation3 + $0xd0] sm:$0xff] %vm2904, %v2866
      %2932 = vst.msk [vmem:[#allocation3 + $0xd8] sm:$0xff] %vm2904, %v2867
      %2933 = vst.msk [vmem:[#allocation3 + $0xe0] sm:$0xff] %vm2904, %v2868
      %2934 = vst.msk [vmem:[#allocation3 + $0xe8] sm:$0xff] %vm2904, %v2869
      %2935 = vst.msk [vmem:[#allocation3 + $0xf0] sm:$0xff] %vm2904, %v2870
      %2936 = vst.msk [vmem:[#allocation3 + $0xf8] sm:$0xff] %vm2904, %v2871
      %2937 = vst.msk [vmem:[#allocation3 + $0x100] sm:$0xff] %vm2904, %v2872
      %2938 = vst.msk [vmem:[#allocation3 + $0x108] sm:$0xff] %vm2904, %v2873
      %2939 = vst.msk [vmem:[#allocation3 + $0x110] sm:$0xff] %vm2904, %v2874
      %2940 = vst.msk [vmem:[#allocation3 + $0x118] sm:$0xff] %vm2904, %v2875
      %2941 = vst.msk [vmem:[#allocation3 + $0x120] sm:$0xff] %vm2904, %v2876
      %2942 = vst.msk [vmem:[#allocation3 + $0x128] sm:$0xff] %vm2904, %v2877
      %2943 = vst.msk [vmem:[#allocation3 + $0x130] sm:$0xff] %vm2904, %v2878
      %2944 = vst.msk [vmem:[#allocation3 + $0x138] sm:$0xff] %vm2904, %v2879
      %2945 = vst.msk [vmem:[#allocation3 + $0x140] sm:$0xff] %vm2904, %v2880
      %2946 = vst.msk [vmem:[#allocation3 + $0x148] sm:$0xff] %vm2904, %v2881
      %2947 = vst.msk [vmem:[#allocation3 + $0x150] sm:$0xff] %vm2904, %v2882
      %2948 = vst.msk [vmem:[#allocation3 + $0x158] sm:$0xff] %vm2904, %v2883
      %2949 = vst.msk [vmem:[#allocation3 + $0x160] sm:$0xff] %vm2904, %v2884
      %2950 = vst.msk [vmem:[#allocation3 + $0x168] sm:$0xff] %vm2904, %v2885
      %2951 = vst.msk [vmem:[#allocation3 + $0x170] sm:$0xff] %vm2904, %v2886
      %2952 = vst.msk [vmem:[#allocation3 + $0x178] sm:$0xff] %vm2904, %v2887
      %2953 = vst.msk [vmem:[#allocation3 + $0x180] sm:$0xff] %vm2904, %v2888
      %2954 = vst.msk [vmem:[#allocation3 + $0x188] sm:$0xff] %vm2904, %v2889
      %2955 = vst.msk [vmem:[#allocation3 + $0x190] sm:$0xff] %vm2904, %v2890
      %2956 = vst.msk [vmem:[#allocation3 + $0x198] sm:$0xff] %vm2904, %v2891
      %2957 = vst.msk [vmem:[#allocation3 + $0x1a0] sm:$0xff] %vm2904, %v2892
      %2958 = vst.msk [vmem:[#allocation3 + $0x1a8] sm:$0xff] %vm2904, %v2893
      %2959 = vst.msk [vmem:[#allocation3 + $0x1b0] sm:$0xff] %vm2904, %v2894
      %2960 = vst.msk [vmem:[#allocation3 + $0x1b8] sm:$0xff] %vm2904, %v2895
      %2961 = vst.msk [vmem:[#allocation3 + $0x1c0] sm:$0xff] %vm2904, %v2896
      %2962 = vst.msk [vmem:[#allocation3 + $0x1c8] sm:$0xff] %vm2904, %v2897
      %2963 = vst.msk [vmem:[#allocation3 + $0x1d0] sm:$0xff] %vm2904, %v2898
      %2964 = vst.msk [vmem:[#allocation3 + $0x1d8] sm:$0xff] %vm2904, %v2899
      %2965 = vst.msk [vmem:[#allocation3 + $0x1e0] sm:$0xff] %vm2904, %v2900
      %2966 = vst.msk [vmem:[#allocation3 + $0x1e8] sm:$0xff] %vm2904, %v2901
      %2967 = vst.msk [vmem:[#allocation3 + $0x1f0] sm:$0xff] %vm2904, %v2902
      %2968 = vst.msk [vmem:[#allocation3 + $0x1f8] sm:$0xff] %vm2904, %v2903
      %v2969 = vld [vmem:[#allocation4] sm:$0xff]
      %v2970 = vld [vmem:[#allocation4 + $0x8] sm:$0xff]
      %v2971 = vld [vmem:[#allocation4 + $0x10] sm:$0xff]
      %v2972 = vld [vmem:[#allocation4 + $0x18] sm:$0xff]
      %v2973 = vld [vmem:[#allocation4 + $0x20] sm:$0xff]
      %v2974 = vld [vmem:[#allocation4 + $0x28] sm:$0xff]
      %v2975 = vld [vmem:[#allocation4 + $0x30] sm:$0xff]
      %v2976 = vld [vmem:[#allocation4 + $0x38] sm:$0xff]
      %v2977 = vld [vmem:[#allocation4 + $0x40] sm:$0xff]
      %v2978 = vld [vmem:[#allocation4 + $0x48] sm:$0xff]
      %v2979 = vld [vmem:[#allocation4 + $0x50] sm:$0xff]
      %v2980 = vld [vmem:[#allocation4 + $0x58] sm:$0xff]
      %v2981 = vld [vmem:[#allocation4 + $0x60] sm:$0xff]
      %v2982 = vld [vmem:[#allocation4 + $0x68] sm:$0xff]
      %v2983 = vld [vmem:[#allocation4 + $0x70] sm:$0xff]
      %v2984 = vld [vmem:[#allocation4 + $0x78] sm:$0xff]
      %v2985 = vld [vmem:[#allocation4 + $0x80] sm:$0xff]
      %v2986 = vld [vmem:[#allocation4 + $0x88] sm:$0xff]
      %v2987 = vld [vmem:[#allocation4 + $0x90] sm:$0xff]
      %v2988 = vld [vmem:[#allocation4 + $0x98] sm:$0xff]
      %v2989 = vld [vmem:[#allocation4 + $0xa0] sm:$0xff]
      %v2990 = vld [vmem:[#allocation4 + $0xa8] sm:$0xff]
      %v2991 = vld [vmem:[#allocation4 + $0xb0] sm:$0xff]
      %v2992 = vld [vmem:[#allocation4 + $0xb8] sm:$0xff]
      %v2993 = vld [vmem:[#allocation4 + $0xc0] sm:$0xff]
      %v2994 = vld [vmem:[#allocation4 + $0xc8] sm:$0xff]
      %v2995 = vld [vmem:[#allocation4 + $0xd0] sm:$0xff]
      %v2996 = vld [vmem:[#allocation4 + $0xd8] sm:$0xff]
      %v2997 = vld [vmem:[#allocation4 + $0xe0] sm:$0xff]
      %v2998 = vld [vmem:[#allocation4 + $0xe8] sm:$0xff]
      %v2999 = vld [vmem:[#allocation4 + $0xf0] sm:$0xff]
      %v3000 = vld [vmem:[#allocation4 + $0xf8] sm:$0xff]
      %v3001 = vld [vmem:[#allocation4 + $0x100] sm:$0xff]
      %v3002 = vld [vmem:[#allocation4 + $0x108] sm:$0xff]
      %v3003 = vld [vmem:[#allocation4 + $0x110] sm:$0xff]
      %v3004 = vld [vmem:[#allocation4 + $0x118] sm:$0xff]
      %v3005 = vld [vmem:[#allocation4 + $0x120] sm:$0xff]
      %v3006 = vld [vmem:[#allocation4 + $0x128] sm:$0xff]
      %v3007 = vld [vmem:[#allocation4 + $0x130] sm:$0xff]
      %v3008 = vld [vmem:[#allocation4 + $0x138] sm:$0xff]
      %v3009 = vld [vmem:[#allocation4 + $0x140] sm:$0xff]
      %v3010 = vld [vmem:[#allocation4 + $0x148] sm:$0xff]
      %v3011 = vld [vmem:[#allocation4 + $0x150] sm:$0xff]
      %v3012 = vld [vmem:[#allocation4 + $0x158] sm:$0xff]
      %v3013 = vld [vmem:[#allocation4 + $0x160] sm:$0xff]
      %v3014 = vld [vmem:[#allocation4 + $0x168] sm:$0xff]
      %v3015 = vld [vmem:[#allocation4 + $0x170] sm:$0xff]
      %v3016 = vld [vmem:[#allocation4 + $0x178] sm:$0xff]
      %v3017 = vld [vmem:[#allocation4 + $0x180] sm:$0xff]
      %v3018 = vld [vmem:[#allocation4 + $0x188] sm:$0xff]
      %v3019 = vld [vmem:[#allocation4 + $0x190] sm:$0xff]
      %v3020 = vld [vmem:[#allocation4 + $0x198] sm:$0xff]
      %v3021 = vld [vmem:[#allocation4 + $0x1a0] sm:$0xff]
      %v3022 = vld [vmem:[#allocation4 + $0x1a8] sm:$0xff]
      %v3023 = vld [vmem:[#allocation4 + $0x1b0] sm:$0xff]
      %v3024 = vld [vmem:[#allocation4 + $0x1b8] sm:$0xff]
      %v3025 = vld [vmem:[#allocation4 + $0x1c0] sm:$0xff]
      %v3026 = vld [vmem:[#allocation4 + $0x1c8] sm:$0xff]
      %v3027 = vld [vmem:[#allocation4 + $0x1d0] sm:$0xff]
      %v3028 = vld [vmem:[#allocation4 + $0x1d8] sm:$0xff]
      %v3029 = vld [vmem:[#allocation4 + $0x1e0] sm:$0xff]
      %v3030 = vld [vmem:[#allocation4 + $0x1e8] sm:$0xff]
      %v3031 = vld [vmem:[#allocation4 + $0x1f0] sm:$0xff]
      %v3032 = vld [vmem:[#allocation4 + $0x1f8] sm:$0xff]
      %3034 = vset.pattern.permute.xlu0 0
      %3035 = vperm.xlu0 %3034, %v1945
      %v3036 = vpop.permute.xlu0 %3035
      %3039 = vset.pattern.permute.xlu0 0
      %3040 = vperm.xlu0 %3039, %v1947
      %v3041 = vpop.permute.xlu0 %3040
      %3044 = vset.pattern.permute.xlu0 0
      %3045 = vperm.xlu0 %3044, %v1949
      %v3046 = vpop.permute.xlu0 %3045
      %3049 = vset.pattern.permute.xlu0 0
      %3050 = vperm.xlu0 %3049, %v1951
      %v3051 = vpop.permute.xlu0 %3050
      %3054 = vset.pattern.permute.xlu0 0
      %3055 = vperm.xlu0 %3054, %v1953
      %v3056 = vpop.permute.xlu0 %3055
      %3059 = vset.pattern.permute.xlu0 0
      %3060 = vperm.xlu0 %3059, %v1955
      %v3061 = vpop.permute.xlu0 %3060
      %3064 = vset.pattern.permute.xlu0 0
      %3065 = vperm.xlu0 %3064, %v1957
      %v3066 = vpop.permute.xlu0 %3065
      %3069 = vset.pattern.permute.xlu0 0
      %3070 = vperm.xlu0 %3069, %v1959
      %v3071 = vpop.permute.xlu0 %3070
      %3074 = vset.pattern.permute.xlu0 0
      %3075 = vperm.xlu0 %3074, %v1961
      %v3076 = vpop.permute.xlu0 %3075
      %3079 = vset.pattern.permute.xlu0 0
      %3080 = vperm.xlu0 %3079, %v1963
      %v3081 = vpop.permute.xlu0 %3080
      %3084 = vset.pattern.permute.xlu0 0
      %3085 = vperm.xlu0 %3084, %v1965
      %v3086 = vpop.permute.xlu0 %3085
      %3089 = vset.pattern.permute.xlu0 0
      %3090 = vperm.xlu0 %3089, %v1967
      %v3091 = vpop.permute.xlu0 %3090
      %3094 = vset.pattern.permute.xlu0 0
      %3095 = vperm.xlu0 %3094, %v1969
      %v3096 = vpop.permute.xlu0 %3095
      %3099 = vset.pattern.permute.xlu0 0
      %3100 = vperm.xlu0 %3099, %v1971
      %v3101 = vpop.permute.xlu0 %3100
      %3104 = vset.pattern.permute.xlu0 0
      %3105 = vperm.xlu0 %3104, %v1973
      %v3106 = vpop.permute.xlu0 %3105
      %3109 = vset.pattern.permute.xlu0 0
      %3110 = vperm.xlu0 %3109, %v1975
      %v3111 = vpop.permute.xlu0 %3110
      %3114 = vset.pattern.permute.xlu0 0
      %3115 = vperm.xlu0 %3114, %v1977
      %v3116 = vpop.permute.xlu0 %3115
      %3119 = vset.pattern.permute.xlu0 0
      %3120 = vperm.xlu0 %3119, %v1979
      %v3121 = vpop.permute.xlu0 %3120
      %3124 = vset.pattern.permute.xlu0 0
      %3125 = vperm.xlu0 %3124, %v1981
      %v3126 = vpop.permute.xlu0 %3125
      %3129 = vset.pattern.permute.xlu0 0
      %3130 = vperm.xlu0 %3129, %v1983
      %v3131 = vpop.permute.xlu0 %3130
      %3134 = vset.pattern.permute.xlu0 0
      %3135 = vperm.xlu0 %3134, %v1985
      %v3136 = vpop.permute.xlu0 %3135
      %3139 = vset.pattern.permute.xlu0 0
      %3140 = vperm.xlu0 %3139, %v1987
      %v3141 = vpop.permute.xlu0 %3140
      %3144 = vset.pattern.permute.xlu0 0
      %3145 = vperm.xlu0 %3144, %v1989
      %v3146 = vpop.permute.xlu0 %3145
      %3149 = vset.pattern.permute.xlu0 0
      %3150 = vperm.xlu0 %3149, %v1991
      %v3151 = vpop.permute.xlu0 %3150
      %3154 = vset.pattern.permute.xlu0 0
      %3155 = vperm.xlu0 %3154, %v1993
      %v3156 = vpop.permute.xlu0 %3155
      %3159 = vset.pattern.permute.xlu0 0
      %3160 = vperm.xlu0 %3159, %v1995
      %v3161 = vpop.permute.xlu0 %3160
      %3164 = vset.pattern.permute.xlu0 0
      %3165 = vperm.xlu0 %3164, %v1997
      %v3166 = vpop.permute.xlu0 %3165
      %3169 = vset.pattern.permute.xlu0 0
      %3170 = vperm.xlu0 %3169, %v1999
      %v3171 = vpop.permute.xlu0 %3170
      %3174 = vset.pattern.permute.xlu0 0
      %3175 = vperm.xlu0 %3174, %v2001
      %v3176 = vpop.permute.xlu0 %3175
      %3179 = vset.pattern.permute.xlu0 0
      %3180 = vperm.xlu0 %3179, %v2003
      %v3181 = vpop.permute.xlu0 %3180
      %3184 = vset.pattern.permute.xlu0 0
      %3185 = vperm.xlu0 %3184, %v2005
      %v3186 = vpop.permute.xlu0 %3185
      %3189 = vset.pattern.permute.xlu0 0
      %3190 = vperm.xlu0 %3189, %v2007
      %v3191 = vpop.permute.xlu0 %3190
      %3194 = vset.pattern.permute.xlu0 0
      %3195 = vperm.xlu0 %3194, %v2009
      %v3196 = vpop.permute.xlu0 %3195
      %3199 = vset.pattern.permute.xlu0 0
      %3200 = vperm.xlu0 %3199, %v2011
      %v3201 = vpop.permute.xlu0 %3200
      %3204 = vset.pattern.permute.xlu0 0
      %3205 = vperm.xlu0 %3204, %v2013
      %v3206 = vpop.permute.xlu0 %3205
      %3209 = vset.pattern.permute.xlu0 0
      %3210 = vperm.xlu0 %3209, %v2015
      %v3211 = vpop.permute.xlu0 %3210
      %3214 = vset.pattern.permute.xlu0 0
      %3215 = vperm.xlu0 %3214, %v2017
      %v3216 = vpop.permute.xlu0 %3215
      %3219 = vset.pattern.permute.xlu0 0
      %3220 = vperm.xlu0 %3219, %v2019
      %v3221 = vpop.permute.xlu0 %3220
      %3224 = vset.pattern.permute.xlu0 0
      %3225 = vperm.xlu0 %3224, %v2021
      %v3226 = vpop.permute.xlu0 %3225
      %3229 = vset.pattern.permute.xlu0 0
      %3230 = vperm.xlu0 %3229, %v2023
      %v3231 = vpop.permute.xlu0 %3230
      %3234 = vset.pattern.permute.xlu0 0
      %3235 = vperm.xlu0 %3234, %v2025
      %v3236 = vpop.permute.xlu0 %3235
      %3239 = vset.pattern.permute.xlu0 0
      %3240 = vperm.xlu0 %3239, %v2027
      %v3241 = vpop.permute.xlu0 %3240
      %3244 = vset.pattern.permute.xlu0 0
      %3245 = vperm.xlu0 %3244, %v2029
      %v3246 = vpop.permute.xlu0 %3245
      %3249 = vset.pattern.permute.xlu0 0
      %3250 = vperm.xlu0 %3249, %v2031
      %v3251 = vpop.permute.xlu0 %3250
      %3254 = vset.pattern.permute.xlu0 0
      %3255 = vperm.xlu0 %3254, %v2033
      %v3256 = vpop.permute.xlu0 %3255
      %3259 = vset.pattern.permute.xlu0 0
      %3260 = vperm.xlu0 %3259, %v2035
      %v3261 = vpop.permute.xlu0 %3260
      %3264 = vset.pattern.permute.xlu0 0
      %3265 = vperm.xlu0 %3264, %v2037
      %v3266 = vpop.permute.xlu0 %3265
      %3269 = vset.pattern.permute.xlu0 0
      %3270 = vperm.xlu0 %3269, %v2039
      %v3271 = vpop.permute.xlu0 %3270
      %3274 = vset.pattern.permute.xlu0 0
      %3275 = vperm.xlu0 %3274, %v2041
      %v3276 = vpop.permute.xlu0 %3275
      %3279 = vset.pattern.permute.xlu0 0
      %3280 = vperm.xlu0 %3279, %v2043
      %v3281 = vpop.permute.xlu0 %3280
      %3284 = vset.pattern.permute.xlu0 0
      %3285 = vperm.xlu0 %3284, %v2045
      %v3286 = vpop.permute.xlu0 %3285
      %3289 = vset.pattern.permute.xlu0 0
      %3290 = vperm.xlu0 %3289, %v2047
      %v3291 = vpop.permute.xlu0 %3290
      %3294 = vset.pattern.permute.xlu0 0
      %3295 = vperm.xlu0 %3294, %v2049
      %v3296 = vpop.permute.xlu0 %3295
      %3299 = vset.pattern.permute.xlu0 0
      %3300 = vperm.xlu0 %3299, %v2051
      %v3301 = vpop.permute.xlu0 %3300
      %3304 = vset.pattern.permute.xlu0 0
      %3305 = vperm.xlu0 %3304, %v2053
      %v3306 = vpop.permute.xlu0 %3305
      %3309 = vset.pattern.permute.xlu0 0
      %3310 = vperm.xlu0 %3309, %v2055
      %v3311 = vpop.permute.xlu0 %3310
      %3314 = vset.pattern.permute.xlu0 0
      %3315 = vperm.xlu0 %3314, %v2057
      %v3316 = vpop.permute.xlu0 %3315
      %3319 = vset.pattern.permute.xlu0 0
      %3320 = vperm.xlu0 %3319, %v2059
      %v3321 = vpop.permute.xlu0 %3320
      %3324 = vset.pattern.permute.xlu0 0
      %3325 = vperm.xlu0 %3324, %v2061
      %v3326 = vpop.permute.xlu0 %3325
      %3329 = vset.pattern.permute.xlu0 0
      %3330 = vperm.xlu0 %3329, %v2063
      %v3331 = vpop.permute.xlu0 %3330
      %3334 = vset.pattern.permute.xlu0 0
      %3335 = vperm.xlu0 %3334, %v2065
      %v3336 = vpop.permute.xlu0 %3335
      %3339 = vset.pattern.permute.xlu0 0
      %3340 = vperm.xlu0 %3339, %v2067
      %v3341 = vpop.permute.xlu0 %3340
      %3344 = vset.pattern.permute.xlu0 0
      %3345 = vperm.xlu0 %3344, %v2069
      %v3346 = vpop.permute.xlu0 %3345
      %3349 = vset.pattern.permute.xlu0 0
      %3350 = vperm.xlu0 %3349, %v2071
      %v3351 = vpop.permute.xlu0 %3350
      %v3353 = vmul.f32 %v3036, %v2969
      %v3354 = vmul.f32 %v3041, %v2970
      %v3355 = vmul.f32 %v3046, %v2971
      %v3356 = vmul.f32 %v3051, %v2972
      %v3357 = vmul.f32 %v3056, %v2973
      %v3358 = vmul.f32 %v3061, %v2974
      %v3359 = vmul.f32 %v3066, %v2975
      %v3360 = vmul.f32 %v3071, %v2976
      %v3361 = vmul.f32 %v3076, %v2977
      %v3362 = vmul.f32 %v3081, %v2978
      %v3363 = vmul.f32 %v3086, %v2979
      %v3364 = vmul.f32 %v3091, %v2980
      %v3365 = vmul.f32 %v3096, %v2981
      %v3366 = vmul.f32 %v3101, %v2982
      %v3367 = vmul.f32 %v3106, %v2983
      %v3368 = vmul.f32 %v3111, %v2984
      %v3369 = vmul.f32 %v3116, %v2985
      %v3370 = vmul.f32 %v3121, %v2986
      %v3371 = vmul.f32 %v3126, %v2987
      %v3372 = vmul.f32 %v3131, %v2988
      %v3373 = vmul.f32 %v3136, %v2989
      %v3374 = vmul.f32 %v3141, %v2990
      %v3375 = vmul.f32 %v3146, %v2991
      %v3376 = vmul.f32 %v3151, %v2992
      %v3377 = vmul.f32 %v3156, %v2993
      %v3378 = vmul.f32 %v3161, %v2994
      %v3379 = vmul.f32 %v3166, %v2995
      %v3380 = vmul.f32 %v3171, %v2996
      %v3381 = vmul.f32 %v3176, %v2997
      %v3382 = vmul.f32 %v3181, %v2998
      %v3383 = vmul.f32 %v3186, %v2999
      %v3384 = vmul.f32 %v3191, %v3000
      %v3385 = vmul.f32 %v3196, %v3001
      %v3386 = vmul.f32 %v3201, %v3002
      %v3387 = vmul.f32 %v3206, %v3003
      %v3388 = vmul.f32 %v3211, %v3004
      %v3389 = vmul.f32 %v3216, %v3005
      %v3390 = vmul.f32 %v3221, %v3006
      %v3391 = vmul.f32 %v3226, %v3007
      %v3392 = vmul.f32 %v3231, %v3008
      %v3393 = vmul.f32 %v3236, %v3009
      %v3394 = vmul.f32 %v3241, %v3010
      %v3395 = vmul.f32 %v3246, %v3011
      %v3396 = vmul.f32 %v3251, %v3012
      %v3397 = vmul.f32 %v3256, %v3013
      %v3398 = vmul.f32 %v3261, %v3014
      %v3399 = vmul.f32 %v3266, %v3015
      %v3400 = vmul.f32 %v3271, %v3016
      %v3401 = vmul.f32 %v3276, %v3017
      %v3402 = vmul.f32 %v3281, %v3018
      %v3403 = vmul.f32 %v3286, %v3019
      %v3404 = vmul.f32 %v3291, %v3020
      %v3405 = vmul.f32 %v3296, %v3021
      %v3406 = vmul.f32 %v3301, %v3022
      %v3407 = vmul.f32 %v3306, %v3023
      %v3408 = vmul.f32 %v3311, %v3024
      %v3409 = vmul.f32 %v3316, %v3025
      %v3410 = vmul.f32 %v3321, %v3026
      %v3411 = vmul.f32 %v3326, %v3027
      %v3412 = vmul.f32 %v3331, %v3028
      %v3413 = vmul.f32 %v3336, %v3029
      %v3414 = vmul.f32 %v3341, %v3030
      %v3415 = vmul.f32 %v3346, %v3031
      %v3416 = vmul.f32 %v3351, %v3032
      %v3417 = vpack.c.bf16 %v2457, %v2457
      %v3418 = vpack.c.bf16 %v2459, %v2459
      %v3419 = vpack.c.bf16 %v2461, %v2461
      %v3420 = vpack.c.bf16 %v2463, %v2463
      %v3421 = vpack.c.bf16 %v2465, %v2465
      %v3422 = vpack.c.bf16 %v2467, %v2467
      %v3423 = vpack.c.bf16 %v2469, %v2469
      %v3424 = vpack.c.bf16 %v2471, %v2471
      %v3425 = vpack.c.bf16 %v2473, %v2473
      %v3426 = vpack.c.bf16 %v2475, %v2475
      %v3427 = vpack.c.bf16 %v2477, %v2477
      %v3428 = vpack.c.bf16 %v2479, %v2479
      %v3429 = vpack.c.bf16 %v2481, %v2481
      %v3430 = vpack.c.bf16 %v2483, %v2483
      %v3431 = vpack.c.bf16 %v2485, %v2485
      %v3432 = vpack.c.bf16 %v2487, %v2487
      %v3433 = vpack.c.bf16 %v2489, %v2489
      %v3434 = vpack.c.bf16 %v2491, %v2491
      %v3435 = vpack.c.bf16 %v2493, %v2493
      %v3436 = vpack.c.bf16 %v2495, %v2495
      %v3437 = vpack.c.bf16 %v2497, %v2497
      %v3438 = vpack.c.bf16 %v2499, %v2499
      %v3439 = vpack.c.bf16 %v2501, %v2501
      %v3440 = vpack.c.bf16 %v2503, %v2503
      %v3441 = vpack.c.bf16 %v2505, %v2505
      %v3442 = vpack.c.bf16 %v2507, %v2507
      %v3443 = vpack.c.bf16 %v2509, %v2509
      %v3444 = vpack.c.bf16 %v2511, %v2511
      %v3445 = vpack.c.bf16 %v2513, %v2513
      %v3446 = vpack.c.bf16 %v2515, %v2515
      %v3447 = vpack.c.bf16 %v2517, %v2517
      %v3448 = vpack.c.bf16 %v2519, %v2519
      %v3449 = vpack.c.bf16 %v2521, %v2521
      %v3450 = vpack.c.bf16 %v2523, %v2523
      %v3451 = vpack.c.bf16 %v2525, %v2525
      %v3452 = vpack.c.bf16 %v2527, %v2527
      %v3453 = vpack.c.bf16 %v2529, %v2529
      %v3454 = vpack.c.bf16 %v2531, %v2531
      %v3455 = vpack.c.bf16 %v2533, %v2533
      %v3456 = vpack.c.bf16 %v2535, %v2535
      %v3457 = vpack.c.bf16 %v2537, %v2537
      %v3458 = vpack.c.bf16 %v2539, %v2539
      %v3459 = vpack.c.bf16 %v2541, %v2541
      %v3460 = vpack.c.bf16 %v2543, %v2543
      %v3461 = vpack.c.bf16 %v2545, %v2545
      %v3462 = vpack.c.bf16 %v2547, %v2547
      %v3463 = vpack.c.bf16 %v2549, %v2549
      %v3464 = vpack.c.bf16 %v2551, %v2551
      %v3465 = vpack.c.bf16 %v2553, %v2553
      %v3466 = vpack.c.bf16 %v2555, %v2555
      %v3467 = vpack.c.bf16 %v2557, %v2557
      %v3468 = vpack.c.bf16 %v2559, %v2559
      %v3469 = vpack.c.bf16 %v2561, %v2561
      %v3470 = vpack.c.bf16 %v2563, %v2563
      %v3471 = vpack.c.bf16 %v2565, %v2565
      %v3472 = vpack.c.bf16 %v2567, %v2567
      %v3473 = vpack.c.bf16 %v2569, %v2569
      %v3474 = vpack.c.bf16 %v2571, %v2571
      %v3475 = vpack.c.bf16 %v2573, %v2573
      %v3476 = vpack.c.bf16 %v2575, %v2575
      %v3477 = vpack.c.bf16 %v2577, %v2577
      %v3478 = vpack.c.bf16 %v2579, %v2579
      %v3479 = vpack.c.bf16 %v2581, %v2581
      %v3480 = vpack.c.bf16 %v2583, %v2583
      %v3497 = vunpack.c.l.b16 %v3417
      %v3498 = vunpack.c.l.b16 %v3418
      %v3499 = vunpack.c.l.b16 %v3419
      %v3500 = vunpack.c.l.b16 %v3420
      %v3501 = vunpack.c.l.b16 %v3421
      %v3502 = vunpack.c.l.b16 %v3422
      %v3503 = vunpack.c.l.b16 %v3423
      %v3504 = vunpack.c.l.b16 %v3424
      %v3505 = vunpack.c.l.b16 %v3425
      %v3506 = vunpack.c.l.b16 %v3426
      %v3507 = vunpack.c.l.b16 %v3427
      %v3508 = vunpack.c.l.b16 %v3428
      %v3509 = vunpack.c.l.b16 %v3429
      %v3510 = vunpack.c.l.b16 %v3430
      %v3511 = vunpack.c.l.b16 %v3431
      %v3512 = vunpack.c.l.b16 %v3432
      %v3513 = vpack.c.b16 %v3498, %v3497
      %v3514 = vpack.c.b16 %v3500, %v3499
      %v3515 = vpack.c.b16 %v3502, %v3501
      %v3516 = vpack.c.b16 %v3504, %v3503
      %v3517 = vpack.c.b16 %v3506, %v3505
      %v3518 = vpack.c.b16 %v3508, %v3507
      %v3519 = vpack.c.b16 %v3510, %v3509
      %v3520 = vpack.c.b16 %v3512, %v3511
      %v3545 = vunpack.c.l.b16 %v787
      %v3546 = vunpack.c.l.b16 %v788
      %v3547 = vunpack.c.l.b16 %v789
      %v3548 = vunpack.c.l.b16 %v790
      %v3549 = vunpack.c.l.b16 %v791
      %v3550 = vunpack.c.l.b16 %v792
      %v3551 = vunpack.c.l.b16 %v793
      %v3552 = vunpack.c.l.b16 %v794
      %v3553 = vunpack.c.l.b16 %v795
      %v3554 = vunpack.c.l.b16 %v796
      %v3555 = vunpack.c.l.b16 %v797
      %v3556 = vunpack.c.l.b16 %v798
      %v3557 = vunpack.c.l.b16 %v799
      %v3558 = vunpack.c.l.b16 %v800
      %v3559 = vunpack.c.l.b16 %v801
      %v3560 = vunpack.c.l.b16 %v802
      %v3561 = vpack.c.b16 %v3546, %v3545
      %v3562 = vpack.c.b16 %v3548, %v3547
      %v3563 = vpack.c.b16 %v3550, %v3549
      %v3564 = vpack.c.b16 %v3552, %v3551
      %v3565 = vpack.c.b16 %v3554, %v3553
      %v3566 = vpack.c.b16 %v3556, %v3555
      %v3567 = vpack.c.b16 %v3558, %v3557
      %v3568 = vpack.c.b16 %v3560, %v3559
      %3577 = vmatpush.bf16.msra.mxu0 %v3568
      %3578 = vmatpush.bf16.msra.mxu0 %v3567
      %3579 = vmatpush.bf16.msra.mxu0 %v3566
      %3580 = vmatpush.bf16.msra.mxu0 %v3565
      %3581 = vmatpush.bf16.msra.mxu0 %v3564
      %3582 = vmatpush.bf16.msra.mxu0 %v3563
      %3583 = vmatpush.bf16.msra.mxu0 %v3562
      %3584 = vmatpush.bf16.msra.mxu0 %v3561
      %3585 = vmatmul.bf16.gmra.mxu0 %v3513
      %v3586 = vpop.f32.mrf.mxu0
      %v3587 = vadd.f32 0.0, %v3586
      %v3588 = vpop.f32.mrf.mxu0
      %v3589 = vadd.f32 0.0, %v3588
      %3590 = vmatmul.bf16.gmra.mxu0 %v3514
      %v3591 = vpop.f32.mrf.mxu0
      %v3592 = vadd.f32 0.0, %v3591
      %v3593 = vpop.f32.mrf.mxu0
      %v3594 = vadd.f32 0.0, %v3593
      %3595 = vmatmul.bf16.gmra.mxu0 %v3515
      %v3596 = vpop.f32.mrf.mxu0
      %v3597 = vadd.f32 0.0, %v3596
      %v3598 = vpop.f32.mrf.mxu0
      %v3599 = vadd.f32 0.0, %v3598
      %3600 = vmatmul.bf16.gmra.mxu0 %v3516
      %v3601 = vpop.f32.mrf.mxu0
      %v3602 = vadd.f32 0.0, %v3601
      %v3603 = vpop.f32.mrf.mxu0
      %v3604 = vadd.f32 0.0, %v3603
      %3605 = vmatmul.bf16.gmra.mxu0 %v3517
      %v3606 = vpop.f32.mrf.mxu0
      %v3607 = vadd.f32 0.0, %v3606
      %v3608 = vpop.f32.mrf.mxu0
      %v3609 = vadd.f32 0.0, %v3608
      %3610 = vmatmul.bf16.gmra.mxu0 %v3518
      %v3611 = vpop.f32.mrf.mxu0
      %v3612 = vadd.f32 0.0, %v3611
      %v3613 = vpop.f32.mrf.mxu0
      %v3614 = vadd.f32 0.0, %v3613
      %3615 = vmatmul.bf16.gmra.mxu0 %v3519
      %v3616 = vpop.f32.mrf.mxu0
      %v3617 = vadd.f32 0.0, %v3616
      %v3618 = vpop.f32.mrf.mxu0
      %v3619 = vadd.f32 0.0, %v3618
      %3620 = vmatmul.bf16.gmra.mxu0 %v3520
      %v3621 = vpop.f32.mrf.mxu0
      %v3622 = vadd.f32 0.0, %v3621
      %v3623 = vpop.f32.mrf.mxu0
      %v3624 = vadd.f32 0.0, %v3623
      %3625 = vdwg.mxu0
      %v3642 = vunpack.c.l.b16 %v3433
      %v3643 = vunpack.c.l.b16 %v3434
      %v3644 = vunpack.c.l.b16 %v3435
      %v3645 = vunpack.c.l.b16 %v3436
      %v3646 = vunpack.c.l.b16 %v3437
      %v3647 = vunpack.c.l.b16 %v3438
      %v3648 = vunpack.c.l.b16 %v3439
      %v3649 = vunpack.c.l.b16 %v3440
      %v3650 = vunpack.c.l.b16 %v3441
      %v3651 = vunpack.c.l.b16 %v3442
      %v3652 = vunpack.c.l.b16 %v3443
      %v3653 = vunpack.c.l.b16 %v3444
      %v3654 = vunpack.c.l.b16 %v3445
      %v3655 = vunpack.c.l.b16 %v3446
      %v3656 = vunpack.c.l.b16 %v3447
      %v3657 = vunpack.c.l.b16 %v3448
      %v3658 = vpack.c.b16 %v3643, %v3642
      %v3659 = vpack.c.b16 %v3645, %v3644
      %v3660 = vpack.c.b16 %v3647, %v3646
      %v3661 = vpack.c.b16 %v3649, %v3648
      %v3662 = vpack.c.b16 %v3651, %v3650
      %v3663 = vpack.c.b16 %v3653, %v3652
      %v3664 = vpack.c.b16 %v3655, %v3654
      %v3665 = vpack.c.b16 %v3657, %v3656
      %v3690 = vunpack.c.l.b16 %v803
      %v3691 = vunpack.c.l.b16 %v804
      %v3692 = vunpack.c.l.b16 %v805
      %v3693 = vunpack.c.l.b16 %v806
      %v3694 = vunpack.c.l.b16 %v807
      %v3695 = vunpack.c.l.b16 %v808
      %v3696 = vunpack.c.l.b16 %v809
      %v3697 = vunpack.c.l.b16 %v810
      %v3698 = vunpack.c.l.b16 %v811
      %v3699 = vunpack.c.l.b16 %v812
      %v3700 = vunpack.c.l.b16 %v813
      %v3701 = vunpack.c.l.b16 %v814
      %v3702 = vunpack.c.l.b16 %v815
      %v3703 = vunpack.c.l.b16 %v816
      %v3704 = vunpack.c.l.b16 %v817
      %v3705 = vunpack.c.l.b16 %v818
      %v3706 = vpack.c.b16 %v3691, %v3690
      %v3707 = vpack.c.b16 %v3693, %v3692
      %v3708 = vpack.c.b16 %v3695, %v3694
      %v3709 = vpack.c.b16 %v3697, %v3696
      %v3710 = vpack.c.b16 %v3699, %v3698
      %v3711 = vpack.c.b16 %v3701, %v3700
      %v3712 = vpack.c.b16 %v3703, %v3702
      %v3713 = vpack.c.b16 %v3705, %v3704
      %3722 = vmatpush.bf16.msra.mxu0 %v3713
      %3723 = vmatpush.bf16.msra.mxu0 %v3712
      %3724 = vmatpush.bf16.msra.mxu0 %v3711
      %3725 = vmatpush.bf16.msra.mxu0 %v3710
      %3726 = vmatpush.bf16.msra.mxu0 %v3709
      %3727 = vmatpush.bf16.msra.mxu0 %v3708
      %3728 = vmatpush.bf16.msra.mxu0 %v3707
      %3729 = vmatpush.bf16.msra.mxu0 %v3706
      %3730 = vmatmul.bf16.gmra.mxu0 %v3658
      %v3731 = vpop.f32.mrf.mxu0
      %v3732 = vadd.f32 0.0, %v3731
      %v3733 = vpop.f32.mrf.mxu0
      %v3734 = vadd.f32 0.0, %v3733
      %3735 = vmatmul.bf16.gmra.mxu0 %v3659
      %v3736 = vpop.f32.mrf.mxu0
      %v3737 = vadd.f32 0.0, %v3736
      %v3738 = vpop.f32.mrf.mxu0
      %v3739 = vadd.f32 0.0, %v3738
      %3740 = vmatmul.bf16.gmra.mxu0 %v3660
      %v3741 = vpop.f32.mrf.mxu0
      %v3742 = vadd.f32 0.0, %v3741
      %v3743 = vpop.f32.mrf.mxu0
      %v3744 = vadd.f32 0.0, %v3743
      %3745 = vmatmul.bf16.gmra.mxu0 %v3661
      %v3746 = vpop.f32.mrf.mxu0
      %v3747 = vadd.f32 0.0, %v3746
      %v3748 = vpop.f32.mrf.mxu0
      %v3749 = vadd.f32 0.0, %v3748
      %3750 = vmatmul.bf16.gmra.mxu0 %v3662
      %v3751 = vpop.f32.mrf.mxu0
      %v3752 = vadd.f32 0.0, %v3751
      %v3753 = vpop.f32.mrf.mxu0
      %v3754 = vadd.f32 0.0, %v3753
      %3755 = vmatmul.bf16.gmra.mxu0 %v3663
      %v3756 = vpop.f32.mrf.mxu0
      %v3757 = vadd.f32 0.0, %v3756
      %v3758 = vpop.f32.mrf.mxu0
      %v3759 = vadd.f32 0.0, %v3758
      %3760 = vmatmul.bf16.gmra.mxu0 %v3664
      %v3761 = vpop.f32.mrf.mxu0
      %v3762 = vadd.f32 0.0, %v3761
      %v3763 = vpop.f32.mrf.mxu0
      %v3764 = vadd.f32 0.0, %v3763
      %3765 = vmatmul.bf16.gmra.mxu0 %v3665
      %v3766 = vpop.f32.mrf.mxu0
      %v3767 = vadd.f32 0.0, %v3766
      %v3768 = vpop.f32.mrf.mxu0
      %v3769 = vadd.f32 0.0, %v3768
      %3770 = vdwg.mxu0
      %v3787 = vunpack.c.l.b16 %v3449
      %v3788 = vunpack.c.l.b16 %v3450
      %v3789 = vunpack.c.l.b16 %v3451
      %v3790 = vunpack.c.l.b16 %v3452
      %v3791 = vunpack.c.l.b16 %v3453
      %v3792 = vunpack.c.l.b16 %v3454
      %v3793 = vunpack.c.l.b16 %v3455
      %v3794 = vunpack.c.l.b16 %v3456
      %v3795 = vunpack.c.l.b16 %v3457
      %v3796 = vunpack.c.l.b16 %v3458
      %v3797 = vunpack.c.l.b16 %v3459
      %v3798 = vunpack.c.l.b16 %v3460
      %v3799 = vunpack.c.l.b16 %v3461
      %v3800 = vunpack.c.l.b16 %v3462
      %v3801 = vunpack.c.l.b16 %v3463
      %v3802 = vunpack.c.l.b16 %v3464
      %v3803 = vpack.c.b16 %v3788, %v3787
      %v3804 = vpack.c.b16 %v3790, %v3789
      %v3805 = vpack.c.b16 %v3792, %v3791
      %v3806 = vpack.c.b16 %v3794, %v3793
      %v3807 = vpack.c.b16 %v3796, %v3795
      %v3808 = vpack.c.b16 %v3798, %v3797
      %v3809 = vpack.c.b16 %v3800, %v3799
      %v3810 = vpack.c.b16 %v3802, %v3801
      %v3835 = vunpack.c.l.b16 %v819
      %v3836 = vunpack.c.l.b16 %v820
      %v3837 = vunpack.c.l.b16 %v821
      %v3838 = vunpack.c.l.b16 %v822
      %v3839 = vunpack.c.l.b16 %v823
      %v3840 = vunpack.c.l.b16 %v824
      %v3841 = vunpack.c.l.b16 %v825
      %v3842 = vunpack.c.l.b16 %v826
      %v3843 = vunpack.c.l.b16 %v827
      %v3844 = vunpack.c.l.b16 %v828
      %v3845 = vunpack.c.l.b16 %v829
      %v3846 = vunpack.c.l.b16 %v830
      %v3847 = vunpack.c.l.b16 %v831
      %v3848 = vunpack.c.l.b16 %v832
      %v3849 = vunpack.c.l.b16 %v833
      %v3850 = vunpack.c.l.b16 %v834
      %v3851 = vpack.c.b16 %v3836, %v3835
      %v3852 = vpack.c.b16 %v3838, %v3837
      %v3853 = vpack.c.b16 %v3840, %v3839
      %v3854 = vpack.c.b16 %v3842, %v3841
      %v3855 = vpack.c.b16 %v3844, %v3843
      %v3856 = vpack.c.b16 %v3846, %v3845
      %v3857 = vpack.c.b16 %v3848, %v3847
      %v3858 = vpack.c.b16 %v3850, %v3849
      %3867 = vmatpush.bf16.msra.mxu0 %v3858
      %3868 = vmatpush.bf16.msra.mxu0 %v3857
      %3869 = vmatpush.bf16.msra.mxu0 %v3856
      %3870 = vmatpush.bf16.msra.mxu0 %v3855
      %3871 = vmatpush.bf16.msra.mxu0 %v3854
      %3872 = vmatpush.bf16.msra.mxu0 %v3853
      %3873 = vmatpush.bf16.msra.mxu0 %v3852
      %3874 = vmatpush.bf16.msra.mxu0 %v3851
      %3875 = vmatmul.bf16.gmra.mxu0 %v3803
      %v3876 = vpop.f32.mrf.mxu0
      %v3877 = vadd.f32 0.0, %v3876
      %v3878 = vpop.f32.mrf.mxu0
      %v3879 = vadd.f32 0.0, %v3878
      %3880 = vmatmul.bf16.gmra.mxu0 %v3804
      %v3881 = vpop.f32.mrf.mxu0
      %v3882 = vadd.f32 0.0, %v3881
      %v3883 = vpop.f32.mrf.mxu0
      %v3884 = vadd.f32 0.0, %v3883
      %3885 = vmatmul.bf16.gmra.mxu0 %v3805
      %v3886 = vpop.f32.mrf.mxu0
      %v3887 = vadd.f32 0.0, %v3886
      %v3888 = vpop.f32.mrf.mxu0
      %v3889 = vadd.f32 0.0, %v3888
      %3890 = vmatmul.bf16.gmra.mxu0 %v3806
      %v3891 = vpop.f32.mrf.mxu0
      %v3892 = vadd.f32 0.0, %v3891
      %v3893 = vpop.f32.mrf.mxu0
      %v3894 = vadd.f32 0.0, %v3893
      %3895 = vmatmul.bf16.gmra.mxu0 %v3807
      %v3896 = vpop.f32.mrf.mxu0
      %v3897 = vadd.f32 0.0, %v3896
      %v3898 = vpop.f32.mrf.mxu0
      %v3899 = vadd.f32 0.0, %v3898
      %3900 = vmatmul.bf16.gmra.mxu0 %v3808
      %v3901 = vpop.f32.mrf.mxu0
      %v3902 = vadd.f32 0.0, %v3901
      %v3903 = vpop.f32.mrf.mxu0
      %v3904 = vadd.f32 0.0, %v3903
      %3905 = vmatmul.bf16.gmra.mxu0 %v3809
      %v3906 = vpop.f32.mrf.mxu0
      %v3907 = vadd.f32 0.0, %v3906
      %v3908 = vpop.f32.mrf.mxu0
      %v3909 = vadd.f32 0.0, %v3908
      %3910 = vmatmul.bf16.gmra.mxu0 %v3810
      %v3911 = vpop.f32.mrf.mxu0
      %v3912 = vadd.f32 0.0, %v3911
      %v3913 = vpop.f32.mrf.mxu0
      %v3914 = vadd.f32 0.0, %v3913
      %3915 = vdwg.mxu0
      %v3932 = vunpack.c.l.b16 %v3465
      %v3933 = vunpack.c.l.b16 %v3466
      %v3934 = vunpack.c.l.b16 %v3467
      %v3935 = vunpack.c.l.b16 %v3468
      %v3936 = vunpack.c.l.b16 %v3469
      %v3937 = vunpack.c.l.b16 %v3470
      %v3938 = vunpack.c.l.b16 %v3471
      %v3939 = vunpack.c.l.b16 %v3472
      %v3940 = vunpack.c.l.b16 %v3473
      %v3941 = vunpack.c.l.b16 %v3474
      %v3942 = vunpack.c.l.b16 %v3475
      %v3943 = vunpack.c.l.b16 %v3476
      %v3944 = vunpack.c.l.b16 %v3477
      %v3945 = vunpack.c.l.b16 %v3478
      %v3946 = vunpack.c.l.b16 %v3479
      %v3947 = vunpack.c.l.b16 %v3480
      %v3948 = vpack.c.b16 %v3933, %v3932
      %v3949 = vpack.c.b16 %v3935, %v3934
      %v3950 = vpack.c.b16 %v3937, %v3936
      %v3951 = vpack.c.b16 %v3939, %v3938
      %v3952 = vpack.c.b16 %v3941, %v3940
      %v3953 = vpack.c.b16 %v3943, %v3942
      %v3954 = vpack.c.b16 %v3945, %v3944
      %v3955 = vpack.c.b16 %v3947, %v3946
      %v3980 = vunpack.c.l.b16 %v835
      %v3981 = vunpack.c.l.b16 %v836
      %v3982 = vunpack.c.l.b16 %v837
      %v3983 = vunpack.c.l.b16 %v838
      %v3984 = vunpack.c.l.b16 %v839
      %v3985 = vunpack.c.l.b16 %v840
      %v3986 = vunpack.c.l.b16 %v841
      %v3987 = vunpack.c.l.b16 %v842
      %v3988 = vunpack.c.l.b16 %v843
      %v3989 = vunpack.c.l.b16 %v844
      %v3990 = vunpack.c.l.b16 %v845
      %v3991 = vunpack.c.l.b16 %v846
      %v3992 = vunpack.c.l.b16 %v847
      %v3993 = vunpack.c.l.b16 %v848
      %v3994 = vunpack.c.l.b16 %v849
      %v3995 = vunpack.c.l.b16 %v850
      %v3996 = vpack.c.b16 %v3981, %v3980
      %v3997 = vpack.c.b16 %v3983, %v3982
      %v3998 = vpack.c.b16 %v3985, %v3984
      %v3999 = vpack.c.b16 %v3987, %v3986
      %v4000 = vpack.c.b16 %v3989, %v3988
      %v4001 = vpack.c.b16 %v3991, %v3990
      %v4002 = vpack.c.b16 %v3993, %v3992
      %v4003 = vpack.c.b16 %v3995, %v3994
      %4012 = vmatpush.bf16.msra.mxu0 %v4003
      %4013 = vmatpush.bf16.msra.mxu0 %v4002
      %4014 = vmatpush.bf16.msra.mxu0 %v4001
      %4015 = vmatpush.bf16.msra.mxu0 %v4000
      %4016 = vmatpush.bf16.msra.mxu0 %v3999
      %4017 = vmatpush.bf16.msra.mxu0 %v3998
      %4018 = vmatpush.bf16.msra.mxu0 %v3997
      %4019 = vmatpush.bf16.msra.mxu0 %v3996
      %4020 = vmatmul.bf16.gmra.mxu0 %v3948
      %v4021 = vpop.f32.mrf.mxu0
      %v4022 = vadd.f32 0.0, %v4021
      %v4023 = vpop.f32.mrf.mxu0
      %v4024 = vadd.f32 0.0, %v4023
      %4025 = vmatmul.bf16.gmra.mxu0 %v3949
      %v4026 = vpop.f32.mrf.mxu0
      %v4027 = vadd.f32 0.0, %v4026
      %v4028 = vpop.f32.mrf.mxu0
      %v4029 = vadd.f32 0.0, %v4028
      %4030 = vmatmul.bf16.gmra.mxu0 %v3950
      %v4031 = vpop.f32.mrf.mxu0
      %v4032 = vadd.f32 0.0, %v4031
      %v4033 = vpop.f32.mrf.mxu0
      %v4034 = vadd.f32 0.0, %v4033
      %4035 = vmatmul.bf16.gmra.mxu0 %v3951
      %v4036 = vpop.f32.mrf.mxu0
      %v4037 = vadd.f32 0.0, %v4036
      %v4038 = vpop.f32.mrf.mxu0
      %v4039 = vadd.f32 0.0, %v4038
      %4040 = vmatmul.bf16.gmra.mxu0 %v3952
      %v4041 = vpop.f32.mrf.mxu0
      %v4042 = vadd.f32 0.0, %v4041
      %v4043 = vpop.f32.mrf.mxu0
      %v4044 = vadd.f32 0.0, %v4043
      %4045 = vmatmul.bf16.gmra.mxu0 %v3953
      %v4046 = vpop.f32.mrf.mxu0
      %v4047 = vadd.f32 0.0, %v4046
      %v4048 = vpop.f32.mrf.mxu0
      %v4049 = vadd.f32 0.0, %v4048
      %4050 = vmatmul.bf16.gmra.mxu0 %v3954
      %v4051 = vpop.f32.mrf.mxu0
      %v4052 = vadd.f32 0.0, %v4051
      %v4053 = vpop.f32.mrf.mxu0
      %v4054 = vadd.f32 0.0, %v4053
      %4055 = vmatmul.bf16.gmra.mxu0 %v3955
      %v4056 = vpop.f32.mrf.mxu0
      %v4057 = vadd.f32 0.0, %v4056
      %v4058 = vpop.f32.mrf.mxu0
      %v4059 = vadd.f32 0.0, %v4058
      %4060 = vdwg.mxu0
      %v4061 = vadd.f32 %v3353, %v3587
      %v4062 = vadd.f32 %v3354, %v3589
      %v4063 = vadd.f32 %v3355, %v3592
      %v4064 = vadd.f32 %v3356, %v3594
      %v4065 = vadd.f32 %v3357, %v3597
      %v4066 = vadd.f32 %v3358, %v3599
      %v4067 = vadd.f32 %v3359, %v3602
      %v4068 = vadd.f32 %v3360, %v3604
      %v4069 = vadd.f32 %v3361, %v3607
      %v4070 = vadd.f32 %v3362, %v3609
      %v4071 = vadd.f32 %v3363, %v3612
      %v4072 = vadd.f32 %v3364, %v3614
      %v4073 = vadd.f32 %v3365, %v3617
      %v4074 = vadd.f32 %v3366, %v3619
      %v4075 = vadd.f32 %v3367, %v3622
      %v4076 = vadd.f32 %v3368, %v3624
      %v4077 = vadd.f32 %v3369, %v3732
      %v4078 = vadd.f32 %v3370, %v3734
      %v4079 = vadd.f32 %v3371, %v3737
      %v4080 = vadd.f32 %v3372, %v3739
      %v4081 = vadd.f32 %v3373, %v3742
      %v4082 = vadd.f32 %v3374, %v3744
      %v4083 = vadd.f32 %v3375, %v3747
      %v4084 = vadd.f32 %v3376, %v3749
      %v4085 = vadd.f32 %v3377, %v3752
      %v4086 = vadd.f32 %v3378, %v3754
      %v4087 = vadd.f32 %v3379, %v3757
      %v4088 = vadd.f32 %v3380, %v3759
      %v4089 = vadd.f32 %v3381, %v3762
      %v4090 = vadd.f32 %v3382, %v3764
      %v4091 = vadd.f32 %v3383, %v3767
      %v4092 = vadd.f32 %v3384, %v3769
      %v4093 = vadd.f32 %v3385, %v3877
      %v4094 = vadd.f32 %v3386, %v3879
      %v4095 = vadd.f32 %v3387, %v3882
      %v4096 = vadd.f32 %v3388, %v3884
      %v4097 = vadd.f32 %v3389, %v3887
      %v4098 = vadd.f32 %v3390, %v3889
      %v4099 = vadd.f32 %v3391, %v3892
      %v4100 = vadd.f32 %v3392, %v3894
      %v4101 = vadd.f32 %v3393, %v3897
      %v4102 = vadd.f32 %v3394, %v3899
      %v4103 = vadd.f32 %v3395, %v3902
      %v4104 = vadd.f32 %v3396, %v3904
      %v4105 = vadd.f32 %v3397, %v3907
      %v4106 = vadd.f32 %v3398, %v3909
      %v4107 = vadd.f32 %v3399, %v3912
      %v4108 = vadd.f32 %v3400, %v3914
      %v4109 = vadd.f32 %v3401, %v4022
      %v4110 = vadd.f32 %v3402, %v4024
      %v4111 = vadd.f32 %v3403, %v4027
      %v4112 = vadd.f32 %v3404, %v4029
      %v4113 = vadd.f32 %v3405, %v4032
      %v4114 = vadd.f32 %v3406, %v4034
      %v4115 = vadd.f32 %v3407, %v4037
      %v4116 = vadd.f32 %v3408, %v4039
      %v4117 = vadd.f32 %v3409, %v4042
      %v4118 = vadd.f32 %v3410, %v4044
      %v4119 = vadd.f32 %v3411, %v4047
      %v4120 = vadd.f32 %v3412, %v4049
      %v4121 = vadd.f32 %v3413, %v4052
      %v4122 = vadd.f32 %v3414, %v4054
      %v4123 = vadd.f32 %v3415, %v4057
      %v4124 = vadd.f32 %v3416, %v4059
      %4125 = vst.msk [vmem:[#allocation4] sm:$0xff] %vm931, %v4061
      %4126 = vst.msk [vmem:[#allocation4 + $0x8] sm:$0xff] %vm931, %v4062
      %4127 = vst.msk [vmem:[#allocation4 + $0x10] sm:$0xff] %vm931, %v4063
      %4128 = vst.msk [vmem:[#allocation4 + $0x18] sm:$0xff] %vm931, %v4064
      %4129 = vst.msk [vmem:[#allocation4 + $0x20] sm:$0xff] %vm931, %v4065
      %4130 = vst.msk [vmem:[#allocation4 + $0x28] sm:$0xff] %vm931, %v4066
      %4131 = vst.msk [vmem:[#allocation4 + $0x30] sm:$0xff] %vm931, %v4067
      %4132 = vst.msk [vmem:[#allocation4 + $0x38] sm:$0xff] %vm931, %v4068
      %4133 = vst.msk [vmem:[#allocation4 + $0x40] sm:$0xff] %vm931, %v4069
      %4134 = vst.msk [vmem:[#allocation4 + $0x48] sm:$0xff] %vm931, %v4070
      %4135 = vst.msk [vmem:[#allocation4 + $0x50] sm:$0xff] %vm931, %v4071
      %4136 = vst.msk [vmem:[#allocation4 + $0x58] sm:$0xff] %vm931, %v4072
      %4137 = vst.msk [vmem:[#allocation4 + $0x60] sm:$0xff] %vm931, %v4073
      %4138 = vst.msk [vmem:[#allocation4 + $0x68] sm:$0xff] %vm931, %v4074
      %4139 = vst.msk [vmem:[#allocation4 + $0x70] sm:$0xff] %vm931, %v4075
      %4140 = vst.msk [vmem:[#allocation4 + $0x78] sm:$0xff] %vm931, %v4076
      %4141 = vst.msk [vmem:[#allocation4 + $0x80] sm:$0xff] %vm931, %v4077
      %4142 = vst.msk [vmem:[#allocation4 + $0x88] sm:$0xff] %vm931, %v4078
      %4143 = vst.msk [vmem:[#allocation4 + $0x90] sm:$0xff] %vm931, %v4079
      %4144 = vst.msk [vmem:[#allocation4 + $0x98] sm:$0xff] %vm931, %v4080
      %4145 = vst.msk [vmem:[#allocation4 + $0xa0] sm:$0xff] %vm931, %v4081
      %4146 = vst.msk [vmem:[#allocation4 + $0xa8] sm:$0xff] %vm931, %v4082
      %4147 = vst.msk [vmem:[#allocation4 + $0xb0] sm:$0xff] %vm931, %v4083
      %4148 = vst.msk [vmem:[#allocation4 + $0xb8] sm:$0xff] %vm931, %v4084
      %4149 = vst.msk [vmem:[#allocation4 + $0xc0] sm:$0xff] %vm931, %v4085
      %4150 = vst.msk [vmem:[#allocation4 + $0xc8] sm:$0xff] %vm931, %v4086
      %4151 = vst.msk [vmem:[#allocation4 + $0xd0] sm:$0xff] %vm931, %v4087
      %4152 = vst.msk [vmem:[#allocation4 + $0xd8] sm:$0xff] %vm931, %v4088
      %4153 = vst.msk [vmem:[#allocation4 + $0xe0] sm:$0xff] %vm931, %v4089
      %4154 = vst.msk [vmem:[#allocation4 + $0xe8] sm:$0xff] %vm931, %v4090
      %4155 = vst.msk [vmem:[#allocation4 + $0xf0] sm:$0xff] %vm931, %v4091
      %4156 = vst.msk [vmem:[#allocation4 + $0xf8] sm:$0xff] %vm931, %v4092
      %4157 = vst.msk [vmem:[#allocation4 + $0x100] sm:$0xff] %vm931, %v4093
      %4158 = vst.msk [vmem:[#allocation4 + $0x108] sm:$0xff] %vm931, %v4094
      %4159 = vst.msk [vmem:[#allocation4 + $0x110] sm:$0xff] %vm931, %v4095
      %4160 = vst.msk [vmem:[#allocation4 + $0x118] sm:$0xff] %vm931, %v4096
      %4161 = vst.msk [vmem:[#allocation4 + $0x120] sm:$0xff] %vm931, %v4097
      %4162 = vst.msk [vmem:[#allocation4 + $0x128] sm:$0xff] %vm931, %v4098
      %4163 = vst.msk [vmem:[#allocation4 + $0x130] sm:$0xff] %vm931, %v4099
      %4164 = vst.msk [vmem:[#allocation4 + $0x138] sm:$0xff] %vm931, %v4100
      %4165 = vst.msk [vmem:[#allocation4 + $0x140] sm:$0xff] %vm931, %v4101
      %4166 = vst.msk [vmem:[#allocation4 + $0x148] sm:$0xff] %vm931, %v4102
      %4167 = vst.msk [vmem:[#allocation4 + $0x150] sm:$0xff] %vm931, %v4103
      %4168 = vst.msk [vmem:[#allocation4 + $0x158] sm:$0xff] %vm931, %v4104
      %4169 = vst.msk [vmem:[#allocation4 + $0x160] sm:$0xff] %vm931, %v4105
      %4170 = vst.msk [vmem:[#allocation4 + $0x168] sm:$0xff] %vm931, %v4106
      %4171 = vst.msk [vmem:[#allocation4 + $0x170] sm:$0xff] %vm931, %v4107
      %4172 = vst.msk [vmem:[#allocation4 + $0x178] sm:$0xff] %vm931, %v4108
      %4173 = vst.msk [vmem:[#allocation4 + $0x180] sm:$0xff] %vm931, %v4109
      %4174 = vst.msk [vmem:[#allocation4 + $0x188] sm:$0xff] %vm931, %v4110
      %4175 = vst.msk [vmem:[#allocation4 + $0x190] sm:$0xff] %vm931, %v4111
      %4176 = vst.msk [vmem:[#allocation4 + $0x198] sm:$0xff] %vm931, %v4112
      %4177 = vst.msk [vmem:[#allocation4 + $0x1a0] sm:$0xff] %vm931, %v4113
      %4178 = vst.msk [vmem:[#allocation4 + $0x1a8] sm:$0xff] %vm931, %v4114
      %4179 = vst.msk [vmem:[#allocation4 + $0x1b0] sm:$0xff] %vm931, %v4115
      %4180 = vst.msk [vmem:[#allocation4 + $0x1b8] sm:$0xff] %vm931, %v4116
      %4181 = vst.msk [vmem:[#allocation4 + $0x1c0] sm:$0xff] %vm931, %v4117
      %4182 = vst.msk [vmem:[#allocation4 + $0x1c8] sm:$0xff] %vm931, %v4118
      %4183 = vst.msk [vmem:[#allocation4 + $0x1d0] sm:$0xff] %vm931, %v4119
      %4184 = vst.msk [vmem:[#allocation4 + $0x1d8] sm:$0xff] %vm931, %v4120
      %4185 = vst.msk [vmem:[#allocation4 + $0x1e0] sm:$0xff] %vm931, %v4121
      %4186 = vst.msk [vmem:[#allocation4 + $0x1e8] sm:$0xff] %vm931, %v4122
      %4187 = vst.msk [vmem:[#allocation4 + $0x1f0] sm:$0xff] %vm931, %v4123
      %4188 = vst.msk [vmem:[#allocation4 + $0x1f8] sm:$0xff] %vm931, %v4124
      %4189 = vst.msk [vmem:[#allocation2] sm:$0xff] %vm2904, %v1816
      %4190 = vst.msk [vmem:[#allocation2 + $0x8] sm:$0xff] %vm2904, %v1817
      %4191 = vst.msk [vmem:[#allocation2 + $0x10] sm:$0xff] %vm2904, %v1818
      %4192 = vst.msk [vmem:[#allocation2 + $0x18] sm:$0xff] %vm2904, %v1819
      %4193 = vst.msk [vmem:[#allocation2 + $0x20] sm:$0xff] %vm2904, %v1820
      %4194 = vst.msk [vmem:[#allocation2 + $0x28] sm:$0xff] %vm2904, %v1821
      %4195 = vst.msk [vmem:[#allocation2 + $0x30] sm:$0xff] %vm2904, %v1822
      %4196 = vst.msk [vmem:[#allocation2 + $0x38] sm:$0xff] %vm2904, %v1823
      %4197 = vst.msk [vmem:[#allocation2 + $0x40] sm:$0xff] %vm2904, %v1824
      %4198 = vst.msk [vmem:[#allocation2 + $0x48] sm:$0xff] %vm2904, %v1825
      %4199 = vst.msk [vmem:[#allocation2 + $0x50] sm:$0xff] %vm2904, %v1826
      %4200 = vst.msk [vmem:[#allocation2 + $0x58] sm:$0xff] %vm2904, %v1827
      %4201 = vst.msk [vmem:[#allocation2 + $0x60] sm:$0xff] %vm2904, %v1828
      %4202 = vst.msk [vmem:[#allocation2 + $0x68] sm:$0xff] %vm2904, %v1829
      %4203 = vst.msk [vmem:[#allocation2 + $0x70] sm:$0xff] %vm2904, %v1830
      %4204 = vst.msk [vmem:[#allocation2 + $0x78] sm:$0xff] %vm2904, %v1831
      %4205 = vst.msk [vmem:[#allocation2 + $0x80] sm:$0xff] %vm2904, %v1832
      %4206 = vst.msk [vmem:[#allocation2 + $0x88] sm:$0xff] %vm2904, %v1833
      %4207 = vst.msk [vmem:[#allocation2 + $0x90] sm:$0xff] %vm2904, %v1834
      %4208 = vst.msk [vmem:[#allocation2 + $0x98] sm:$0xff] %vm2904, %v1835
      %4209 = vst.msk [vmem:[#allocation2 + $0xa0] sm:$0xff] %vm2904, %v1836
      %4210 = vst.msk [vmem:[#allocation2 + $0xa8] sm:$0xff] %vm2904, %v1837
      %4211 = vst.msk [vmem:[#allocation2 + $0xb0] sm:$0xff] %vm2904, %v1838
      %4212 = vst.msk [vmem:[#allocation2 + $0xb8] sm:$0xff] %vm2904, %v1839
      %4213 = vst.msk [vmem:[#allocation2 + $0xc0] sm:$0xff] %vm2904, %v1840
      %4214 = vst.msk [vmem:[#allocation2 + $0xc8] sm:$0xff] %vm2904, %v1841
      %4215 = vst.msk [vmem:[#allocation2 + $0xd0] sm:$0xff] %vm2904, %v1842
      %4216 = vst.msk [vmem:[#allocation2 + $0xd8] sm:$0xff] %vm2904, %v1843
      %4217 = vst.msk [vmem:[#allocation2 + $0xe0] sm:$0xff] %vm2904, %v1844
      %4218 = vst.msk [vmem:[#allocation2 + $0xe8] sm:$0xff] %vm2904, %v1845
      %4219 = vst.msk [vmem:[#allocation2 + $0xf0] sm:$0xff] %vm2904, %v1846
      %4220 = vst.msk [vmem:[#allocation2 + $0xf8] sm:$0xff] %vm2904, %v1847
      %4221 = vst.msk [vmem:[#allocation2 + $0x100] sm:$0xff] %vm2904, %v1848
      %4222 = vst.msk [vmem:[#allocation2 + $0x108] sm:$0xff] %vm2904, %v1849
      %4223 = vst.msk [vmem:[#allocation2 + $0x110] sm:$0xff] %vm2904, %v1850
      %4224 = vst.msk [vmem:[#allocation2 + $0x118] sm:$0xff] %vm2904, %v1851
      %4225 = vst.msk [vmem:[#allocation2 + $0x120] sm:$0xff] %vm2904, %v1852
      %4226 = vst.msk [vmem:[#allocation2 + $0x128] sm:$0xff] %vm2904, %v1853
      %4227 = vst.msk [vmem:[#allocation2 + $0x130] sm:$0xff] %vm2904, %v1854
      %4228 = vst.msk [vmem:[#allocation2 + $0x138] sm:$0xff] %vm2904, %v1855
      %4229 = vst.msk [vmem:[#allocation2 + $0x140] sm:$0xff] %vm2904, %v1856
      %4230 = vst.msk [vmem:[#allocation2 + $0x148] sm:$0xff] %vm2904, %v1857
      %4231 = vst.msk [vmem:[#allocation2 + $0x150] sm:$0xff] %vm2904, %v1858
      %4232 = vst.msk [vmem:[#allocation2 + $0x158] sm:$0xff] %vm2904, %v1859
      %4233 = vst.msk [vmem:[#allocation2 + $0x160] sm:$0xff] %vm2904, %v1860
      %4234 = vst.msk [vmem:[#allocation2 + $0x168] sm:$0xff] %vm2904, %v1861
      %4235 = vst.msk [vmem:[#allocation2 + $0x170] sm:$0xff] %vm2904, %v1862
      %4236 = vst.msk [vmem:[#allocation2 + $0x178] sm:$0xff] %vm2904, %v1863
      %4237 = vst.msk [vmem:[#allocation2 + $0x180] sm:$0xff] %vm2904, %v1864
      %4238 = vst.msk [vmem:[#allocation2 + $0x188] sm:$0xff] %vm2904, %v1865
      %4239 = vst.msk [vmem:[#allocation2 + $0x190] sm:$0xff] %vm2904, %v1866
      %4240 = vst.msk [vmem:[#allocation2 + $0x198] sm:$0xff] %vm2904, %v1867
      %4241 = vst.msk [vmem:[#allocation2 + $0x1a0] sm:$0xff] %vm2904, %v1868
      %4242 = vst.msk [vmem:[#allocation2 + $0x1a8] sm:$0xff] %vm2904, %v1869
      %4243 = vst.msk [vmem:[#allocation2 + $0x1b0] sm:$0xff] %vm2904, %v1870
      %4244 = vst.msk [vmem:[#allocation2 + $0x1b8] sm:$0xff] %vm2904, %v1871
      %4245 = vst.msk [vmem:[#allocation2 + $0x1c0] sm:$0xff] %vm2904, %v1872
      %4246 = vst.msk [vmem:[#allocation2 + $0x1c8] sm:$0xff] %vm2904, %v1873
      %4247 = vst.msk [vmem:[#allocation2 + $0x1d0] sm:$0xff] %vm2904, %v1874
      %4248 = vst.msk [vmem:[#allocation2 + $0x1d8] sm:$0xff] %vm2904, %v1875
      %4249 = vst.msk [vmem:[#allocation2 + $0x1e0] sm:$0xff] %vm2904, %v1876
      %4250 = vst.msk [vmem:[#allocation2 + $0x1e8] sm:$0xff] %vm2904, %v1877
      %4251 = vst.msk [vmem:[#allocation2 + $0x1f0] sm:$0xff] %vm2904, %v1878
      %4252 = vst.msk [vmem:[#allocation2 + $0x1f8] sm:$0xff] %vm2904, %v1879
      // Predicated region
      $region57: #{encoder_forward.4} parent=51 // pred_check
        %p4253 = pneg %p461
      $region58: #{encoder_forward.4} parent=51 // pred_check_branch
        %4255 = sbr.rel (%p4253) target = $region60
      $region59: #{encoder_forward.4} parent=51 // pred_region
        %v4256 = vld [vmem:[#allocation3] sm:$0xff]
        %v4257 = vld [vmem:[#allocation3 + $0x8] sm:$0xff]
        %v4258 = vld [vmem:[#allocation3 + $0x10] sm:$0xff]
        %v4259 = vld [vmem:[#allocation3 + $0x18] sm:$0xff]
        %v4260 = vld [vmem:[#allocation3 + $0x20] sm:$0xff]
        %v4261 = vld [vmem:[#allocation3 + $0x28] sm:$0xff]
        %v4262 = vld [vmem:[#allocation3 + $0x30] sm:$0xff]
        %v4263 = vld [vmem:[#allocation3 + $0x38] sm:$0xff]
        %v4264 = vld [vmem:[#allocation3 + $0x40] sm:$0xff]
        %v4265 = vld [vmem:[#allocation3 + $0x48] sm:$0xff]
        %v4266 = vld [vmem:[#allocation3 + $0x50] sm:$0xff]
        %v4267 = vld [vmem:[#allocation3 + $0x58] sm:$0xff]
        %v4268 = vld [vmem:[#allocation3 + $0x60] sm:$0xff]
        %v4269 = vld [vmem:[#allocation3 + $0x68] sm:$0xff]
        %v4270 = vld [vmem:[#allocation3 + $0x70] sm:$0xff]
        %v4271 = vld [vmem:[#allocation3 + $0x78] sm:$0xff]
        %v4272 = vld [vmem:[#allocation3 + $0x80] sm:$0xff]
        %v4273 = vld [vmem:[#allocation3 + $0x88] sm:$0xff]
        %v4274 = vld [vmem:[#allocation3 + $0x90] sm:$0xff]
        %v4275 = vld [vmem:[#allocation3 + $0x98] sm:$0xff]
        %v4276 = vld [vmem:[#allocation3 + $0xa0] sm:$0xff]
        %v4277 = vld [vmem:[#allocation3 + $0xa8] sm:$0xff]
        %v4278 = vld [vmem:[#allocation3 + $0xb0] sm:$0xff]
        %v4279 = vld [vmem:[#allocation3 + $0xb8] sm:$0xff]
        %v4280 = vld [vmem:[#allocation3 + $0xc0] sm:$0xff]
        %v4281 = vld [vmem:[#allocation3 + $0xc8] sm:$0xff]
        %v4282 = vld [vmem:[#allocation3 + $0xd0] sm:$0xff]
        %v4283 = vld [vmem:[#allocation3 + $0xd8] sm:$0xff]
        %v4284 = vld [vmem:[#allocation3 + $0xe0] sm:$0xff]
        %v4285 = vld [vmem:[#allocation3 + $0xe8] sm:$0xff]
        %v4286 = vld [vmem:[#allocation3 + $0xf0] sm:$0xff]
        %v4287 = vld [vmem:[#allocation3 + $0xf8] sm:$0xff]
        %v4288 = vld [vmem:[#allocation3 + $0x100] sm:$0xff]
        %v4289 = vld [vmem:[#allocation3 + $0x108] sm:$0xff]
        %v4290 = vld [vmem:[#allocation3 + $0x110] sm:$0xff]
        %v4291 = vld [vmem:[#allocation3 + $0x118] sm:$0xff]
        %v4292 = vld [vmem:[#allocation3 + $0x120] sm:$0xff]
        %v4293 = vld [vmem:[#allocation3 + $0x128] sm:$0xff]
        %v4294 = vld [vmem:[#allocation3 + $0x130] sm:$0xff]
        %v4295 = vld [vmem:[#allocation3 + $0x138] sm:$0xff]
        %v4296 = vld [vmem:[#allocation3 + $0x140] sm:$0xff]
        %v4297 = vld [vmem:[#allocation3 + $0x148] sm:$0xff]
        %v4298 = vld [vmem:[#allocation3 + $0x150] sm:$0xff]
        %v4299 = vld [vmem:[#allocation3 + $0x158] sm:$0xff]
        %v4300 = vld [vmem:[#allocation3 + $0x160] sm:$0xff]
        %v4301 = vld [vmem:[#allocation3 + $0x168] sm:$0xff]
        %v4302 = vld [vmem:[#allocation3 + $0x170] sm:$0xff]
        %v4303 = vld [vmem:[#allocation3 + $0x178] sm:$0xff]
        %v4304 = vld [vmem:[#allocation3 + $0x180] sm:$0xff]
        %v4305 = vld [vmem:[#allocation3 + $0x188] sm:$0xff]
        %v4306 = vld [vmem:[#allocation3 + $0x190] sm:$0xff]
        %v4307 = vld [vmem:[#allocation3 + $0x198] sm:$0xff]
        %v4308 = vld [vmem:[#allocation3 + $0x1a0] sm:$0xff]
        %v4309 = vld [vmem:[#allocation3 + $0x1a8] sm:$0xff]
        %v4310 = vld [vmem:[#allocation3 + $0x1b0] sm:$0xff]
        %v4311 = vld [vmem:[#allocation3 + $0x1b8] sm:$0xff]
        %v4312 = vld [vmem:[#allocation3 + $0x1c0] sm:$0xff]
        %v4313 = vld [vmem:[#allocation3 + $0x1c8] sm:$0xff]
        %v4314 = vld [vmem:[#allocation3 + $0x1d0] sm:$0xff]
        %v4315 = vld [vmem:[#allocation3 + $0x1d8] sm:$0xff]
        %v4316 = vld [vmem:[#allocation3 + $0x1e0] sm:$0xff]
        %v4317 = vld [vmem:[#allocation3 + $0x1e8] sm:$0xff]
        %v4318 = vld [vmem:[#allocation3 + $0x1f0] sm:$0xff]
        %v4319 = vld [vmem:[#allocation3 + $0x1f8] sm:$0xff]
        %v4320 = vrcp.pop %v4256
        %v4321 = vrcp.pop %v4257
        %v4322 = vrcp.pop %v4258
        %v4323 = vrcp.pop %v4259
        %v4324 = vrcp.pop %v4260
        %v4325 = vrcp.pop %v4261
        %v4326 = vrcp.pop %v4262
        %v4327 = vrcp.pop %v4263
        %v4328 = vrcp.pop %v4264
        %v4329 = vrcp.pop %v4265
        %v4330 = vrcp.pop %v4266
        %v4331 = vrcp.pop %v4267
        %v4332 = vrcp.pop %v4268
        %v4333 = vrcp.pop %v4269
        %v4334 = vrcp.pop %v4270
        %v4335 = vrcp.pop %v4271
        %v4336 = vrcp.pop %v4272
        %v4337 = vrcp.pop %v4273
        %v4338 = vrcp.pop %v4274
        %v4339 = vrcp.pop %v4275
        %v4340 = vrcp.pop %v4276
        %v4341 = vrcp.pop %v4277
        %v4342 = vrcp.pop %v4278
        %v4343 = vrcp.pop %v4279
        %v4344 = vrcp.pop %v4280
        %v4345 = vrcp.pop %v4281
        %v4346 = vrcp.pop %v4282
        %v4347 = vrcp.pop %v4283
        %v4348 = vrcp.pop %v4284
        %v4349 = vrcp.pop %v4285
        %v4350 = vrcp.pop %v4286
        %v4351 = vrcp.pop %v4287
        %v4352 = vrcp.pop %v4288
        %v4353 = vrcp.pop %v4289
        %v4354 = vrcp.pop %v4290
        %v4355 = vrcp.pop %v4291
        %v4356 = vrcp.pop %v4292
        %v4357 = vrcp.pop %v4293
        %v4358 = vrcp.pop %v4294
        %v4359 = vrcp.pop %v4295
        %v4360 = vrcp.pop %v4296
        %v4361 = vrcp.pop %v4297
        %v4362 = vrcp.pop %v4298
        %v4363 = vrcp.pop %v4299
        %v4364 = vrcp.pop %v4300
        %v4365 = vrcp.pop %v4301
        %v4366 = vrcp.pop %v4302
        %v4367 = vrcp.pop %v4303
        %v4368 = vrcp.pop %v4304
        %v4369 = vrcp.pop %v4305
        %v4370 = vrcp.pop %v4306
        %v4371 = vrcp.pop %v4307
        %v4372 = vrcp.pop %v4308
        %v4373 = vrcp.pop %v4309
        %v4374 = vrcp.pop %v4310
        %v4375 = vrcp.pop %v4311
        %v4376 = vrcp.pop %v4312
        %v4377 = vrcp.pop %v4313
        %v4378 = vrcp.pop %v4314
        %v4379 = vrcp.pop %v4315
        %v4380 = vrcp.pop %v4316
        %v4381 = vrcp.pop %v4317
        %v4382 = vrcp.pop %v4318
        %v4383 = vrcp.pop %v4319
        %v4384 = vld [vmem:[#allocation4] sm:$0xff]
        %v4385 = vld [vmem:[#allocation4 + $0x8] sm:$0xff]
        %v4386 = vld [vmem:[#allocation4 + $0x10] sm:$0xff]
        %v4387 = vld [vmem:[#allocation4 + $0x18] sm:$0xff]
        %v4388 = vld [vmem:[#allocation4 + $0x20] sm:$0xff]
        %v4389 = vld [vmem:[#allocation4 + $0x28] sm:$0xff]
        %v4390 = vld [vmem:[#allocation4 + $0x30] sm:$0xff]
        %v4391 = vld [vmem:[#allocation4 + $0x38] sm:$0xff]
        %v4392 = vld [vmem:[#allocation4 + $0x40] sm:$0xff]
        %v4393 = vld [vmem:[#allocation4 + $0x48] sm:$0xff]
        %v4394 = vld [vmem:[#allocation4 + $0x50] sm:$0xff]
        %v4395 = vld [vmem:[#allocation4 + $0x58] sm:$0xff]
        %v4396 = vld [vmem:[#allocation4 + $0x60] sm:$0xff]
        %v4397 = vld [vmem:[#allocation4 + $0x68] sm:$0xff]
        %v4398 = vld [vmem:[#allocation4 + $0x70] sm:$0xff]
        %v4399 = vld [vmem:[#allocation4 + $0x78] sm:$0xff]
        %4401 = vset.pattern.permute.xlu0 0
        %4402 = vperm.xlu0 %4401, %v4320
        %v4403 = vpop.permute.xlu0 %4402
        %4406 = vset.pattern.permute.xlu0 0
        %4407 = vperm.xlu0 %4406, %v4321
        %v4408 = vpop.permute.xlu0 %4407
        %4411 = vset.pattern.permute.xlu0 0
        %4412 = vperm.xlu0 %4411, %v4322
        %v4413 = vpop.permute.xlu0 %4412
        %4416 = vset.pattern.permute.xlu0 0
        %4417 = vperm.xlu0 %4416, %v4323
        %v4418 = vpop.permute.xlu0 %4417
        %4421 = vset.pattern.permute.xlu0 0
        %4422 = vperm.xlu0 %4421, %v4324
        %v4423 = vpop.permute.xlu0 %4422
        %4426 = vset.pattern.permute.xlu0 0
        %4427 = vperm.xlu0 %4426, %v4325
        %v4428 = vpop.permute.xlu0 %4427
        %4431 = vset.pattern.permute.xlu0 0
        %4432 = vperm.xlu0 %4431, %v4326
        %v4433 = vpop.permute.xlu0 %4432
        %4436 = vset.pattern.permute.xlu0 0
        %4437 = vperm.xlu0 %4436, %v4327
        %v4438 = vpop.permute.xlu0 %4437
        %4441 = vset.pattern.permute.xlu0 0
        %4442 = vperm.xlu0 %4441, %v4328
        %v4443 = vpop.permute.xlu0 %4442
        %4446 = vset.pattern.permute.xlu0 0
        %4447 = vperm.xlu0 %4446, %v4329
        %v4448 = vpop.permute.xlu0 %4447
        %4451 = vset.pattern.permute.xlu0 0
        %4452 = vperm.xlu0 %4451, %v4330
        %v4453 = vpop.permute.xlu0 %4452
        %4456 = vset.pattern.permute.xlu0 0
        %4457 = vperm.xlu0 %4456, %v4331
        %v4458 = vpop.permute.xlu0 %4457
        %4461 = vset.pattern.permute.xlu0 0
        %4462 = vperm.xlu0 %4461, %v4332
        %v4463 = vpop.permute.xlu0 %4462
        %4466 = vset.pattern.permute.xlu0 0
        %4467 = vperm.xlu0 %4466, %v4333
        %v4468 = vpop.permute.xlu0 %4467
        %4471 = vset.pattern.permute.xlu0 0
        %4472 = vperm.xlu0 %4471, %v4334
        %v4473 = vpop.permute.xlu0 %4472
        %4476 = vset.pattern.permute.xlu0 0
        %4477 = vperm.xlu0 %4476, %v4335
        %v4478 = vpop.permute.xlu0 %4477
        %v4480 = vmul.f32 %v4384, %v4403
        %v4481 = vmul.f32 %v4385, %v4408
        %v4482 = vmul.f32 %v4386, %v4413
        %v4483 = vmul.f32 %v4387, %v4418
        %v4484 = vmul.f32 %v4388, %v4423
        %v4485 = vmul.f32 %v4389, %v4428
        %v4486 = vmul.f32 %v4390, %v4433
        %v4487 = vmul.f32 %v4391, %v4438
        %v4488 = vmul.f32 %v4392, %v4443
        %v4489 = vmul.f32 %v4393, %v4448
        %v4490 = vmul.f32 %v4394, %v4453
        %v4491 = vmul.f32 %v4395, %v4458
        %v4492 = vmul.f32 %v4396, %v4463
        %v4493 = vmul.f32 %v4397, %v4468
        %v4494 = vmul.f32 %v4398, %v4473
        %v4495 = vmul.f32 %v4399, %v4478
        %v4496 = vpack.c.bf16 %v4481, %v4480
        %v4497 = vpack.c.bf16 %v4483, %v4482
        %v4498 = vpack.c.bf16 %v4485, %v4484
        %v4499 = vpack.c.bf16 %v4487, %v4486
        %v4500 = vpack.c.bf16 %v4489, %v4488
        %v4501 = vpack.c.bf16 %v4491, %v4490
        %v4502 = vpack.c.bf16 %v4493, %v4492
        %v4503 = vpack.c.bf16 %v4495, %v4494
        %v4504 = vld [vmem:[%s4] sm:$0xf]
        %v4505 = vld [vmem:[%s4 + $0x4] sm:$0xf]
        %v4506 = vld [vmem:[%s4 + $0x8] sm:$0xf]
        %v4507 = vld [vmem:[%s4 + $0xc] sm:$0xf]
        %s4508 = scalar_lea.vmem [#allocation4], 128
        %v4509 = vld [vmem:[%s4508] sm:$0xff]
        %v4510 = vld [vmem:[%s4508 + $0x8] sm:$0xff]
        %v4511 = vld [vmem:[%s4508 + $0x10] sm:$0xff]
        %v4512 = vld [vmem:[%s4508 + $0x18] sm:$0xff]
        %v4513 = vld [vmem:[%s4508 + $0x20] sm:$0xff]
        %v4514 = vld [vmem:[%s4508 + $0x28] sm:$0xff]
        %v4515 = vld [vmem:[%s4508 + $0x30] sm:$0xff]
        %v4516 = vld [vmem:[%s4508 + $0x38] sm:$0xff]
        %v4517 = vld [vmem:[%s4508 + $0x40] sm:$0xff]
        %v4518 = vld [vmem:[%s4508 + $0x48] sm:$0xff]
        %v4519 = vld [vmem:[%s4508 + $0x50] sm:$0xff]
        %v4520 = vld [vmem:[%s4508 + $0x58] sm:$0xff]
        %v4521 = vld [vmem:[%s4508 + $0x60] sm:$0xff]
        %v4522 = vld [vmem:[%s4508 + $0x68] sm:$0xff]
        %v4523 = vld [vmem:[%s4508 + $0x70] sm:$0xff]
        %v4524 = vld [vmem:[%s4508 + $0x78] sm:$0xff]
        %4526 = vset.pattern.permute.xlu0 0
        %4527 = vperm.xlu0 %4526, %v4336
        %v4528 = vpop.permute.xlu0 %4527
        %4531 = vset.pattern.permute.xlu0 0
        %4532 = vperm.xlu0 %4531, %v4337
        %v4533 = vpop.permute.xlu0 %4532
        %4536 = vset.pattern.permute.xlu0 0
        %4537 = vperm.xlu0 %4536, %v4338
        %v4538 = vpop.permute.xlu0 %4537
        %4541 = vset.pattern.permute.xlu0 0
        %4542 = vperm.xlu0 %4541, %v4339
        %v4543 = vpop.permute.xlu0 %4542
        %4546 = vset.pattern.permute.xlu0 0
        %4547 = vperm.xlu0 %4546, %v4340
        %v4548 = vpop.permute.xlu0 %4547
        %4551 = vset.pattern.permute.xlu0 0
        %4552 = vperm.xlu0 %4551, %v4341
        %v4553 = vpop.permute.xlu0 %4552
        %4556 = vset.pattern.permute.xlu0 0
        %4557 = vperm.xlu0 %4556, %v4342
        %v4558 = vpop.permute.xlu0 %4557
        %4561 = vset.pattern.permute.xlu0 0
        %4562 = vperm.xlu0 %4561, %v4343
        %v4563 = vpop.permute.xlu0 %4562
        %4566 = vset.pattern.permute.xlu0 0
        %4567 = vperm.xlu0 %4566, %v4344
        %v4568 = vpop.permute.xlu0 %4567
        %4571 = vset.pattern.permute.xlu0 0
        %4572 = vperm.xlu0 %4571, %v4345
        %v4573 = vpop.permute.xlu0 %4572
        %4576 = vset.pattern.permute.xlu0 0
        %4577 = vperm.xlu0 %4576, %v4346
        %v4578 = vpop.permute.xlu0 %4577
        %4581 = vset.pattern.permute.xlu0 0
        %4582 = vperm.xlu0 %4581, %v4347
        %v4583 = vpop.permute.xlu0 %4582
        %4586 = vset.pattern.permute.xlu0 0
        %4587 = vperm.xlu0 %4586, %v4348
        %v4588 = vpop.permute.xlu0 %4587
        %4591 = vset.pattern.permute.xlu0 0
        %4592 = vperm.xlu0 %4591, %v4349
        %v4593 = vpop.permute.xlu0 %4592
        %4596 = vset.pattern.permute.xlu0 0
        %4597 = vperm.xlu0 %4596, %v4350
        %v4598 = vpop.permute.xlu0 %4597
        %4601 = vset.pattern.permute.xlu0 0
        %4602 = vperm.xlu0 %4601, %v4351
        %v4603 = vpop.permute.xlu0 %4602
        %v4605 = vmul.f32 %v4509, %v4528
        %v4606 = vmul.f32 %v4510, %v4533
        %v4607 = vmul.f32 %v4511, %v4538
        %v4608 = vmul.f32 %v4512, %v4543
        %v4609 = vmul.f32 %v4513, %v4548
        %v4610 = vmul.f32 %v4514, %v4553
        %v4611 = vmul.f32 %v4515, %v4558
        %v4612 = vmul.f32 %v4516, %v4563
        %v4613 = vmul.f32 %v4517, %v4568
        %v4614 = vmul.f32 %v4518, %v4573
        %v4615 = vmul.f32 %v4519, %v4578
        %v4616 = vmul.f32 %v4520, %v4583
        %v4617 = vmul.f32 %v4521, %v4588
        %v4618 = vmul.f32 %v4522, %v4593
        %v4619 = vmul.f32 %v4523, %v4598
        %v4620 = vmul.f32 %v4524, %v4603
        %v4621 = vpack.c.bf16 %v4606, %v4605
        %v4622 = vpack.c.bf16 %v4608, %v4607
        %v4623 = vpack.c.bf16 %v4610, %v4609
        %v4624 = vpack.c.bf16 %v4612, %v4611
        %v4625 = vpack.c.bf16 %v4614, %v4613
        %v4626 = vpack.c.bf16 %v4616, %v4615
        %v4627 = vpack.c.bf16 %v4618, %v4617
        %v4628 = vpack.c.bf16 %v4620, %v4619
        %v4629 = vld [vmem:[%s4 + $0x10] sm:$0xf]
        %v4630 = vld [vmem:[%s4 + $0x14] sm:$0xf]
        %v4631 = vld [vmem:[%s4 + $0x18] sm:$0xf]
        %v4632 = vld [vmem:[%s4 + $0x1c] sm:$0xf]
        %v4637 = vunpack.c.l.b16 %v4629
        %v4638 = vunpack.c.l.b16 %v4630
        %v4639 = vunpack.c.l.b16 %v4631
        %v4640 = vunpack.c.l.b16 %v4632
        %v4641 = vpack.c.b16 %v4638, %v4637
        %v4642 = vpack.c.b16 %v4640, %v4639
        %v4646 = vsel %vm931, %v4621, 0
        %v4649 = vsel %vm931, %v4622, 0
        %v4652 = vsel %vm931, %v4623, 0
        %v4655 = vsel %vm931, %v4624, 0
        %v4658 = vsel %vm931, %v4625, 0
        %v4661 = vsel %vm931, %v4626, 0
        %v4664 = vsel %vm931, %v4627, 0
        %v4667 = vsel %vm931, %v4628, 0
        %4669 = vmatpush.bf16.msra.mxu0 0
        %4670 = vmatpush.bf16.msra.mxu0 0
        %4671 = vmatpush.bf16.msra.mxu0 0
        %4672 = vmatpush.bf16.msra.mxu0 0
        %4673 = vmatpush.bf16.msra.mxu0 0
        %4674 = vmatpush.bf16.msra.mxu0 0
        %4675 = vmatpush.bf16.msra.mxu0 %v4642
        %4676 = vmatpush.bf16.msra.mxu0 %v4641
        %4677 = vmatmul.bf16.gmra.mxu0 %v4646
        %v4678 = vpop.f32.mrf.mxu0
        %v4679 = vadd.f32 0.0, %v4678
        %v4680 = vpop.f32.mrf.mxu0
        %v4681 = vadd.f32 0.0, %v4680
        %4682 = vmatmul.bf16.gmra.mxu0 %v4649
        %v4683 = vpop.f32.mrf.mxu0
        %v4684 = vadd.f32 0.0, %v4683
        %v4685 = vpop.f32.mrf.mxu0
        %v4686 = vadd.f32 0.0, %v4685
        %4687 = vmatmul.bf16.gmra.mxu0 %v4652
        %v4688 = vpop.f32.mrf.mxu0
        %v4689 = vadd.f32 0.0, %v4688
        %v4690 = vpop.f32.mrf.mxu0
        %v4691 = vadd.f32 0.0, %v4690
        %4692 = vmatmul.bf16.gmra.mxu0 %v4655
        %v4693 = vpop.f32.mrf.mxu0
        %v4694 = vadd.f32 0.0, %v4693
        %v4695 = vpop.f32.mrf.mxu0
        %v4696 = vadd.f32 0.0, %v4695
        %4697 = vmatmul.bf16.gmra.mxu0 %v4658
        %v4698 = vpop.f32.mrf.mxu0
        %v4699 = vadd.f32 0.0, %v4698
        %v4700 = vpop.f32.mrf.mxu0
        %v4701 = vadd.f32 0.0, %v4700
        %4702 = vmatmul.bf16.gmra.mxu0 %v4661
        %v4703 = vpop.f32.mrf.mxu0
        %v4704 = vadd.f32 0.0, %v4703
        %v4705 = vpop.f32.mrf.mxu0
        %v4706 = vadd.f32 0.0, %v4705
        %4707 = vmatmul.bf16.gmra.mxu0 %v4664
        %v4708 = vpop.f32.mrf.mxu0
        %v4709 = vadd.f32 0.0, %v4708
        %v4710 = vpop.f32.mrf.mxu0
        %v4711 = vadd.f32 0.0, %v4710
        %4712 = vmatmul.bf16.gmra.mxu0 %v4667
        %v4713 = vpop.f32.mrf.mxu0
        %v4714 = vadd.f32 0.0, %v4713
        %v4715 = vpop.f32.mrf.mxu0
        %v4716 = vadd.f32 0.0, %v4715
        %4717 = vdwg.mxu0
        %v4722 = vunpack.c.l.b16 %v4504
        %v4723 = vunpack.c.l.b16 %v4505
        %v4724 = vunpack.c.l.b16 %v4506
        %v4725 = vunpack.c.l.b16 %v4507
        %v4726 = vpack.c.b16 %v4723, %v4722
        %v4727 = vpack.c.b16 %v4725, %v4724
        %v4731 = vsel %vm931, %v4496, 0
        %v4734 = vsel %vm931, %v4497, 0
        %v4737 = vsel %vm931, %v4498, 0
        %v4740 = vsel %vm931, %v4499, 0
        %v4743 = vsel %vm931, %v4500, 0
        %v4746 = vsel %vm931, %v4501, 0
        %v4749 = vsel %vm931, %v4502, 0
        %v4752 = vsel %vm931, %v4503, 0
        %4754 = vmatpush.bf16.msra.mxu0 0
        %4755 = vmatpush.bf16.msra.mxu0 0
        %4756 = vmatpush.bf16.msra.mxu0 0
        %4757 = vmatpush.bf16.msra.mxu0 0
        %4758 = vmatpush.bf16.msra.mxu0 0
        %4759 = vmatpush.bf16.msra.mxu0 0
        %4760 = vmatpush.bf16.msra.mxu0 %v4727
        %4761 = vmatpush.bf16.msra.mxu0 %v4726
        %4762 = vmatmul.bf16.gmra.mxu0 %v4731
        %v4763 = vpop.f32.mrf.mxu0
        %v4764 = vadd.f32 %v4679, %v4763
        %v4765 = vpop.f32.mrf.mxu0
        %v4766 = vadd.f32 %v4681, %v4765
        %4767 = vmatmul.bf16.gmra.mxu0 %v4734
        %v4768 = vpop.f32.mrf.mxu0
        %v4769 = vadd.f32 %v4684, %v4768
        %v4770 = vpop.f32.mrf.mxu0
        %v4771 = vadd.f32 %v4686, %v4770
        %4772 = vmatmul.bf16.gmra.mxu0 %v4737
        %v4773 = vpop.f32.mrf.mxu0
        %v4774 = vadd.f32 %v4689, %v4773
        %v4775 = vpop.f32.mrf.mxu0
        %v4776 = vadd.f32 %v4691, %v4775
        %4777 = vmatmul.bf16.gmra.mxu0 %v4740
        %v4778 = vpop.f32.mrf.mxu0
        %v4779 = vadd.f32 %v4694, %v4778
        %v4780 = vpop.f32.mrf.mxu0
        %v4781 = vadd.f32 %v4696, %v4780
        %4782 = vmatmul.bf16.gmra.mxu0 %v4743
        %v4783 = vpop.f32.mrf.mxu0
        %v4784 = vadd.f32 %v4699, %v4783
        %v4785 = vpop.f32.mrf.mxu0
        %v4786 = vadd.f32 %v4701, %v4785
        %4787 = vmatmul.bf16.gmra.mxu0 %v4746
        %v4788 = vpop.f32.mrf.mxu0
        %v4789 = vadd.f32 %v4704, %v4788
        %v4790 = vpop.f32.mrf.mxu0
        %v4791 = vadd.f32 %v4706, %v4790
        %4792 = vmatmul.bf16.gmra.mxu0 %v4749
        %v4793 = vpop.f32.mrf.mxu0
        %v4794 = vadd.f32 %v4709, %v4793
        %v4795 = vpop.f32.mrf.mxu0
        %v4796 = vadd.f32 %v4711, %v4795
        %4797 = vmatmul.bf16.gmra.mxu0 %v4752
        %v4798 = vpop.f32.mrf.mxu0
        %v4799 = vadd.f32 %v4714, %v4798
        %v4800 = vpop.f32.mrf.mxu0
        %v4801 = vadd.f32 %v4716, %v4800
        %4802 = vdwg.mxu0
        %s4803 = scalar_lea.vmem [#allocation4], 256
        %v4804 = vld [vmem:[%s4803] sm:$0xff]
        %v4805 = vld [vmem:[%s4803 + $0x8] sm:$0xff]
        %v4806 = vld [vmem:[%s4803 + $0x10] sm:$0xff]
        %v4807 = vld [vmem:[%s4803 + $0x18] sm:$0xff]
        %v4808 = vld [vmem:[%s4803 + $0x20] sm:$0xff]
        %v4809 = vld [vmem:[%s4803 + $0x28] sm:$0xff]
        %v4810 = vld [vmem:[%s4803 + $0x30] sm:$0xff]
        %v4811 = vld [vmem:[%s4803 + $0x38] sm:$0xff]
        %v4812 = vld [vmem:[%s4803 + $0x40] sm:$0xff]
        %v4813 = vld [vmem:[%s4803 + $0x48] sm:$0xff]
        %v4814 = vld [vmem:[%s4803 + $0x50] sm:$0xff]
        %v4815 = vld [vmem:[%s4803 + $0x58] sm:$0xff]
        %v4816 = vld [vmem:[%s4803 + $0x60] sm:$0xff]
        %v4817 = vld [vmem:[%s4803 + $0x68] sm:$0xff]
        %v4818 = vld [vmem:[%s4803 + $0x70] sm:$0xff]
        %v4819 = vld [vmem:[%s4803 + $0x78] sm:$0xff]
        %4821 = vset.pattern.permute.xlu0 0
        %4822 = vperm.xlu0 %4821, %v4352
        %v4823 = vpop.permute.xlu0 %4822
        %4826 = vset.pattern.permute.xlu0 0
        %4827 = vperm.xlu0 %4826, %v4353
        %v4828 = vpop.permute.xlu0 %4827
        %4831 = vset.pattern.permute.xlu0 0
        %4832 = vperm.xlu0 %4831, %v4354
        %v4833 = vpop.permute.xlu0 %4832
        %4836 = vset.pattern.permute.xlu0 0
        %4837 = vperm.xlu0 %4836, %v4355
        %v4838 = vpop.permute.xlu0 %4837
        %4841 = vset.pattern.permute.xlu0 0
        %4842 = vperm.xlu0 %4841, %v4356
        %v4843 = vpop.permute.xlu0 %4842
        %4846 = vset.pattern.permute.xlu0 0
        %4847 = vperm.xlu0 %4846, %v4357
        %v4848 = vpop.permute.xlu0 %4847
        %4851 = vset.pattern.permute.xlu0 0
        %4852 = vperm.xlu0 %4851, %v4358
        %v4853 = vpop.permute.xlu0 %4852
        %4856 = vset.pattern.permute.xlu0 0
        %4857 = vperm.xlu0 %4856, %v4359
        %v4858 = vpop.permute.xlu0 %4857
        %4861 = vset.pattern.permute.xlu0 0
        %4862 = vperm.xlu0 %4861, %v4360
        %v4863 = vpop.permute.xlu0 %4862
        %4866 = vset.pattern.permute.xlu0 0
        %4867 = vperm.xlu0 %4866, %v4361
        %v4868 = vpop.permute.xlu0 %4867
        %4871 = vset.pattern.permute.xlu0 0
        %4872 = vperm.xlu0 %4871, %v4362
        %v4873 = vpop.permute.xlu0 %4872
        %4876 = vset.pattern.permute.xlu0 0
        %4877 = vperm.xlu0 %4876, %v4363
        %v4878 = vpop.permute.xlu0 %4877
        %4881 = vset.pattern.permute.xlu0 0
        %4882 = vperm.xlu0 %4881, %v4364
        %v4883 = vpop.permute.xlu0 %4882
        %4886 = vset.pattern.permute.xlu0 0
        %4887 = vperm.xlu0 %4886, %v4365
        %v4888 = vpop.permute.xlu0 %4887
        %4891 = vset.pattern.permute.xlu0 0
        %4892 = vperm.xlu0 %4891, %v4366
        %v4893 = vpop.permute.xlu0 %4892
        %4896 = vset.pattern.permute.xlu0 0
        %4897 = vperm.xlu0 %4896, %v4367
        %v4898 = vpop.permute.xlu0 %4897
        %v4900 = vmul.f32 %v4804, %v4823
        %v4901 = vmul.f32 %v4805, %v4828
        %v4902 = vmul.f32 %v4806, %v4833
        %v4903 = vmul.f32 %v4807, %v4838
        %v4904 = vmul.f32 %v4808, %v4843
        %v4905 = vmul.f32 %v4809, %v4848
        %v4906 = vmul.f32 %v4810, %v4853
        %v4907 = vmul.f32 %v4811, %v4858
        %v4908 = vmul.f32 %v4812, %v4863
        %v4909 = vmul.f32 %v4813, %v4868
        %v4910 = vmul.f32 %v4814, %v4873
        %v4911 = vmul.f32 %v4815, %v4878
        %v4912 = vmul.f32 %v4816, %v4883
        %v4913 = vmul.f32 %v4817, %v4888
        %v4914 = vmul.f32 %v4818, %v4893
        %v4915 = vmul.f32 %v4819, %v4898
        %v4916 = vpack.c.bf16 %v4901, %v4900
        %v4917 = vpack.c.bf16 %v4903, %v4902
        %v4918 = vpack.c.bf16 %v4905, %v4904
        %v4919 = vpack.c.bf16 %v4907, %v4906
        %v4920 = vpack.c.bf16 %v4909, %v4908
        %v4921 = vpack.c.bf16 %v4911, %v4910
        %v4922 = vpack.c.bf16 %v4913, %v4912
        %v4923 = vpack.c.bf16 %v4915, %v4914
        %v4924 = vld [vmem:[%s4 + $0x20] sm:$0xf]
        %v4925 = vld [vmem:[%s4 + $0x24] sm:$0xf]
        %v4926 = vld [vmem:[%s4 + $0x28] sm:$0xf]
        %v4927 = vld [vmem:[%s4 + $0x2c] sm:$0xf]
        %v4932 = vunpack.c.l.b16 %v4924
        %v4933 = vunpack.c.l.b16 %v4925
        %v4934 = vunpack.c.l.b16 %v4926
        %v4935 = vunpack.c.l.b16 %v4927
        %v4936 = vpack.c.b16 %v4933, %v4932
        %v4937 = vpack.c.b16 %v4935, %v4934
        %v4941 = vsel %vm931, %v4916, 0
        %v4944 = vsel %vm931, %v4917, 0
        %v4947 = vsel %vm931, %v4918, 0
        %v4950 = vsel %vm931, %v4919, 0
        %v4953 = vsel %vm931, %v4920, 0
        %v4956 = vsel %vm931, %v4921, 0
        %v4959 = vsel %vm931, %v4922, 0
        %v4962 = vsel %vm931, %v4923, 0
        %4964 = vmatpush.bf16.msra.mxu0 0
        %4965 = vmatpush.bf16.msra.mxu0 0
        %4966 = vmatpush.bf16.msra.mxu0 0
        %4967 = vmatpush.bf16.msra.mxu0 0
        %4968 = vmatpush.bf16.msra.mxu0 0
        %4969 = vmatpush.bf16.msra.mxu0 0
        %4970 = vmatpush.bf16.msra.mxu0 %v4937
        %4971 = vmatpush.bf16.msra.mxu0 %v4936
        %4972 = vmatmul.bf16.gmra.mxu0 %v4941
        %v4973 = vpop.f32.mrf.mxu0
        %v4974 = vadd.f32 0.0, %v4973
        %v4975 = vpop.f32.mrf.mxu0
        %v4976 = vadd.f32 0.0, %v4975
        %4977 = vmatmul.bf16.gmra.mxu0 %v4944
        %v4978 = vpop.f32.mrf.mxu0
        %v4979 = vadd.f32 0.0, %v4978
        %v4980 = vpop.f32.mrf.mxu0
        %v4981 = vadd.f32 0.0, %v4980
        %4982 = vmatmul.bf16.gmra.mxu0 %v4947
        %v4983 = vpop.f32.mrf.mxu0
        %v4984 = vadd.f32 0.0, %v4983
        %v4985 = vpop.f32.mrf.mxu0
        %v4986 = vadd.f32 0.0, %v4985
        %4987 = vmatmul.bf16.gmra.mxu0 %v4950
        %v4988 = vpop.f32.mrf.mxu0
        %v4989 = vadd.f32 0.0, %v4988
        %v4990 = vpop.f32.mrf.mxu0
        %v4991 = vadd.f32 0.0, %v4990
        %4992 = vmatmul.bf16.gmra.mxu0 %v4953
        %v4993 = vpop.f32.mrf.mxu0
        %v4994 = vadd.f32 0.0, %v4993
        %v4995 = vpop.f32.mrf.mxu0
        %v4996 = vadd.f32 0.0, %v4995
        %4997 = vmatmul.bf16.gmra.mxu0 %v4956
        %v4998 = vpop.f32.mrf.mxu0
        %v4999 = vadd.f32 0.0, %v4998
        %v5000 = vpop.f32.mrf.mxu0
        %v5001 = vadd.f32 0.0, %v5000
        %5002 = vmatmul.bf16.gmra.mxu0 %v4959
        %v5003 = vpop.f32.mrf.mxu0
        %v5004 = vadd.f32 0.0, %v5003
        %v5005 = vpop.f32.mrf.mxu0
        %v5006 = vadd.f32 0.0, %v5005
        %5007 = vmatmul.bf16.gmra.mxu0 %v4962
        %v5008 = vpop.f32.mrf.mxu0
        %v5009 = vadd.f32 0.0, %v5008
        %v5010 = vpop.f32.mrf.mxu0
        %v5011 = vadd.f32 0.0, %v5010
        %5012 = vdwg.mxu0
        %v5013 = vadd.f32 %v4764, %v4974
        %v5014 = vadd.f32 %v4766, %v4976
        %v5015 = vadd.f32 %v4769, %v4979
        %v5016 = vadd.f32 %v4771, %v4981
        %v5017 = vadd.f32 %v4774, %v4984
        %v5018 = vadd.f32 %v4776, %v4986
        %v5019 = vadd.f32 %v4779, %v4989
        %v5020 = vadd.f32 %v4781, %v4991
        %v5021 = vadd.f32 %v4784, %v4994
        %v5022 = vadd.f32 %v4786, %v4996
        %v5023 = vadd.f32 %v4789, %v4999
        %v5024 = vadd.f32 %v4791, %v5001
        %v5025 = vadd.f32 %v4794, %v5004
        %v5026 = vadd.f32 %v4796, %v5006
        %v5027 = vadd.f32 %v4799, %v5009
        %v5028 = vadd.f32 %v4801, %v5011
        %s5029 = scalar_lea.vmem [#allocation4], 384
        %v5030 = vld [vmem:[%s5029] sm:$0xff]
        %v5031 = vld [vmem:[%s5029 + $0x8] sm:$0xff]
        %v5032 = vld [vmem:[%s5029 + $0x10] sm:$0xff]
        %v5033 = vld [vmem:[%s5029 + $0x18] sm:$0xff]
        %v5034 = vld [vmem:[%s5029 + $0x20] sm:$0xff]
        %v5035 = vld [vmem:[%s5029 + $0x28] sm:$0xff]
        %v5036 = vld [vmem:[%s5029 + $0x30] sm:$0xff]
        %v5037 = vld [vmem:[%s5029 + $0x38] sm:$0xff]
        %v5038 = vld [vmem:[%s5029 + $0x40] sm:$0xff]
        %v5039 = vld [vmem:[%s5029 + $0x48] sm:$0xff]
        %v5040 = vld [vmem:[%s5029 + $0x50] sm:$0xff]
        %v5041 = vld [vmem:[%s5029 + $0x58] sm:$0xff]
        %v5042 = vld [vmem:[%s5029 + $0x60] sm:$0xff]
        %v5043 = vld [vmem:[%s5029 + $0x68] sm:$0xff]
        %v5044 = vld [vmem:[%s5029 + $0x70] sm:$0xff]
        %v5045 = vld [vmem:[%s5029 + $0x78] sm:$0xff]
        %5047 = vset.pattern.permute.xlu0 0
        %5048 = vperm.xlu0 %5047, %v4368
        %v5049 = vpop.permute.xlu0 %5048
        %5052 = vset.pattern.permute.xlu0 0
        %5053 = vperm.xlu0 %5052, %v4369
        %v5054 = vpop.permute.xlu0 %5053
        %5057 = vset.pattern.permute.xlu0 0
        %5058 = vperm.xlu0 %5057, %v4370
        %v5059 = vpop.permute.xlu0 %5058
        %5062 = vset.pattern.permute.xlu0 0
        %5063 = vperm.xlu0 %5062, %v4371
        %v5064 = vpop.permute.xlu0 %5063
        %5067 = vset.pattern.permute.xlu0 0
        %5068 = vperm.xlu0 %5067, %v4372
        %v5069 = vpop.permute.xlu0 %5068
        %5072 = vset.pattern.permute.xlu0 0
        %5073 = vperm.xlu0 %5072, %v4373
        %v5074 = vpop.permute.xlu0 %5073
        %5077 = vset.pattern.permute.xlu0 0
        %5078 = vperm.xlu0 %5077, %v4374
        %v5079 = vpop.permute.xlu0 %5078
        %5082 = vset.pattern.permute.xlu0 0
        %5083 = vperm.xlu0 %5082, %v4375
        %v5084 = vpop.permute.xlu0 %5083
        %5087 = vset.pattern.permute.xlu0 0
        %5088 = vperm.xlu0 %5087, %v4376
        %v5089 = vpop.permute.xlu0 %5088
        %5092 = vset.pattern.permute.xlu0 0
        %5093 = vperm.xlu0 %5092, %v4377
        %v5094 = vpop.permute.xlu0 %5093
        %5097 = vset.pattern.permute.xlu0 0
        %5098 = vperm.xlu0 %5097, %v4378
        %v5099 = vpop.permute.xlu0 %5098
        %5102 = vset.pattern.permute.xlu0 0
        %5103 = vperm.xlu0 %5102, %v4379
        %v5104 = vpop.permute.xlu0 %5103
        %5107 = vset.pattern.permute.xlu0 0
        %5108 = vperm.xlu0 %5107, %v4380
        %v5109 = vpop.permute.xlu0 %5108
        %5112 = vset.pattern.permute.xlu0 0
        %5113 = vperm.xlu0 %5112, %v4381
        %v5114 = vpop.permute.xlu0 %5113
        %5117 = vset.pattern.permute.xlu0 0
        %5118 = vperm.xlu0 %5117, %v4382
        %v5119 = vpop.permute.xlu0 %5118
        %5122 = vset.pattern.permute.xlu0 0
        %5123 = vperm.xlu0 %5122, %v4383
        %v5124 = vpop.permute.xlu0 %5123
        %v5126 = vmul.f32 %v5030, %v5049
        %v5127 = vmul.f32 %v5031, %v5054
        %v5128 = vmul.f32 %v5032, %v5059
        %v5129 = vmul.f32 %v5033, %v5064
        %v5130 = vmul.f32 %v5034, %v5069
        %v5131 = vmul.f32 %v5035, %v5074
        %v5132 = vmul.f32 %v5036, %v5079
        %v5133 = vmul.f32 %v5037, %v5084
        %v5134 = vmul.f32 %v5038, %v5089
        %v5135 = vmul.f32 %v5039, %v5094
        %v5136 = vmul.f32 %v5040, %v5099
        %v5137 = vmul.f32 %v5041, %v5104
        %v5138 = vmul.f32 %v5042, %v5109
        %v5139 = vmul.f32 %v5043, %v5114
        %v5140 = vmul.f32 %v5044, %v5119
        %v5141 = vmul.f32 %v5045, %v5124
        %v5142 = vpack.c.bf16 %v5127, %v5126
        %v5143 = vpack.c.bf16 %v5129, %v5128
        %v5144 = vpack.c.bf16 %v5131, %v5130
        %v5145 = vpack.c.bf16 %v5133, %v5132
        %v5146 = vpack.c.bf16 %v5135, %v5134
        %v5147 = vpack.c.bf16 %v5137, %v5136
        %v5148 = vpack.c.bf16 %v5139, %v5138
        %v5149 = vpack.c.bf16 %v5141, %v5140
        %v5150 = vld [vmem:[%s4 + $0x30] sm:$0xf]
        %v5151 = vld [vmem:[%s4 + $0x34] sm:$0xf]
        %v5152 = vld [vmem:[%s4 + $0x38] sm:$0xf]
        %v5153 = vld [vmem:[%s4 + $0x3c] sm:$0xf]
        %v5158 = vunpack.c.l.b16 %v5150
        %v5159 = vunpack.c.l.b16 %v5151
        %v5160 = vunpack.c.l.b16 %v5152
        %v5161 = vunpack.c.l.b16 %v5153
        %v5162 = vpack.c.b16 %v5159, %v5158
        %v5163 = vpack.c.b16 %v5161, %v5160
        %v5167 = vsel %vm931, %v5142, 0
        %v5170 = vsel %vm931, %v5143, 0
        %v5173 = vsel %vm931, %v5144, 0
        %v5176 = vsel %vm931, %v5145, 0
        %v5179 = vsel %vm931, %v5146, 0
        %v5182 = vsel %vm931, %v5147, 0
        %v5185 = vsel %vm931, %v5148, 0
        %v5188 = vsel %vm931, %v5149, 0
        %5190 = vmatpush.bf16.msra.mxu0 0
        %5191 = vmatpush.bf16.msra.mxu0 0
        %5192 = vmatpush.bf16.msra.mxu0 0
        %5193 = vmatpush.bf16.msra.mxu0 0
        %5194 = vmatpush.bf16.msra.mxu0 0
        %5195 = vmatpush.bf16.msra.mxu0 0
        %5196 = vmatpush.bf16.msra.mxu0 %v5163
        %5197 = vmatpush.bf16.msra.mxu0 %v5162
        %5198 = vmatmul.bf16.gmra.mxu0 %v5167
        %v5199 = vpop.f32.mrf.mxu0
        %v5200 = vadd.f32 0.0, %v5199
        %v5201 = vpop.f32.mrf.mxu0
        %v5202 = vadd.f32 0.0, %v5201
        %5203 = vmatmul.bf16.gmra.mxu0 %v5170
        %v5204 = vpop.f32.mrf.mxu0
        %v5205 = vadd.f32 0.0, %v5204
        %v5206 = vpop.f32.mrf.mxu0
        %v5207 = vadd.f32 0.0, %v5206
        %5208 = vmatmul.bf16.gmra.mxu0 %v5173
        %v5209 = vpop.f32.mrf.mxu0
        %v5210 = vadd.f32 0.0, %v5209
        %v5211 = vpop.f32.mrf.mxu0
        %v5212 = vadd.f32 0.0, %v5211
        %5213 = vmatmul.bf16.gmra.mxu0 %v5176
        %v5214 = vpop.f32.mrf.mxu0
        %v5215 = vadd.f32 0.0, %v5214
        %v5216 = vpop.f32.mrf.mxu0
        %v5217 = vadd.f32 0.0, %v5216
        %5218 = vmatmul.bf16.gmra.mxu0 %v5179
        %v5219 = vpop.f32.mrf.mxu0
        %v5220 = vadd.f32 0.0, %v5219
        %v5221 = vpop.f32.mrf.mxu0
        %v5222 = vadd.f32 0.0, %v5221
        %5223 = vmatmul.bf16.gmra.mxu0 %v5182
        %v5224 = vpop.f32.mrf.mxu0
        %v5225 = vadd.f32 0.0, %v5224
        %v5226 = vpop.f32.mrf.mxu0
        %v5227 = vadd.f32 0.0, %v5226
        %5228 = vmatmul.bf16.gmra.mxu0 %v5185
        %v5229 = vpop.f32.mrf.mxu0
        %v5230 = vadd.f32 0.0, %v5229
        %v5231 = vpop.f32.mrf.mxu0
        %v5232 = vadd.f32 0.0, %v5231
        %5233 = vmatmul.bf16.gmra.mxu0 %v5188
        %v5234 = vpop.f32.mrf.mxu0
        %v5235 = vadd.f32 0.0, %v5234
        %v5236 = vpop.f32.mrf.mxu0
        %v5237 = vadd.f32 0.0, %v5236
        %5238 = vdwg.mxu0
        %v5239 = vadd.f32 %v5013, %v5200
        %v5240 = vadd.f32 %v5014, %v5202
        %v5241 = vadd.f32 %v5015, %v5205
        %v5242 = vadd.f32 %v5016, %v5207
        %v5243 = vadd.f32 %v5017, %v5210
        %v5244 = vadd.f32 %v5018, %v5212
        %v5245 = vadd.f32 %v5019, %v5215
        %v5246 = vadd.f32 %v5020, %v5217
        %v5247 = vadd.f32 %v5021, %v5220
        %v5248 = vadd.f32 %v5022, %v5222
        %v5249 = vadd.f32 %v5023, %v5225
        %v5250 = vadd.f32 %v5024, %v5227
        %v5251 = vadd.f32 %v5025, %v5230
        %v5252 = vadd.f32 %v5026, %v5232
        %v5253 = vadd.f32 %v5027, %v5235
        %v5254 = vadd.f32 %v5028, %v5237
        %v5255 = vld [vmem:[%s5] sm:$0x1]
        %v5257 = vperm.slane %v5255, 0
        %v5259 = vadd.f32 %v5239, %v5257
        %v5260 = vadd.f32 %v5240, %v5257
        %v5261 = vadd.f32 %v5241, %v5257
        %v5262 = vadd.f32 %v5242, %v5257
        %v5263 = vadd.f32 %v5243, %v5257
        %v5264 = vadd.f32 %v5244, %v5257
        %v5265 = vadd.f32 %v5245, %v5257
        %v5266 = vadd.f32 %v5246, %v5257
        %v5267 = vadd.f32 %v5247, %v5257
        %v5268 = vadd.f32 %v5248, %v5257
        %v5269 = vadd.f32 %v5249, %v5257
        %v5270 = vadd.f32 %v5250, %v5257
        %v5271 = vadd.f32 %v5251, %v5257
        %v5272 = vadd.f32 %v5252, %v5257
        %v5273 = vadd.f32 %v5253, %v5257
        %v5274 = vadd.f32 %v5254, %v5257
        %v5275 = vld [vmem:[%s418] sm:$0xff]
        %v5276 = vld [vmem:[%s418 + $0x8] sm:$0xff]
        %v5277 = vld [vmem:[%s418 + $0x10] sm:$0xff]
        %v5278 = vld [vmem:[%s418 + $0x18] sm:$0xff]
        %v5279 = vld [vmem:[%s418 + $0x20] sm:$0xff]
        %v5280 = vld [vmem:[%s418 + $0x28] sm:$0xff]
        %v5281 = vld [vmem:[%s418 + $0x30] sm:$0xff]
        %v5282 = vld [vmem:[%s418 + $0x38] sm:$0xff]
        %v5283 = vld [vmem:[%s418 + $0x40] sm:$0xff]
        %v5284 = vld [vmem:[%s418 + $0x48] sm:$0xff]
        %v5285 = vld [vmem:[%s418 + $0x50] sm:$0xff]
        %v5286 = vld [vmem:[%s418 + $0x58] sm:$0xff]
        %v5287 = vld [vmem:[%s418 + $0x60] sm:$0xff]
        %v5288 = vld [vmem:[%s418 + $0x68] sm:$0xff]
        %v5289 = vld [vmem:[%s418 + $0x70] sm:$0xff]
        %v5290 = vld [vmem:[%s418 + $0x78] sm:$0xff]
        %v5291 = vadd.f32 %v5275, %v5259
        %v5292 = vadd.f32 %v5276, %v5260
        %v5293 = vadd.f32 %v5277, %v5261
        %v5294 = vadd.f32 %v5278, %v5262
        %v5295 = vadd.f32 %v5279, %v5263
        %v5296 = vadd.f32 %v5280, %v5264
        %v5297 = vadd.f32 %v5281, %v5265
        %v5298 = vadd.f32 %v5282, %v5266
        %v5299 = vadd.f32 %v5283, %v5267
        %v5300 = vadd.f32 %v5284, %v5268
        %v5301 = vadd.f32 %v5285, %v5269
        %v5302 = vadd.f32 %v5286, %v5270
        %v5303 = vadd.f32 %v5287, %v5271
        %v5304 = vadd.f32 %v5288, %v5272
        %v5305 = vadd.f32 %v5289, %v5273
        %v5306 = vadd.f32 %v5290, %v5274
        %v5307 = vld [vmem:[%s6] sm:$0x1]
        %v5308 = vld [vmem:[%s7] sm:$0x1]
        %5309 = vadd.xlane.f32.xlu0 %v5291
        %v5310 = vpop.xlane.xlu0 %5309
        %5311 = vadd.xlane.f32.xlu0 %v5292
        %v5312 = vpop.xlane.xlu0 %5311
        %5313 = vadd.xlane.f32.xlu0 %v5293
        %v5314 = vpop.xlane.xlu0 %5313
        %5315 = vadd.xlane.f32.xlu0 %v5294
        %v5316 = vpop.xlane.xlu0 %5315
        %5317 = vadd.xlane.f32.xlu0 %v5295
        %v5318 = vpop.xlane.xlu0 %5317
        %5319 = vadd.xlane.f32.xlu0 %v5296
        %v5320 = vpop.xlane.xlu0 %5319
        %5321 = vadd.xlane.f32.xlu0 %v5297
        %v5322 = vpop.xlane.xlu0 %5321
        %5323 = vadd.xlane.f32.xlu0 %v5298
        %v5324 = vpop.xlane.xlu0 %5323
        %5325 = vadd.xlane.f32.xlu0 %v5299
        %v5326 = vpop.xlane.xlu0 %5325
        %5327 = vadd.xlane.f32.xlu0 %v5300
        %v5328 = vpop.xlane.xlu0 %5327
        %5329 = vadd.xlane.f32.xlu0 %v5301
        %v5330 = vpop.xlane.xlu0 %5329
        %5331 = vadd.xlane.f32.xlu0 %v5302
        %v5332 = vpop.xlane.xlu0 %5331
        %5333 = vadd.xlane.f32.xlu0 %v5303
        %v5334 = vpop.xlane.xlu0 %5333
        %5335 = vadd.xlane.f32.xlu0 %v5304
        %v5336 = vpop.xlane.xlu0 %5335
        %5337 = vadd.xlane.f32.xlu0 %v5305
        %v5338 = vpop.xlane.xlu0 %5337
        %5339 = vadd.xlane.f32.xlu0 %v5306
        %v5340 = vpop.xlane.xlu0 %5339
        %v5341 = vrcp.pop 128.0
        %v5342 = vmul.f32 128.0, %v5341
        %v5343 = vsub.f32 1.0, %v5342
        %v5344 = vmul.f32 %v5341, %v5343
        %v5345 = vadd.f32 %v5341, %v5344
        %vm5346 = vweird.f32 %v5341
        %v5347 = vsel %vm5346, %v5341, %v5345
        %v5348 = vmul.f32 %v5310, %v5347
        %v5349 = vmul.f32 %v5312, %v5347
        %v5350 = vmul.f32 %v5314, %v5347
        %v5351 = vmul.f32 %v5316, %v5347
        %v5352 = vmul.f32 %v5318, %v5347
        %v5353 = vmul.f32 %v5320, %v5347
        %v5354 = vmul.f32 %v5322, %v5347
        %v5355 = vmul.f32 %v5324, %v5347
        %v5356 = vmul.f32 %v5326, %v5347
        %v5357 = vmul.f32 %v5328, %v5347
        %v5358 = vmul.f32 %v5330, %v5347
        %v5359 = vmul.f32 %v5332, %v5347
        %v5360 = vmul.f32 %v5334, %v5347
        %v5361 = vmul.f32 %v5336, %v5347
        %v5362 = vmul.f32 %v5338, %v5347
        %v5363 = vmul.f32 %v5340, %v5347
        %v5364 = vsub.f32 %v5291, %v5348
        %v5365 = vsub.f32 %v5292, %v5349
        %v5366 = vsub.f32 %v5293, %v5350
        %v5367 = vsub.f32 %v5294, %v5351
        %v5368 = vsub.f32 %v5295, %v5352
        %v5369 = vsub.f32 %v5296, %v5353
        %v5370 = vsub.f32 %v5297, %v5354
        %v5371 = vsub.f32 %v5298, %v5355
        %v5372 = vsub.f32 %v5299, %v5356
        %v5373 = vsub.f32 %v5300, %v5357
        %v5374 = vsub.f32 %v5301, %v5358
        %v5375 = vsub.f32 %v5302, %v5359
        %v5376 = vsub.f32 %v5303, %v5360
        %v5377 = vsub.f32 %v5304, %v5361
        %v5378 = vsub.f32 %v5305, %v5362
        %v5379 = vsub.f32 %v5306, %v5363
        %v5380 = vmul.f32 %v5364, %v5364
        %v5381 = vmul.f32 %v5365, %v5365
        %v5382 = vmul.f32 %v5366, %v5366
        %v5383 = vmul.f32 %v5367, %v5367
        %v5384 = vmul.f32 %v5368, %v5368
        %v5385 = vmul.f32 %v5369, %v5369
        %v5386 = vmul.f32 %v5370, %v5370
        %v5387 = vmul.f32 %v5371, %v5371
        %v5388 = vmul.f32 %v5372, %v5372
        %v5389 = vmul.f32 %v5373, %v5373
        %v5390 = vmul.f32 %v5374, %v5374
        %v5391 = vmul.f32 %v5375, %v5375
        %v5392 = vmul.f32 %v5376, %v5376
        %v5393 = vmul.f32 %v5377, %v5377
        %v5394 = vmul.f32 %v5378, %v5378
        %v5395 = vmul.f32 %v5379, %v5379
        %5396 = vadd.xlane.f32.xlu0 %v5380
        %v5397 = vpop.xlane.xlu0 %5396
        %5398 = vadd.xlane.f32.xlu0 %v5381
        %v5399 = vpop.xlane.xlu0 %5398
        %5400 = vadd.xlane.f32.xlu0 %v5382
        %v5401 = vpop.xlane.xlu0 %5400
        %5402 = vadd.xlane.f32.xlu0 %v5383
        %v5403 = vpop.xlane.xlu0 %5402
        %5404 = vadd.xlane.f32.xlu0 %v5384
        %v5405 = vpop.xlane.xlu0 %5404
        %5406 = vadd.xlane.f32.xlu0 %v5385
        %v5407 = vpop.xlane.xlu0 %5406
        %5408 = vadd.xlane.f32.xlu0 %v5386
        %v5409 = vpop.xlane.xlu0 %5408
        %5410 = vadd.xlane.f32.xlu0 %v5387
        %v5411 = vpop.xlane.xlu0 %5410
        %5412 = vadd.xlane.f32.xlu0 %v5388
        %v5413 = vpop.xlane.xlu0 %5412
        %5414 = vadd.xlane.f32.xlu0 %v5389
        %v5415 = vpop.xlane.xlu0 %5414
        %5416 = vadd.xlane.f32.xlu0 %v5390
        %v5417 = vpop.xlane.xlu0 %5416
        %5418 = vadd.xlane.f32.xlu0 %v5391
        %v5419 = vpop.xlane.xlu0 %5418
        %5420 = vadd.xlane.f32.xlu0 %v5392
        %v5421 = vpop.xlane.xlu0 %5420
        %5422 = vadd.xlane.f32.xlu0 %v5393
        %v5423 = vpop.xlane.xlu0 %5422
        %5424 = vadd.xlane.f32.xlu0 %v5394
        %v5425 = vpop.xlane.xlu0 %5424
        %5426 = vadd.xlane.f32.xlu0 %v5395
        %v5427 = vpop.xlane.xlu0 %5426
        %v5428 = vmul.f32 %v5397, %v5347
        %v5429 = vmul.f32 %v5399, %v5347
        %v5430 = vmul.f32 %v5401, %v5347
        %v5431 = vmul.f32 %v5403, %v5347
        %v5432 = vmul.f32 %v5405, %v5347
        %v5433 = vmul.f32 %v5407, %v5347
        %v5434 = vmul.f32 %v5409, %v5347
        %v5435 = vmul.f32 %v5411, %v5347
        %v5436 = vmul.f32 %v5413, %v5347
        %v5437 = vmul.f32 %v5415, %v5347
        %v5438 = vmul.f32 %v5417, %v5347
        %v5439 = vmul.f32 %v5419, %v5347
        %v5440 = vmul.f32 %v5421, %v5347
        %v5441 = vmul.f32 %v5423, %v5347
        %v5442 = vmul.f32 %v5425, %v5347
        %v5443 = vmul.f32 %v5427, %v5347
        %v5444 = vadd.f32 %v5428, 1e-05
        %v5445 = vadd.f32 %v5429, 1e-05
        %v5446 = vadd.f32 %v5430, 1e-05
        %v5447 = vadd.f32 %v5431, 1e-05
        %v5448 = vadd.f32 %v5432, 1e-05
        %v5449 = vadd.f32 %v5433, 1e-05
        %v5450 = vadd.f32 %v5434, 1e-05
        %v5451 = vadd.f32 %v5435, 1e-05
        %v5452 = vadd.f32 %v5436, 1e-05
        %v5453 = vadd.f32 %v5437, 1e-05
        %v5454 = vadd.f32 %v5438, 1e-05
        %v5455 = vadd.f32 %v5439, 1e-05
        %v5456 = vadd.f32 %v5440, 1e-05
        %v5457 = vadd.f32 %v5441, 1e-05
        %v5458 = vadd.f32 %v5442, 1e-05
        %v5459 = vadd.f32 %v5443, 1e-05
        %v5460 = vrsqrt.pop %v5444
        %v5461 = vmul.f32 %v5460, %v5444
        %v5462 = vmul.f32 %v5461, %v5460
        %v5463 = vmul.f32 0.5, %v5462
        %v5464 = vsub.f32 1.5, %v5463
        %v5465 = vmul.f32 %v5460, %v5464
        %vm5466 = vweird.f32 %v5444
        %vm5467 = vweird.f32 %v5460
        %vm5468 = vmor %vm5466, %vm5467
        %v5469 = vsel %vm5468, %v5460, %v5465
        %v5470 = vrsqrt.pop %v5445
        %v5471 = vmul.f32 %v5470, %v5445
        %v5472 = vmul.f32 %v5471, %v5470
        %v5473 = vmul.f32 0.5, %v5472
        %v5474 = vsub.f32 1.5, %v5473
        %v5475 = vmul.f32 %v5470, %v5474
        %vm5476 = vweird.f32 %v5445
        %vm5477 = vweird.f32 %v5470
        %vm5478 = vmor %vm5476, %vm5477
        %v5479 = vsel %vm5478, %v5470, %v5475
        %v5480 = vrsqrt.pop %v5446
        %v5481 = vmul.f32 %v5480, %v5446
        %v5482 = vmul.f32 %v5481, %v5480
        %v5483 = vmul.f32 0.5, %v5482
        %v5484 = vsub.f32 1.5, %v5483
        %v5485 = vmul.f32 %v5480, %v5484
        %vm5486 = vweird.f32 %v5446
        %vm5487 = vweird.f32 %v5480
        %vm5488 = vmor %vm5486, %vm5487
        %v5489 = vsel %vm5488, %v5480, %v5485
        %v5490 = vrsqrt.pop %v5447
        %v5491 = vmul.f32 %v5490, %v5447
        %v5492 = vmul.f32 %v5491, %v5490
        %v5493 = vmul.f32 0.5, %v5492
        %v5494 = vsub.f32 1.5, %v5493
        %v5495 = vmul.f32 %v5490, %v5494
        %vm5496 = vweird.f32 %v5447
        %vm5497 = vweird.f32 %v5490
        %vm5498 = vmor %vm5496, %vm5497
        %v5499 = vsel %vm5498, %v5490, %v5495
        %v5500 = vrsqrt.pop %v5448
        %v5501 = vmul.f32 %v5500, %v5448
        %v5502 = vmul.f32 %v5501, %v5500
        %v5503 = vmul.f32 0.5, %v5502
        %v5504 = vsub.f32 1.5, %v5503
        %v5505 = vmul.f32 %v5500, %v5504
        %vm5506 = vweird.f32 %v5448
        %vm5507 = vweird.f32 %v5500
        %vm5508 = vmor %vm5506, %vm5507
        %v5509 = vsel %vm5508, %v5500, %v5505
        %v5510 = vrsqrt.pop %v5449
        %v5511 = vmul.f32 %v5510, %v5449
        %v5512 = vmul.f32 %v5511, %v5510
        %v5513 = vmul.f32 0.5, %v5512
        %v5514 = vsub.f32 1.5, %v5513
        %v5515 = vmul.f32 %v5510, %v5514
        %vm5516 = vweird.f32 %v5449
        %vm5517 = vweird.f32 %v5510
        %vm5518 = vmor %vm5516, %vm5517
        %v5519 = vsel %vm5518, %v5510, %v5515
        %v5520 = vrsqrt.pop %v5450
        %v5521 = vmul.f32 %v5520, %v5450
        %v5522 = vmul.f32 %v5521, %v5520
        %v5523 = vmul.f32 0.5, %v5522
        %v5524 = vsub.f32 1.5, %v5523
        %v5525 = vmul.f32 %v5520, %v5524
        %vm5526 = vweird.f32 %v5450
        %vm5527 = vweird.f32 %v5520
        %vm5528 = vmor %vm5526, %vm5527
        %v5529 = vsel %vm5528, %v5520, %v5525
        %v5530 = vrsqrt.pop %v5451
        %v5531 = vmul.f32 %v5530, %v5451
        %v5532 = vmul.f32 %v5531, %v5530
        %v5533 = vmul.f32 0.5, %v5532
        %v5534 = vsub.f32 1.5, %v5533
        %v5535 = vmul.f32 %v5530, %v5534
        %vm5536 = vweird.f32 %v5451
        %vm5537 = vweird.f32 %v5530
        %vm5538 = vmor %vm5536, %vm5537
        %v5539 = vsel %vm5538, %v5530, %v5535
        %v5540 = vrsqrt.pop %v5452
        %v5541 = vmul.f32 %v5540, %v5452
        %v5542 = vmul.f32 %v5541, %v5540
        %v5543 = vmul.f32 0.5, %v5542
        %v5544 = vsub.f32 1.5, %v5543
        %v5545 = vmul.f32 %v5540, %v5544
        %vm5546 = vweird.f32 %v5452
        %vm5547 = vweird.f32 %v5540
        %vm5548 = vmor %vm5546, %vm5547
        %v5549 = vsel %vm5548, %v5540, %v5545
        %v5550 = vrsqrt.pop %v5453
        %v5551 = vmul.f32 %v5550, %v5453
        %v5552 = vmul.f32 %v5551, %v5550
        %v5553 = vmul.f32 0.5, %v5552
        %v5554 = vsub.f32 1.5, %v5553
        %v5555 = vmul.f32 %v5550, %v5554
        %vm5556 = vweird.f32 %v5453
        %vm5557 = vweird.f32 %v5550
        %vm5558 = vmor %vm5556, %vm5557
        %v5559 = vsel %vm5558, %v5550, %v5555
        %v5560 = vrsqrt.pop %v5454
        %v5561 = vmul.f32 %v5560, %v5454
        %v5562 = vmul.f32 %v5561, %v5560
        %v5563 = vmul.f32 0.5, %v5562
        %v5564 = vsub.f32 1.5, %v5563
        %v5565 = vmul.f32 %v5560, %v5564
        %vm5566 = vweird.f32 %v5454
        %vm5567 = vweird.f32 %v5560
        %vm5568 = vmor %vm5566, %vm5567
        %v5569 = vsel %vm5568, %v5560, %v5565
        %v5570 = vrsqrt.pop %v5455
        %v5571 = vmul.f32 %v5570, %v5455
        %v5572 = vmul.f32 %v5571, %v5570
        %v5573 = vmul.f32 0.5, %v5572
        %v5574 = vsub.f32 1.5, %v5573
        %v5575 = vmul.f32 %v5570, %v5574
        %vm5576 = vweird.f32 %v5455
        %vm5577 = vweird.f32 %v5570
        %vm5578 = vmor %vm5576, %vm5577
        %v5579 = vsel %vm5578, %v5570, %v5575
        %v5580 = vrsqrt.pop %v5456
        %v5581 = vmul.f32 %v5580, %v5456
        %v5582 = vmul.f32 %v5581, %v5580
        %v5583 = vmul.f32 0.5, %v5582
        %v5584 = vsub.f32 1.5, %v5583
        %v5585 = vmul.f32 %v5580, %v5584
        %vm5586 = vweird.f32 %v5456
        %vm5587 = vweird.f32 %v5580
        %vm5588 = vmor %vm5586, %vm5587
        %v5589 = vsel %vm5588, %v5580, %v5585
        %v5590 = vrsqrt.pop %v5457
        %v5591 = vmul.f32 %v5590, %v5457
        %v5592 = vmul.f32 %v5591, %v5590
        %v5593 = vmul.f32 0.5, %v5592
        %v5594 = vsub.f32 1.5, %v5593
        %v5595 = vmul.f32 %v5590, %v5594
        %vm5596 = vweird.f32 %v5457
        %vm5597 = vweird.f32 %v5590
        %vm5598 = vmor %vm5596, %vm5597
        %v5599 = vsel %vm5598, %v5590, %v5595
        %v5600 = vrsqrt.pop %v5458
        %v5601 = vmul.f32 %v5600, %v5458
        %v5602 = vmul.f32 %v5601, %v5600
        %v5603 = vmul.f32 0.5, %v5602
        %v5604 = vsub.f32 1.5, %v5603
        %v5605 = vmul.f32 %v5600, %v5604
        %vm5606 = vweird.f32 %v5458
        %vm5607 = vweird.f32 %v5600
        %vm5608 = vmor %vm5606, %vm5607
        %v5609 = vsel %vm5608, %v5600, %v5605
        %v5610 = vrsqrt.pop %v5459
        %v5611 = vmul.f32 %v5610, %v5459
        %v5612 = vmul.f32 %v5611, %v5610
        %v5613 = vmul.f32 0.5, %v5612
        %v5614 = vsub.f32 1.5, %v5613
        %v5615 = vmul.f32 %v5610, %v5614
        %vm5616 = vweird.f32 %v5459
        %vm5617 = vweird.f32 %v5610
        %vm5618 = vmor %vm5616, %vm5617
        %v5619 = vsel %vm5618, %v5610, %v5615
        %v5620 = vmul.f32 %v5364, %v5469
        %v5621 = vmul.f32 %v5365, %v5479
        %v5622 = vmul.f32 %v5366, %v5489
        %v5623 = vmul.f32 %v5367, %v5499
        %v5624 = vmul.f32 %v5368, %v5509
        %v5625 = vmul.f32 %v5369, %v5519
        %v5626 = vmul.f32 %v5370, %v5529
        %v5627 = vmul.f32 %v5371, %v5539
        %v5628 = vmul.f32 %v5372, %v5549
        %v5629 = vmul.f32 %v5373, %v5559
        %v5630 = vmul.f32 %v5374, %v5569
        %v5631 = vmul.f32 %v5375, %v5579
        %v5632 = vmul.f32 %v5376, %v5589
        %v5633 = vmul.f32 %v5377, %v5599
        %v5634 = vmul.f32 %v5378, %v5609
        %v5635 = vmul.f32 %v5379, %v5619
        %v5637 = vperm.slane %v5307, 0
        %v5639 = vmul.f32 %v5620, %v5637
        %v5640 = vmul.f32 %v5621, %v5637
        %v5641 = vmul.f32 %v5622, %v5637
        %v5642 = vmul.f32 %v5623, %v5637
        %v5643 = vmul.f32 %v5624, %v5637
        %v5644 = vmul.f32 %v5625, %v5637
        %v5645 = vmul.f32 %v5626, %v5637
        %v5646 = vmul.f32 %v5627, %v5637
        %v5647 = vmul.f32 %v5628, %v5637
        %v5648 = vmul.f32 %v5629, %v5637
        %v5649 = vmul.f32 %v5630, %v5637
        %v5650 = vmul.f32 %v5631, %v5637
        %v5651 = vmul.f32 %v5632, %v5637
        %v5652 = vmul.f32 %v5633, %v5637
        %v5653 = vmul.f32 %v5634, %v5637
        %v5654 = vmul.f32 %v5635, %v5637
        %v5656 = vperm.slane %v5308, 0
        %v5658 = vadd.f32 %v5639, %v5656
        %v5659 = vadd.f32 %v5640, %v5656
        %v5660 = vadd.f32 %v5641, %v5656
        %v5661 = vadd.f32 %v5642, %v5656
        %v5662 = vadd.f32 %v5643, %v5656
        %v5663 = vadd.f32 %v5644, %v5656
        %v5664 = vadd.f32 %v5645, %v5656
        %v5665 = vadd.f32 %v5646, %v5656
        %v5666 = vadd.f32 %v5647, %v5656
        %v5667 = vadd.f32 %v5648, %v5656
        %v5668 = vadd.f32 %v5649, %v5656
        %v5669 = vadd.f32 %v5650, %v5656
        %v5670 = vadd.f32 %v5651, %v5656
        %v5671 = vadd.f32 %v5652, %v5656
        %v5672 = vadd.f32 %v5653, %v5656
        %v5673 = vadd.f32 %v5654, %v5656
        %v5674 = vpack.c.bf16 %v5658, %v5658
        %v5675 = vpack.c.bf16 %v5659, %v5659
        %v5676 = vpack.c.bf16 %v5660, %v5660
        %v5677 = vpack.c.bf16 %v5661, %v5661
        %v5678 = vpack.c.bf16 %v5662, %v5662
        %v5679 = vpack.c.bf16 %v5663, %v5663
        %v5680 = vpack.c.bf16 %v5664, %v5664
        %v5681 = vpack.c.bf16 %v5665, %v5665
        %v5682 = vpack.c.bf16 %v5666, %v5666
        %v5683 = vpack.c.bf16 %v5667, %v5667
        %v5684 = vpack.c.bf16 %v5668, %v5668
        %v5685 = vpack.c.bf16 %v5669, %v5669
        %v5686 = vpack.c.bf16 %v5670, %v5670
        %v5687 = vpack.c.bf16 %v5671, %v5671
        %v5688 = vpack.c.bf16 %v5672, %v5672
        %v5689 = vpack.c.bf16 %v5673, %v5673
        %5690 = vst [vmem:[%s458] sm:$0xf] %v5674
        %5691 = vst [vmem:[%s458 + $0x4] sm:$0xf] %v5675
        %5692 = vst [vmem:[%s458 + $0x8] sm:$0xf] %v5676
        %5693 = vst [vmem:[%s458 + $0xc] sm:$0xf] %v5677
        %5694 = vst [vmem:[%s458 + $0x10] sm:$0xf] %v5678
        %5695 = vst [vmem:[%s458 + $0x14] sm:$0xf] %v5679
        %5696 = vst [vmem:[%s458 + $0x18] sm:$0xf] %v5680
        %5697 = vst [vmem:[%s458 + $0x1c] sm:$0xf] %v5681
        %5698 = vst [vmem:[%s458 + $0x20] sm:$0xf] %v5682
        %5699 = vst [vmem:[%s458 + $0x24] sm:$0xf] %v5683
        %5700 = vst [vmem:[%s458 + $0x28] sm:$0xf] %v5684
        %5701 = vst [vmem:[%s458 + $0x2c] sm:$0xf] %v5685
        %5702 = vst [vmem:[%s458 + $0x30] sm:$0xf] %v5686
        %5703 = vst [vmem:[%s458 + $0x34] sm:$0xf] %v5687
        %5704 = vst [vmem:[%s458 + $0x38] sm:$0xf] %v5688
        %5705 = vst [vmem:[%s458 + $0x3c] sm:$0xf] %v5689
      $region60: #{encoder_forward.4} parent=51 // pred_fallthru
        _
      %s5706 = smul.u32 16, %s25
      %p5707 = scmp.lt.s32.totalorder %s24, 1
      %s5708 = scalar_select %p5707, %s24, 1
      %p5709 = scmp.lt.s32.totalorder %s5706, 15
      %s5710 = scalar_select %p5709, %s5706, 15
      %s5711 = smul.addr %s5708, 16
      %s5712 = sadd.s32 %s5710, %s5711
      %s5713 = smul.addr %s5712, 4
      %s5714 = scalar_lea.vmem %s8, %s5713
      // Predicated region
      $region61: #{encoder_forward.4} parent=51 // pred_check
        %p5715 = pneg %p254
      $region62: #{encoder_forward.4} parent=51 // pred_check_branch
        %5717 = sbr.rel (%p5715) target = $region64
      $region63: #{encoder_forward.4} parent=51 // pred_region
        %s5718 = smul.u32 16, %s25
      $region64: #{encoder_forward.4} parent=51 // pred_fallthru
        _
    $region52: #{encoder_forward.4} parent=5 // pred_fallthru
      _
    %p5719 = scmp.le.s32.totalorder 2, %s14
    // Predicated region
    $region65: #{encoder_forward.4} parent=5 // pred_check
      %p5720 = pneg %p5719
    $region66: #{encoder_forward.4} parent=5 // pred_check_branch
      %5722 = sbr.rel (%p5720) target = $region68
    $region67: #{encoder_forward.4} parent=5 // pred_region
      %s5723 = ssub.s32 %s14, 2
      // Predicated region
      $region69: #{encoder_forward.4} parent=67 // pred_check
        %p5724 = pneg %p260
      $region70: #{encoder_forward.4} parent=67 // pred_check_branch
        %5726 = sbr.rel (%p5724) target = $region72
      $region71: #{encoder_forward.4} parent=67 // pred_region
        %s5727 = smul.u32 16, %s28
        %p5728 = scmp.lt.s32.totalorder %s27, 1
        %s5729 = scalar_select %p5728, %s27, 1
        %p5730 = scmp.lt.s32.totalorder %s5727, 15
        %s5731 = scalar_select %p5730, %s5727, 15
        %s5732 = smul.addr %s5729, 16
        %s5733 = sadd.s32 %s5731, %s5732
        %s5734 = smul.addr %s5733, 4
        %s5735 = scalar_lea.vmem %s8, %s5734
      $region72: #{encoder_forward.4} parent=67 // pred_fallthru
        _
    $region68: #{encoder_forward.4} parent=5 // pred_fallthru
      _
  $region6: #{encoder_forward.4} parent=0 // loop_footer
    %s18 = sadd.s32 1, %s14
  $region7: #{encoder_forward.4} parent=0 // loop_footer_branch
    %13 = sbr.rel target = $region3
  $region8: #{encoder_forward.4} parent=0 // loop_exit
    _

</llo_original>
